<compile_context>
chip_gen: v5e
topology: v5e:2x2
jax: 0.10.0
libtpu: 0.0.40
codegen_flags: <defaults>
</compile_context>

<pallas_src>
import functools

import jax
import jax.numpy as jnp
from jax import lax
from jax.experimental import pallas as pl
from jax.experimental.pallas import tpu as pltpu

BN_EPS = 1e-5
LEAKY_SLOPE = 0.2
SHRINK_THRES = 0.0025

_LANE = 128
_TM_MAX = 512                        # token-tile rows (multiple of 16 for bf16 blocks)
_VMEM_LIMIT = 64 * 1024 * 1024       # <= v7x physical VMEM; well below v5e/v6e

# Mild version hedges (documented API is pltpu.CompilerParams / pl.reciprocal).
_CompilerParams = getattr(pltpu, "CompilerParams", None) or getattr(
    pltpu, "TPUCompilerParams")
_reciprocal = getattr(pl, "reciprocal", None) or (lambda x, approx=False: 1.0 / x)


def _round_up(x, m):
    return (x + m - 1) // m * m


def _compiler_params():
    return _CompilerParams(dimension_semantics=("parallel",),
                           vmem_limit_bytes=_VMEM_LIMIT)


def _apply_act(y, act):
    if act == "relu":
        return jnp.maximum(y, 0.0)
    if act == "leaky":
        return jnp.where(y >= 0.0, y, LEAKY_SLOPE * y)
    if act == "tanh":
        return jnp.tanh(y)
    return y


# ----------------------------------------------------------------------------
# Pallas kernels
# ----------------------------------------------------------------------------
def _matmul_stats_kernel(p_ref, w_ref, y_ref, s_ref):
    """Tiled conv matmul (bf16 operands, f32 acc) + per-tile channel sum / sumsq."""
    y = jnp.dot(p_ref[...], w_ref[...], preferred_element_type=jnp.float32)
    y_ref[...] = y
    s = jnp.concatenate(
        [jnp.sum(y, axis=0, keepdims=True),
         jnp.sum(y * y, axis=0, keepdims=True)], axis=0)      # (2, Cp)
    s_ref[...] = s[None]                                      # (1, 2, Cp)


def _matmul_act_kernel(p_ref, w_ref, o_ref, *, act):
    """Tiled matmul + activation (no BatchNorm path)."""
    y = jnp.dot(p_ref[...], w_ref[...], preferred_element_type=jnp.float32)
    o_ref[...] = _apply_act(y, act)


def _scale_shift_act_kernel(y_ref, sc_ref, sh_ref, o_ref, *, act):
    """BN pass 2: y * scale + shift (scale/shift precomputed from batch stats) + act."""
    o_ref[...] = _apply_act(y_ref[...] * sc_ref[...] + sh_ref[...], act)


def _mem_kernel(x_ref, w_ref, o_ref, a_ref, *, m_true, shrink_thres):
    """MemAE memory unit: att = L1norm(hardshrink(softmax(x @ M^T))); out = att @ M."""
    x = x_ref[...]                       # (tm, Cp) bf16
    w = w_ref[...]                       # (Mp, Cp) bf16, resident across the T grid
    s = lax.dot_general(x, w, (((1,), (1,)), ((), ())),
                        preferred_element_type=jnp.float32)   # (tm, Mp)
    m_pad = s.shape[1]
    if m_true < m_pad:                   # mask zero-padded memory slots out of softmax
        col = lax.broadcasted_iota(jnp.int32, s.shape, 1)
        s = jnp.where(col < m_true, s, -1e30)
    s = s - jnp.max(s, axis=1, keepdims=True)
    e = jnp.exp(s)
    att = e * _reciprocal(jnp.sum(e, axis=1, keepdims=True), approx=True)
    if shrink_thres > 0:
        # hard_shrink_relu(att, lambd) = relu(att - lambd) * att / (|att - lambd| + 1e-12)
        att = (jnp.maximum(att - shrink_thres, 0.0) * att) / (
            jnp.abs(att - shrink_thres) + 1e-12)
        # F.normalize(att, p=1, dim=1)
        att = att * _reciprocal(
            jnp.maximum(jnp.sum(jnp.abs(att), axis=1, keepdims=True), 1e-12),
            approx=True)
    o_ref[...] = jnp.dot(att.astype(w.dtype), w, preferred_element_type=jnp.float32)
    a_ref[...] = att


# ----------------------------------------------------------------------------
# Pallas wrappers (padding + tiling)
# ----------------------------------------------------------------------------
def _pad2(a, rows, cols):
    pr, pc = rows - a.shape[0], cols - a.shape[1]
    if pr == 0 and pc == 0:
        return a
    return jnp.pad(a, ((0, pr), (0, pc)))


def _matmul_stats(patches, wmat, cout):
    """patches (T, K) bf16, wmat (K, cout) f32 -> (y (T, Cp) f32, stats (2, Cp))."""
    T, K = patches.shape
    Kp = _round_up(K, _LANE)
    Cp = _round_up(cout, _LANE)
    tm = min(_TM_MAX, _round_up(T, 16))
    Tp = _round_up(T, tm)
    p = _pad2(patches, Tp, Kp)
    w = _pad2(wmat, Kp, Cp).astype(jnp.bfloat16)
    grid_t = Tp // tm
    y, stats = pl.pallas_call(
        _matmul_stats_kernel,
        out_shape=(jax.ShapeDtypeStruct((Tp, Cp), jnp.float32),
                   jax.ShapeDtypeStruct((grid_t, 2, Cp), jnp.float32)),
        grid=(grid_t,),
        in_specs=[pl.BlockSpec((tm, Kp), lambda i: (i, 0)),
                  pl.BlockSpec((Kp, Cp), lambda i: (0, 0))],
        out_specs=(pl.BlockSpec((tm, Cp), lambda i: (i, 0)),
                   pl.BlockSpec((1, 2, Cp), lambda i: (i, 0, 0))),
        compiler_params=_compiler_params(),
    )(p, w)
    # zero-padded rows/columns contribute exactly 0 to the sums.
    return y[:T], jnp.sum(stats, axis=0)


def _matmul_act(patches, wmat, cout, act):
    """patches (T, K) bf16, wmat (K, cout) f32 -> activated (T, Cp) f32 (no BN)."""
    T, K = patches.shape
    Kp = _round_up(K, _LANE)
    Cp = _round_up(cout, _LANE)
    tm = min(_TM_MAX, _round_up(T, 16))
    Tp = _round_up(T, tm)
    p = _pad2(patches, Tp, Kp)
    w = _pad2(wmat, Kp, Cp).astype(jnp.bfloat16)
    y = pl.pallas_call(
        functools.partial(_matmul_act_kernel, act=act),
        out_shape=jax.ShapeDtypeStruct((Tp, Cp), jnp.float32),
        grid=(Tp // tm,),
        in_specs=[pl.BlockSpec((tm, Kp), lambda i: (i, 0)),
                  pl.BlockSpec((Kp, Cp), lambda i: (0, 0))],
        out_specs=pl.BlockSpec((tm, Cp), lambda i: (i, 0)),
        compiler_params=_compiler_params(),
    )(p, w)
    return y[:T]


def _bn_act(y, scale, shift, act):
    """y (T, Cp) f32; scale/shift (1, Cp) -> activated (T, Cp)."""
    T, Cp = y.shape
    tm = min(_TM_MAX, _round_up(T, 16))
    Tp = _round_up(T, tm)
    yp = _pad2(y, Tp, Cp)
    out = pl.pallas_call(
        functools.partial(_scale_shift_act_kernel, act=act),
        out_shape=jax.ShapeDtypeStruct((Tp, Cp), jnp.float32),
        grid=(Tp // tm,),
        in_specs=[pl.BlockSpec((tm, Cp), lambda i: (i, 0)),
                  pl.BlockSpec((1, Cp), lambda i: (0, 0)),
                  pl.BlockSpec((1, Cp), lambda i: (0, 0))],
        out_specs=pl.BlockSpec((tm, Cp), lambda i: (i, 0)),
        compiler_params=_compiler_params(),
    )(yp, scale, shift)
    return out[:T]


def _bn_scale_shift(stats, count, gamma, beta):
    """Fold biased batch stats (sum, sumsq over `count` pixels) + gamma/beta into
    a per-channel affine (scale, shift)."""
    Cp = stats.shape[1]
    c = gamma.shape[0]
    mean = stats[0] / count
    var = jnp.maximum(stats[1] / count - mean * mean, 0.0)
    if Cp > c:
        gamma = jnp.concatenate([gamma, jnp.ones((Cp - c,), jnp.float32)])
        beta = jnp.concatenate([beta, jnp.zeros((Cp - c,), jnp.float32)])
    scale = gamma * lax.rsqrt(var + BN_EPS)
    shift = beta - mean * scale
    return scale.reshape(1, Cp), shift.reshape(1, Cp)


# ----------------------------------------------------------------------------
# Plain-JAX glue: NHWC im2col, ConvTranspose phase decomposition, blocks
# ----------------------------------------------------------------------------
def _im2col(x, k, stride, pad):
    """x (N, H, W, C) -> patches (N*Ho*Wo, k*k*C); K ordering = (kh, kw, c)."""
    N, H, W, C = x.shape
    xp = jnp.pad(x, ((0, 0), (pad, pad), (pad, pad), (0, 0))) if pad else x
    Ho = (H + 2 * pad - k) // stride + 1
    Wo = (W + 2 * pad - k) // stride + 1
    cols = [xp[:, kh:kh + stride * Ho:stride, kw:kw + stride * Wo:stride, :]
            for kh in range(k) for kw in range(k)]
    return jnp.concatenate(cols, axis=-1).reshape(N * Ho * Wo, k * k * C), (N, Ho, Wo)


def _conv_block(x, prm, k, stride, pad, act):
    """Conv2d(bias=False) + training-mode BatchNorm + activation. x is NHWC."""
    cin = x.shape[-1]
    cout = prm["w"].shape[0]
    patches, (N, Ho, Wo) = _im2col(x.astype(jnp.bfloat16), k, stride, pad)
    # weight (Cout, Cin, kh, kw) -> (kh, kw, Cin, Cout) flattening matches patch K order
    wmat = prm["w"].transpose(2, 3, 1, 0).reshape(k * k * cin, cout)
    y, stats = _matmul_stats(patches, wmat, cout)
    scale, shift = _bn_scale_shift(stats, N * Ho * Wo, prm["gamma"], prm["beta"])
    out = _bn_act(y, scale, shift, act)[:, :cout]
    return out.reshape(N, Ho, Wo, cout)


def _double_conv(x, prm):
    y = _conv_block(x, prm["c1"], 3, 1, 1, act="relu")
    return _conv_block(y, prm["c2"], 3, 1, 1, act="relu")


# ConvTranspose2d(k=4, s=2, p=1): out[2i+py] = sum over the 2 kernel taps below.
_PHASE_TAPS = ((3, 1), (2, 0))       # output parity -> kernel-tap indices per dim


def _phase_patches(x, py, px):
    """2x2 im2col (T, 4*C) for output phase (py, px); K ordering = (kh, kw, c)."""
    N, H, W, C = x.shape
    xp = jnp.pad(x, ((0, 0), (1 - py, py), (1 - px, px), (0, 0)))
    cols = [xp[:, kh:kh + H, kw:kw + W, :] for kh in range(2) for kw in range(2)]
    return jnp.concatenate(cols, axis=-1).reshape(N * H * W, 4 * C)


def _phase_weight(w, py, px):
    """w (Cin, Cout, 4, 4) -> phase conv weight (2*2*Cin, Cout), K order (kh, kw, ci)."""
    wp = w[:, :, list(_PHASE_TAPS[py]), :][:, :, :, list(_PHASE_TAPS[px])]
    return wp.transpose(2, 3, 0, 1).reshape(4 * w.shape[0], w.shape[1])


def _convT_block(x, prm, act, use_bn=True):
    """ConvTranspose2d(4, 2, 1, bias=False) via 4-phase decomposition (+BN +act).
    x (N, H, W, Cin) NHWC -> (N, 2H, 2W, Cout)."""
    N, H, W, _ = x.shape
    cout = prm["w"].shape[1]
    xb = x.astype(jnp.bfloat16)
    T = N * H * W
    if use_bn:
        ys, stats = [], None
        for py in range(2):
            for px in range(2):
                y, st = _matmul_stats(_phase_patches(xb, py, px),
                                      _phase_weight(prm["w"], py, px), cout)
                ys.append(y)
                stats = st if stats is None else stats + st
        # BN statistics are over the FULL (interleaved) output: 4*T pixels.
        scale, shift = _bn_scale_shift(stats, 4 * T, prm["gamma"], prm["beta"])
        out = _bn_act(jnp.concatenate(ys, axis=0), scale, shift, act)
    else:
        out = jnp.concatenate(
            [_matmul_act(_phase_patches(xb, py, px),
                         _phase_weight(prm["w"], py, px), cout, act)
             for py in range(2) for px in range(2)], axis=0)
    out = out.reshape(2, 2, N, H, W, -1)                  # (py, px, N, H, W, Cp)
    out = out.transpose(2, 3, 0, 4, 1, 5).reshape(N, 2 * H, 2 * W, -1)
    return out[..., :cout]


def _mem_module(x, mem_w):
    """x (N, H, W, C) NHWC; mem_w (M, C). Returns (read-out NHWC, att (N, H, W, M))."""
    N, H, W, C = x.shape
    M = mem_w.shape[0]
    T = N * H * W
    Cp = _round_up(C, _LANE)
    Mp = _round_up(M, _LANE)
    tm = min(_TM_MAX, _round_up(T, 16))
    Tp = _round_up(T, tm)
    xm = _pad2(x.reshape(T, C).astype(jnp.bfloat16), Tp, Cp)
    wm = _pad2(mem_w, Mp, Cp).astype(jnp.bfloat16)
    out, att = pl.pallas_call(
        functools.partial(_mem_kernel, m_true=M, shrink_thres=SHRINK_THRES),
        out_shape=(jax.ShapeDtypeStruct((Tp, Cp), jnp.float32),
                   jax.ShapeDtypeStruct((Tp, Mp), jnp.float32)),
        grid=(Tp // tm,),
        in_specs=[pl.BlockSpec((tm, Cp), lambda i: (i, 0)),
                  pl.BlockSpec((Mp, Cp), lambda i: (0, 0))],
        out_specs=(pl.BlockSpec((tm, Cp), lambda i: (i, 0)),
                   pl.BlockSpec((tm, Mp), lambda i: (i, 0))),
        compiler_params=_compiler_params(),
    )(xm, wm)
    return out[:T, :C].reshape(N, H, W, C), att[:T, :M].reshape(N, H, W, M)


# ----------------------------------------------------------------------------
# Parameters (deterministic synthetic init)
# ----------------------------------------------------------------------------
def _conv_prm(key, cout, cin, k, bn=True):
    k1, k2, k3 = jax.random.split(key, 3)
    p = {"w": 0.05 * jax.random.normal(k1, (cout, cin, k, k), jnp.float32)}
    if bn:
        p["gamma"] = 1.0 + 0.1 * jax.random.normal(k2, (cout,), jnp.float32)
        p["beta"] = 0.1 * jax.random.normal(k3, (cout,), jnp.float32)
    return p


def _convT_prm(key, cin, cout, k, bn=True):
    k1, k2, k3 = jax.random.split(key, 3)
    p = {"w": 0.05 * jax.random.normal(k1, (cin, cout, k, k), jnp.float32)}
    if bn:
        p["gamma"] = 1.0 + 0.1 * jax.random.normal(k2, (cout,), jnp.float32)
        p["beta"] = 0.1 * jax.random.normal(k3, (cout,), jnp.float32)
    return p


def init_params(key, nc, bc, mem_dim):
    ks = iter(jax.random.split(key, 20))
    P = {}
    P["initial0"]   = _conv_prm(next(ks), bc, nc, 4)
    P["pyramid0"]   = _conv_prm(next(ks), 2 * bc, bc, 4)
    P["pyramid1"]   = _conv_prm(next(ks), 4 * bc, 2 * bc, 4)
    P["pyramid2"]   = _conv_prm(next(ks), 8 * bc, 4 * bc, 4)
    P["pyramid3"]   = _conv_prm(next(ks), 16 * bc, 8 * bc, 4)
    P["mem3"]       = 0.05 * jax.random.normal(next(ks), (mem_dim, 16 * bc), jnp.float32)
    P["pyramid0_D"] = _convT_prm(next(ks), 16 * bc, 8 * bc, 4)
    P["dc2"] = {"c1": _conv_prm(next(ks), 8 * bc, 16 * bc, 3),
                "c2": _conv_prm(next(ks), 8 * bc, 8 * bc, 3)}
    P["mem2"]       = 0.05 * jax.random.normal(next(ks), (mem_dim, 8 * bc), jnp.float32)
    P["pyramid1_D"] = _convT_prm(next(ks), 8 * bc, 4 * bc, 4)
    P["dc1"] = {"c1": _conv_prm(next(ks), 4 * bc, 8 * bc, 3),
                "c2": _conv_prm(next(ks), 4 * bc, 4 * bc, 3)}
    P["mem1"]       = 0.05 * jax.random.normal(next(ks), (mem_dim, 4 * bc), jnp.float32)
    P["pyramid2_D"] = _convT_prm(next(ks), 4 * bc, 2 * bc, 4)
    P["pyramid3_D"] = _convT_prm(next(ks), 2 * bc, bc, 4)
    P["final0_D"]   = _convT_prm(next(ks), bc, nc, 4, bn=False)
    return P


# ----------------------------------------------------------------------------
# Encoder forward (mirrors Encoder.forward); NCHW at the boundaries only.
# ----------------------------------------------------------------------------
def encoder_forward(x, P):
    x = x.transpose(0, 2, 3, 1)                                       # NCHW -> NHWC
    out = _conv_block(x, P["initial0"], 4, 2, 1, act="relu")          # initial0
    out = _conv_block(out, P["pyramid0"], 4, 2, 1, act="leaky")       # pyramid0
    out_1 = _conv_block(out, P["pyramid1"], 4, 2, 1, act="leaky")     # pyramid1
    out_2 = _conv_block(out_1, P["pyramid2"], 4, 2, 1, act="leaky")   # pyramid2
    out = _conv_block(out_2, P["pyramid3"], 4, 2, 1, act="leaky")     # pyramid3

    f3, att3 = _mem_module(out, P["mem3"])                            # mem_rep3
    out = _convT_block(f3, P["pyramid0_D"], act="relu")               # pyramid0_D
    out = jnp.concatenate([out_2, out], axis=-1)                      # cat (channels)
    out = _double_conv(out, P["dc2"])                                 # DoubleConv2

    f2, att2 = _mem_module(out, P["mem2"])                            # mem_rep2
    out = _convT_block(f2, P["pyramid1_D"], act="relu")               # pyramid1_D
    out = jnp.concatenate([out_1, out], axis=-1)
    out = _double_conv(out, P["dc1"])                                 # DoubleConv1

    f1, att1 = _mem_module(out, P["mem1"])                            # mem_rep1
    out = _convT_block(f1, P["pyramid2_D"], act="relu")               # pyramid2_D
    out = _convT_block(out, P["pyramid3_D"], act="relu")              # pyramid3_D
    out = _convT_block(out, P["final0_D"], act="tanh", use_bn=False)  # final0_D + Tanh

    out = out.transpose(0, 3, 1, 2)                                   # NHWC -> NCHW
    att1 = att1.transpose(0, 3, 1, 2)
    att2 = att2.transpose(0, 3, 1, 2)
    att3 = att3.transpose(0, 3, 1, 2)
    return out, att1, att2, att3


# ----------------------------------------------------------------------------
if __name__ == "__main__":
    key = jax.random.PRNGKey(0)
    N, nc, img = 2, 3, 32          # imageSize must be a multiple of 16
    bc, mem_dim = 16, 64           # scaled-down base_channels / mem_dim for a small run
    kp, kx = jax.random.split(key)
    P = init_params(kp, nc, bc, mem_dim)
    x = jax.random.normal(kx, (N, nc, img, img), jnp.float32)

    fwd = jax.jit(encoder_forward)
    out, att1, att2, att3 = fwd(x, P)
    jax.block_until_ready((out, att1, att2, att3))

    assert out.shape == (N, nc, img, img)
    assert att1.shape == (N, mem_dim, img // 8, img // 8)
    assert att2.shape == (N, mem_dim, img // 16, img // 16)
    assert att3.shape == (N, mem_dim, img // 32, img // 32)
    assert bool(jnp.all(jnp.isfinite(out)))
    print("KERNEL_OK")
</pallas_src>

<mosaic_0001>
module attributes {stable_mosaic.version = 11 : i64} {
  func.func @_scale_shift_act_kernel(%arg0: i32, %arg1: memref<512x128xf32, #tpu.memory_space<vmem>>, %arg2: memref<1x128xf32, #tpu.memory_space<vmem>>, %arg3: memref<1x128xf32, #tpu.memory_space<vmem>>, %arg4: memref<512x128xf32, #tpu.memory_space<vmem>>) attributes {dimension_semantics = [#tpu.dimension_semantics<parallel>], iteration_bounds = array<i64: 1>, scalar_prefetch = 0 : i64, scratch_operands = 0 : i64, tpu.core_type = #tpu.core_type<tc>, window_params = [{transform_indices = @transform_0, window_bounds = array<i64: 512, 128>}, {pipeline_mode = #tpu.pipeline_mode<synchronous>, transform_indices = @transform_1, window_bounds = array<i64: 1, 128>}, {pipeline_mode = #tpu.pipeline_mode<synchronous>, transform_indices = @transform_2, window_bounds = array<i64: 1, 128>}, {transform_indices = @transform_3, window_bounds = array<i64: 512, 128>}]} {
    %c0 = arith.constant 0 : index
    %c0_0 = arith.constant 0 : index
    %0 = vector.load %arg1[%c0, %c0_0] : memref<512x128xf32, #tpu.memory_space<vmem>>, vector<512x128xf32>
    %c0_1 = arith.constant 0 : index
    %c0_2 = arith.constant 0 : index
    %1 = vector.load %arg2[%c0_1, %c0_2] : memref<1x128xf32, #tpu.memory_space<vmem>>, vector<1x128xf32>
    %2 = vector.broadcast %1 : vector<1x128xf32> to vector<512x128xf32>
    %3 = arith.mulf %0, %2 : vector<512x128xf32>
    %c0_3 = arith.constant 0 : index
    %c0_4 = arith.constant 0 : index
    %4 = vector.load %arg3[%c0_3, %c0_4] : memref<1x128xf32, #tpu.memory_space<vmem>>, vector<1x128xf32>
    %5 = vector.broadcast %4 : vector<1x128xf32> to vector<512x128xf32>
    %6 = arith.addf %3, %5 : vector<512x128xf32>
    %cst = arith.constant 0.000000e+00 : f32
    %7 = vector.broadcast %cst : f32 to vector<512x128xf32>
    %8 = arith.maximumf %6, %7 : vector<512x128xf32>
    %c0_5 = arith.constant 0 : index
    %c0_6 = arith.constant 0 : index
    %9 = vector.load %arg4[%c0_5, %c0_6] : memref<512x128xf32, #tpu.memory_space<vmem>>, vector<512x128xf32>
    tpu.vector_store %arg4[%c0_5, %c0_6], %8 {strides = array<i32>} : memref<512x128xf32, #tpu.memory_space<vmem>>, vector<512x128xf32>,
    return
  }
  func.func @transform_0(%arg0: i32) -> (i32, i32) {
    %c0_i32 = arith.constant 0 : i32
    %c0_i32_0 = arith.constant 0 : i32
    return %arg0, %c0_i32 : i32, i32
  }
  func.func @transform_1(%arg0: i32) -> (i32, i32) {
    %c0_i32 = arith.constant 0 : i32
    %c0_i32_0 = arith.constant 0 : i32
    %c0_i32_1 = arith.constant 0 : i32
    return %c0_i32, %c0_i32_0 : i32, i32
  }
  func.func @transform_2(%arg0: i32) -> (i32, i32) {
    %c0_i32 = arith.constant 0 : i32
    %c0_i32_0 = arith.constant 0 : i32
    %c0_i32_1 = arith.constant 0 : i32
    return %c0_i32, %c0_i32_0 : i32, i32
  }
  func.func @transform_3(%arg0: i32) -> (i32, i32) {
    %c0_i32 = arith.constant 0 : i32
    %c0_i32_0 = arith.constant 0 : i32
    return %arg0, %c0_i32 : i32, i32
  }
}

module attributes {stable_mosaic.version = 11 : i64} {
  func.func @_matmul_stats_kernel(%arg0: i32, %arg1: memref<512x128xbf16, #tpu.memory_space<vmem>>, %arg2: memref<128x128xbf16, #tpu.memory_space<vmem>>, %arg3: memref<512x128xf32, #tpu.memory_space<vmem>>, %arg4: memref<1x2x128xf32, #tpu.memory_space<vmem>>) attributes {dimension_semantics = [#tpu.dimension_semantics<parallel>], iteration_bounds = array<i64: 1>, scalar_prefetch = 0 : i64, scratch_operands = 0 : i64, tpu.core_type = #tpu.core_type<tc>, window_params = [{transform_indices = @transform_0, window_bounds = array<i64: 512, 128>}, {pipeline_mode = #tpu.pipeline_mode<synchronous>, transform_indices = @transform_1, window_bounds = array<i64: 128, 128>}, {transform_indices = @transform_2, window_bounds = array<i64: 512, 128>}, {transform_indices = @transform_3, window_bounds = array<i64: 1, 2, 128>}]} {
    %c0 = arith.constant 0 : index
    %c0_0 = arith.constant 0 : index
    %0 = vector.load %arg1[%c0, %c0_0] : memref<512x128xbf16, #tpu.memory_space<vmem>>, vector<512x128xbf16>
    %c0_1 = arith.constant 0 : index
    %c0_2 = arith.constant 0 : index
    %1 = vector.load %arg2[%c0_1, %c0_2] : memref<128x128xbf16, #tpu.memory_space<vmem>>, vector<128x128xbf16>
    %cst = arith.constant dense<0.000000e+00> : vector<512x128xf32>
    %2 = tpu.matmul %0, %1, %cst {dimension_numbers = #tpu.dot_dimension_numbers<[1], [0], [0], [1], [0, 0, 1, 1], [], []>} : vector<512x128xbf16>, vector<128x128xbf16>, vector<512x128xf32> -> vector<512x128xf32>
    %c0_3 = arith.constant 0 : index
    %c0_4 = arith.constant 0 : index
    %3 = vector.load %arg3[%c0_3, %c0_4] : memref<512x128xf32, #tpu.memory_space<vmem>>, vector<512x128xf32>
    tpu.vector_store %arg3[%c0_3, %c0_4], %2 {strides = array<i32>} : memref<512x128xf32, #tpu.memory_space<vmem>>, vector<512x128xf32>,
    %cst_5 = arith.constant dense<0.000000e+00> : vector<128xf32>
    %4 = vector.multi_reduction <add>, %2, %cst_5 [0] : vector<512x128xf32> to vector<128xf32>
    %5 = vector.shape_cast %4 : vector<128xf32> to vector<1x128xf32>
    %6 = arith.mulf %2, %2 : vector<512x128xf32>
    %cst_6 = arith.constant dense<0.000000e+00> : vector<128xf32>
    %7 = vector.multi_reduction <add>, %6, %cst_6 [0] : vector<512x128xf32> to vector<128xf32>
    %8 = vector.shape_cast %7 : vector<128xf32> to vector<1x128xf32>
    %9 = tpu.concatenate %5, %8 in 0 : vector<1x128xf32>, vector<1x128xf32> -> vector<2x128xf32>
    %10 = vector.shape_cast %9 : vector<2x128xf32> to vector<1x2x128xf32>
    %c0_7 = arith.constant 0 : index
    %c0_8 = arith.constant 0 : index
    %c0_9 = arith.constant 0 : index
    %11 = vector.load %arg4[%c0_7, %c0_8, %c0_9] : memref<1x2x128xf32, #tpu.memory_space<vmem>>, vector<1x2x128xf32>
    tpu.vector_store %arg4[%c0_7, %c0_8, %c0_9], %10 {strides = array<i32>} : memref<1x2x128xf32, #tpu.memory_space<vmem>>, vector<1x2x128xf32>,
    return
  }
  func.func @transform_0(%arg0: i32) -> (i32, i32) {
    %c0_i32 = arith.constant 0 : i32
    %c0_i32_0 = arith.constant 0 : i32
    return %arg0, %c0_i32 : i32, i32
  }
  func.func @transform_1(%arg0: i32) -> (i32, i32) {
    %c0_i32 = arith.constant 0 : i32
    %c0_i32_0 = arith.constant 0 : i32
    %c0_i32_1 = arith.constant 0 : i32
    return %c0_i32, %c0_i32_0 : i32, i32
  }
  func.func @transform_2(%arg0: i32) -> (i32, i32) {
    %c0_i32 = arith.constant 0 : i32
    %c0_i32_0 = arith.constant 0 : i32
    return %arg0, %c0_i32 : i32, i32
  }
  func.func @transform_3(%arg0: i32) -> (i32, i32, i32) {
    %c0_i32 = arith.constant 0 : i32
    %c0_i32_0 = arith.constant 0 : i32
    %c0_i32_1 = arith.constant 0 : i32
    return %arg0, %c0_i32, %c0_i32_0 : i32, i32, i32
  }
}

module attributes {stable_mosaic.version = 11 : i64} {
  func.func @_matmul_stats_kernel(%arg0: i32, %arg1: memref<128x256xbf16, #tpu.memory_space<vmem>>, %arg2: memref<256x128xbf16, #tpu.memory_space<vmem>>, %arg3: memref<128x128xf32, #tpu.memory_space<vmem>>, %arg4: memref<1x2x128xf32, #tpu.memory_space<vmem>>) attributes {dimension_semantics = [#tpu.dimension_semantics<parallel>], iteration_bounds = array<i64: 1>, scalar_prefetch = 0 : i64, scratch_operands = 0 : i64, tpu.core_type = #tpu.core_type<tc>, window_params = [{transform_indices = @transform_0, window_bounds = array<i64: 128, 256>}, {pipeline_mode = #tpu.pipeline_mode<synchronous>, transform_indices = @transform_1, window_bounds = array<i64: 256, 128>}, {transform_indices = @transform_2, window_bounds = array<i64: 128, 128>}, {transform_indices = @transform_3, window_bounds = array<i64: 1, 2, 128>}]} {
    %c0 = arith.constant 0 : index
    %c0_0 = arith.constant 0 : index
    %0 = vector.load %arg1[%c0, %c0_0] : memref<128x256xbf16, #tpu.memory_space<vmem>>, vector<128x256xbf16>
    %c0_1 = arith.constant 0 : index
    %c0_2 = arith.constant 0 : index
    %1 = vector.load %arg2[%c0_1, %c0_2] : memref<256x128xbf16, #tpu.memory_space<vmem>>, vector<256x128xbf16>
    %cst = arith.constant dense<0.000000e+00> : vector<128x128xf32>
    %2 = tpu.matmul %0, %1, %cst {dimension_numbers = #tpu.dot_dimension_numbers<[1], [0], [0], [1], [0, 0, 1, 1], [], []>} : vector<128x256xbf16>, vector<256x128xbf16>, vector<128x128xf32> -> vector<128x128xf32>
    %c0_3 = arith.constant 0 : index
    %c0_4 = arith.constant 0 : index
    %3 = vector.load %arg3[%c0_3, %c0_4] : memref<128x128xf32, #tpu.memory_space<vmem>>, vector<128x128xf32>
    tpu.vector_store %arg3[%c0_3, %c0_4], %2 {strides = array<i32>} : memref<128x128xf32, #tpu.memory_space<vmem>>, vector<128x128xf32>,
    %cst_5 = arith.constant dense<0.000000e+00> : vector<128xf32>
    %4 = vector.multi_reduction <add>, %2, %cst_5 [0] : vector<128x128xf32> to vector<128xf32>
    %5 = vector.shape_cast %4 : vector<128xf32> to vector<1x128xf32>
    %6 = arith.mulf %2, %2 : vector<128x128xf32>
    %cst_6 = arith.constant dense<0.000000e+00> : vector<128xf32>
    %7 = vector.multi_reduction <add>, %6, %cst_6 [0] : vector<128x128xf32> to vector<128xf32>
    %8 = vector.shape_cast %7 : vector<128xf32> to vector<1x128xf32>
    %9 = tpu.concatenate %5, %8 in 0 : vector<1x128xf32>, vector<1x128xf32> -> vector<2x128xf32>
    %10 = vector.shape_cast %9 : vector<2x128xf32> to vector<1x2x128xf32>
    %c0_7 = arith.constant 0 : index
    %c0_8 = arith.constant 0 : index
    %c0_9 = arith.constant 0 : index
    %11 = vector.load %arg4[%c0_7, %c0_8, %c0_9] : memref<1x2x128xf32, #tpu.memory_space<vmem>>, vector<1x2x128xf32>
    tpu.vector_store %arg4[%c0_7, %c0_8, %c0_9], %10 {strides = array<i32>} : memref<1x2x128xf32, #tpu.memory_space<vmem>>, vector<1x2x128xf32>,
    return
  }
  func.func @transform_0(%arg0: i32) -> (i32, i32) {
    %c0_i32 = arith.constant 0 : i32
    %c0_i32_0 = arith.constant 0 : i32
    return %arg0, %c0_i32 : i32, i32
  }
  func.func @transform_1(%arg0: i32) -> (i32, i32) {
    %c0_i32 = arith.constant 0 : i32
    %c0_i32_0 = arith.constant 0 : i32
    %c0_i32_1 = arith.constant 0 : i32
    return %c0_i32, %c0_i32_0 : i32, i32
  }
  func.func @transform_2(%arg0: i32) -> (i32, i32) {
    %c0_i32 = arith.constant 0 : i32
    %c0_i32_0 = arith.constant 0 : i32
    return %arg0, %c0_i32 : i32, i32
  }
  func.func @transform_3(%arg0: i32) -> (i32, i32, i32) {
    %c0_i32 = arith.constant 0 : i32
    %c0_i32_0 = arith.constant 0 : i32
    %c0_i32_1 = arith.constant 0 : i32
    return %arg0, %c0_i32, %c0_i32_0 : i32, i32, i32
  }
}

module attributes {stable_mosaic.version = 11 : i64} {
  func.func @_scale_shift_act_kernel(%arg0: i32, %arg1: memref<128x128xf32, #tpu.memory_space<vmem>>, %arg2: memref<1x128xf32, #tpu.memory_space<vmem>>, %arg3: memref<1x128xf32, #tpu.memory_space<vmem>>, %arg4: memref<128x128xf32, #tpu.memory_space<vmem>>) attributes {dimension_semantics = [#tpu.dimension_semantics<parallel>], iteration_bounds = array<i64: 1>, scalar_prefetch = 0 : i64, scratch_operands = 0 : i64, tpu.core_type = #tpu.core_type<tc>, window_params = [{transform_indices = @transform_0, window_bounds = array<i64: 128, 128>}, {pipeline_mode = #tpu.pipeline_mode<synchronous>, transform_indices = @transform_1, window_bounds = array<i64: 1, 128>}, {pipeline_mode = #tpu.pipeline_mode<synchronous>, transform_indices = @transform_2, window_bounds = array<i64: 1, 128>}, {transform_indices = @transform_3, window_bounds = array<i64: 128, 128>}]} {
    %c0 = arith.constant 0 : index
    %c0_0 = arith.constant 0 : index
    %0 = vector.load %arg1[%c0, %c0_0] : memref<128x128xf32, #tpu.memory_space<vmem>>, vector<128x128xf32>
    %c0_1 = arith.constant 0 : index
    %c0_2 = arith.constant 0 : index
    %1 = vector.load %arg2[%c0_1, %c0_2] : memref<1x128xf32, #tpu.memory_space<vmem>>, vector<1x128xf32>
    %2 = vector.broadcast %1 : vector<1x128xf32> to vector<128x128xf32>
    %3 = arith.mulf %0, %2 : vector<128x128xf32>
    %c0_3 = arith.constant 0 : index
    %c0_4 = arith.constant 0 : index
    %4 = vector.load %arg3[%c0_3, %c0_4] : memref<1x128xf32, #tpu.memory_space<vmem>>, vector<1x128xf32>
    %5 = vector.broadcast %4 : vector<1x128xf32> to vector<128x128xf32>
    %6 = arith.addf %3, %5 : vector<128x128xf32>
    %cst = arith.constant 0.000000e+00 : f32
    %7 = vector.broadcast %cst : f32 to vector<128x128xf32>
    %8 = arith.cmpf oge, %6, %7 : vector<128x128xf32>
    %cst_5 = arith.constant 2.000000e-01 : f32
    %9 = vector.broadcast %cst_5 : f32 to vector<128x128xf32>
    %10 = arith.mulf %9, %6 : vector<128x128xf32>
    %11 = arith.select %8, %6, %10 : vector<128x128xi1>, vector<128x128xf32>
    %c0_6 = arith.constant 0 : index
    %c0_7 = arith.constant 0 : index
    %12 = vector.load %arg4[%c0_6, %c0_7] : memref<128x128xf32, #tpu.memory_space<vmem>>, vector<128x128xf32>
    tpu.vector_store %arg4[%c0_6, %c0_7], %11 {strides = array<i32>} : memref<128x128xf32, #tpu.memory_space<vmem>>, vector<128x128xf32>,
    return
  }
  func.func @transform_0(%arg0: i32) -> (i32, i32) {
    %c0_i32 = arith.constant 0 : i32
    %c0_i32_0 = arith.constant 0 : i32
    return %arg0, %c0_i32 : i32, i32
  }
  func.func @transform_1(%arg0: i32) -> (i32, i32) {
    %c0_i32 = arith.constant 0 : i32
    %c0_i32_0 = arith.constant 0 : i32
    %c0_i32_1 = arith.constant 0 : i32
    return %c0_i32, %c0_i32_0 : i32, i32
  }
  func.func @transform_2(%arg0: i32) -> (i32, i32) {
    %c0_i32 = arith.constant 0 : i32
    %c0_i32_0 = arith.constant 0 : i32
    %c0_i32_1 = arith.constant 0 : i32
    return %c0_i32, %c0_i32_0 : i32, i32
  }
  func.func @transform_3(%arg0: i32) -> (i32, i32) {
    %c0_i32 = arith.constant 0 : i32
    %c0_i32_0 = arith.constant 0 : i32
    return %arg0, %c0_i32 : i32, i32
  }
}

module attributes {stable_mosaic.version = 11 : i64} {
  func.func @_matmul_stats_kernel(%arg0: i32, %arg1: memref<32x512xbf16, #tpu.memory_space<vmem>>, %arg2: memref<512x128xbf16, #tpu.memory_space<vmem>>, %arg3: memref<32x128xf32, #tpu.memory_space<vmem>>, %arg4: memref<1x2x128xf32, #tpu.memory_space<vmem>>) attributes {dimension_semantics = [#tpu.dimension_semantics<parallel>], iteration_bounds = array<i64: 1>, scalar_prefetch = 0 : i64, scratch_operands = 0 : i64, tpu.core_type = #tpu.core_type<tc>, window_params = [{transform_indices = @transform_0, window_bounds = array<i64: 32, 512>}, {pipeline_mode = #tpu.pipeline_mode<synchronous>, transform_indices = @transform_1, window_bounds = array<i64: 512, 128>}, {transform_indices = @transform_2, window_bounds = array<i64: 32, 128>}, {transform_indices = @transform_3, window_bounds = array<i64: 1, 2, 128>}]} {
    %c0 = arith.constant 0 : index
    %c0_0 = arith.constant 0 : index
    %0 = vector.load %arg1[%c0, %c0_0] : memref<32x512xbf16, #tpu.memory_space<vmem>>, vector<32x512xbf16>
    %c0_1 = arith.constant 0 : index
    %c0_2 = arith.constant 0 : index
    %1 = vector.load %arg2[%c0_1, %c0_2] : memref<512x128xbf16, #tpu.memory_space<vmem>>, vector<512x128xbf16>
    %cst = arith.constant dense<0.000000e+00> : vector<32x128xf32>
    %2 = tpu.matmul %0, %1, %cst {dimension_numbers = #tpu.dot_dimension_numbers<[1], [0], [0], [1], [0, 0, 1, 1], [], []>} : vector<32x512xbf16>, vector<512x128xbf16>, vector<32x128xf32> -> vector<32x128xf32>
    %c0_3 = arith.constant 0 : index
    %c0_4 = arith.constant 0 : index
    %3 = vector.load %arg3[%c0_3, %c0_4] : memref<32x128xf32, #tpu.memory_space<vmem>>, vector<32x128xf32>
    tpu.vector_store %arg3[%c0_3, %c0_4], %2 {strides = array<i32>} : memref<32x128xf32, #tpu.memory_space<vmem>>, vector<32x128xf32>,
    %cst_5 = arith.constant dense<0.000000e+00> : vector<128xf32>
    %4 = vector.multi_reduction <add>, %2, %cst_5 [0] : vector<32x128xf32> to vector<128xf32>
    %5 = vector.shape_cast %4 : vector<128xf32> to vector<1x128xf32>
    %6 = arith.mulf %2, %2 : vector<32x128xf32>
    %cst_6 = arith.constant dense<0.000000e+00> : vector<128xf32>
    %7 = vector.multi_reduction <add>, %6, %cst_6 [0] : vector<32x128xf32> to vector<128xf32>
    %8 = vector.shape_cast %7 : vector<128xf32> to vector<1x128xf32>
    %9 = tpu.concatenate %5, %8 in 0 : vector<1x128xf32>, vector<1x128xf32> -> vector<2x128xf32>
    %10 = vector.shape_cast %9 : vector<2x128xf32> to vector<1x2x128xf32>
    %c0_7 = arith.constant 0 : index
    %c0_8 = arith.constant 0 : index
    %c0_9 = arith.constant 0 : index
    %11 = vector.load %arg4[%c0_7, %c0_8, %c0_9] : memref<1x2x128xf32, #tpu.memory_space<vmem>>, vector<1x2x128xf32>
    tpu.vector_store %arg4[%c0_7, %c0_8, %c0_9], %10 {strides = array<i32>} : memref<1x2x128xf32, #tpu.memory_space<vmem>>, vector<1x2x128xf32>,
    return
  }
  func.func @transform_0(%arg0: i32) -> (i32, i32) {
    %c0_i32 = arith.constant 0 : i32
    %c0_i32_0 = arith.constant 0 : i32
    return %arg0, %c0_i32 : i32, i32
  }
  func.func @transform_1(%arg0: i32) -> (i32, i32) {
    %c0_i32 = arith.constant 0 : i32
    %c0_i32_0 = arith.constant 0 : i32
    %c0_i32_1 = arith.constant 0 : i32
    return %c0_i32, %c0_i32_0 : i32, i32
  }
  func.func @transform_2(%arg0: i32) -> (i32, i32) {
    %c0_i32 = arith.constant 0 : i32
    %c0_i32_0 = arith.constant 0 : i32
    return %arg0, %c0_i32 : i32, i32
  }
  func.func @transform_3(%arg0: i32) -> (i32, i32, i32) {
    %c0_i32 = arith.constant 0 : i32
    %c0_i32_0 = arith.constant 0 : i32
    %c0_i32_1 = arith.constant 0 : i32
    return %arg0, %c0_i32, %c0_i32_0 : i32, i32, i32
  }
}

module attributes {stable_mosaic.version = 11 : i64} {
  func.func @_scale_shift_act_kernel(%arg0: i32, %arg1: memref<32x128xf32, #tpu.memory_space<vmem>>, %arg2: memref<1x128xf32, #tpu.memory_space<vmem>>, %arg3: memref<1x128xf32, #tpu.memory_space<vmem>>, %arg4: memref<32x128xf32, #tpu.memory_space<vmem>>) attributes {dimension_semantics = [#tpu.dimension_semantics<parallel>], iteration_bounds = array<i64: 1>, scalar_prefetch = 0 : i64, scratch_operands = 0 : i64, tpu.core_type = #tpu.core_type<tc>, window_params = [{transform_indices = @transform_0, window_bounds = array<i64: 32, 128>}, {pipeline_mode = #tpu.pipeline_mode<synchronous>, transform_indices = @transform_1, window_bounds = array<i64: 1, 128>}, {pipeline_mode = #tpu.pipeline_mode<synchronous>, transform_indices = @transform_2, window_bounds = array<i64: 1, 128>}, {transform_indices = @transform_3, window_bounds = array<i64: 32, 128>}]} {
    %c0 = arith.constant 0 : index
    %c0_0 = arith.constant 0 : index
    %0 = vector.load %arg1[%c0, %c0_0] : memref<32x128xf32, #tpu.memory_space<vmem>>, vector<32x128xf32>
    %c0_1 = arith.constant 0 : index
    %c0_2 = arith.constant 0 : index
    %1 = vector.load %arg2[%c0_1, %c0_2] : memref<1x128xf32, #tpu.memory_space<vmem>>, vector<1x128xf32>
    %2 = vector.broadcast %1 : vector<1x128xf32> to vector<32x128xf32>
    %3 = arith.mulf %0, %2 : vector<32x128xf32>
    %c0_3 = arith.constant 0 : index
    %c0_4 = arith.constant 0 : index
    %4 = vector.load %arg3[%c0_3, %c0_4] : memref<1x128xf32, #tpu.memory_space<vmem>>, vector<1x128xf32>
    %5 = vector.broadcast %4 : vector<1x128xf32> to vector<32x128xf32>
    %6 = arith.addf %3, %5 : vector<32x128xf32>
    %cst = arith.constant 0.000000e+00 : f32
    %7 = vector.broadcast %cst : f32 to vector<32x128xf32>
    %8 = arith.cmpf oge, %6, %7 : vector<32x128xf32>
    %cst_5 = arith.constant 2.000000e-01 : f32
    %9 = vector.broadcast %cst_5 : f32 to vector<32x128xf32>
    %10 = arith.mulf %9, %6 : vector<32x128xf32>
    %11 = arith.select %8, %6, %10 : vector<32x128xi1>, vector<32x128xf32>
    %c0_6 = arith.constant 0 : index
    %c0_7 = arith.constant 0 : index
    %12 = vector.load %arg4[%c0_6, %c0_7] : memref<32x128xf32, #tpu.memory_space<vmem>>, vector<32x128xf32>
    tpu.vector_store %arg4[%c0_6, %c0_7], %11 {strides = array<i32>} : memref<32x128xf32, #tpu.memory_space<vmem>>, vector<32x128xf32>,
    return
  }
  func.func @transform_0(%arg0: i32) -> (i32, i32) {
    %c0_i32 = arith.constant 0 : i32
    %c0_i32_0 = arith.constant 0 : i32
    return %arg0, %c0_i32 : i32, i32
  }
  func.func @transform_1(%arg0: i32) -> (i32, i32) {
    %c0_i32 = arith.constant 0 : i32
    %c0_i32_0 = arith.constant 0 : i32
    %c0_i32_1 = arith.constant 0 : i32
    return %c0_i32, %c0_i32_0 : i32, i32
  }
  func.func @transform_2(%arg0: i32) -> (i32, i32) {
    %c0_i32 = arith.constant 0 : i32
    %c0_i32_0 = arith.constant 0 : i32
    %c0_i32_1 = arith.constant 0 : i32
    return %c0_i32, %c0_i32_0 : i32, i32
  }
  func.func @transform_3(%arg0: i32) -> (i32, i32) {
    %c0_i32 = arith.constant 0 : i32
    %c0_i32_0 = arith.constant 0 : i32
    return %arg0, %c0_i32 : i32, i32
  }
}

module attributes {stable_mosaic.version = 11 : i64} {
  func.func @_matmul_stats_kernel(%arg0: i32, %arg1: memref<16x1024xbf16, #tpu.memory_space<vmem>>, %arg2: memref<1024x128xbf16, #tpu.memory_space<vmem>>, %arg3: memref<16x128xf32, #tpu.memory_space<vmem>>, %arg4: memref<1x2x128xf32, #tpu.memory_space<vmem>>) attributes {dimension_semantics = [#tpu.dimension_semantics<parallel>], iteration_bounds = array<i64: 1>, scalar_prefetch = 0 : i64, scratch_operands = 0 : i64, tpu.core_type = #tpu.core_type<tc>, window_params = [{transform_indices = @transform_0, window_bounds = array<i64: 16, 1024>}, {pipeline_mode = #tpu.pipeline_mode<synchronous>, transform_indices = @transform_1, window_bounds = array<i64: 1024, 128>}, {transform_indices = @transform_2, window_bounds = array<i64: 16, 128>}, {transform_indices = @transform_3, window_bounds = array<i64: 1, 2, 128>}]} {
    %c0 = arith.constant 0 : index
    %c0_0 = arith.constant 0 : index
    %0 = vector.load %arg1[%c0, %c0_0] : memref<16x1024xbf16, #tpu.memory_space<vmem>>, vector<16x1024xbf16>
    %c0_1 = arith.constant 0 : index
    %c0_2 = arith.constant 0 : index
    %1 = vector.load %arg2[%c0_1, %c0_2] : memref<1024x128xbf16, #tpu.memory_space<vmem>>, vector<1024x128xbf16>
    %cst = arith.constant dense<0.000000e+00> : vector<16x128xf32>
    %2 = tpu.matmul %0, %1, %cst {dimension_numbers = #tpu.dot_dimension_numbers<[1], [0], [0], [1], [0, 0, 1, 1], [], []>} : vector<16x1024xbf16>, vector<1024x128xbf16>, vector<16x128xf32> -> vector<16x128xf32>
    %c0_3 = arith.constant 0 : index
    %c0_4 = arith.constant 0 : index
    %3 = vector.load %arg3[%c0_3, %c0_4] : memref<16x128xf32, #tpu.memory_space<vmem>>, vector<16x128xf32>
    tpu.vector_store %arg3[%c0_3, %c0_4], %2 {strides = array<i32>} : memref<16x128xf32, #tpu.memory_space<vmem>>, vector<16x128xf32>,
    %cst_5 = arith.constant dense<0.000000e+00> : vector<128xf32>
    %4 = vector.multi_reduction <add>, %2, %cst_5 [0] : vector<16x128xf32> to vector<128xf32>
    %5 = vector.shape_cast %4 : vector<128xf32> to vector<1x128xf32>
    %6 = arith.mulf %2, %2 : vector<16x128xf32>
    %cst_6 = arith.constant dense<0.000000e+00> : vector<128xf32>
    %7 = vector.multi_reduction <add>, %6, %cst_6 [0] : vector<16x128xf32> to vector<128xf32>
    %8 = vector.shape_cast %7 : vector<128xf32> to vector<1x128xf32>
    %9 = tpu.concatenate %5, %8 in 0 : vector<1x128xf32>, vector<1x128xf32> -> vector<2x128xf32>
    %10 = vector.shape_cast %9 : vector<2x128xf32> to vector<1x2x128xf32>
    %c0_7 = arith.constant 0 : index
    %c0_8 = arith.constant 0 : index
    %c0_9 = arith.constant 0 : index
    %11 = vector.load %arg4[%c0_7, %c0_8, %c0_9] : memref<1x2x128xf32, #tpu.memory_space<vmem>>, vector<1x2x128xf32>
    tpu.vector_store %arg4[%c0_7, %c0_8, %c0_9], %10 {strides = array<i32>} : memref<1x2x128xf32, #tpu.memory_space<vmem>>, vector<1x2x128xf32>,
    return
  }
  func.func @transform_0(%arg0: i32) -> (i32, i32) {
    %c0_i32 = arith.constant 0 : i32
    %c0_i32_0 = arith.constant 0 : i32
    return %arg0, %c0_i32 : i32, i32
  }
  func.func @transform_1(%arg0: i32) -> (i32, i32) {
    %c0_i32 = arith.constant 0 : i32
    %c0_i32_0 = arith.constant 0 : i32
    %c0_i32_1 = arith.constant 0 : i32
    return %c0_i32, %c0_i32_0 : i32, i32
  }
  func.func @transform_2(%arg0: i32) -> (i32, i32) {
    %c0_i32 = arith.constant 0 : i32
    %c0_i32_0 = arith.constant 0 : i32
    return %arg0, %c0_i32 : i32, i32
  }
  func.func @transform_3(%arg0: i32) -> (i32, i32, i32) {
    %c0_i32 = arith.constant 0 : i32
    %c0_i32_0 = arith.constant 0 : i32
    %c0_i32_1 = arith.constant 0 : i32
    return %arg0, %c0_i32, %c0_i32_0 : i32, i32, i32
  }
}

module attributes {stable_mosaic.version = 11 : i64} {
  func.func @_scale_shift_act_kernel(%arg0: i32, %arg1: memref<16x128xf32, #tpu.memory_space<vmem>>, %arg2: memref<1x128xf32, #tpu.memory_space<vmem>>, %arg3: memref<1x128xf32, #tpu.memory_space<vmem>>, %arg4: memref<16x128xf32, #tpu.memory_space<vmem>>) attributes {dimension_semantics = [#tpu.dimension_semantics<parallel>], iteration_bounds = array<i64: 1>, scalar_prefetch = 0 : i64, scratch_operands = 0 : i64, tpu.core_type = #tpu.core_type<tc>, window_params = [{transform_indices = @transform_0, window_bounds = array<i64: 16, 128>}, {pipeline_mode = #tpu.pipeline_mode<synchronous>, transform_indices = @transform_1, window_bounds = array<i64: 1, 128>}, {pipeline_mode = #tpu.pipeline_mode<synchronous>, transform_indices = @transform_2, window_bounds = array<i64: 1, 128>}, {transform_indices = @transform_3, window_bounds = array<i64: 16, 128>}]} {
    %c0 = arith.constant 0 : index
    %c0_0 = arith.constant 0 : index
    %0 = vector.load %arg1[%c0, %c0_0] : memref<16x128xf32, #tpu.memory_space<vmem>>, vector<16x128xf32>
    %c0_1 = arith.constant 0 : index
    %c0_2 = arith.constant 0 : index
    %1 = vector.load %arg2[%c0_1, %c0_2] : memref<1x128xf32, #tpu.memory_space<vmem>>, vector<1x128xf32>
    %2 = vector.broadcast %1 : vector<1x128xf32> to vector<16x128xf32>
    %3 = arith.mulf %0, %2 : vector<16x128xf32>
    %c0_3 = arith.constant 0 : index
    %c0_4 = arith.constant 0 : index
    %4 = vector.load %arg3[%c0_3, %c0_4] : memref<1x128xf32, #tpu.memory_space<vmem>>, vector<1x128xf32>
    %5 = vector.broadcast %4 : vector<1x128xf32> to vector<16x128xf32>
    %6 = arith.addf %3, %5 : vector<16x128xf32>
    %cst = arith.constant 0.000000e+00 : f32
    %7 = vector.broadcast %cst : f32 to vector<16x128xf32>
    %8 = arith.cmpf oge, %6, %7 : vector<16x128xf32>
    %cst_5 = arith.constant 2.000000e-01 : f32
    %9 = vector.broadcast %cst_5 : f32 to vector<16x128xf32>
    %10 = arith.mulf %9, %6 : vector<16x128xf32>
    %11 = arith.select %8, %6, %10 : vector<16x128xi1>, vector<16x128xf32>
    %c0_6 = arith.constant 0 : index
    %c0_7 = arith.constant 0 : index
    %12 = vector.load %arg4[%c0_6, %c0_7] : memref<16x128xf32, #tpu.memory_space<vmem>>, vector<16x128xf32>
    tpu.vector_store %arg4[%c0_6, %c0_7], %11 {strides = array<i32>} : memref<16x128xf32, #tpu.memory_space<vmem>>, vector<16x128xf32>,
    return
  }
  func.func @transform_0(%arg0: i32) -> (i32, i32) {
    %c0_i32 = arith.constant 0 : i32
    %c0_i32_0 = arith.constant 0 : i32
    return %arg0, %c0_i32 : i32, i32
  }
  func.func @transform_1(%arg0: i32) -> (i32, i32) {
    %c0_i32 = arith.constant 0 : i32
    %c0_i32_0 = arith.constant 0 : i32
    %c0_i32_1 = arith.constant 0 : i32
    return %c0_i32, %c0_i32_0 : i32, i32
  }
  func.func @transform_2(%arg0: i32) -> (i32, i32) {
    %c0_i32 = arith.constant 0 : i32
    %c0_i32_0 = arith.constant 0 : i32
    %c0_i32_1 = arith.constant 0 : i32
    return %c0_i32, %c0_i32_0 : i32, i32
  }
  func.func @transform_3(%arg0: i32) -> (i32, i32) {
    %c0_i32 = arith.constant 0 : i32
    %c0_i32_0 = arith.constant 0 : i32
    return %arg0, %c0_i32 : i32, i32
  }
}

module attributes {stable_mosaic.version = 11 : i64} {
  func.func @_matmul_stats_kernel(%arg0: i32, %arg1: memref<16x2048xbf16, #tpu.memory_space<vmem>>, %arg2: memref<2048x256xbf16, #tpu.memory_space<vmem>>, %arg3: memref<16x256xf32, #tpu.memory_space<vmem>>, %arg4: memref<1x2x256xf32, #tpu.memory_space<vmem>>) attributes {dimension_semantics = [#tpu.dimension_semantics<parallel>], iteration_bounds = array<i64: 1>, scalar_prefetch = 0 : i64, scratch_operands = 0 : i64, tpu.core_type = #tpu.core_type<tc>, window_params = [{transform_indices = @transform_0, window_bounds = array<i64: 16, 2048>}, {pipeline_mode = #tpu.pipeline_mode<synchronous>, transform_indices = @transform_1, window_bounds = array<i64: 2048, 256>}, {transform_indices = @transform_2, window_bounds = array<i64: 16, 256>}, {transform_indices = @transform_3, window_bounds = array<i64: 1, 2, 256>}]} {
    %c0 = arith.constant 0 : index
    %c0_0 = arith.constant 0 : index
    %0 = vector.load %arg1[%c0, %c0_0] : memref<16x2048xbf16, #tpu.memory_space<vmem>>, vector<16x2048xbf16>
    %c0_1 = arith.constant 0 : index
    %c0_2 = arith.constant 0 : index
    %1 = vector.load %arg2[%c0_1, %c0_2] : memref<2048x256xbf16, #tpu.memory_space<vmem>>, vector<2048x256xbf16>
    %cst = arith.constant dense<0.000000e+00> : vector<16x256xf32>
    %2 = tpu.matmul %0, %1, %cst {dimension_numbers = #tpu.dot_dimension_numbers<[1], [0], [0], [1], [0, 0, 1, 1], [], []>} : vector<16x2048xbf16>, vector<2048x256xbf16>, vector<16x256xf32> -> vector<16x256xf32>
    %c0_3 = arith.constant 0 : index
    %c0_4 = arith.constant 0 : index
    %3 = vector.load %arg3[%c0_3, %c0_4] : memref<16x256xf32, #tpu.memory_space<vmem>>, vector<16x256xf32>
    tpu.vector_store %arg3[%c0_3, %c0_4], %2 {strides = array<i32>} : memref<16x256xf32, #tpu.memory_space<vmem>>, vector<16x256xf32>,
    %cst_5 = arith.constant dense<0.000000e+00> : vector<256xf32>
    %4 = vector.multi_reduction <add>, %2, %cst_5 [0] : vector<16x256xf32> to vector<256xf32>
    %5 = vector.shape_cast %4 : vector<256xf32> to vector<1x256xf32>
    %6 = arith.mulf %2, %2 : vector<16x256xf32>
    %cst_6 = arith.constant dense<0.000000e+00> : vector<256xf32>
    %7 = vector.multi_reduction <add>, %6, %cst_6 [0] : vector<16x256xf32> to vector<256xf32>
    %8 = vector.shape_cast %7 : vector<256xf32> to vector<1x256xf32>
    %9 = tpu.concatenate %5, %8 in 0 : vector<1x256xf32>, vector<1x256xf32> -> vector<2x256xf32>
    %10 = vector.shape_cast %9 : vector<2x256xf32> to vector<1x2x256xf32>
    %c0_7 = arith.constant 0 : index
    %c0_8 = arith.constant 0 : index
    %c0_9 = arith.constant 0 : index
    %11 = vector.load %arg4[%c0_7, %c0_8, %c0_9] : memref<1x2x256xf32, #tpu.memory_space<vmem>>, vector<1x2x256xf32>
    tpu.vector_store %arg4[%c0_7, %c0_8, %c0_9], %10 {strides = array<i32>} : memref<1x2x256xf32, #tpu.memory_space<vmem>>, vector<1x2x256xf32>,
    return
  }
  func.func @transform_0(%arg0: i32) -> (i32, i32) {
    %c0_i32 = arith.constant 0 : i32
    %c0_i32_0 = arith.constant 0 : i32
    return %arg0, %c0_i32 : i32, i32
  }
  func.func @transform_1(%arg0: i32) -> (i32, i32) {
    %c0_i32 = arith.constant 0 : i32
    %c0_i32_0 = arith.constant 0 : i32
    %c0_i32_1 = arith.constant 0 : i32
    return %c0_i32, %c0_i32_0 : i32, i32
  }
  func.func @transform_2(%arg0: i32) -> (i32, i32) {
    %c0_i32 = arith.constant 0 : i32
    %c0_i32_0 = arith.constant 0 : i32
    return %arg0, %c0_i32 : i32, i32
  }
  func.func @transform_3(%arg0: i32) -> (i32, i32, i32) {
    %c0_i32 = arith.constant 0 : i32
    %c0_i32_0 = arith.constant 0 : i32
    %c0_i32_1 = arith.constant 0 : i32
    return %arg0, %c0_i32, %c0_i32_0 : i32, i32, i32
  }
}

module attributes {stable_mosaic.version = 11 : i64} {
  func.func @_scale_shift_act_kernel(%arg0: i32, %arg1: memref<16x256xf32, #tpu.memory_space<vmem>>, %arg2: memref<1x256xf32, #tpu.memory_space<vmem>>, %arg3: memref<1x256xf32, #tpu.memory_space<vmem>>, %arg4: memref<16x256xf32, #tpu.memory_space<vmem>>) attributes {dimension_semantics = [#tpu.dimension_semantics<parallel>], iteration_bounds = array<i64: 1>, scalar_prefetch = 0 : i64, scratch_operands = 0 : i64, tpu.core_type = #tpu.core_type<tc>, window_params = [{transform_indices = @transform_0, window_bounds = array<i64: 16, 256>}, {pipeline_mode = #tpu.pipeline_mode<synchronous>, transform_indices = @transform_1, window_bounds = array<i64: 1, 256>}, {pipeline_mode = #tpu.pipeline_mode<synchronous>, transform_indices = @transform_2, window_bounds = array<i64: 1, 256>}, {transform_indices = @transform_3, window_bounds = array<i64: 16, 256>}]} {
    %c0 = arith.constant 0 : index
    %c0_0 = arith.constant 0 : index
    %0 = vector.load %arg1[%c0, %c0_0] : memref<16x256xf32, #tpu.memory_space<vmem>>, vector<16x256xf32>
    %c0_1 = arith.constant 0 : index
    %c0_2 = arith.constant 0 : index
    %1 = vector.load %arg2[%c0_1, %c0_2] : memref<1x256xf32, #tpu.memory_space<vmem>>, vector<1x256xf32>
    %2 = vector.broadcast %1 : vector<1x256xf32> to vector<16x256xf32>
    %3 = arith.mulf %0, %2 : vector<16x256xf32>
    %c0_3 = arith.constant 0 : index
    %c0_4 = arith.constant 0 : index
    %4 = vector.load %arg3[%c0_3, %c0_4] : memref<1x256xf32, #tpu.memory_space<vmem>>, vector<1x256xf32>
    %5 = vector.broadcast %4 : vector<1x256xf32> to vector<16x256xf32>
    %6 = arith.addf %3, %5 : vector<16x256xf32>
    %cst = arith.constant 0.000000e+00 : f32
    %7 = vector.broadcast %cst : f32 to vector<16x256xf32>
    %8 = arith.cmpf oge, %6, %7 : vector<16x256xf32>
    %cst_5 = arith.constant 2.000000e-01 : f32
    %9 = vector.broadcast %cst_5 : f32 to vector<16x256xf32>
    %10 = arith.mulf %9, %6 : vector<16x256xf32>
    %11 = arith.select %8, %6, %10 : vector<16x256xi1>, vector<16x256xf32>
    %c0_6 = arith.constant 0 : index
    %c0_7 = arith.constant 0 : index
    %12 = vector.load %arg4[%c0_6, %c0_7] : memref<16x256xf32, #tpu.memory_space<vmem>>, vector<16x256xf32>
    tpu.vector_store %arg4[%c0_6, %c0_7], %11 {strides = array<i32>} : memref<16x256xf32, #tpu.memory_space<vmem>>, vector<16x256xf32>,
    return
  }
  func.func @transform_0(%arg0: i32) -> (i32, i32) {
    %c0_i32 = arith.constant 0 : i32
    %c0_i32_0 = arith.constant 0 : i32
    return %arg0, %c0_i32 : i32, i32
  }
  func.func @transform_1(%arg0: i32) -> (i32, i32) {
    %c0_i32 = arith.constant 0 : i32
    %c0_i32_0 = arith.constant 0 : i32
    %c0_i32_1 = arith.constant 0 : i32
    return %c0_i32, %c0_i32_0 : i32, i32
  }
  func.func @transform_2(%arg0: i32) -> (i32, i32) {
    %c0_i32 = arith.constant 0 : i32
    %c0_i32_0 = arith.constant 0 : i32
    %c0_i32_1 = arith.constant 0 : i32
    return %c0_i32, %c0_i32_0 : i32, i32
  }
  func.func @transform_3(%arg0: i32) -> (i32, i32) {
    %c0_i32 = arith.constant 0 : i32
    %c0_i32_0 = arith.constant 0 : i32
    return %arg0, %c0_i32 : i32, i32
  }
}

module attributes {stable_mosaic.version = 11 : i64} {
  func.func @_mem_kernel(%arg0: i32, %arg1: memref<16x256xbf16, #tpu.memory_space<vmem>>, %arg2: memref<128x256xbf16, #tpu.memory_space<vmem>>, %arg3: memref<16x256xf32, #tpu.memory_space<vmem>>, %arg4: memref<16x128xf32, #tpu.memory_space<vmem>>) attributes {dimension_semantics = [#tpu.dimension_semantics<parallel>], iteration_bounds = array<i64: 1>, scalar_prefetch = 0 : i64, scratch_operands = 0 : i64, tpu.core_type = #tpu.core_type<tc>, window_params = [{transform_indices = @transform_0, window_bounds = array<i64: 16, 256>}, {pipeline_mode = #tpu.pipeline_mode<synchronous>, transform_indices = @transform_1, window_bounds = array<i64: 128, 256>}, {transform_indices = @transform_2, window_bounds = array<i64: 16, 256>}, {transform_indices = @transform_3, window_bounds = array<i64: 16, 128>}]} {
    %c0 = arith.constant 0 : index
    %c0_0 = arith.constant 0 : index
    %0 = vector.load %arg1[%c0, %c0_0] : memref<16x256xbf16, #tpu.memory_space<vmem>>, vector<16x256xbf16>
    %c0_1 = arith.constant 0 : index
    %c0_2 = arith.constant 0 : index
    %1 = vector.load %arg2[%c0_1, %c0_2] : memref<128x256xbf16, #tpu.memory_space<vmem>>, vector<128x256xbf16>
    %cst = arith.constant dense<0.000000e+00> : vector<16x128xf32>
    %2 = tpu.matmul %0, %1, %cst {dimension_numbers = #tpu.dot_dimension_numbers<[1], [1], [0], [0], [0, 0, 1, 0], [], []>} : vector<16x256xbf16>, vector<128x256xbf16>, vector<16x128xf32> -> vector<16x128xf32>
    %3 = tpu.iota {dimensions = array<i32: 1>} : vector<16x128xi32>
    %c64_i32 = arith.constant 64 : i32
    %4 = vector.broadcast %c64_i32 : i32 to vector<16x128xi32>
    %5 = arith.cmpi slt, %3, %4 : vector<16x128xi32>
    %cst_3 = arith.constant -1.000000e+30 : f32
    %6 = vector.broadcast %cst_3 : f32 to vector<16x128xf32>
    %7 = arith.select %5, %2, %6 : vector<16x128xi1>, vector<16x128xf32>
    %cst_4 = arith.constant dense<0xFF800000> : vector<16xf32>
    %8 = vector.multi_reduction <maximumf>, %7, %cst_4 [1] : vector<16x128xf32> to vector<16xf32>
    %9 = vector.shape_cast %8 : vector<16xf32> to vector<16x1xf32>
    %10 = vector.broadcast %9 : vector<16x1xf32> to vector<16x128xf32>
    %11 = arith.subf %7, %10 : vector<16x128xf32>
    %12 = math.exp %11 : vector<16x128xf32>
    %cst_5 = arith.constant dense<0.000000e+00> : vector<16xf32>
    %13 = vector.multi_reduction <add>, %12, %cst_5 [1] : vector<16x128xf32> to vector<16xf32>
    %14 = vector.shape_cast %13 : vector<16xf32> to vector<16x1xf32>
    %15 = tpu.reciprocal %14 {approx = true} : vector<16x1xf32> -> vector<16x1xf32>
    %16 = vector.broadcast %15 : vector<16x1xf32> to vector<16x128xf32>
    %17 = arith.mulf %12, %16 : vector<16x128xf32>
    %cst_6 = arith.constant 2.500000e-03 : f32
    %18 = vector.broadcast %cst_6 : f32 to vector<16x128xf32>
    %19 = arith.subf %17, %18 : vector<16x128xf32>
    %cst_7 = arith.constant 0.000000e+00 : f32
    %20 = vector.broadcast %cst_7 : f32 to vector<16x128xf32>
    %21 = arith.maximumf %19, %20 : vector<16x128xf32>
    %22 = arith.mulf %21, %17 : vector<16x128xf32>
    %cst_8 = arith.constant 2.500000e-03 : f32
    %23 = vector.broadcast %cst_8 : f32 to vector<16x128xf32>
    %24 = arith.subf %17, %23 : vector<16x128xf32>
    %25 = math.absf %24 : vector<16x128xf32>
    %cst_9 = arith.constant 9.99999996E-13 : f32
    %26 = vector.broadcast %cst_9 : f32 to vector<16x128xf32>
    %27 = arith.addf %25, %26 : vector<16x128xf32>
    %28 = arith.divf %22, %27 : vector<16x128xf32>
    %29 = math.absf %28 : vector<16x128xf32>
    %cst_10 = arith.constant dense<0.000000e+00> : vector<16xf32>
    %30 = vector.multi_reduction <add>, %29, %cst_10 [1] : vector<16x128xf32> to vector<16xf32>
    %31 = vector.shape_cast %30 : vector<16xf32> to vector<16x1xf32>
    %cst_11 = arith.constant 9.99999996E-13 : f32
    %32 = vector.broadcast %cst_11 : f32 to vector<16x1xf32>
    %33 = arith.maximumf %31, %32 : vector<16x1xf32>
    %34 = tpu.reciprocal %33 {approx = true} : vector<16x1xf32> -> vector<16x1xf32>
    %35 = vector.broadcast %34 : vector<16x1xf32> to vector<16x128xf32>
    %36 = arith.mulf %28, %35 : vector<16x128xf32>
    %37 = arith.truncf %36 : vector<16x128xf32> to vector<16x128xbf16>
    %cst_12 = arith.constant dense<0.000000e+00> : vector<16x256xf32>
    %38 = tpu.matmul %37, %1, %cst_12 {dimension_numbers = #tpu.dot_dimension_numbers<[1], [0], [0], [1], [0, 0, 1, 1], [], []>} : vector<16x128xbf16>, vector<128x256xbf16>, vector<16x256xf32> -> vector<16x256xf32>
    %c0_13 = arith.constant 0 : index
    %c0_14 = arith.constant 0 : index
    %39 = vector.load %arg3[%c0_13, %c0_14] : memref<16x256xf32, #tpu.memory_space<vmem>>, vector<16x256xf32>
    tpu.vector_store %arg3[%c0_13, %c0_14], %38 {strides = array<i32>} : memref<16x256xf32, #tpu.memory_space<vmem>>, vector<16x256xf32>,
    %c0_15 = arith.constant 0 : index
    %c0_16 = arith.constant 0 : index
    %40 = vector.load %arg4[%c0_15, %c0_16] : memref<16x128xf32, #tpu.memory_space<vmem>>, vector<16x128xf32>
    tpu.vector_store %arg4[%c0_15, %c0_16], %36 {strides = array<i32>} : memref<16x128xf32, #tpu.memory_space<vmem>>, vector<16x128xf32>,
    return
  }
  func.func @transform_0(%arg0: i32) -> (i32, i32) {
    %c0_i32 = arith.constant 0 : i32
    %c0_i32_0 = arith.constant 0 : i32
    return %arg0, %c0_i32 : i32, i32
  }
  func.func @transform_1(%arg0: i32) -> (i32, i32) {
    %c0_i32 = arith.constant 0 : i32
    %c0_i32_0 = arith.constant 0 : i32
    %c0_i32_1 = arith.constant 0 : i32
    return %c0_i32, %c0_i32_0 : i32, i32
  }
  func.func @transform_2(%arg0: i32) -> (i32, i32) {
    %c0_i32 = arith.constant 0 : i32
    %c0_i32_0 = arith.constant 0 : i32
    return %arg0, %c0_i32 : i32, i32
  }
  func.func @transform_3(%arg0: i32) -> (i32, i32) {
    %c0_i32 = arith.constant 0 : i32
    %c0_i32_0 = arith.constant 0 : i32
    return %arg0, %c0_i32 : i32, i32
  }
}

module attributes {stable_mosaic.version = 11 : i64} {
  func.func @_scale_shift_act_kernel(%arg0: i32, %arg1: memref<16x128xf32, #tpu.memory_space<vmem>>, %arg2: memref<1x128xf32, #tpu.memory_space<vmem>>, %arg3: memref<1x128xf32, #tpu.memory_space<vmem>>, %arg4: memref<16x128xf32, #tpu.memory_space<vmem>>) attributes {dimension_semantics = [#tpu.dimension_semantics<parallel>], iteration_bounds = array<i64: 1>, scalar_prefetch = 0 : i64, scratch_operands = 0 : i64, tpu.core_type = #tpu.core_type<tc>, window_params = [{transform_indices = @transform_0, window_bounds = array<i64: 16, 128>}, {pipeline_mode = #tpu.pipeline_mode<synchronous>, transform_indices = @transform_1, window_bounds = array<i64: 1, 128>}, {pipeline_mode = #tpu.pipeline_mode<synchronous>, transform_indices = @transform_2, window_bounds = array<i64: 1, 128>}, {transform_indices = @transform_3, window_bounds = array<i64: 16, 128>}]} {
    %c0 = arith.constant 0 : index
    %c0_0 = arith.constant 0 : index
    %0 = vector.load %arg1[%c0, %c0_0] : memref<16x128xf32, #tpu.memory_space<vmem>>, vector<16x128xf32>
    %c0_1 = arith.constant 0 : index
    %c0_2 = arith.constant 0 : index
    %1 = vector.load %arg2[%c0_1, %c0_2] : memref<1x128xf32, #tpu.memory_space<vmem>>, vector<1x128xf32>
    %2 = vector.broadcast %1 : vector<1x128xf32> to vector<16x128xf32>
    %3 = arith.mulf %0, %2 : vector<16x128xf32>
    %c0_3 = arith.constant 0 : index
    %c0_4 = arith.constant 0 : index
    %4 = vector.load %arg3[%c0_3, %c0_4] : memref<1x128xf32, #tpu.memory_space<vmem>>, vector<1x128xf32>
    %5 = vector.broadcast %4 : vector<1x128xf32> to vector<16x128xf32>
    %6 = arith.addf %3, %5 : vector<16x128xf32>
    %cst = arith.constant 0.000000e+00 : f32
    %7 = vector.broadcast %cst : f32 to vector<16x128xf32>
    %8 = arith.maximumf %6, %7 : vector<16x128xf32>
    %c0_5 = arith.constant 0 : index
    %c0_6 = arith.constant 0 : index
    %9 = vector.load %arg4[%c0_5, %c0_6] : memref<16x128xf32, #tpu.memory_space<vmem>>, vector<16x128xf32>
    tpu.vector_store %arg4[%c0_5, %c0_6], %8 {strides = array<i32>} : memref<16x128xf32, #tpu.memory_space<vmem>>, vector<16x128xf32>,
    return
  }
  func.func @transform_0(%arg0: i32) -> (i32, i32) {
    %c0_i32 = arith.constant 0 : i32
    %c0_i32_0 = arith.constant 0 : i32
    return %arg0, %c0_i32 : i32, i32
  }
  func.func @transform_1(%arg0: i32) -> (i32, i32) {
    %c0_i32 = arith.constant 0 : i32
    %c0_i32_0 = arith.constant 0 : i32
    %c0_i32_1 = arith.constant 0 : i32
    return %c0_i32, %c0_i32_0 : i32, i32
  }
  func.func @transform_2(%arg0: i32) -> (i32, i32) {
    %c0_i32 = arith.constant 0 : i32
    %c0_i32_0 = arith.constant 0 : i32
    %c0_i32_1 = arith.constant 0 : i32
    return %c0_i32, %c0_i32_0 : i32, i32
  }
  func.func @transform_3(%arg0: i32) -> (i32, i32) {
    %c0_i32 = arith.constant 0 : i32
    %c0_i32_0 = arith.constant 0 : i32
    return %arg0, %c0_i32 : i32, i32
  }
}

module attributes {stable_mosaic.version = 11 : i64} {
  func.func @_matmul_stats_kernel(%arg0: i32, %arg1: memref<16x2304xbf16, #tpu.memory_space<vmem>>, %arg2: memref<2304x128xbf16, #tpu.memory_space<vmem>>, %arg3: memref<16x128xf32, #tpu.memory_space<vmem>>, %arg4: memref<1x2x128xf32, #tpu.memory_space<vmem>>) attributes {dimension_semantics = [#tpu.dimension_semantics<parallel>], iteration_bounds = array<i64: 1>, scalar_prefetch = 0 : i64, scratch_operands = 0 : i64, tpu.core_type = #tpu.core_type<tc>, window_params = [{transform_indices = @transform_0, window_bounds = array<i64: 16, 2304>}, {pipeline_mode = #tpu.pipeline_mode<synchronous>, transform_indices = @transform_1, window_bounds = array<i64: 2304, 128>}, {transform_indices = @transform_2, window_bounds = array<i64: 16, 128>}, {transform_indices = @transform_3, window_bounds = array<i64: 1, 2, 128>}]} {
    %c0 = arith.constant 0 : index
    %c0_0 = arith.constant 0 : index
    %0 = vector.load %arg1[%c0, %c0_0] : memref<16x2304xbf16, #tpu.memory_space<vmem>>, vector<16x2304xbf16>
    %c0_1 = arith.constant 0 : index
    %c0_2 = arith.constant 0 : index
    %1 = vector.load %arg2[%c0_1, %c0_2] : memref<2304x128xbf16, #tpu.memory_space<vmem>>, vector<2304x128xbf16>
    %cst = arith.constant dense<0.000000e+00> : vector<16x128xf32>
    %2 = tpu.matmul %0, %1, %cst {dimension_numbers = #tpu.dot_dimension_numbers<[1], [0], [0], [1], [0, 0, 1, 1], [], []>} : vector<16x2304xbf16>, vector<2304x128xbf16>, vector<16x128xf32> -> vector<16x128xf32>
    %c0_3 = arith.constant 0 : index
    %c0_4 = arith.constant 0 : index
    %3 = vector.load %arg3[%c0_3, %c0_4] : memref<16x128xf32, #tpu.memory_space<vmem>>, vector<16x128xf32>
    tpu.vector_store %arg3[%c0_3, %c0_4], %2 {strides = array<i32>} : memref<16x128xf32, #tpu.memory_space<vmem>>, vector<16x128xf32>,
    %cst_5 = arith.constant dense<0.000000e+00> : vector<128xf32>
    %4 = vector.multi_reduction <add>, %2, %cst_5 [0] : vector<16x128xf32> to vector<128xf32>
    %5 = vector.shape_cast %4 : vector<128xf32> to vector<1x128xf32>
    %6 = arith.mulf %2, %2 : vector<16x128xf32>
    %cst_6 = arith.constant dense<0.000000e+00> : vector<128xf32>
    %7 = vector.multi_reduction <add>, %6, %cst_6 [0] : vector<16x128xf32> to vector<128xf32>
    %8 = vector.shape_cast %7 : vector<128xf32> to vector<1x128xf32>
    %9 = tpu.concatenate %5, %8 in 0 : vector<1x128xf32>, vector<1x128xf32> -> vector<2x128xf32>
    %10 = vector.shape_cast %9 : vector<2x128xf32> to vector<1x2x128xf32>
    %c0_7 = arith.constant 0 : index
    %c0_8 = arith.constant 0 : index
    %c0_9 = arith.constant 0 : index
    %11 = vector.load %arg4[%c0_7, %c0_8, %c0_9] : memref<1x2x128xf32, #tpu.memory_space<vmem>>, vector<1x2x128xf32>
    tpu.vector_store %arg4[%c0_7, %c0_8, %c0_9], %10 {strides = array<i32>} : memref<1x2x128xf32, #tpu.memory_space<vmem>>, vector<1x2x128xf32>,
    return
  }
  func.func @transform_0(%arg0: i32) -> (i32, i32) {
    %c0_i32 = arith.constant 0 : i32
    %c0_i32_0 = arith.constant 0 : i32
    return %arg0, %c0_i32 : i32, i32
  }
  func.func @transform_1(%arg0: i32) -> (i32, i32) {
    %c0_i32 = arith.constant 0 : i32
    %c0_i32_0 = arith.constant 0 : i32
    %c0_i32_1 = arith.constant 0 : i32
    return %c0_i32, %c0_i32_0 : i32, i32
  }
  func.func @transform_2(%arg0: i32) -> (i32, i32) {
    %c0_i32 = arith.constant 0 : i32
    %c0_i32_0 = arith.constant 0 : i32
    return %arg0, %c0_i32 : i32, i32
  }
  func.func @transform_3(%arg0: i32) -> (i32, i32, i32) {
    %c0_i32 = arith.constant 0 : i32
    %c0_i32_0 = arith.constant 0 : i32
    %c0_i32_1 = arith.constant 0 : i32
    return %arg0, %c0_i32, %c0_i32_0 : i32, i32, i32
  }
}

module attributes {stable_mosaic.version = 11 : i64} {
  func.func @_matmul_stats_kernel(%arg0: i32, %arg1: memref<16x1152xbf16, #tpu.memory_space<vmem>>, %arg2: memref<1152x128xbf16, #tpu.memory_space<vmem>>, %arg3: memref<16x128xf32, #tpu.memory_space<vmem>>, %arg4: memref<1x2x128xf32, #tpu.memory_space<vmem>>) attributes {dimension_semantics = [#tpu.dimension_semantics<parallel>], iteration_bounds = array<i64: 1>, scalar_prefetch = 0 : i64, scratch_operands = 0 : i64, tpu.core_type = #tpu.core_type<tc>, window_params = [{transform_indices = @transform_0, window_bounds = array<i64: 16, 1152>}, {pipeline_mode = #tpu.pipeline_mode<synchronous>, transform_indices = @transform_1, window_bounds = array<i64: 1152, 128>}, {transform_indices = @transform_2, window_bounds = array<i64: 16, 128>}, {transform_indices = @transform_3, window_bounds = array<i64: 1, 2, 128>}]} {
    %c0 = arith.constant 0 : index
    %c0_0 = arith.constant 0 : index
    %0 = vector.load %arg1[%c0, %c0_0] : memref<16x1152xbf16, #tpu.memory_space<vmem>>, vector<16x1152xbf16>
    %c0_1 = arith.constant 0 : index
    %c0_2 = arith.constant 0 : index
    %1 = vector.load %arg2[%c0_1, %c0_2] : memref<1152x128xbf16, #tpu.memory_space<vmem>>, vector<1152x128xbf16>
    %cst = arith.constant dense<0.000000e+00> : vector<16x128xf32>
    %2 = tpu.matmul %0, %1, %cst {dimension_numbers = #tpu.dot_dimension_numbers<[1], [0], [0], [1], [0, 0, 1, 1], [], []>} : vector<16x1152xbf16>, vector<1152x128xbf16>, vector<16x128xf32> -> vector<16x128xf32>
    %c0_3 = arith.constant 0 : index
    %c0_4 = arith.constant 0 : index
    %3 = vector.load %arg3[%c0_3, %c0_4] : memref<16x128xf32, #tpu.memory_space<vmem>>, vector<16x128xf32>
    tpu.vector_store %arg3[%c0_3, %c0_4], %2 {strides = array<i32>} : memref<16x128xf32, #tpu.memory_space<vmem>>, vector<16x128xf32>,
    %cst_5 = arith.constant dense<0.000000e+00> : vector<128xf32>
    %4 = vector.multi_reduction <add>, %2, %cst_5 [0] : vector<16x128xf32> to vector<128xf32>
    %5 = vector.shape_cast %4 : vector<128xf32> to vector<1x128xf32>
    %6 = arith.mulf %2, %2 : vector<16x128xf32>
    %cst_6 = arith.constant dense<0.000000e+00> : vector<128xf32>
    %7 = vector.multi_reduction <add>, %6, %cst_6 [0] : vector<16x128xf32> to vector<128xf32>
    %8 = vector.shape_cast %7 : vector<128xf32> to vector<1x128xf32>
    %9 = tpu.concatenate %5, %8 in 0 : vector<1x128xf32>, vector<1x128xf32> -> vector<2x128xf32>
    %10 = vector.shape_cast %9 : vector<2x128xf32> to vector<1x2x128xf32>
    %c0_7 = arith.constant 0 : index
    %c0_8 = arith.constant 0 : index
    %c0_9 = arith.constant 0 : index
    %11 = vector.load %arg4[%c0_7, %c0_8, %c0_9] : memref<1x2x128xf32, #tpu.memory_space<vmem>>, vector<1x2x128xf32>
    tpu.vector_store %arg4[%c0_7, %c0_8, %c0_9], %10 {strides = array<i32>} : memref<1x2x128xf32, #tpu.memory_space<vmem>>, vector<1x2x128xf32>,
    return
  }
  func.func @transform_0(%arg0: i32) -> (i32, i32) {
    %c0_i32 = arith.constant 0 : i32
    %c0_i32_0 = arith.constant 0 : i32
    return %arg0, %c0_i32 : i32, i32
  }
  func.func @transform_1(%arg0: i32) -> (i32, i32) {
    %c0_i32 = arith.constant 0 : i32
    %c0_i32_0 = arith.constant 0 : i32
    %c0_i32_1 = arith.constant 0 : i32
    return %c0_i32, %c0_i32_0 : i32, i32
  }
  func.func @transform_2(%arg0: i32) -> (i32, i32) {
    %c0_i32 = arith.constant 0 : i32
    %c0_i32_0 = arith.constant 0 : i32
    return %arg0, %c0_i32 : i32, i32
  }
  func.func @transform_3(%arg0: i32) -> (i32, i32, i32) {
    %c0_i32 = arith.constant 0 : i32
    %c0_i32_0 = arith.constant 0 : i32
    %c0_i32_1 = arith.constant 0 : i32
    return %arg0, %c0_i32, %c0_i32_0 : i32, i32, i32
  }
}

module attributes {stable_mosaic.version = 11 : i64} {
  func.func @_mem_kernel(%arg0: i32, %arg1: memref<16x128xbf16, #tpu.memory_space<vmem>>, %arg2: memref<128x128xbf16, #tpu.memory_space<vmem>>, %arg3: memref<16x128xf32, #tpu.memory_space<vmem>>, %arg4: memref<16x128xf32, #tpu.memory_space<vmem>>) attributes {dimension_semantics = [#tpu.dimension_semantics<parallel>], iteration_bounds = array<i64: 1>, scalar_prefetch = 0 : i64, scratch_operands = 0 : i64, tpu.core_type = #tpu.core_type<tc>, window_params = [{transform_indices = @transform_0, window_bounds = array<i64: 16, 128>}, {pipeline_mode = #tpu.pipeline_mode<synchronous>, transform_indices = @transform_1, window_bounds = array<i64: 128, 128>}, {transform_indices = @transform_2, window_bounds = array<i64: 16, 128>}, {transform_indices = @transform_3, window_bounds = array<i64: 16, 128>}]} {
    %c0 = arith.constant 0 : index
    %c0_0 = arith.constant 0 : index
    %0 = vector.load %arg1[%c0, %c0_0] : memref<16x128xbf16, #tpu.memory_space<vmem>>, vector<16x128xbf16>
    %c0_1 = arith.constant 0 : index
    %c0_2 = arith.constant 0 : index
    %1 = vector.load %arg2[%c0_1, %c0_2] : memref<128x128xbf16, #tpu.memory_space<vmem>>, vector<128x128xbf16>
    %cst = arith.constant dense<0.000000e+00> : vector<16x128xf32>
    %2 = tpu.matmul %0, %1, %cst {dimension_numbers = #tpu.dot_dimension_numbers<[1], [1], [0], [0], [0, 0, 1, 0], [], []>} : vector<16x128xbf16>, vector<128x128xbf16>, vector<16x128xf32> -> vector<16x128xf32>
    %3 = tpu.iota {dimensions = array<i32: 1>} : vector<16x128xi32>
    %c64_i32 = arith.constant 64 : i32
    %4 = vector.broadcast %c64_i32 : i32 to vector<16x128xi32>
    %5 = arith.cmpi slt, %3, %4 : vector<16x128xi32>
    %cst_3 = arith.constant -1.000000e+30 : f32
    %6 = vector.broadcast %cst_3 : f32 to vector<16x128xf32>
    %7 = arith.select %5, %2, %6 : vector<16x128xi1>, vector<16x128xf32>
    %cst_4 = arith.constant dense<0xFF800000> : vector<16xf32>
    %8 = vector.multi_reduction <maximumf>, %7, %cst_4 [1] : vector<16x128xf32> to vector<16xf32>
    %9 = vector.shape_cast %8 : vector<16xf32> to vector<16x1xf32>
    %10 = vector.broadcast %9 : vector<16x1xf32> to vector<16x128xf32>
    %11 = arith.subf %7, %10 : vector<16x128xf32>
    %12 = math.exp %11 : vector<16x128xf32>
    %cst_5 = arith.constant dense<0.000000e+00> : vector<16xf32>
    %13 = vector.multi_reduction <add>, %12, %cst_5 [1] : vector<16x128xf32> to vector<16xf32>
    %14 = vector.shape_cast %13 : vector<16xf32> to vector<16x1xf32>
    %15 = tpu.reciprocal %14 {approx = true} : vector<16x1xf32> -> vector<16x1xf32>
    %16 = vector.broadcast %15 : vector<16x1xf32> to vector<16x128xf32>
    %17 = arith.mulf %12, %16 : vector<16x128xf32>
    %cst_6 = arith.constant 2.500000e-03 : f32
    %18 = vector.broadcast %cst_6 : f32 to vector<16x128xf32>
    %19 = arith.subf %17, %18 : vector<16x128xf32>
    %cst_7 = arith.constant 0.000000e+00 : f32
    %20 = vector.broadcast %cst_7 : f32 to vector<16x128xf32>
    %21 = arith.maximumf %19, %20 : vector<16x128xf32>
    %22 = arith.mulf %21, %17 : vector<16x128xf32>
    %cst_8 = arith.constant 2.500000e-03 : f32
    %23 = vector.broadcast %cst_8 : f32 to vector<16x128xf32>
    %24 = arith.subf %17, %23 : vector<16x128xf32>
    %25 = math.absf %24 : vector<16x128xf32>
    %cst_9 = arith.constant 9.99999996E-13 : f32
    %26 = vector.broadcast %cst_9 : f32 to vector<16x128xf32>
    %27 = arith.addf %25, %26 : vector<16x128xf32>
    %28 = arith.divf %22, %27 : vector<16x128xf32>
    %29 = math.absf %28 : vector<16x128xf32>
    %cst_10 = arith.constant dense<0.000000e+00> : vector<16xf32>
    %30 = vector.multi_reduction <add>, %29, %cst_10 [1] : vector<16x128xf32> to vector<16xf32>
    %31 = vector.shape_cast %30 : vector<16xf32> to vector<16x1xf32>
    %cst_11 = arith.constant 9.99999996E-13 : f32
    %32 = vector.broadcast %cst_11 : f32 to vector<16x1xf32>
    %33 = arith.maximumf %31, %32 : vector<16x1xf32>
    %34 = tpu.reciprocal %33 {approx = true} : vector<16x1xf32> -> vector<16x1xf32>
    %35 = vector.broadcast %34 : vector<16x1xf32> to vector<16x128xf32>
    %36 = arith.mulf %28, %35 : vector<16x128xf32>
    %37 = arith.truncf %36 : vector<16x128xf32> to vector<16x128xbf16>
    %cst_12 = arith.constant dense<0.000000e+00> : vector<16x128xf32>
    %38 = tpu.matmul %37, %1, %cst_12 {dimension_numbers = #tpu.dot_dimension_numbers<[1], [0], [0], [1], [0, 0, 1, 1], [], []>} : vector<16x128xbf16>, vector<128x128xbf16>, vector<16x128xf32> -> vector<16x128xf32>
    %c0_13 = arith.constant 0 : index
    %c0_14 = arith.constant 0 : index
    %39 = vector.load %arg3[%c0_13, %c0_14] : memref<16x128xf32, #tpu.memory_space<vmem>>, vector<16x128xf32>
    tpu.vector_store %arg3[%c0_13, %c0_14], %38 {strides = array<i32>} : memref<16x128xf32, #tpu.memory_space<vmem>>, vector<16x128xf32>,
    %c0_15 = arith.constant 0 : index
    %c0_16 = arith.constant 0 : index
    %40 = vector.load %arg4[%c0_15, %c0_16] : memref<16x128xf32, #tpu.memory_space<vmem>>, vector<16x128xf32>
    tpu.vector_store %arg4[%c0_15, %c0_16], %36 {strides = array<i32>} : memref<16x128xf32, #tpu.memory_space<vmem>>, vector<16x128xf32>,
    return
  }
  func.func @transform_0(%arg0: i32) -> (i32, i32) {
    %c0_i32 = arith.constant 0 : i32
    %c0_i32_0 = arith.constant 0 : i32
    return %arg0, %c0_i32 : i32, i32
  }
  func.func @transform_1(%arg0: i32) -> (i32, i32) {
    %c0_i32 = arith.constant 0 : i32
    %c0_i32_0 = arith.constant 0 : i32
    %c0_i32_1 = arith.constant 0 : i32
    return %c0_i32, %c0_i32_0 : i32, i32
  }
  func.func @transform_2(%arg0: i32) -> (i32, i32) {
    %c0_i32 = arith.constant 0 : i32
    %c0_i32_0 = arith.constant 0 : i32
    return %arg0, %c0_i32 : i32, i32
  }
  func.func @transform_3(%arg0: i32) -> (i32, i32) {
    %c0_i32 = arith.constant 0 : i32
    %c0_i32_0 = arith.constant 0 : i32
    return %arg0, %c0_i32 : i32, i32
  }
}

module attributes {stable_mosaic.version = 11 : i64} {
  func.func @_matmul_stats_kernel(%arg0: i32, %arg1: memref<16x512xbf16, #tpu.memory_space<vmem>>, %arg2: memref<512x128xbf16, #tpu.memory_space<vmem>>, %arg3: memref<16x128xf32, #tpu.memory_space<vmem>>, %arg4: memref<1x2x128xf32, #tpu.memory_space<vmem>>) attributes {dimension_semantics = [#tpu.dimension_semantics<parallel>], iteration_bounds = array<i64: 1>, scalar_prefetch = 0 : i64, scratch_operands = 0 : i64, tpu.core_type = #tpu.core_type<tc>, window_params = [{transform_indices = @transform_0, window_bounds = array<i64: 16, 512>}, {pipeline_mode = #tpu.pipeline_mode<synchronous>, transform_indices = @transform_1, window_bounds = array<i64: 512, 128>}, {transform_indices = @transform_2, window_bounds = array<i64: 16, 128>}, {transform_indices = @transform_3, window_bounds = array<i64: 1, 2, 128>}]} {
    %c0 = arith.constant 0 : index
    %c0_0 = arith.constant 0 : index
    %0 = vector.load %arg1[%c0, %c0_0] : memref<16x512xbf16, #tpu.memory_space<vmem>>, vector<16x512xbf16>
    %c0_1 = arith.constant 0 : index
    %c0_2 = arith.constant 0 : index
    %1 = vector.load %arg2[%c0_1, %c0_2] : memref<512x128xbf16, #tpu.memory_space<vmem>>, vector<512x128xbf16>
    %cst = arith.constant dense<0.000000e+00> : vector<16x128xf32>
    %2 = tpu.matmul %0, %1, %cst {dimension_numbers = #tpu.dot_dimension_numbers<[1], [0], [0], [1], [0, 0, 1, 1], [], []>} : vector<16x512xbf16>, vector<512x128xbf16>, vector<16x128xf32> -> vector<16x128xf32>
    %c0_3 = arith.constant 0 : index
    %c0_4 = arith.constant 0 : index
    %3 = vector.load %arg3[%c0_3, %c0_4] : memref<16x128xf32, #tpu.memory_space<vmem>>, vector<16x128xf32>
    tpu.vector_store %arg3[%c0_3, %c0_4], %2 {strides = array<i32>} : memref<16x128xf32, #tpu.memory_space<vmem>>, vector<16x128xf32>,
    %cst_5 = arith.constant dense<0.000000e+00> : vector<128xf32>
    %4 = vector.multi_reduction <add>, %2, %cst_5 [0] : vector<16x128xf32> to vector<128xf32>
    %5 = vector.shape_cast %4 : vector<128xf32> to vector<1x128xf32>
    %6 = arith.mulf %2, %2 : vector<16x128xf32>
    %cst_6 = arith.constant dense<0.000000e+00> : vector<128xf32>
    %7 = vector.multi_reduction <add>, %6, %cst_6 [0] : vector<16x128xf32> to vector<128xf32>
    %8 = vector.shape_cast %7 : vector<128xf32> to vector<1x128xf32>
    %9 = tpu.concatenate %5, %8 in 0 : vector<1x128xf32>, vector<1x128xf32> -> vector<2x128xf32>
    %10 = vector.shape_cast %9 : vector<2x128xf32> to vector<1x2x128xf32>
    %c0_7 = arith.constant 0 : index
    %c0_8 = arith.constant 0 : index
    %c0_9 = arith.constant 0 : index
    %11 = vector.load %arg4[%c0_7, %c0_8, %c0_9] : memref<1x2x128xf32, #tpu.memory_space<vmem>>, vector<1x2x128xf32>
    tpu.vector_store %arg4[%c0_7, %c0_8, %c0_9], %10 {strides = array<i32>} : memref<1x2x128xf32, #tpu.memory_space<vmem>>, vector<1x2x128xf32>,
    return
  }
  func.func @transform_0(%arg0: i32) -> (i32, i32) {
    %c0_i32 = arith.constant 0 : i32
    %c0_i32_0 = arith.constant 0 : i32
    return %arg0, %c0_i32 : i32, i32
  }
  func.func @transform_1(%arg0: i32) -> (i32, i32) {
    %c0_i32 = arith.constant 0 : i32
    %c0_i32_0 = arith.constant 0 : i32
    %c0_i32_1 = arith.constant 0 : i32
    return %c0_i32, %c0_i32_0 : i32, i32
  }
  func.func @transform_2(%arg0: i32) -> (i32, i32) {
    %c0_i32 = arith.constant 0 : i32
    %c0_i32_0 = arith.constant 0 : i32
    return %arg0, %c0_i32 : i32, i32
  }
  func.func @transform_3(%arg0: i32) -> (i32, i32, i32) {
    %c0_i32 = arith.constant 0 : i32
    %c0_i32_0 = arith.constant 0 : i32
    %c0_i32_1 = arith.constant 0 : i32
    return %arg0, %c0_i32, %c0_i32_0 : i32, i32, i32
  }
}

module attributes {stable_mosaic.version = 11 : i64} {
  func.func @_scale_shift_act_kernel(%arg0: i32, %arg1: memref<32x128xf32, #tpu.memory_space<vmem>>, %arg2: memref<1x128xf32, #tpu.memory_space<vmem>>, %arg3: memref<1x128xf32, #tpu.memory_space<vmem>>, %arg4: memref<32x128xf32, #tpu.memory_space<vmem>>) attributes {dimension_semantics = [#tpu.dimension_semantics<parallel>], iteration_bounds = array<i64: 1>, scalar_prefetch = 0 : i64, scratch_operands = 0 : i64, tpu.core_type = #tpu.core_type<tc>, window_params = [{transform_indices = @transform_0, window_bounds = array<i64: 32, 128>}, {pipeline_mode = #tpu.pipeline_mode<synchronous>, transform_indices = @transform_1, window_bounds = array<i64: 1, 128>}, {pipeline_mode = #tpu.pipeline_mode<synchronous>, transform_indices = @transform_2, window_bounds = array<i64: 1, 128>}, {transform_indices = @transform_3, window_bounds = array<i64: 32, 128>}]} {
    %c0 = arith.constant 0 : index
    %c0_0 = arith.constant 0 : index
    %0 = vector.load %arg1[%c0, %c0_0] : memref<32x128xf32, #tpu.memory_space<vmem>>, vector<32x128xf32>
    %c0_1 = arith.constant 0 : index
    %c0_2 = arith.constant 0 : index
    %1 = vector.load %arg2[%c0_1, %c0_2] : memref<1x128xf32, #tpu.memory_space<vmem>>, vector<1x128xf32>
    %2 = vector.broadcast %1 : vector<1x128xf32> to vector<32x128xf32>
    %3 = arith.mulf %0, %2 : vector<32x128xf32>
    %c0_3 = arith.constant 0 : index
    %c0_4 = arith.constant 0 : index
    %4 = vector.load %arg3[%c0_3, %c0_4] : memref<1x128xf32, #tpu.memory_space<vmem>>, vector<1x128xf32>
    %5 = vector.broadcast %4 : vector<1x128xf32> to vector<32x128xf32>
    %6 = arith.addf %3, %5 : vector<32x128xf32>
    %cst = arith.constant 0.000000e+00 : f32
    %7 = vector.broadcast %cst : f32 to vector<32x128xf32>
    %8 = arith.maximumf %6, %7 : vector<32x128xf32>
    %c0_5 = arith.constant 0 : index
    %c0_6 = arith.constant 0 : index
    %9 = vector.load %arg4[%c0_5, %c0_6] : memref<32x128xf32, #tpu.memory_space<vmem>>, vector<32x128xf32>
    tpu.vector_store %arg4[%c0_5, %c0_6], %8 {strides = array<i32>} : memref<32x128xf32, #tpu.memory_space<vmem>>, vector<32x128xf32>,
    return
  }
  func.func @transform_0(%arg0: i32) -> (i32, i32) {
    %c0_i32 = arith.constant 0 : i32
    %c0_i32_0 = arith.constant 0 : i32
    return %arg0, %c0_i32 : i32, i32
  }
  func.func @transform_1(%arg0: i32) -> (i32, i32) {
    %c0_i32 = arith.constant 0 : i32
    %c0_i32_0 = arith.constant 0 : i32
    %c0_i32_1 = arith.constant 0 : i32
    return %c0_i32, %c0_i32_0 : i32, i32
  }
  func.func @transform_2(%arg0: i32) -> (i32, i32) {
    %c0_i32 = arith.constant 0 : i32
    %c0_i32_0 = arith.constant 0 : i32
    %c0_i32_1 = arith.constant 0 : i32
    return %c0_i32, %c0_i32_0 : i32, i32
  }
  func.func @transform_3(%arg0: i32) -> (i32, i32) {
    %c0_i32 = arith.constant 0 : i32
    %c0_i32_0 = arith.constant 0 : i32
    return %arg0, %c0_i32 : i32, i32
  }
}

module attributes {stable_mosaic.version = 11 : i64} {
  func.func @_matmul_stats_kernel(%arg0: i32, %arg1: memref<32x1152xbf16, #tpu.memory_space<vmem>>, %arg2: memref<1152x128xbf16, #tpu.memory_space<vmem>>, %arg3: memref<32x128xf32, #tpu.memory_space<vmem>>, %arg4: memref<1x2x128xf32, #tpu.memory_space<vmem>>) attributes {dimension_semantics = [#tpu.dimension_semantics<parallel>], iteration_bounds = array<i64: 1>, scalar_prefetch = 0 : i64, scratch_operands = 0 : i64, tpu.core_type = #tpu.core_type<tc>, window_params = [{transform_indices = @transform_0, window_bounds = array<i64: 32, 1152>}, {pipeline_mode = #tpu.pipeline_mode<synchronous>, transform_indices = @transform_1, window_bounds = array<i64: 1152, 128>}, {transform_indices = @transform_2, window_bounds = array<i64: 32, 128>}, {transform_indices = @transform_3, window_bounds = array<i64: 1, 2, 128>}]} {
    %c0 = arith.constant 0 : index
    %c0_0 = arith.constant 0 : index
    %0 = vector.load %arg1[%c0, %c0_0] : memref<32x1152xbf16, #tpu.memory_space<vmem>>, vector<32x1152xbf16>
    %c0_1 = arith.constant 0 : index
    %c0_2 = arith.constant 0 : index
    %1 = vector.load %arg2[%c0_1, %c0_2] : memref<1152x128xbf16, #tpu.memory_space<vmem>>, vector<1152x128xbf16>
    %cst = arith.constant dense<0.000000e+00> : vector<32x128xf32>
    %2 = tpu.matmul %0, %1, %cst {dimension_numbers = #tpu.dot_dimension_numbers<[1], [0], [0], [1], [0, 0, 1, 1], [], []>} : vector<32x1152xbf16>, vector<1152x128xbf16>, vector<32x128xf32> -> vector<32x128xf32>
    %c0_3 = arith.constant 0 : index
    %c0_4 = arith.constant 0 : index
    %3 = vector.load %arg3[%c0_3, %c0_4] : memref<32x128xf32, #tpu.memory_space<vmem>>, vector<32x128xf32>
    tpu.vector_store %arg3[%c0_3, %c0_4], %2 {strides = array<i32>} : memref<32x128xf32, #tpu.memory_space<vmem>>, vector<32x128xf32>,
    %cst_5 = arith.constant dense<0.000000e+00> : vector<128xf32>
    %4 = vector.multi_reduction <add>, %2, %cst_5 [0] : vector<32x128xf32> to vector<128xf32>
    %5 = vector.shape_cast %4 : vector<128xf32> to vector<1x128xf32>
    %6 = arith.mulf %2, %2 : vector<32x128xf32>
    %cst_6 = arith.constant dense<0.000000e+00> : vector<128xf32>
    %7 = vector.multi_reduction <add>, %6, %cst_6 [0] : vector<32x128xf32> to vector<128xf32>
    %8 = vector.shape_cast %7 : vector<128xf32> to vector<1x128xf32>
    %9 = tpu.concatenate %5, %8 in 0 : vector<1x128xf32>, vector<1x128xf32> -> vector<2x128xf32>
    %10 = vector.shape_cast %9 : vector<2x128xf32> to vector<1x2x128xf32>
    %c0_7 = arith.constant 0 : index
    %c0_8 = arith.constant 0 : index
    %c0_9 = arith.constant 0 : index
    %11 = vector.load %arg4[%c0_7, %c0_8, %c0_9] : memref<1x2x128xf32, #tpu.memory_space<vmem>>, vector<1x2x128xf32>
    tpu.vector_store %arg4[%c0_7, %c0_8, %c0_9], %10 {strides = array<i32>} : memref<1x2x128xf32, #tpu.memory_space<vmem>>, vector<1x2x128xf32>,
    return
  }
  func.func @transform_0(%arg0: i32) -> (i32, i32) {
    %c0_i32 = arith.constant 0 : i32
    %c0_i32_0 = arith.constant 0 : i32
    return %arg0, %c0_i32 : i32, i32
  }
  func.func @transform_1(%arg0: i32) -> (i32, i32) {
    %c0_i32 = arith.constant 0 : i32
    %c0_i32_0 = arith.constant 0 : i32
    %c0_i32_1 = arith.constant 0 : i32
    return %c0_i32, %c0_i32_0 : i32, i32
  }
  func.func @transform_2(%arg0: i32) -> (i32, i32) {
    %c0_i32 = arith.constant 0 : i32
    %c0_i32_0 = arith.constant 0 : i32
    return %arg0, %c0_i32 : i32, i32
  }
  func.func @transform_3(%arg0: i32) -> (i32, i32, i32) {
    %c0_i32 = arith.constant 0 : i32
    %c0_i32_0 = arith.constant 0 : i32
    %c0_i32_1 = arith.constant 0 : i32
    return %arg0, %c0_i32, %c0_i32_0 : i32, i32, i32
  }
}

module attributes {stable_mosaic.version = 11 : i64} {
  func.func @_matmul_stats_kernel(%arg0: i32, %arg1: memref<32x640xbf16, #tpu.memory_space<vmem>>, %arg2: memref<640x128xbf16, #tpu.memory_space<vmem>>, %arg3: memref<32x128xf32, #tpu.memory_space<vmem>>, %arg4: memref<1x2x128xf32, #tpu.memory_space<vmem>>) attributes {dimension_semantics = [#tpu.dimension_semantics<parallel>], iteration_bounds = array<i64: 1>, scalar_prefetch = 0 : i64, scratch_operands = 0 : i64, tpu.core_type = #tpu.core_type<tc>, window_params = [{transform_indices = @transform_0, window_bounds = array<i64: 32, 640>}, {pipeline_mode = #tpu.pipeline_mode<synchronous>, transform_indices = @transform_1, window_bounds = array<i64: 640, 128>}, {transform_indices = @transform_2, window_bounds = array<i64: 32, 128>}, {transform_indices = @transform_3, window_bounds = array<i64: 1, 2, 128>}]} {
    %c0 = arith.constant 0 : index
    %c0_0 = arith.constant 0 : index
    %0 = vector.load %arg1[%c0, %c0_0] : memref<32x640xbf16, #tpu.memory_space<vmem>>, vector<32x640xbf16>
    %c0_1 = arith.constant 0 : index
    %c0_2 = arith.constant 0 : index
    %1 = vector.load %arg2[%c0_1, %c0_2] : memref<640x128xbf16, #tpu.memory_space<vmem>>, vector<640x128xbf16>
    %cst = arith.constant dense<0.000000e+00> : vector<32x128xf32>
    %2 = tpu.matmul %0, %1, %cst {dimension_numbers = #tpu.dot_dimension_numbers<[1], [0], [0], [1], [0, 0, 1, 1], [], []>} : vector<32x640xbf16>, vector<640x128xbf16>, vector<32x128xf32> -> vector<32x128xf32>
    %c0_3 = arith.constant 0 : index
    %c0_4 = arith.constant 0 : index
    %3 = vector.load %arg3[%c0_3, %c0_4] : memref<32x128xf32, #tpu.memory_space<vmem>>, vector<32x128xf32>
    tpu.vector_store %arg3[%c0_3, %c0_4], %2 {strides = array<i32>} : memref<32x128xf32, #tpu.memory_space<vmem>>, vector<32x128xf32>,
    %cst_5 = arith.constant dense<0.000000e+00> : vector<128xf32>
    %4 = vector.multi_reduction <add>, %2, %cst_5 [0] : vector<32x128xf32> to vector<128xf32>
    %5 = vector.shape_cast %4 : vector<128xf32> to vector<1x128xf32>
    %6 = arith.mulf %2, %2 : vector<32x128xf32>
    %cst_6 = arith.constant dense<0.000000e+00> : vector<128xf32>
    %7 = vector.multi_reduction <add>, %6, %cst_6 [0] : vector<32x128xf32> to vector<128xf32>
    %8 = vector.shape_cast %7 : vector<128xf32> to vector<1x128xf32>
    %9 = tpu.concatenate %5, %8 in 0 : vector<1x128xf32>, vector<1x128xf32> -> vector<2x128xf32>
    %10 = vector.shape_cast %9 : vector<2x128xf32> to vector<1x2x128xf32>
    %c0_7 = arith.constant 0 : index
    %c0_8 = arith.constant 0 : index
    %c0_9 = arith.constant 0 : index
    %11 = vector.load %arg4[%c0_7, %c0_8, %c0_9] : memref<1x2x128xf32, #tpu.memory_space<vmem>>, vector<1x2x128xf32>
    tpu.vector_store %arg4[%c0_7, %c0_8, %c0_9], %10 {strides = array<i32>} : memref<1x2x128xf32, #tpu.memory_space<vmem>>, vector<1x2x128xf32>,
    return
  }
  func.func @transform_0(%arg0: i32) -> (i32, i32) {
    %c0_i32 = arith.constant 0 : i32
    %c0_i32_0 = arith.constant 0 : i32
    return %arg0, %c0_i32 : i32, i32
  }
  func.func @transform_1(%arg0: i32) -> (i32, i32) {
    %c0_i32 = arith.constant 0 : i32
    %c0_i32_0 = arith.constant 0 : i32
    %c0_i32_1 = arith.constant 0 : i32
    return %c0_i32, %c0_i32_0 : i32, i32
  }
  func.func @transform_2(%arg0: i32) -> (i32, i32) {
    %c0_i32 = arith.constant 0 : i32
    %c0_i32_0 = arith.constant 0 : i32
    return %arg0, %c0_i32 : i32, i32
  }
  func.func @transform_3(%arg0: i32) -> (i32, i32, i32) {
    %c0_i32 = arith.constant 0 : i32
    %c0_i32_0 = arith.constant 0 : i32
    %c0_i32_1 = arith.constant 0 : i32
    return %arg0, %c0_i32, %c0_i32_0 : i32, i32, i32
  }
}

module attributes {stable_mosaic.version = 11 : i64} {
  func.func @_mem_kernel(%arg0: i32, %arg1: memref<32x128xbf16, #tpu.memory_space<vmem>>, %arg2: memref<128x128xbf16, #tpu.memory_space<vmem>>, %arg3: memref<32x128xf32, #tpu.memory_space<vmem>>, %arg4: memref<32x128xf32, #tpu.memory_space<vmem>>) attributes {dimension_semantics = [#tpu.dimension_semantics<parallel>], iteration_bounds = array<i64: 1>, scalar_prefetch = 0 : i64, scratch_operands = 0 : i64, tpu.core_type = #tpu.core_type<tc>, window_params = [{transform_indices = @transform_0, window_bounds = array<i64: 32, 128>}, {pipeline_mode = #tpu.pipeline_mode<synchronous>, transform_indices = @transform_1, window_bounds = array<i64: 128, 128>}, {transform_indices = @transform_2, window_bounds = array<i64: 32, 128>}, {transform_indices = @transform_3, window_bounds = array<i64: 32, 128>}]} {
    %c0 = arith.constant 0 : index
    %c0_0 = arith.constant 0 : index
    %0 = vector.load %arg1[%c0, %c0_0] : memref<32x128xbf16, #tpu.memory_space<vmem>>, vector<32x128xbf16>
    %c0_1 = arith.constant 0 : index
    %c0_2 = arith.constant 0 : index
    %1 = vector.load %arg2[%c0_1, %c0_2] : memref<128x128xbf16, #tpu.memory_space<vmem>>, vector<128x128xbf16>
    %cst = arith.constant dense<0.000000e+00> : vector<32x128xf32>
    %2 = tpu.matmul %0, %1, %cst {dimension_numbers = #tpu.dot_dimension_numbers<[1], [1], [0], [0], [0, 0, 1, 0], [], []>} : vector<32x128xbf16>, vector<128x128xbf16>, vector<32x128xf32> -> vector<32x128xf32>
    %3 = tpu.iota {dimensions = array<i32: 1>} : vector<32x128xi32>
    %c64_i32 = arith.constant 64 : i32
    %4 = vector.broadcast %c64_i32 : i32 to vector<32x128xi32>
    %5 = arith.cmpi slt, %3, %4 : vector<32x128xi32>
    %cst_3 = arith.constant -1.000000e+30 : f32
    %6 = vector.broadcast %cst_3 : f32 to vector<32x128xf32>
    %7 = arith.select %5, %2, %6 : vector<32x128xi1>, vector<32x128xf32>
    %cst_4 = arith.constant dense<0xFF800000> : vector<32xf32>
    %8 = vector.multi_reduction <maximumf>, %7, %cst_4 [1] : vector<32x128xf32> to vector<32xf32>
    %9 = vector.shape_cast %8 : vector<32xf32> to vector<32x1xf32>
    %10 = vector.broadcast %9 : vector<32x1xf32> to vector<32x128xf32>
    %11 = arith.subf %7, %10 : vector<32x128xf32>
    %12 = math.exp %11 : vector<32x128xf32>
    %cst_5 = arith.constant dense<0.000000e+00> : vector<32xf32>
    %13 = vector.multi_reduction <add>, %12, %cst_5 [1] : vector<32x128xf32> to vector<32xf32>
    %14 = vector.shape_cast %13 : vector<32xf32> to vector<32x1xf32>
    %15 = tpu.reciprocal %14 {approx = true} : vector<32x1xf32> -> vector<32x1xf32>
    %16 = vector.broadcast %15 : vector<32x1xf32> to vector<32x128xf32>
    %17 = arith.mulf %12, %16 : vector<32x128xf32>
    %cst_6 = arith.constant 2.500000e-03 : f32
    %18 = vector.broadcast %cst_6 : f32 to vector<32x128xf32>
    %19 = arith.subf %17, %18 : vector<32x128xf32>
    %cst_7 = arith.constant 0.000000e+00 : f32
    %20 = vector.broadcast %cst_7 : f32 to vector<32x128xf32>
    %21 = arith.maximumf %19, %20 : vector<32x128xf32>
    %22 = arith.mulf %21, %17 : vector<32x128xf32>
    %cst_8 = arith.constant 2.500000e-03 : f32
    %23 = vector.broadcast %cst_8 : f32 to vector<32x128xf32>
    %24 = arith.subf %17, %23 : vector<32x128xf32>
    %25 = math.absf %24 : vector<32x128xf32>
    %cst_9 = arith.constant 9.99999996E-13 : f32
    %26 = vector.broadcast %cst_9 : f32 to vector<32x128xf32>
    %27 = arith.addf %25, %26 : vector<32x128xf32>
    %28 = arith.divf %22, %27 : vector<32x128xf32>
    %29 = math.absf %28 : vector<32x128xf32>
    %cst_10 = arith.constant dense<0.000000e+00> : vector<32xf32>
    %30 = vector.multi_reduction <add>, %29, %cst_10 [1] : vector<32x128xf32> to vector<32xf32>
    %31 = vector.shape_cast %30 : vector<32xf32> to vector<32x1xf32>
    %cst_11 = arith.constant 9.99999996E-13 : f32
    %32 = vector.broadcast %cst_11 : f32 to vector<32x1xf32>
    %33 = arith.maximumf %31, %32 : vector<32x1xf32>
    %34 = tpu.reciprocal %33 {approx = true} : vector<32x1xf32> -> vector<32x1xf32>
    %35 = vector.broadcast %34 : vector<32x1xf32> to vector<32x128xf32>
    %36 = arith.mulf %28, %35 : vector<32x128xf32>
    %37 = arith.truncf %36 : vector<32x128xf32> to vector<32x128xbf16>
    %cst_12 = arith.constant dense<0.000000e+00> : vector<32x128xf32>
    %38 = tpu.matmul %37, %1, %cst_12 {dimension_numbers = #tpu.dot_dimension_numbers<[1], [0], [0], [1], [0, 0, 1, 1], [], []>} : vector<32x128xbf16>, vector<128x128xbf16>, vector<32x128xf32> -> vector<32x128xf32>
    %c0_13 = arith.constant 0 : index
    %c0_14 = arith.constant 0 : index
    %39 = vector.load %arg3[%c0_13, %c0_14] : memref<32x128xf32, #tpu.memory_space<vmem>>, vector<32x128xf32>
    tpu.vector_store %arg3[%c0_13, %c0_14], %38 {strides = array<i32>} : memref<32x128xf32, #tpu.memory_space<vmem>>, vector<32x128xf32>,
    %c0_15 = arith.constant 0 : index
    %c0_16 = arith.constant 0 : index
    %40 = vector.load %arg4[%c0_15, %c0_16] : memref<32x128xf32, #tpu.memory_space<vmem>>, vector<32x128xf32>
    tpu.vector_store %arg4[%c0_15, %c0_16], %36 {strides = array<i32>} : memref<32x128xf32, #tpu.memory_space<vmem>>, vector<32x128xf32>,
    return
  }
  func.func @transform_0(%arg0: i32) -> (i32, i32) {
    %c0_i32 = arith.constant 0 : i32
    %c0_i32_0 = arith.constant 0 : i32
    return %arg0, %c0_i32 : i32, i32
  }
  func.func @transform_1(%arg0: i32) -> (i32, i32) {
    %c0_i32 = arith.constant 0 : i32
    %c0_i32_0 = arith.constant 0 : i32
    %c0_i32_1 = arith.constant 0 : i32
    return %c0_i32, %c0_i32_0 : i32, i32
  }
  func.func @transform_2(%arg0: i32) -> (i32, i32) {
    %c0_i32 = arith.constant 0 : i32
    %c0_i32_0 = arith.constant 0 : i32
    return %arg0, %c0_i32 : i32, i32
  }
  func.func @transform_3(%arg0: i32) -> (i32, i32) {
    %c0_i32 = arith.constant 0 : i32
    %c0_i32_0 = arith.constant 0 : i32
    return %arg0, %c0_i32 : i32, i32
  }
}

module attributes {stable_mosaic.version = 11 : i64} {
  func.func @_matmul_stats_kernel(%arg0: i32, %arg1: memref<32x256xbf16, #tpu.memory_space<vmem>>, %arg2: memref<256x128xbf16, #tpu.memory_space<vmem>>, %arg3: memref<32x128xf32, #tpu.memory_space<vmem>>, %arg4: memref<1x2x128xf32, #tpu.memory_space<vmem>>) attributes {dimension_semantics = [#tpu.dimension_semantics<parallel>], iteration_bounds = array<i64: 1>, scalar_prefetch = 0 : i64, scratch_operands = 0 : i64, tpu.core_type = #tpu.core_type<tc>, window_params = [{transform_indices = @transform_0, window_bounds = array<i64: 32, 256>}, {pipeline_mode = #tpu.pipeline_mode<synchronous>, transform_indices = @transform_1, window_bounds = array<i64: 256, 128>}, {transform_indices = @transform_2, window_bounds = array<i64: 32, 128>}, {transform_indices = @transform_3, window_bounds = array<i64: 1, 2, 128>}]} {
    %c0 = arith.constant 0 : index
    %c0_0 = arith.constant 0 : index
    %0 = vector.load %arg1[%c0, %c0_0] : memref<32x256xbf16, #tpu.memory_space<vmem>>, vector<32x256xbf16>
    %c0_1 = arith.constant 0 : index
    %c0_2 = arith.constant 0 : index
    %1 = vector.load %arg2[%c0_1, %c0_2] : memref<256x128xbf16, #tpu.memory_space<vmem>>, vector<256x128xbf16>
    %cst = arith.constant dense<0.000000e+00> : vector<32x128xf32>
    %2 = tpu.matmul %0, %1, %cst {dimension_numbers = #tpu.dot_dimension_numbers<[1], [0], [0], [1], [0, 0, 1, 1], [], []>} : vector<32x256xbf16>, vector<256x128xbf16>, vector<32x128xf32> -> vector<32x128xf32>
    %c0_3 = arith.constant 0 : index
    %c0_4 = arith.constant 0 : index
    %3 = vector.load %arg3[%c0_3, %c0_4] : memref<32x128xf32, #tpu.memory_space<vmem>>, vector<32x128xf32>
    tpu.vector_store %arg3[%c0_3, %c0_4], %2 {strides = array<i32>} : memref<32x128xf32, #tpu.memory_space<vmem>>, vector<32x128xf32>,
    %cst_5 = arith.constant dense<0.000000e+00> : vector<128xf32>
    %4 = vector.multi_reduction <add>, %2, %cst_5 [0] : vector<32x128xf32> to vector<128xf32>
    %5 = vector.shape_cast %4 : vector<128xf32> to vector<1x128xf32>
    %6 = arith.mulf %2, %2 : vector<32x128xf32>
    %cst_6 = arith.constant dense<0.000000e+00> : vector<128xf32>
    %7 = vector.multi_reduction <add>, %6, %cst_6 [0] : vector<32x128xf32> to vector<128xf32>
    %8 = vector.shape_cast %7 : vector<128xf32> to vector<1x128xf32>
    %9 = tpu.concatenate %5, %8 in 0 : vector<1x128xf32>, vector<1x128xf32> -> vector<2x128xf32>
    %10 = vector.shape_cast %9 : vector<2x128xf32> to vector<1x2x128xf32>
    %c0_7 = arith.constant 0 : index
    %c0_8 = arith.constant 0 : index
    %c0_9 = arith.constant 0 : index
    %11 = vector.load %arg4[%c0_7, %c0_8, %c0_9] : memref<1x2x128xf32, #tpu.memory_space<vmem>>, vector<1x2x128xf32>
    tpu.vector_store %arg4[%c0_7, %c0_8, %c0_9], %10 {strides = array<i32>} : memref<1x2x128xf32, #tpu.memory_space<vmem>>, vector<1x2x128xf32>,
    return
  }
  func.func @transform_0(%arg0: i32) -> (i32, i32) {
    %c0_i32 = arith.constant 0 : i32
    %c0_i32_0 = arith.constant 0 : i32
    return %arg0, %c0_i32 : i32, i32
  }
  func.func @transform_1(%arg0: i32) -> (i32, i32) {
    %c0_i32 = arith.constant 0 : i32
    %c0_i32_0 = arith.constant 0 : i32
    %c0_i32_1 = arith.constant 0 : i32
    return %c0_i32, %c0_i32_0 : i32, i32
  }
  func.func @transform_2(%arg0: i32) -> (i32, i32) {
    %c0_i32 = arith.constant 0 : i32
    %c0_i32_0 = arith.constant 0 : i32
    return %arg0, %c0_i32 : i32, i32
  }
  func.func @transform_3(%arg0: i32) -> (i32, i32, i32) {
    %c0_i32 = arith.constant 0 : i32
    %c0_i32_0 = arith.constant 0 : i32
    %c0_i32_1 = arith.constant 0 : i32
    return %arg0, %c0_i32, %c0_i32_0 : i32, i32, i32
  }
}

module attributes {stable_mosaic.version = 11 : i64} {
  func.func @_scale_shift_act_kernel(%arg0: i32, %arg1: memref<128x128xf32, #tpu.memory_space<vmem>>, %arg2: memref<1x128xf32, #tpu.memory_space<vmem>>, %arg3: memref<1x128xf32, #tpu.memory_space<vmem>>, %arg4: memref<128x128xf32, #tpu.memory_space<vmem>>) attributes {dimension_semantics = [#tpu.dimension_semantics<parallel>], iteration_bounds = array<i64: 1>, scalar_prefetch = 0 : i64, scratch_operands = 0 : i64, tpu.core_type = #tpu.core_type<tc>, window_params = [{transform_indices = @transform_0, window_bounds = array<i64: 128, 128>}, {pipeline_mode = #tpu.pipeline_mode<synchronous>, transform_indices = @transform_1, window_bounds = array<i64: 1, 128>}, {pipeline_mode = #tpu.pipeline_mode<synchronous>, transform_indices = @transform_2, window_bounds = array<i64: 1, 128>}, {transform_indices = @transform_3, window_bounds = array<i64: 128, 128>}]} {
    %c0 = arith.constant 0 : index
    %c0_0 = arith.constant 0 : index
    %0 = vector.load %arg1[%c0, %c0_0] : memref<128x128xf32, #tpu.memory_space<vmem>>, vector<128x128xf32>
    %c0_1 = arith.constant 0 : index
    %c0_2 = arith.constant 0 : index
    %1 = vector.load %arg2[%c0_1, %c0_2] : memref<1x128xf32, #tpu.memory_space<vmem>>, vector<1x128xf32>
    %2 = vector.broadcast %1 : vector<1x128xf32> to vector<128x128xf32>
    %3 = arith.mulf %0, %2 : vector<128x128xf32>
    %c0_3 = arith.constant 0 : index
    %c0_4 = arith.constant 0 : index
    %4 = vector.load %arg3[%c0_3, %c0_4] : memref<1x128xf32, #tpu.memory_space<vmem>>, vector<1x128xf32>
    %5 = vector.broadcast %4 : vector<1x128xf32> to vector<128x128xf32>
    %6 = arith.addf %3, %5 : vector<128x128xf32>
    %cst = arith.constant 0.000000e+00 : f32
    %7 = vector.broadcast %cst : f32 to vector<128x128xf32>
    %8 = arith.maximumf %6, %7 : vector<128x128xf32>
    %c0_5 = arith.constant 0 : index
    %c0_6 = arith.constant 0 : index
    %9 = vector.load %arg4[%c0_5, %c0_6] : memref<128x128xf32, #tpu.memory_space<vmem>>, vector<128x128xf32>
    tpu.vector_store %arg4[%c0_5, %c0_6], %8 {strides = array<i32>} : memref<128x128xf32, #tpu.memory_space<vmem>>, vector<128x128xf32>,
    return
  }
  func.func @transform_0(%arg0: i32) -> (i32, i32) {
    %c0_i32 = arith.constant 0 : i32
    %c0_i32_0 = arith.constant 0 : i32
    return %arg0, %c0_i32 : i32, i32
  }
  func.func @transform_1(%arg0: i32) -> (i32, i32) {
    %c0_i32 = arith.constant 0 : i32
    %c0_i32_0 = arith.constant 0 : i32
    %c0_i32_1 = arith.constant 0 : i32
    return %c0_i32, %c0_i32_0 : i32, i32
  }
  func.func @transform_2(%arg0: i32) -> (i32, i32) {
    %c0_i32 = arith.constant 0 : i32
    %c0_i32_0 = arith.constant 0 : i32
    %c0_i32_1 = arith.constant 0 : i32
    return %c0_i32, %c0_i32_0 : i32, i32
  }
  func.func @transform_3(%arg0: i32) -> (i32, i32) {
    %c0_i32 = arith.constant 0 : i32
    %c0_i32_0 = arith.constant 0 : i32
    return %arg0, %c0_i32 : i32, i32
  }
}

module attributes {stable_mosaic.version = 11 : i64} {
  func.func @_matmul_stats_kernel(%arg0: i32, %arg1: memref<128x128xbf16, #tpu.memory_space<vmem>>, %arg2: memref<128x128xbf16, #tpu.memory_space<vmem>>, %arg3: memref<128x128xf32, #tpu.memory_space<vmem>>, %arg4: memref<1x2x128xf32, #tpu.memory_space<vmem>>) attributes {dimension_semantics = [#tpu.dimension_semantics<parallel>], iteration_bounds = array<i64: 1>, scalar_prefetch = 0 : i64, scratch_operands = 0 : i64, tpu.core_type = #tpu.core_type<tc>, window_params = [{transform_indices = @transform_0, window_bounds = array<i64: 128, 128>}, {pipeline_mode = #tpu.pipeline_mode<synchronous>, transform_indices = @transform_1, window_bounds = array<i64: 128, 128>}, {transform_indices = @transform_2, window_bounds = array<i64: 128, 128>}, {transform_indices = @transform_3, window_bounds = array<i64: 1, 2, 128>}]} {
    %c0 = arith.constant 0 : index
    %c0_0 = arith.constant 0 : index
    %0 = vector.load %arg1[%c0, %c0_0] : memref<128x128xbf16, #tpu.memory_space<vmem>>, vector<128x128xbf16>
    %c0_1 = arith.constant 0 : index
    %c0_2 = arith.constant 0 : index
    %1 = vector.load %arg2[%c0_1, %c0_2] : memref<128x128xbf16, #tpu.memory_space<vmem>>, vector<128x128xbf16>
    %cst = arith.constant dense<0.000000e+00> : vector<128x128xf32>
    %2 = tpu.matmul %0, %1, %cst {dimension_numbers = #tpu.dot_dimension_numbers<[1], [0], [0], [1], [0, 0, 1, 1], [], []>} : vector<128x128xbf16>, vector<128x128xbf16>, vector<128x128xf32> -> vector<128x128xf32>
    %c0_3 = arith.constant 0 : index
    %c0_4 = arith.constant 0 : index
    %3 = vector.load %arg3[%c0_3, %c0_4] : memref<128x128xf32, #tpu.memory_space<vmem>>, vector<128x128xf32>
    tpu.vector_store %arg3[%c0_3, %c0_4], %2 {strides = array<i32>} : memref<128x128xf32, #tpu.memory_space<vmem>>, vector<128x128xf32>,
    %cst_5 = arith.constant dense<0.000000e+00> : vector<128xf32>
    %4 = vector.multi_reduction <add>, %2, %cst_5 [0] : vector<128x128xf32> to vector<128xf32>
    %5 = vector.shape_cast %4 : vector<128xf32> to vector<1x128xf32>
    %6 = arith.mulf %2, %2 : vector<128x128xf32>
    %cst_6 = arith.constant dense<0.000000e+00> : vector<128xf32>
    %7 = vector.multi_reduction <add>, %6, %cst_6 [0] : vector<128x128xf32> to vector<128xf32>
    %8 = vector.shape_cast %7 : vector<128xf32> to vector<1x128xf32>
    %9 = tpu.concatenate %5, %8 in 0 : vector<1x128xf32>, vector<1x128xf32> -> vector<2x128xf32>
    %10 = vector.shape_cast %9 : vector<2x128xf32> to vector<1x2x128xf32>
    %c0_7 = arith.constant 0 : index
    %c0_8 = arith.constant 0 : index
    %c0_9 = arith.constant 0 : index
    %11 = vector.load %arg4[%c0_7, %c0_8, %c0_9] : memref<1x2x128xf32, #tpu.memory_space<vmem>>, vector<1x2x128xf32>
    tpu.vector_store %arg4[%c0_7, %c0_8, %c0_9], %10 {strides = array<i32>} : memref<1x2x128xf32, #tpu.memory_space<vmem>>, vector<1x2x128xf32>,
    return
  }
  func.func @transform_0(%arg0: i32) -> (i32, i32) {
    %c0_i32 = arith.constant 0 : i32
    %c0_i32_0 = arith.constant 0 : i32
    return %arg0, %c0_i32 : i32, i32
  }
  func.func @transform_1(%arg0: i32) -> (i32, i32) {
    %c0_i32 = arith.constant 0 : i32
    %c0_i32_0 = arith.constant 0 : i32
    %c0_i32_1 = arith.constant 0 : i32
    return %c0_i32, %c0_i32_0 : i32, i32
  }
  func.func @transform_2(%arg0: i32) -> (i32, i32) {
    %c0_i32 = arith.constant 0 : i32
    %c0_i32_0 = arith.constant 0 : i32
    return %arg0, %c0_i32 : i32, i32
  }
  func.func @transform_3(%arg0: i32) -> (i32, i32, i32) {
    %c0_i32 = arith.constant 0 : i32
    %c0_i32_0 = arith.constant 0 : i32
    %c0_i32_1 = arith.constant 0 : i32
    return %arg0, %c0_i32, %c0_i32_0 : i32, i32, i32
  }
}

module attributes {stable_mosaic.version = 11 : i64} {
  func.func @_matmul_act_kernel(%arg0: i32, %arg1: memref<512x128xbf16, #tpu.memory_space<vmem>>, %arg2: memref<128x128xbf16, #tpu.memory_space<vmem>>, %arg3: memref<512x128xf32, #tpu.memory_space<vmem>>) attributes {dimension_semantics = [#tpu.dimension_semantics<parallel>], iteration_bounds = array<i64: 1>, scalar_prefetch = 0 : i64, scratch_operands = 0 : i64, tpu.core_type = #tpu.core_type<tc>, window_params = [{transform_indices = @transform_0, window_bounds = array<i64: 512, 128>}, {pipeline_mode = #tpu.pipeline_mode<synchronous>, transform_indices = @transform_1, window_bounds = array<i64: 128, 128>}, {transform_indices = @transform_2, window_bounds = array<i64: 512, 128>}]} {
    %c0 = arith.constant 0 : index
    %c0_0 = arith.constant 0 : index
    %0 = vector.load %arg1[%c0, %c0_0] : memref<512x128xbf16, #tpu.memory_space<vmem>>, vector<512x128xbf16>
    %c0_1 = arith.constant 0 : index
    %c0_2 = arith.constant 0 : index
    %1 = vector.load %arg2[%c0_1, %c0_2] : memref<128x128xbf16, #tpu.memory_space<vmem>>, vector<128x128xbf16>
    %cst = arith.constant dense<0.000000e+00> : vector<512x128xf32>
    %2 = tpu.matmul %0, %1, %cst {dimension_numbers = #tpu.dot_dimension_numbers<[1], [0], [0], [1], [0, 0, 1, 1], [], []>} : vector<512x128xbf16>, vector<128x128xbf16>, vector<512x128xf32> -> vector<512x128xf32>
    %3 = math.tanh %2 : vector<512x128xf32>
    %c0_3 = arith.constant 0 : index
    %c0_4 = arith.constant 0 : index
    %4 = vector.load %arg3[%c0_3, %c0_4] : memref<512x128xf32, #tpu.memory_space<vmem>>, vector<512x128xf32>
    tpu.vector_store %arg3[%c0_3, %c0_4], %3 {strides = array<i32>} : memref<512x128xf32, #tpu.memory_space<vmem>>, vector<512x128xf32>,
    return
  }
  func.func @transform_0(%arg0: i32) -> (i32, i32) {
    %c0_i32 = arith.constant 0 : i32
    %c0_i32_0 = arith.constant 0 : i32
    return %arg0, %c0_i32 : i32, i32
  }
  func.func @transform_1(%arg0: i32) -> (i32, i32) {
    %c0_i32 = arith.constant 0 : i32
    %c0_i32_0 = arith.constant 0 : i32
    %c0_i32_1 = arith.constant 0 : i32
    return %c0_i32, %c0_i32_0 : i32, i32
  }
  func.func @transform_2(%arg0: i32) -> (i32, i32) {
    %c0_i32 = arith.constant 0 : i32
    %c0_i32_0 = arith.constant 0 : i32
    return %arg0, %c0_i32 : i32, i32
  }
}

</mosaic_0001>

<llo_original>
// kernel: encoder_forward.46
$region0: #{encoder_forward.46}
  #allocation0 [shape = 'u32[]', space=smem, size = 0x4, offset = 0x4, fixed_abs, tag = 'smem constant byte address 0x4 - core index']
  #allocation1 [shape = 'u32[72,128]{1,0:T(1,128)}', space=vmem, size = 0x9000, scoped, tag = 'internal scratch']
  %s0 = inlined_call_operand.vmem [shape: f32[512,128], index: 0, kind: input, shape index: {}]
  %s1 = inlined_call_operand.vmem [shape: f32[1,128], index: 1, kind: input, shape index: {}]
  %s2 = inlined_call_operand.vmem [shape: f32[1,128], index: 2, kind: input, shape index: {}]
  %s3 = inlined_call_operand.vmem [shape: f32[512,128], index: 3, kind: output, shape index: {}]
  %s4 = sld [smem:[#allocation0]]
  $region22: #{encoder_forward.46} parent=0
    _
  %s6 = ssub.s32 1, %s4
  %s7 = scalar_select 0, %s6, %s4
  // Predicated region
  $region2: #{encoder_forward.46} parent=0 // pred_check
    _
  $region3: #{encoder_forward.46} parent=0 // pred_check_branch
    %9 = sbr.rel (0) target = $region5
  $region4: #{encoder_forward.46} parent=0 // pred_region
    _
  $region5: #{encoder_forward.46} parent=0 // pred_fallthru
    _
  // Predicated region
  $region6: #{encoder_forward.46} parent=0 // pred_check
    _
  $region7: #{encoder_forward.46} parent=0 // pred_check_branch
    %11 = sbr.rel (0) target = $region9
  $region8: #{encoder_forward.46} parent=0 // pred_region
    _
  $region9: #{encoder_forward.46} parent=0 // pred_fallthru
    _
  // Predicated region
  $region10: #{encoder_forward.46} parent=0 // pred_check
    _
  $region11: #{encoder_forward.46} parent=0 // pred_check_branch
    %13 = sbr.rel (0) target = $region13
  $region12: #{encoder_forward.46} parent=0 // pred_region
    _
  $region13: #{encoder_forward.46} parent=0 // pred_fallthru
    _
  %v14 = vld [vmem:[%s0] sm:$0xff]
  %v15 = vld [vmem:[%s0 + $0x8] sm:$0xff]
  %v16 = vld [vmem:[%s0 + $0x10] sm:$0xff]
  %v17 = vld [vmem:[%s0 + $0x18] sm:$0xff]
  %v18 = vld [vmem:[%s0 + $0x20] sm:$0xff]
  %v19 = vld [vmem:[%s0 + $0x28] sm:$0xff]
  %v20 = vld [vmem:[%s0 + $0x30] sm:$0xff]
  %v21 = vld [vmem:[%s0 + $0x38] sm:$0xff]
  %v22 = vld [vmem:[%s0 + $0x40] sm:$0xff]
  %v23 = vld [vmem:[%s0 + $0x48] sm:$0xff]
  %v24 = vld [vmem:[%s0 + $0x50] sm:$0xff]
  %v25 = vld [vmem:[%s0 + $0x58] sm:$0xff]
  %v26 = vld [vmem:[%s0 + $0x60] sm:$0xff]
  %v27 = vld [vmem:[%s0 + $0x68] sm:$0xff]
  %v28 = vld [vmem:[%s0 + $0x70] sm:$0xff]
  %v29 = vld [vmem:[%s0 + $0x78] sm:$0xff]
  %v30 = vld [vmem:[%s0 + $0x80] sm:$0xff]
  %v31 = vld [vmem:[%s0 + $0x88] sm:$0xff]
  %v32 = vld [vmem:[%s0 + $0x90] sm:$0xff]
  %v33 = vld [vmem:[%s0 + $0x98] sm:$0xff]
  %v34 = vld [vmem:[%s0 + $0xa0] sm:$0xff]
  %v35 = vld [vmem:[%s0 + $0xa8] sm:$0xff]
  %v36 = vld [vmem:[%s0 + $0xb0] sm:$0xff]
  %v37 = vld [vmem:[%s0 + $0xb8] sm:$0xff]
  %v38 = vld [vmem:[%s0 + $0xc0] sm:$0xff]
  %v39 = vld [vmem:[%s0 + $0xc8] sm:$0xff]
  %v40 = vld [vmem:[%s0 + $0xd0] sm:$0xff]
  %v41 = vld [vmem:[%s0 + $0xd8] sm:$0xff]
  %v42 = vld [vmem:[%s0 + $0xe0] sm:$0xff]
  %v43 = vld [vmem:[%s0 + $0xe8] sm:$0xff]
  %v44 = vld [vmem:[%s0 + $0xf0] sm:$0xff]
  %v45 = vld [vmem:[%s0 + $0xf8] sm:$0xff]
  %v46 = vld [vmem:[%s0 + $0x100] sm:$0xff]
  %v47 = vld [vmem:[%s0 + $0x108] sm:$0xff]
  %v48 = vld [vmem:[%s0 + $0x110] sm:$0xff]
  %v49 = vld [vmem:[%s0 + $0x118] sm:$0xff]
  %v50 = vld [vmem:[%s0 + $0x120] sm:$0xff]
  %v51 = vld [vmem:[%s0 + $0x128] sm:$0xff]
  %v52 = vld [vmem:[%s0 + $0x130] sm:$0xff]
  %v53 = vld [vmem:[%s0 + $0x138] sm:$0xff]
  %v54 = vld [vmem:[%s0 + $0x140] sm:$0xff]
  %v55 = vld [vmem:[%s0 + $0x148] sm:$0xff]
  %v56 = vld [vmem:[%s0 + $0x150] sm:$0xff]
  %v57 = vld [vmem:[%s0 + $0x158] sm:$0xff]
  %v58 = vld [vmem:[%s0 + $0x160] sm:$0xff]
  %v59 = vld [vmem:[%s0 + $0x168] sm:$0xff]
  %v60 = vld [vmem:[%s0 + $0x170] sm:$0xff]
  %v61 = vld [vmem:[%s0 + $0x178] sm:$0xff]
  %v62 = vld [vmem:[%s0 + $0x180] sm:$0xff]
  %v63 = vld [vmem:[%s0 + $0x188] sm:$0xff]
  %v64 = vld [vmem:[%s0 + $0x190] sm:$0xff]
  %v65 = vld [vmem:[%s0 + $0x198] sm:$0xff]
  %v66 = vld [vmem:[%s0 + $0x1a0] sm:$0xff]
  %v67 = vld [vmem:[%s0 + $0x1a8] sm:$0xff]
  %v68 = vld [vmem:[%s0 + $0x1b0] sm:$0xff]
  %v69 = vld [vmem:[%s0 + $0x1b8] sm:$0xff]
  %v70 = vld [vmem:[%s0 + $0x1c0] sm:$0xff]
  %v71 = vld [vmem:[%s0 + $0x1c8] sm:$0xff]
  %v72 = vld [vmem:[%s0 + $0x1d0] sm:$0xff]
  %v73 = vld [vmem:[%s0 + $0x1d8] sm:$0xff]
  %v74 = vld [vmem:[%s0 + $0x1e0] sm:$0xff]
  %v75 = vld [vmem:[%s0 + $0x1e8] sm:$0xff]
  %v76 = vld [vmem:[%s0 + $0x1f0] sm:$0xff]
  %v77 = vld [vmem:[%s0 + $0x1f8] sm:$0xff]
  %v78 = vld [vmem:[%s1] sm:$0x1]
  %v80 = vperm.slane %v78, 0
  %v82 = vmul.f32 %v14, %v80
  %v83 = vmul.f32 %v15, %v80
  %v84 = vmul.f32 %v16, %v80
  %v85 = vmul.f32 %v17, %v80
  %v86 = vmul.f32 %v18, %v80
  %v87 = vmul.f32 %v19, %v80
  %v88 = vmul.f32 %v20, %v80
  %v89 = vmul.f32 %v21, %v80
  %v90 = vmul.f32 %v22, %v80
  %v91 = vmul.f32 %v23, %v80
  %v92 = vmul.f32 %v24, %v80
  %v93 = vmul.f32 %v25, %v80
  %v94 = vmul.f32 %v26, %v80
  %v95 = vmul.f32 %v27, %v80
  %v96 = vmul.f32 %v28, %v80
  %v97 = vmul.f32 %v29, %v80
  %v98 = vmul.f32 %v30, %v80
  %v99 = vmul.f32 %v31, %v80
  %v100 = vmul.f32 %v32, %v80
  %v101 = vmul.f32 %v33, %v80
  %v102 = vmul.f32 %v34, %v80
  %v103 = vmul.f32 %v35, %v80
  %v104 = vmul.f32 %v36, %v80
  %v105 = vmul.f32 %v37, %v80
  %v106 = vmul.f32 %v38, %v80
  %v107 = vmul.f32 %v39, %v80
  %v108 = vmul.f32 %v40, %v80
  %v109 = vmul.f32 %v41, %v80
  %v110 = vmul.f32 %v42, %v80
  %v111 = vmul.f32 %v43, %v80
  %v112 = vmul.f32 %v44, %v80
  %v113 = vmul.f32 %v45, %v80
  %v114 = vmul.f32 %v46, %v80
  %v115 = vmul.f32 %v47, %v80
  %v116 = vmul.f32 %v48, %v80
  %v117 = vmul.f32 %v49, %v80
  %v118 = vmul.f32 %v50, %v80
  %v119 = vmul.f32 %v51, %v80
  %v120 = vmul.f32 %v52, %v80
  %v121 = vmul.f32 %v53, %v80
  %v122 = vmul.f32 %v54, %v80
  %v123 = vmul.f32 %v55, %v80
  %v124 = vmul.f32 %v56, %v80
  %v125 = vmul.f32 %v57, %v80
  %v126 = vmul.f32 %v58, %v80
  %v127 = vmul.f32 %v59, %v80
  %v128 = vmul.f32 %v60, %v80
  %v129 = vmul.f32 %v61, %v80
  %v130 = vmul.f32 %v62, %v80
  %v131 = vmul.f32 %v63, %v80
  %v132 = vmul.f32 %v64, %v80
  %v133 = vmul.f32 %v65, %v80
  %v134 = vmul.f32 %v66, %v80
  %v135 = vmul.f32 %v67, %v80
  %v136 = vmul.f32 %v68, %v80
  %v137 = vmul.f32 %v69, %v80
  %v138 = vmul.f32 %v70, %v80
  %v139 = vmul.f32 %v71, %v80
  %v140 = vmul.f32 %v72, %v80
  %v141 = vmul.f32 %v73, %v80
  %v142 = vmul.f32 %v74, %v80
  %v143 = vmul.f32 %v75, %v80
  %v144 = vmul.f32 %v76, %v80
  %v145 = vmul.f32 %v77, %v80
  %v146 = vld [vmem:[%s2] sm:$0x1]
  %v148 = vperm.slane %v146, 0
  %v150 = vadd.f32 %v82, %v148
  %v151 = vadd.f32 %v83, %v148
  %v152 = vadd.f32 %v84, %v148
  %v153 = vadd.f32 %v85, %v148
  %v154 = vadd.f32 %v86, %v148
  %v155 = vadd.f32 %v87, %v148
  %v156 = vadd.f32 %v88, %v148
  %v157 = vadd.f32 %v89, %v148
  %v158 = vadd.f32 %v90, %v148
  %v159 = vadd.f32 %v91, %v148
  %v160 = vadd.f32 %v92, %v148
  %v161 = vadd.f32 %v93, %v148
  %v162 = vadd.f32 %v94, %v148
  %v163 = vadd.f32 %v95, %v148
  %v164 = vadd.f32 %v96, %v148
  %v165 = vadd.f32 %v97, %v148
  %v166 = vadd.f32 %v98, %v148
  %v167 = vadd.f32 %v99, %v148
  %v168 = vadd.f32 %v100, %v148
  %v169 = vadd.f32 %v101, %v148
  %v170 = vadd.f32 %v102, %v148
  %v171 = vadd.f32 %v103, %v148
  %v172 = vadd.f32 %v104, %v148
  %v173 = vadd.f32 %v105, %v148
  %v174 = vadd.f32 %v106, %v148
  %v175 = vadd.f32 %v107, %v148
  %v176 = vadd.f32 %v108, %v148
  %v177 = vadd.f32 %v109, %v148
  %v178 = vadd.f32 %v110, %v148
  %v179 = vadd.f32 %v111, %v148
  %v180 = vadd.f32 %v112, %v148
  %v181 = vadd.f32 %v113, %v148
  %v182 = vadd.f32 %v114, %v148
  %v183 = vadd.f32 %v115, %v148
  %v184 = vadd.f32 %v116, %v148
  %v185 = vadd.f32 %v117, %v148
  %v186 = vadd.f32 %v118, %v148
  %v187 = vadd.f32 %v119, %v148
  %v188 = vadd.f32 %v120, %v148
  %v189 = vadd.f32 %v121, %v148
  %v190 = vadd.f32 %v122, %v148
  %v191 = vadd.f32 %v123, %v148
  %v192 = vadd.f32 %v124, %v148
  %v193 = vadd.f32 %v125, %v148
  %v194 = vadd.f32 %v126, %v148
  %v195 = vadd.f32 %v127, %v148
  %v196 = vadd.f32 %v128, %v148
  %v197 = vadd.f32 %v129, %v148
  %v198 = vadd.f32 %v130, %v148
  %v199 = vadd.f32 %v131, %v148
  %v200 = vadd.f32 %v132, %v148
  %v201 = vadd.f32 %v133, %v148
  %v202 = vadd.f32 %v134, %v148
  %v203 = vadd.f32 %v135, %v148
  %v204 = vadd.f32 %v136, %v148
  %v205 = vadd.f32 %v137, %v148
  %v206 = vadd.f32 %v138, %v148
  %v207 = vadd.f32 %v139, %v148
  %v208 = vadd.f32 %v140, %v148
  %v209 = vadd.f32 %v141, %v148
  %v210 = vadd.f32 %v142, %v148
  %v211 = vadd.f32 %v143, %v148
  %v212 = vadd.f32 %v144, %v148
  %v213 = vadd.f32 %v145, %v148
  %v214 = vmax.f32 %v150, 0.0
  %v215 = vmax.f32 %v151, 0.0
  %v216 = vmax.f32 %v152, 0.0
  %v217 = vmax.f32 %v153, 0.0
  %v218 = vmax.f32 %v154, 0.0
  %v219 = vmax.f32 %v155, 0.0
  %v220 = vmax.f32 %v156, 0.0
  %v221 = vmax.f32 %v157, 0.0
  %v222 = vmax.f32 %v158, 0.0
  %v223 = vmax.f32 %v159, 0.0
  %v224 = vmax.f32 %v160, 0.0
  %v225 = vmax.f32 %v161, 0.0
  %v226 = vmax.f32 %v162, 0.0
  %v227 = vmax.f32 %v163, 0.0
  %v228 = vmax.f32 %v164, 0.0
  %v229 = vmax.f32 %v165, 0.0
  %v230 = vmax.f32 %v166, 0.0
  %v231 = vmax.f32 %v167, 0.0
  %v232 = vmax.f32 %v168, 0.0
  %v233 = vmax.f32 %v169, 0.0
  %v234 = vmax.f32 %v170, 0.0
  %v235 = vmax.f32 %v171, 0.0
  %v236 = vmax.f32 %v172, 0.0
  %v237 = vmax.f32 %v173, 0.0
  %v238 = vmax.f32 %v174, 0.0
  %v239 = vmax.f32 %v175, 0.0
  %v240 = vmax.f32 %v176, 0.0
  %v241 = vmax.f32 %v177, 0.0
  %v242 = vmax.f32 %v178, 0.0
  %v243 = vmax.f32 %v179, 0.0
  %v244 = vmax.f32 %v180, 0.0
  %v245 = vmax.f32 %v181, 0.0
  %v246 = vmax.f32 %v182, 0.0
  %v247 = vmax.f32 %v183, 0.0
  %v248 = vmax.f32 %v184, 0.0
  %v249 = vmax.f32 %v185, 0.0
  %v250 = vmax.f32 %v186, 0.0
  %v251 = vmax.f32 %v187, 0.0
  %v252 = vmax.f32 %v188, 0.0
  %v253 = vmax.f32 %v189, 0.0
  %v254 = vmax.f32 %v190, 0.0
  %v255 = vmax.f32 %v191, 0.0
  %v256 = vmax.f32 %v192, 0.0
  %v257 = vmax.f32 %v193, 0.0
  %v258 = vmax.f32 %v194, 0.0
  %v259 = vmax.f32 %v195, 0.0
  %v260 = vmax.f32 %v196, 0.0
  %v261 = vmax.f32 %v197, 0.0
  %v262 = vmax.f32 %v198, 0.0
  %v263 = vmax.f32 %v199, 0.0
  %v264 = vmax.f32 %v200, 0.0
  %v265 = vmax.f32 %v201, 0.0
  %v266 = vmax.f32 %v202, 0.0
  %v267 = vmax.f32 %v203, 0.0
  %v268 = vmax.f32 %v204, 0.0
  %v269 = vmax.f32 %v205, 0.0
  %v270 = vmax.f32 %v206, 0.0
  %v271 = vmax.f32 %v207, 0.0
  %v272 = vmax.f32 %v208, 0.0
  %v273 = vmax.f32 %v209, 0.0
  %v274 = vmax.f32 %v210, 0.0
  %v275 = vmax.f32 %v211, 0.0
  %v276 = vmax.f32 %v212, 0.0
  %v277 = vmax.f32 %v213, 0.0
  %278 = vst [vmem:[%s3] sm:$0xff] %v214
  %279 = vst [vmem:[%s3 + $0x8] sm:$0xff] %v215
  %280 = vst [vmem:[%s3 + $0x10] sm:$0xff] %v216
  %281 = vst [vmem:[%s3 + $0x18] sm:$0xff] %v217
  %282 = vst [vmem:[%s3 + $0x20] sm:$0xff] %v218
  %283 = vst [vmem:[%s3 + $0x28] sm:$0xff] %v219
  %284 = vst [vmem:[%s3 + $0x30] sm:$0xff] %v220
  %285 = vst [vmem:[%s3 + $0x38] sm:$0xff] %v221
  %286 = vst [vmem:[%s3 + $0x40] sm:$0xff] %v222
  %287 = vst [vmem:[%s3 + $0x48] sm:$0xff] %v223
  %288 = vst [vmem:[%s3 + $0x50] sm:$0xff] %v224
  %289 = vst [vmem:[%s3 + $0x58] sm:$0xff] %v225
  %290 = vst [vmem:[%s3 + $0x60] sm:$0xff] %v226
  %291 = vst [vmem:[%s3 + $0x68] sm:$0xff] %v227
  %292 = vst [vmem:[%s3 + $0x70] sm:$0xff] %v228
  %293 = vst [vmem:[%s3 + $0x78] sm:$0xff] %v229
  %294 = vst [vmem:[%s3 + $0x80] sm:$0xff] %v230
  %295 = vst [vmem:[%s3 + $0x88] sm:$0xff] %v231
  %296 = vst [vmem:[%s3 + $0x90] sm:$0xff] %v232
  %297 = vst [vmem:[%s3 + $0x98] sm:$0xff] %v233
  %298 = vst [vmem:[%s3 + $0xa0] sm:$0xff] %v234
  %299 = vst [vmem:[%s3 + $0xa8] sm:$0xff] %v235
  %300 = vst [vmem:[%s3 + $0xb0] sm:$0xff] %v236
  %301 = vst [vmem:[%s3 + $0xb8] sm:$0xff] %v237
  %302 = vst [vmem:[%s3 + $0xc0] sm:$0xff] %v238
  %303 = vst [vmem:[%s3 + $0xc8] sm:$0xff] %v239
  %304 = vst [vmem:[%s3 + $0xd0] sm:$0xff] %v240
  %305 = vst [vmem:[%s3 + $0xd8] sm:$0xff] %v241
  %306 = vst [vmem:[%s3 + $0xe0] sm:$0xff] %v242
  %307 = vst [vmem:[%s3 + $0xe8] sm:$0xff] %v243
  %308 = vst [vmem:[%s3 + $0xf0] sm:$0xff] %v244
  %309 = vst [vmem:[%s3 + $0xf8] sm:$0xff] %v245
  %310 = vst [vmem:[%s3 + $0x100] sm:$0xff] %v246
  %311 = vst [vmem:[%s3 + $0x108] sm:$0xff] %v247
  %312 = vst [vmem:[%s3 + $0x110] sm:$0xff] %v248
  %313 = vst [vmem:[%s3 + $0x118] sm:$0xff] %v249
  %314 = vst [vmem:[%s3 + $0x120] sm:$0xff] %v250
  %315 = vst [vmem:[%s3 + $0x128] sm:$0xff] %v251
  %316 = vst [vmem:[%s3 + $0x130] sm:$0xff] %v252
  %317 = vst [vmem:[%s3 + $0x138] sm:$0xff] %v253
  %318 = vst [vmem:[%s3 + $0x140] sm:$0xff] %v254
  %319 = vst [vmem:[%s3 + $0x148] sm:$0xff] %v255
  %320 = vst [vmem:[%s3 + $0x150] sm:$0xff] %v256
  %321 = vst [vmem:[%s3 + $0x158] sm:$0xff] %v257
  %322 = vst [vmem:[%s3 + $0x160] sm:$0xff] %v258
  %323 = vst [vmem:[%s3 + $0x168] sm:$0xff] %v259
  %324 = vst [vmem:[%s3 + $0x170] sm:$0xff] %v260
  %325 = vst [vmem:[%s3 + $0x178] sm:$0xff] %v261
  %326 = vst [vmem:[%s3 + $0x180] sm:$0xff] %v262
  %327 = vst [vmem:[%s3 + $0x188] sm:$0xff] %v263
  %328 = vst [vmem:[%s3 + $0x190] sm:$0xff] %v264
  %329 = vst [vmem:[%s3 + $0x198] sm:$0xff] %v265
  %330 = vst [vmem:[%s3 + $0x1a0] sm:$0xff] %v266
  %331 = vst [vmem:[%s3 + $0x1a8] sm:$0xff] %v267
  %332 = vst [vmem:[%s3 + $0x1b0] sm:$0xff] %v268
  %333 = vst [vmem:[%s3 + $0x1b8] sm:$0xff] %v269
  %334 = vst [vmem:[%s3 + $0x1c0] sm:$0xff] %v270
  %335 = vst [vmem:[%s3 + $0x1c8] sm:$0xff] %v271
  %336 = vst [vmem:[%s3 + $0x1d0] sm:$0xff] %v272
  %337 = vst [vmem:[%s3 + $0x1d8] sm:$0xff] %v273
  %338 = vst [vmem:[%s3 + $0x1e0] sm:$0xff] %v274
  %339 = vst [vmem:[%s3 + $0x1e8] sm:$0xff] %v275
  %340 = vst [vmem:[%s3 + $0x1f0] sm:$0xff] %v276
  %341 = vst [vmem:[%s3 + $0x1f8] sm:$0xff] %v277
  // Predicated region
  $region14: #{encoder_forward.46} parent=0 // pred_check
    _
  $region15: #{encoder_forward.46} parent=0 // pred_check_branch
    %343 = sbr.rel (0) target = $region17
  $region16: #{encoder_forward.46} parent=0 // pred_region
    _
  $region17: #{encoder_forward.46} parent=0 // pred_fallthru
    _
  // Predicated region
  $region18: #{encoder_forward.46} parent=0 // pred_check
    _
  $region19: #{encoder_forward.46} parent=0 // pred_check_branch
    %345 = sbr.rel (0) target = $region21
  $region20: #{encoder_forward.46} parent=0 // pred_region
    _
  $region21: #{encoder_forward.46} parent=0 // pred_fallthru
    _

// kernel: encoder_forward.45
$region0: #{encoder_forward.45}
  #allocation0 [shape = 'u32[]', space=smem, size = 0x4, offset = 0x4, fixed_abs, tag = 'smem constant byte address 0x4 - core index']
  #allocation1 [shape = 'u32[72,128]{1,0:T(1,128)}', space=vmem, size = 0x9000, scoped, tag = 'internal scratch']
  %s0 = inlined_call_operand.vmem [shape: bf16[512,128], index: 0, kind: input, shape index: {}]
  %s1 = inlined_call_operand.vmem [shape: bf16[128,128], index: 1, kind: input, shape index: {}]
  %s2 = inlined_call_operand.vmem [shape: f32[512,128], index: 2, kind: output, shape index: {0}]
  %s3 = inlined_call_operand.vmem [shape: f32[1,2,128], index: 3, kind: output, shape index: {1}]
  %4 = xla_tuple %s2, %s3
  %s5 = sld [smem:[#allocation0]]
  $region26: #{encoder_forward.45} parent=0
    _
  %s7 = ssub.s32 1, %s5
  %s8 = scalar_select 0, %s7, %s5
  // Predicated region
  $region2: #{encoder_forward.45} parent=0 // pred_check
    _
  $region3: #{encoder_forward.45} parent=0 // pred_check_branch
    %10 = sbr.rel (0) target = $region5
  $region4: #{encoder_forward.45} parent=0 // pred_region
    _
  $region5: #{encoder_forward.45} parent=0 // pred_fallthru
    _
  // Predicated region
  $region6: #{encoder_forward.45} parent=0 // pred_check
    _
  $region7: #{encoder_forward.45} parent=0 // pred_check_branch
    %12 = sbr.rel (0) target = $region9
  $region8: #{encoder_forward.45} parent=0 // pred_region
    _
  $region9: #{encoder_forward.45} parent=0 // pred_fallthru
    _
  %v13 = vld [vmem:[%s0] sm:$0xf]
  %v14 = vld [vmem:[%s0 + $0x4] sm:$0xf]
  %v15 = vld [vmem:[%s0 + $0x8] sm:$0xf]
  %v16 = vld [vmem:[%s0 + $0xc] sm:$0xf]
  %v17 = vld [vmem:[%s0 + $0x10] sm:$0xf]
  %v18 = vld [vmem:[%s0 + $0x14] sm:$0xf]
  %v19 = vld [vmem:[%s0 + $0x18] sm:$0xf]
  %v20 = vld [vmem:[%s0 + $0x1c] sm:$0xf]
  %v21 = vld [vmem:[%s0 + $0x20] sm:$0xf]
  %v22 = vld [vmem:[%s0 + $0x24] sm:$0xf]
  %v23 = vld [vmem:[%s0 + $0x28] sm:$0xf]
  %v24 = vld [vmem:[%s0 + $0x2c] sm:$0xf]
  %v25 = vld [vmem:[%s0 + $0x30] sm:$0xf]
  %v26 = vld [vmem:[%s0 + $0x34] sm:$0xf]
  %v27 = vld [vmem:[%s0 + $0x38] sm:$0xf]
  %v28 = vld [vmem:[%s0 + $0x3c] sm:$0xf]
  %v29 = vld [vmem:[%s0 + $0x40] sm:$0xf]
  %v30 = vld [vmem:[%s0 + $0x44] sm:$0xf]
  %v31 = vld [vmem:[%s0 + $0x48] sm:$0xf]
  %v32 = vld [vmem:[%s0 + $0x4c] sm:$0xf]
  %v33 = vld [vmem:[%s0 + $0x50] sm:$0xf]
  %v34 = vld [vmem:[%s0 + $0x54] sm:$0xf]
  %v35 = vld [vmem:[%s0 + $0x58] sm:$0xf]
  %v36 = vld [vmem:[%s0 + $0x5c] sm:$0xf]
  %v37 = vld [vmem:[%s0 + $0x60] sm:$0xf]
  %v38 = vld [vmem:[%s0 + $0x64] sm:$0xf]
  %v39 = vld [vmem:[%s0 + $0x68] sm:$0xf]
  %v40 = vld [vmem:[%s0 + $0x6c] sm:$0xf]
  %v41 = vld [vmem:[%s0 + $0x70] sm:$0xf]
  %v42 = vld [vmem:[%s0 + $0x74] sm:$0xf]
  %v43 = vld [vmem:[%s0 + $0x78] sm:$0xf]
  %v44 = vld [vmem:[%s0 + $0x7c] sm:$0xf]
  %v45 = vld [vmem:[%s0 + $0x80] sm:$0xf]
  %v46 = vld [vmem:[%s0 + $0x84] sm:$0xf]
  %v47 = vld [vmem:[%s0 + $0x88] sm:$0xf]
  %v48 = vld [vmem:[%s0 + $0x8c] sm:$0xf]
  %v49 = vld [vmem:[%s0 + $0x90] sm:$0xf]
  %v50 = vld [vmem:[%s0 + $0x94] sm:$0xf]
  %v51 = vld [vmem:[%s0 + $0x98] sm:$0xf]
  %v52 = vld [vmem:[%s0 + $0x9c] sm:$0xf]
  %v53 = vld [vmem:[%s0 + $0xa0] sm:$0xf]
  %v54 = vld [vmem:[%s0 + $0xa4] sm:$0xf]
  %v55 = vld [vmem:[%s0 + $0xa8] sm:$0xf]
  %v56 = vld [vmem:[%s0 + $0xac] sm:$0xf]
  %v57 = vld [vmem:[%s0 + $0xb0] sm:$0xf]
  %v58 = vld [vmem:[%s0 + $0xb4] sm:$0xf]
  %v59 = vld [vmem:[%s0 + $0xb8] sm:$0xf]
  %v60 = vld [vmem:[%s0 + $0xbc] sm:$0xf]
  %v61 = vld [vmem:[%s0 + $0xc0] sm:$0xf]
  %v62 = vld [vmem:[%s0 + $0xc4] sm:$0xf]
  %v63 = vld [vmem:[%s0 + $0xc8] sm:$0xf]
  %v64 = vld [vmem:[%s0 + $0xcc] sm:$0xf]
  %v65 = vld [vmem:[%s0 + $0xd0] sm:$0xf]
  %v66 = vld [vmem:[%s0 + $0xd4] sm:$0xf]
  %v67 = vld [vmem:[%s0 + $0xd8] sm:$0xf]
  %v68 = vld [vmem:[%s0 + $0xdc] sm:$0xf]
  %v69 = vld [vmem:[%s0 + $0xe0] sm:$0xf]
  %v70 = vld [vmem:[%s0 + $0xe4] sm:$0xf]
  %v71 = vld [vmem:[%s0 + $0xe8] sm:$0xf]
  %v72 = vld [vmem:[%s0 + $0xec] sm:$0xf]
  %v73 = vld [vmem:[%s0 + $0xf0] sm:$0xf]
  %v74 = vld [vmem:[%s0 + $0xf4] sm:$0xf]
  %v75 = vld [vmem:[%s0 + $0xf8] sm:$0xf]
  %v76 = vld [vmem:[%s0 + $0xfc] sm:$0xf]
  %v77 = vld [vmem:[%s1] sm:$0xf]
  %v78 = vld [vmem:[%s1 + $0x4] sm:$0xf]
  %v79 = vld [vmem:[%s1 + $0x8] sm:$0xf]
  %v80 = vld [vmem:[%s1 + $0xc] sm:$0xf]
  %v81 = vld [vmem:[%s1 + $0x10] sm:$0xf]
  %v82 = vld [vmem:[%s1 + $0x14] sm:$0xf]
  %v83 = vld [vmem:[%s1 + $0x18] sm:$0xf]
  %v84 = vld [vmem:[%s1 + $0x1c] sm:$0xf]
  %v85 = vld [vmem:[%s1 + $0x20] sm:$0xf]
  %v86 = vld [vmem:[%s1 + $0x24] sm:$0xf]
  %v87 = vld [vmem:[%s1 + $0x28] sm:$0xf]
  %v88 = vld [vmem:[%s1 + $0x2c] sm:$0xf]
  %v89 = vld [vmem:[%s1 + $0x30] sm:$0xf]
  %v90 = vld [vmem:[%s1 + $0x34] sm:$0xf]
  %v91 = vld [vmem:[%s1 + $0x38] sm:$0xf]
  %v92 = vld [vmem:[%s1 + $0x3c] sm:$0xf]
  %v157 = vunpack.c.l.b16 %v13
  %v158 = vunpack.c.l.b16 %v14
  %v159 = vunpack.c.l.b16 %v15
  %v160 = vunpack.c.l.b16 %v16
  %v161 = vunpack.c.l.b16 %v17
  %v162 = vunpack.c.l.b16 %v18
  %v163 = vunpack.c.l.b16 %v19
  %v164 = vunpack.c.l.b16 %v20
  %v165 = vunpack.c.l.b16 %v21
  %v166 = vunpack.c.l.b16 %v22
  %v167 = vunpack.c.l.b16 %v23
  %v168 = vunpack.c.l.b16 %v24
  %v169 = vunpack.c.l.b16 %v25
  %v170 = vunpack.c.l.b16 %v26
  %v171 = vunpack.c.l.b16 %v27
  %v172 = vunpack.c.l.b16 %v28
  %v173 = vunpack.c.l.b16 %v29
  %v174 = vunpack.c.l.b16 %v30
  %v175 = vunpack.c.l.b16 %v31
  %v176 = vunpack.c.l.b16 %v32
  %v177 = vunpack.c.l.b16 %v33
  %v178 = vunpack.c.l.b16 %v34
  %v179 = vunpack.c.l.b16 %v35
  %v180 = vunpack.c.l.b16 %v36
  %v181 = vunpack.c.l.b16 %v37
  %v182 = vunpack.c.l.b16 %v38
  %v183 = vunpack.c.l.b16 %v39
  %v184 = vunpack.c.l.b16 %v40
  %v185 = vunpack.c.l.b16 %v41
  %v186 = vunpack.c.l.b16 %v42
  %v187 = vunpack.c.l.b16 %v43
  %v188 = vunpack.c.l.b16 %v44
  %v189 = vunpack.c.l.b16 %v45
  %v190 = vunpack.c.l.b16 %v46
  %v191 = vunpack.c.l.b16 %v47
  %v192 = vunpack.c.l.b16 %v48
  %v193 = vunpack.c.l.b16 %v49
  %v194 = vunpack.c.l.b16 %v50
  %v195 = vunpack.c.l.b16 %v51
  %v196 = vunpack.c.l.b16 %v52
  %v197 = vunpack.c.l.b16 %v53
  %v198 = vunpack.c.l.b16 %v54
  %v199 = vunpack.c.l.b16 %v55
  %v200 = vunpack.c.l.b16 %v56
  %v201 = vunpack.c.l.b16 %v57
  %v202 = vunpack.c.l.b16 %v58
  %v203 = vunpack.c.l.b16 %v59
  %v204 = vunpack.c.l.b16 %v60
  %v205 = vunpack.c.l.b16 %v61
  %v206 = vunpack.c.l.b16 %v62
  %v207 = vunpack.c.l.b16 %v63
  %v208 = vunpack.c.l.b16 %v64
  %v209 = vunpack.c.l.b16 %v65
  %v210 = vunpack.c.l.b16 %v66
  %v211 = vunpack.c.l.b16 %v67
  %v212 = vunpack.c.l.b16 %v68
  %v213 = vunpack.c.l.b16 %v69
  %v214 = vunpack.c.l.b16 %v70
  %v215 = vunpack.c.l.b16 %v71
  %v216 = vunpack.c.l.b16 %v72
  %v217 = vunpack.c.l.b16 %v73
  %v218 = vunpack.c.l.b16 %v74
  %v219 = vunpack.c.l.b16 %v75
  %v220 = vunpack.c.l.b16 %v76
  %v221 = vpack.c.b16 %v158, %v157
  %v222 = vpack.c.b16 %v160, %v159
  %v223 = vpack.c.b16 %v162, %v161
  %v224 = vpack.c.b16 %v164, %v163
  %v225 = vpack.c.b16 %v166, %v165
  %v226 = vpack.c.b16 %v168, %v167
  %v227 = vpack.c.b16 %v170, %v169
  %v228 = vpack.c.b16 %v172, %v171
  %v229 = vpack.c.b16 %v174, %v173
  %v230 = vpack.c.b16 %v176, %v175
  %v231 = vpack.c.b16 %v178, %v177
  %v232 = vpack.c.b16 %v180, %v179
  %v233 = vpack.c.b16 %v182, %v181
  %v234 = vpack.c.b16 %v184, %v183
  %v235 = vpack.c.b16 %v186, %v185
  %v236 = vpack.c.b16 %v188, %v187
  %v237 = vpack.c.b16 %v190, %v189
  %v238 = vpack.c.b16 %v192, %v191
  %v239 = vpack.c.b16 %v194, %v193
  %v240 = vpack.c.b16 %v196, %v195
  %v241 = vpack.c.b16 %v198, %v197
  %v242 = vpack.c.b16 %v200, %v199
  %v243 = vpack.c.b16 %v202, %v201
  %v244 = vpack.c.b16 %v204, %v203
  %v245 = vpack.c.b16 %v206, %v205
  %v246 = vpack.c.b16 %v208, %v207
  %v247 = vpack.c.b16 %v210, %v209
  %v248 = vpack.c.b16 %v212, %v211
  %v249 = vpack.c.b16 %v214, %v213
  %v250 = vpack.c.b16 %v216, %v215
  %v251 = vpack.c.b16 %v218, %v217
  %v252 = vpack.c.b16 %v220, %v219
  %v301 = vunpack.c.l.b16 %v77
  %v302 = vunpack.c.l.b16 %v78
  %v303 = vunpack.c.l.b16 %v79
  %v304 = vunpack.c.l.b16 %v80
  %v305 = vunpack.c.l.b16 %v81
  %v306 = vunpack.c.l.b16 %v82
  %v307 = vunpack.c.l.b16 %v83
  %v308 = vunpack.c.l.b16 %v84
  %v309 = vunpack.c.l.b16 %v85
  %v310 = vunpack.c.l.b16 %v86
  %v311 = vunpack.c.l.b16 %v87
  %v312 = vunpack.c.l.b16 %v88
  %v313 = vunpack.c.l.b16 %v89
  %v314 = vunpack.c.l.b16 %v90
  %v315 = vunpack.c.l.b16 %v91
  %v316 = vunpack.c.l.b16 %v92
  %v317 = vpack.c.b16 %v302, %v301
  %v318 = vpack.c.b16 %v304, %v303
  %v319 = vpack.c.b16 %v306, %v305
  %v320 = vpack.c.b16 %v308, %v307
  %v321 = vpack.c.b16 %v310, %v309
  %v322 = vpack.c.b16 %v312, %v311
  %v323 = vpack.c.b16 %v314, %v313
  %v324 = vpack.c.b16 %v316, %v315
  %333 = vmatpush.bf16.msra.mxu0 %v324
  %334 = vmatpush.bf16.msra.mxu0 %v323
  %335 = vmatpush.bf16.msra.mxu0 %v322
  %336 = vmatpush.bf16.msra.mxu0 %v321
  %337 = vmatpush.bf16.msra.mxu0 %v320
  %338 = vmatpush.bf16.msra.mxu0 %v319
  %339 = vmatpush.bf16.msra.mxu0 %v318
  %340 = vmatpush.bf16.msra.mxu0 %v317
  %341 = vmatmul.bf16.gmra.mxu0 %v221
  %v342 = vpop.f32.mrf.mxu0
  %v343 = vadd.f32 0.0, %v342
  %v344 = vpop.f32.mrf.mxu0
  %v345 = vadd.f32 0.0, %v344
  %346 = vmatmul.bf16.gmra.mxu0 %v222
  %v347 = vpop.f32.mrf.mxu0
  %v348 = vadd.f32 0.0, %v347
  %v349 = vpop.f32.mrf.mxu0
  %v350 = vadd.f32 0.0, %v349
  %351 = vmatmul.bf16.gmra.mxu0 %v223
  %v352 = vpop.f32.mrf.mxu0
  %v353 = vadd.f32 0.0, %v352
  %v354 = vpop.f32.mrf.mxu0
  %v355 = vadd.f32 0.0, %v354
  %356 = vmatmul.bf16.gmra.mxu0 %v224
  %v357 = vpop.f32.mrf.mxu0
  %v358 = vadd.f32 0.0, %v357
  %v359 = vpop.f32.mrf.mxu0
  %v360 = vadd.f32 0.0, %v359
  %361 = vmatmul.bf16.gmra.mxu0 %v225
  %v362 = vpop.f32.mrf.mxu0
  %v363 = vadd.f32 0.0, %v362
  %v364 = vpop.f32.mrf.mxu0
  %v365 = vadd.f32 0.0, %v364
  %366 = vmatmul.bf16.gmra.mxu0 %v226
  %v367 = vpop.f32.mrf.mxu0
  %v368 = vadd.f32 0.0, %v367
  %v369 = vpop.f32.mrf.mxu0
  %v370 = vadd.f32 0.0, %v369
  %371 = vmatmul.bf16.gmra.mxu0 %v227
  %v372 = vpop.f32.mrf.mxu0
  %v373 = vadd.f32 0.0, %v372
  %v374 = vpop.f32.mrf.mxu0
  %v375 = vadd.f32 0.0, %v374
  %376 = vmatmul.bf16.gmra.mxu0 %v228
  %v377 = vpop.f32.mrf.mxu0
  %v378 = vadd.f32 0.0, %v377
  %v379 = vpop.f32.mrf.mxu0
  %v380 = vadd.f32 0.0, %v379
  %381 = vmatmul.bf16.gmra.mxu0 %v229
  %v382 = vpop.f32.mrf.mxu0
  %v383 = vadd.f32 0.0, %v382
  %v384 = vpop.f32.mrf.mxu0
  %v385 = vadd.f32 0.0, %v384
  %386 = vmatmul.bf16.gmra.mxu0 %v230
  %v387 = vpop.f32.mrf.mxu0
  %v388 = vadd.f32 0.0, %v387
  %v389 = vpop.f32.mrf.mxu0
  %v390 = vadd.f32 0.0, %v389
  %391 = vmatmul.bf16.gmra.mxu0 %v231
  %v392 = vpop.f32.mrf.mxu0
  %v393 = vadd.f32 0.0, %v392
  %v394 = vpop.f32.mrf.mxu0
  %v395 = vadd.f32 0.0, %v394
  %396 = vmatmul.bf16.gmra.mxu0 %v232
  %v397 = vpop.f32.mrf.mxu0
  %v398 = vadd.f32 0.0, %v397
  %v399 = vpop.f32.mrf.mxu0
  %v400 = vadd.f32 0.0, %v399
  %401 = vmatmul.bf16.gmra.mxu0 %v233
  %v402 = vpop.f32.mrf.mxu0
  %v403 = vadd.f32 0.0, %v402
  %v404 = vpop.f32.mrf.mxu0
  %v405 = vadd.f32 0.0, %v404
  %406 = vmatmul.bf16.gmra.mxu0 %v234
  %v407 = vpop.f32.mrf.mxu0
  %v408 = vadd.f32 0.0, %v407
  %v409 = vpop.f32.mrf.mxu0
  %v410 = vadd.f32 0.0, %v409
  %411 = vmatmul.bf16.gmra.mxu0 %v235
  %v412 = vpop.f32.mrf.mxu0
  %v413 = vadd.f32 0.0, %v412
  %v414 = vpop.f32.mrf.mxu0
  %v415 = vadd.f32 0.0, %v414
  %416 = vmatmul.bf16.gmra.mxu0 %v236
  %v417 = vpop.f32.mrf.mxu0
  %v418 = vadd.f32 0.0, %v417
  %v419 = vpop.f32.mrf.mxu0
  %v420 = vadd.f32 0.0, %v419
  %421 = vmatmul.bf16.gmra.mxu0 %v237
  %v422 = vpop.f32.mrf.mxu0
  %v423 = vadd.f32 0.0, %v422
  %v424 = vpop.f32.mrf.mxu0
  %v425 = vadd.f32 0.0, %v424
  %426 = vmatmul.bf16.gmra.mxu0 %v238
  %v427 = vpop.f32.mrf.mxu0
  %v428 = vadd.f32 0.0, %v427
  %v429 = vpop.f32.mrf.mxu0
  %v430 = vadd.f32 0.0, %v429
  %431 = vmatmul.bf16.gmra.mxu0 %v239
  %v432 = vpop.f32.mrf.mxu0
  %v433 = vadd.f32 0.0, %v432
  %v434 = vpop.f32.mrf.mxu0
  %v435 = vadd.f32 0.0, %v434
  %436 = vmatmul.bf16.gmra.mxu0 %v240
  %v437 = vpop.f32.mrf.mxu0
  %v438 = vadd.f32 0.0, %v437
  %v439 = vpop.f32.mrf.mxu0
  %v440 = vadd.f32 0.0, %v439
  %441 = vmatmul.bf16.gmra.mxu0 %v241
  %v442 = vpop.f32.mrf.mxu0
  %v443 = vadd.f32 0.0, %v442
  %v444 = vpop.f32.mrf.mxu0
  %v445 = vadd.f32 0.0, %v444
  %446 = vmatmul.bf16.gmra.mxu0 %v242
  %v447 = vpop.f32.mrf.mxu0
  %v448 = vadd.f32 0.0, %v447
  %v449 = vpop.f32.mrf.mxu0
  %v450 = vadd.f32 0.0, %v449
  %451 = vmatmul.bf16.gmra.mxu0 %v243
  %v452 = vpop.f32.mrf.mxu0
  %v453 = vadd.f32 0.0, %v452
  %v454 = vpop.f32.mrf.mxu0
  %v455 = vadd.f32 0.0, %v454
  %456 = vmatmul.bf16.gmra.mxu0 %v244
  %v457 = vpop.f32.mrf.mxu0
  %v458 = vadd.f32 0.0, %v457
  %v459 = vpop.f32.mrf.mxu0
  %v460 = vadd.f32 0.0, %v459
  %461 = vmatmul.bf16.gmra.mxu0 %v245
  %v462 = vpop.f32.mrf.mxu0
  %v463 = vadd.f32 0.0, %v462
  %v464 = vpop.f32.mrf.mxu0
  %v465 = vadd.f32 0.0, %v464
  %466 = vmatmul.bf16.gmra.mxu0 %v246
  %v467 = vpop.f32.mrf.mxu0
  %v468 = vadd.f32 0.0, %v467
  %v469 = vpop.f32.mrf.mxu0
  %v470 = vadd.f32 0.0, %v469
  %471 = vmatmul.bf16.gmra.mxu0 %v247
  %v472 = vpop.f32.mrf.mxu0
  %v473 = vadd.f32 0.0, %v472
  %v474 = vpop.f32.mrf.mxu0
  %v475 = vadd.f32 0.0, %v474
  %476 = vmatmul.bf16.gmra.mxu0 %v248
  %v477 = vpop.f32.mrf.mxu0
  %v478 = vadd.f32 0.0, %v477
  %v479 = vpop.f32.mrf.mxu0
  %v480 = vadd.f32 0.0, %v479
  %481 = vmatmul.bf16.gmra.mxu0 %v249
  %v482 = vpop.f32.mrf.mxu0
  %v483 = vadd.f32 0.0, %v482
  %v484 = vpop.f32.mrf.mxu0
  %v485 = vadd.f32 0.0, %v484
  %486 = vmatmul.bf16.gmra.mxu0 %v250
  %v487 = vpop.f32.mrf.mxu0
  %v488 = vadd.f32 0.0, %v487
  %v489 = vpop.f32.mrf.mxu0
  %v490 = vadd.f32 0.0, %v489
  %491 = vmatmul.bf16.gmra.mxu0 %v251
  %v492 = vpop.f32.mrf.mxu0
  %v493 = vadd.f32 0.0, %v492
  %v494 = vpop.f32.mrf.mxu0
  %v495 = vadd.f32 0.0, %v494
  %496 = vmatmul.bf16.gmra.mxu0 %v252
  %v497 = vpop.f32.mrf.mxu0
  %v498 = vadd.f32 0.0, %v497
  %v499 = vpop.f32.mrf.mxu0
  %v500 = vadd.f32 0.0, %v499
  %501 = vdwg.mxu0
  %502 = vst [vmem:[%s2] sm:$0xff] %v343
  %503 = vst [vmem:[%s2 + $0x8] sm:$0xff] %v345
  %504 = vst [vmem:[%s2 + $0x10] sm:$0xff] %v348
  %505 = vst [vmem:[%s2 + $0x18] sm:$0xff] %v350
  %506 = vst [vmem:[%s2 + $0x20] sm:$0xff] %v353
  %507 = vst [vmem:[%s2 + $0x28] sm:$0xff] %v355
  %508 = vst [vmem:[%s2 + $0x30] sm:$0xff] %v358
  %509 = vst [vmem:[%s2 + $0x38] sm:$0xff] %v360
  %510 = vst [vmem:[%s2 + $0x40] sm:$0xff] %v363
  %511 = vst [vmem:[%s2 + $0x48] sm:$0xff] %v365
  %512 = vst [vmem:[%s2 + $0x50] sm:$0xff] %v368
  %513 = vst [vmem:[%s2 + $0x58] sm:$0xff] %v370
  %514 = vst [vmem:[%s2 + $0x60] sm:$0xff] %v373
  %515 = vst [vmem:[%s2 + $0x68] sm:$0xff] %v375
  %516 = vst [vmem:[%s2 + $0x70] sm:$0xff] %v378
  %517 = vst [vmem:[%s2 + $0x78] sm:$0xff] %v380
  %518 = vst [vmem:[%s2 + $0x80] sm:$0xff] %v383
  %519 = vst [vmem:[%s2 + $0x88] sm:$0xff] %v385
  %520 = vst [vmem:[%s2 + $0x90] sm:$0xff] %v388
  %521 = vst [vmem:[%s2 + $0x98] sm:$0xff] %v390
  %522 = vst [vmem:[%s2 + $0xa0] sm:$0xff] %v393
  %523 = vst [vmem:[%s2 + $0xa8] sm:$0xff] %v395
  %524 = vst [vmem:[%s2 + $0xb0] sm:$0xff] %v398
  %525 = vst [vmem:[%s2 + $0xb8] sm:$0xff] %v400
  %526 = vst [vmem:[%s2 + $0xc0] sm:$0xff] %v403
  %527 = vst [vmem:[%s2 + $0xc8] sm:$0xff] %v405
  %528 = vst [vmem:[%s2 + $0xd0] sm:$0xff] %v408
  %529 = vst [vmem:[%s2 + $0xd8] sm:$0xff] %v410
  %530 = vst [vmem:[%s2 + $0xe0] sm:$0xff] %v413
  %531 = vst [vmem:[%s2 + $0xe8] sm:$0xff] %v415
  %532 = vst [vmem:[%s2 + $0xf0] sm:$0xff] %v418
  %533 = vst [vmem:[%s2 + $0xf8] sm:$0xff] %v420
  %534 = vst [vmem:[%s2 + $0x100] sm:$0xff] %v423
  %535 = vst [vmem:[%s2 + $0x108] sm:$0xff] %v425
  %536 = vst [vmem:[%s2 + $0x110] sm:$0xff] %v428
  %537 = vst [vmem:[%s2 + $0x118] sm:$0xff] %v430
  %538 = vst [vmem:[%s2 + $0x120] sm:$0xff] %v433
  %539 = vst [vmem:[%s2 + $0x128] sm:$0xff] %v435
  %540 = vst [vmem:[%s2 + $0x130] sm:$0xff] %v438
  %541 = vst [vmem:[%s2 + $0x138] sm:$0xff] %v440
  %542 = vst [vmem:[%s2 + $0x140] sm:$0xff] %v443
  %543 = vst [vmem:[%s2 + $0x148] sm:$0xff] %v445
  %544 = vst [vmem:[%s2 + $0x150] sm:$0xff] %v448
  %545 = vst [vmem:[%s2 + $0x158] sm:$0xff] %v450
  %546 = vst [vmem:[%s2 + $0x160] sm:$0xff] %v453
  %547 = vst [vmem:[%s2 + $0x168] sm:$0xff] %v455
  %548 = vst [vmem:[%s2 + $0x170] sm:$0xff] %v458
  %549 = vst [vmem:[%s2 + $0x178] sm:$0xff] %v460
  %550 = vst [vmem:[%s2 + $0x180] sm:$0xff] %v463
  %551 = vst [vmem:[%s2 + $0x188] sm:$0xff] %v465
  %552 = vst [vmem:[%s2 + $0x190] sm:$0xff] %v468
  %553 = vst [vmem:[%s2 + $0x198] sm:$0xff] %v470
  %554 = vst [vmem:[%s2 + $0x1a0] sm:$0xff] %v473
  %555 = vst [vmem:[%s2 + $0x1a8] sm:$0xff] %v475
  %556 = vst [vmem:[%s2 + $0x1b0] sm:$0xff] %v478
  %557 = vst [vmem:[%s2 + $0x1b8] sm:$0xff] %v480
  %558 = vst [vmem:[%s2 + $0x1c0] sm:$0xff] %v483
  %559 = vst [vmem:[%s2 + $0x1c8] sm:$0xff] %v485
  %560 = vst [vmem:[%s2 + $0x1d0] sm:$0xff] %v488
  %561 = vst [vmem:[%s2 + $0x1d8] sm:$0xff] %v490
  %562 = vst [vmem:[%s2 + $0x1e0] sm:$0xff] %v493
  %563 = vst [vmem:[%s2 + $0x1e8] sm:$0xff] %v495
  %564 = vst [vmem:[%s2 + $0x1f0] sm:$0xff] %v498
  %565 = vst [vmem:[%s2 + $0x1f8] sm:$0xff] %v500
  %v566 = vadd.f32 %v343, %v345
  %v567 = vadd.f32 %v566, %v348
  %v568 = vadd.f32 %v567, %v350
  %v569 = vadd.f32 %v568, %v353
  %v570 = vadd.f32 %v569, %v355
  %v571 = vadd.f32 %v570, %v358
  %v572 = vadd.f32 %v571, %v360
  %v573 = vadd.f32 %v572, %v363
  %v574 = vadd.f32 %v573, %v365
  %v575 = vadd.f32 %v574, %v368
  %v576 = vadd.f32 %v575, %v370
  %v577 = vadd.f32 %v576, %v373
  %v578 = vadd.f32 %v577, %v375
  %v579 = vadd.f32 %v578, %v378
  %v580 = vadd.f32 %v579, %v380
  %v581 = vadd.f32 %v580, %v383
  %v582 = vadd.f32 %v581, %v385
  %v583 = vadd.f32 %v582, %v388
  %v584 = vadd.f32 %v583, %v390
  %v585 = vadd.f32 %v584, %v393
  %v586 = vadd.f32 %v585, %v395
  %v587 = vadd.f32 %v586, %v398
  %v588 = vadd.f32 %v587, %v400
  %v589 = vadd.f32 %v588, %v403
  %v590 = vadd.f32 %v589, %v405
  %v591 = vadd.f32 %v590, %v408
  %v592 = vadd.f32 %v591, %v410
  %v593 = vadd.f32 %v592, %v413
  %v594 = vadd.f32 %v593, %v415
  %v595 = vadd.f32 %v594, %v418
  %v596 = vadd.f32 %v595, %v420
  %v597 = vadd.f32 %v596, %v423
  %v598 = vadd.f32 %v597, %v425
  %v599 = vadd.f32 %v598, %v428
  %v600 = vadd.f32 %v599, %v430
  %v601 = vadd.f32 %v600, %v433
  %v602 = vadd.f32 %v601, %v435
  %v603 = vadd.f32 %v602, %v438
  %v604 = vadd.f32 %v603, %v440
  %v605 = vadd.f32 %v604, %v443
  %v606 = vadd.f32 %v605, %v445
  %v607 = vadd.f32 %v606, %v448
  %v608 = vadd.f32 %v607, %v450
  %v609 = vadd.f32 %v608, %v453
  %v610 = vadd.f32 %v609, %v455
  %v611 = vadd.f32 %v610, %v458
  %v612 = vadd.f32 %v611, %v460
  %v613 = vadd.f32 %v612, %v463
  %v614 = vadd.f32 %v613, %v465
  %v615 = vadd.f32 %v614, %v468
  %v616 = vadd.f32 %v615, %v470
  %v617 = vadd.f32 %v616, %v473
  %v618 = vadd.f32 %v617, %v475
  %v619 = vadd.f32 %v618, %v478
  %v620 = vadd.f32 %v619, %v480
  %v621 = vadd.f32 %v620, %v483
  %v622 = vadd.f32 %v621, %v485
  %v623 = vadd.f32 %v622, %v488
  %v624 = vadd.f32 %v623, %v490
  %v625 = vadd.f32 %v624, %v493
  %v626 = vadd.f32 %v625, %v495
  %v627 = vadd.f32 %v626, %v498
  %v628 = vadd.f32 %v627, %v500
  %v629 = vrot.slane %v628, 4
  %v630 = vadd.f32 %v628, %v629
  %v631 = vrot.slane %v630, 2
  %v632 = vadd.f32 %v630, %v631
  %v633 = vrot.slane %v632, 1
  %v634 = vadd.f32 %v632, %v633
  %v635 = vmul.f32 %v343, %v343
  %v636 = vmul.f32 %v345, %v345
  %v637 = vmul.f32 %v348, %v348
  %v638 = vmul.f32 %v350, %v350
  %v639 = vmul.f32 %v353, %v353
  %v640 = vmul.f32 %v355, %v355
  %v641 = vmul.f32 %v358, %v358
  %v642 = vmul.f32 %v360, %v360
  %v643 = vmul.f32 %v363, %v363
  %v644 = vmul.f32 %v365, %v365
  %v645 = vmul.f32 %v368, %v368
  %v646 = vmul.f32 %v370, %v370
  %v647 = vmul.f32 %v373, %v373
  %v648 = vmul.f32 %v375, %v375
  %v649 = vmul.f32 %v378, %v378
  %v650 = vmul.f32 %v380, %v380
  %v651 = vmul.f32 %v383, %v383
  %v652 = vmul.f32 %v385, %v385
  %v653 = vmul.f32 %v388, %v388
  %v654 = vmul.f32 %v390, %v390
  %v655 = vmul.f32 %v393, %v393
  %v656 = vmul.f32 %v395, %v395
  %v657 = vmul.f32 %v398, %v398
  %v658 = vmul.f32 %v400, %v400
  %v659 = vmul.f32 %v403, %v403
  %v660 = vmul.f32 %v405, %v405
  %v661 = vmul.f32 %v408, %v408
  %v662 = vmul.f32 %v410, %v410
  %v663 = vmul.f32 %v413, %v413
  %v664 = vmul.f32 %v415, %v415
  %v665 = vmul.f32 %v418, %v418
  %v666 = vmul.f32 %v420, %v420
  %v667 = vmul.f32 %v423, %v423
  %v668 = vmul.f32 %v425, %v425
  %v669 = vmul.f32 %v428, %v428
  %v670 = vmul.f32 %v430, %v430
  %v671 = vmul.f32 %v433, %v433
  %v672 = vmul.f32 %v435, %v435
  %v673 = vmul.f32 %v438, %v438
  %v674 = vmul.f32 %v440, %v440
  %v675 = vmul.f32 %v443, %v443
  %v676 = vmul.f32 %v445, %v445
  %v677 = vmul.f32 %v448, %v448
  %v678 = vmul.f32 %v450, %v450
  %v679 = vmul.f32 %v453, %v453
  %v680 = vmul.f32 %v455, %v455
  %v681 = vmul.f32 %v458, %v458
  %v682 = vmul.f32 %v460, %v460
  %v683 = vmul.f32 %v463, %v463
  %v684 = vmul.f32 %v465, %v465
  %v685 = vmul.f32 %v468, %v468
  %v686 = vmul.f32 %v470, %v470
  %v687 = vmul.f32 %v473, %v473
  %v688 = vmul.f32 %v475, %v475
  %v689 = vmul.f32 %v478, %v478
  %v690 = vmul.f32 %v480, %v480
  %v691 = vmul.f32 %v483, %v483
  %v692 = vmul.f32 %v485, %v485
  %v693 = vmul.f32 %v488, %v488
  %v694 = vmul.f32 %v490, %v490
  %v695 = vmul.f32 %v493, %v493
  %v696 = vmul.f32 %v495, %v495
  %v697 = vmul.f32 %v498, %v498
  %v698 = vmul.f32 %v500, %v500
  %v699 = vadd.f32 %v635, %v636
  %v700 = vadd.f32 %v699, %v637
  %v701 = vadd.f32 %v700, %v638
  %v702 = vadd.f32 %v701, %v639
  %v703 = vadd.f32 %v702, %v640
  %v704 = vadd.f32 %v703, %v641
  %v705 = vadd.f32 %v704, %v642
  %v706 = vadd.f32 %v705, %v643
  %v707 = vadd.f32 %v706, %v644
  %v708 = vadd.f32 %v707, %v645
  %v709 = vadd.f32 %v708, %v646
  %v710 = vadd.f32 %v709, %v647
  %v711 = vadd.f32 %v710, %v648
  %v712 = vadd.f32 %v711, %v649
  %v713 = vadd.f32 %v712, %v650
  %v714 = vadd.f32 %v713, %v651
  %v715 = vadd.f32 %v714, %v652
  %v716 = vadd.f32 %v715, %v653
  %v717 = vadd.f32 %v716, %v654
  %v718 = vadd.f32 %v717, %v655
  %v719 = vadd.f32 %v718, %v656
  %v720 = vadd.f32 %v719, %v657
  %v721 = vadd.f32 %v720, %v658
  %v722 = vadd.f32 %v721, %v659
  %v723 = vadd.f32 %v722, %v660
  %v724 = vadd.f32 %v723, %v661
  %v725 = vadd.f32 %v724, %v662
  %v726 = vadd.f32 %v725, %v663
  %v727 = vadd.f32 %v726, %v664
  %v728 = vadd.f32 %v727, %v665
  %v729 = vadd.f32 %v728, %v666
  %v730 = vadd.f32 %v729, %v667
  %v731 = vadd.f32 %v730, %v668
  %v732 = vadd.f32 %v731, %v669
  %v733 = vadd.f32 %v732, %v670
  %v734 = vadd.f32 %v733, %v671
  %v735 = vadd.f32 %v734, %v672
  %v736 = vadd.f32 %v735, %v673
  %v737 = vadd.f32 %v736, %v674
  %v738 = vadd.f32 %v737, %v675
  %v739 = vadd.f32 %v738, %v676
  %v740 = vadd.f32 %v739, %v677
  %v741 = vadd.f32 %v740, %v678
  %v742 = vadd.f32 %v741, %v679
  %v743 = vadd.f32 %v742, %v680
  %v744 = vadd.f32 %v743, %v681
  %v745 = vadd.f32 %v744, %v682
  %v746 = vadd.f32 %v745, %v683
  %v747 = vadd.f32 %v746, %v684
  %v748 = vadd.f32 %v747, %v685
  %v749 = vadd.f32 %v748, %v686
  %v750 = vadd.f32 %v749, %v687
  %v751 = vadd.f32 %v750, %v688
  %v752 = vadd.f32 %v751, %v689
  %v753 = vadd.f32 %v752, %v690
  %v754 = vadd.f32 %v753, %v691
  %v755 = vadd.f32 %v754, %v692
  %v756 = vadd.f32 %v755, %v693
  %v757 = vadd.f32 %v756, %v694
  %v758 = vadd.f32 %v757, %v695
  %v759 = vadd.f32 %v758, %v696
  %v760 = vadd.f32 %v759, %v697
  %v761 = vadd.f32 %v760, %v698
  %v762 = vrot.slane %v761, 4
  %v763 = vadd.f32 %v761, %v762
  %v764 = vrot.slane %v763, 2
  %v765 = vadd.f32 %v763, %v764
  %v766 = vrot.slane %v765, 1
  %v767 = vadd.f32 %v765, %v766
  %vm768 = vcmask 1040384
  %v769 = vsel %vm768, %v634, %v767
  %770 = vst [vmem:[%s3] sm:$0x3] %v769
  // Predicated region
  $region10: #{encoder_forward.45} parent=0 // pred_check
    _
  $region11: #{encoder_forward.45} parent=0 // pred_check_branch
    %772 = sbr.rel (0) target = $region13
  $region12: #{encoder_forward.45} parent=0 // pred_region
    _
  $region13: #{encoder_forward.45} parent=0 // pred_fallthru
    _
  // Predicated region
  $region14: #{encoder_forward.45} parent=0 // pred_check
    _
  $region15: #{encoder_forward.45} parent=0 // pred_check_branch
    %774 = sbr.rel (0) target = $region17
  $region16: #{encoder_forward.45} parent=0 // pred_region
    _
  $region17: #{encoder_forward.45} parent=0 // pred_fallthru
    _
  // Predicated region
  $region18: #{encoder_forward.45} parent=0 // pred_check
    _
  $region19: #{encoder_forward.45} parent=0 // pred_check_branch
    %776 = sbr.rel (0) target = $region21
  $region20: #{encoder_forward.45} parent=0 // pred_region
    _
  $region21: #{encoder_forward.45} parent=0 // pred_fallthru
    _
  // Predicated region
  $region22: #{encoder_forward.45} parent=0 // pred_check
    _
  $region23: #{encoder_forward.45} parent=0 // pred_check_branch
    %778 = sbr.rel (0) target = $region25
  $region24: #{encoder_forward.45} parent=0 // pred_region
    _
  $region25: #{encoder_forward.45} parent=0 // pred_fallthru
    _

// kernel: encoder_forward.48
$region0: #{encoder_forward.48}
  #allocation0 [shape = 'u32[]', space=smem, size = 0x4, offset = 0x4, fixed_abs, tag = 'smem constant byte address 0x4 - core index']
  #allocation1 [shape = 'u32[72,128]{1,0:T(1,128)}', space=vmem, size = 0x9000, scoped, tag = 'internal scratch']
  %s0 = inlined_call_operand.vmem [shape: f32[128,128], index: 0, kind: input, shape index: {}]
  %s1 = inlined_call_operand.vmem [shape: f32[1,128], index: 1, kind: input, shape index: {}]
  %s2 = inlined_call_operand.vmem [shape: f32[1,128], index: 2, kind: input, shape index: {}]
  %s3 = inlined_call_operand.vmem [shape: f32[128,128], index: 3, kind: output, shape index: {}]
  %s4 = sld [smem:[#allocation0]]
  $region22: #{encoder_forward.48} parent=0
    _
  %s6 = ssub.s32 1, %s4
  %s7 = scalar_select 0, %s6, %s4
  // Predicated region
  $region2: #{encoder_forward.48} parent=0 // pred_check
    _
  $region3: #{encoder_forward.48} parent=0 // pred_check_branch
    %9 = sbr.rel (0) target = $region5
  $region4: #{encoder_forward.48} parent=0 // pred_region
    _
  $region5: #{encoder_forward.48} parent=0 // pred_fallthru
    _
  // Predicated region
  $region6: #{encoder_forward.48} parent=0 // pred_check
    _
  $region7: #{encoder_forward.48} parent=0 // pred_check_branch
    %11 = sbr.rel (0) target = $region9
  $region8: #{encoder_forward.48} parent=0 // pred_region
    _
  $region9: #{encoder_forward.48} parent=0 // pred_fallthru
    _
  // Predicated region
  $region10: #{encoder_forward.48} parent=0 // pred_check
    _
  $region11: #{encoder_forward.48} parent=0 // pred_check_branch
    %13 = sbr.rel (0) target = $region13
  $region12: #{encoder_forward.48} parent=0 // pred_region
    _
  $region13: #{encoder_forward.48} parent=0 // pred_fallthru
    _
  %v14 = vld [vmem:[%s0] sm:$0xff]
  %v15 = vld [vmem:[%s0 + $0x8] sm:$0xff]
  %v16 = vld [vmem:[%s0 + $0x10] sm:$0xff]
  %v17 = vld [vmem:[%s0 + $0x18] sm:$0xff]
  %v18 = vld [vmem:[%s0 + $0x20] sm:$0xff]
  %v19 = vld [vmem:[%s0 + $0x28] sm:$0xff]
  %v20 = vld [vmem:[%s0 + $0x30] sm:$0xff]
  %v21 = vld [vmem:[%s0 + $0x38] sm:$0xff]
  %v22 = vld [vmem:[%s0 + $0x40] sm:$0xff]
  %v23 = vld [vmem:[%s0 + $0x48] sm:$0xff]
  %v24 = vld [vmem:[%s0 + $0x50] sm:$0xff]
  %v25 = vld [vmem:[%s0 + $0x58] sm:$0xff]
  %v26 = vld [vmem:[%s0 + $0x60] sm:$0xff]
  %v27 = vld [vmem:[%s0 + $0x68] sm:$0xff]
  %v28 = vld [vmem:[%s0 + $0x70] sm:$0xff]
  %v29 = vld [vmem:[%s0 + $0x78] sm:$0xff]
  %v30 = vld [vmem:[%s1] sm:$0x1]
  %v32 = vperm.slane %v30, 0
  %v34 = vmul.f32 %v14, %v32
  %v35 = vmul.f32 %v15, %v32
  %v36 = vmul.f32 %v16, %v32
  %v37 = vmul.f32 %v17, %v32
  %v38 = vmul.f32 %v18, %v32
  %v39 = vmul.f32 %v19, %v32
  %v40 = vmul.f32 %v20, %v32
  %v41 = vmul.f32 %v21, %v32
  %v42 = vmul.f32 %v22, %v32
  %v43 = vmul.f32 %v23, %v32
  %v44 = vmul.f32 %v24, %v32
  %v45 = vmul.f32 %v25, %v32
  %v46 = vmul.f32 %v26, %v32
  %v47 = vmul.f32 %v27, %v32
  %v48 = vmul.f32 %v28, %v32
  %v49 = vmul.f32 %v29, %v32
  %v50 = vld [vmem:[%s2] sm:$0x1]
  %v52 = vperm.slane %v50, 0
  %v54 = vadd.f32 %v34, %v52
  %v55 = vadd.f32 %v35, %v52
  %v56 = vadd.f32 %v36, %v52
  %v57 = vadd.f32 %v37, %v52
  %v58 = vadd.f32 %v38, %v52
  %v59 = vadd.f32 %v39, %v52
  %v60 = vadd.f32 %v40, %v52
  %v61 = vadd.f32 %v41, %v52
  %v62 = vadd.f32 %v42, %v52
  %v63 = vadd.f32 %v43, %v52
  %v64 = vadd.f32 %v44, %v52
  %v65 = vadd.f32 %v45, %v52
  %v66 = vadd.f32 %v46, %v52
  %v67 = vadd.f32 %v47, %v52
  %v68 = vadd.f32 %v48, %v52
  %v69 = vadd.f32 %v49, %v52
  %vm70 = vcmp.ge.f32.partialorder %v54, 0.0
  %vm71 = vcmp.ge.f32.partialorder %v55, 0.0
  %vm72 = vcmp.ge.f32.partialorder %v56, 0.0
  %vm73 = vcmp.ge.f32.partialorder %v57, 0.0
  %vm74 = vcmp.ge.f32.partialorder %v58, 0.0
  %vm75 = vcmp.ge.f32.partialorder %v59, 0.0
  %vm76 = vcmp.ge.f32.partialorder %v60, 0.0
  %vm77 = vcmp.ge.f32.partialorder %v61, 0.0
  %vm78 = vcmp.ge.f32.partialorder %v62, 0.0
  %vm79 = vcmp.ge.f32.partialorder %v63, 0.0
  %vm80 = vcmp.ge.f32.partialorder %v64, 0.0
  %vm81 = vcmp.ge.f32.partialorder %v65, 0.0
  %vm82 = vcmp.ge.f32.partialorder %v66, 0.0
  %vm83 = vcmp.ge.f32.partialorder %v67, 0.0
  %vm84 = vcmp.ge.f32.partialorder %v68, 0.0
  %vm85 = vcmp.ge.f32.partialorder %v69, 0.0
  %v86 = vmul.f32 %v54, 0.2
  %v87 = vmul.f32 %v55, 0.2
  %v88 = vmul.f32 %v56, 0.2
  %v89 = vmul.f32 %v57, 0.2
  %v90 = vmul.f32 %v58, 0.2
  %v91 = vmul.f32 %v59, 0.2
  %v92 = vmul.f32 %v60, 0.2
  %v93 = vmul.f32 %v61, 0.2
  %v94 = vmul.f32 %v62, 0.2
  %v95 = vmul.f32 %v63, 0.2
  %v96 = vmul.f32 %v64, 0.2
  %v97 = vmul.f32 %v65, 0.2
  %v98 = vmul.f32 %v66, 0.2
  %v99 = vmul.f32 %v67, 0.2
  %v100 = vmul.f32 %v68, 0.2
  %v101 = vmul.f32 %v69, 0.2
  %v102 = vsel %vm70, %v54, %v86
  %v103 = vsel %vm71, %v55, %v87
  %v104 = vsel %vm72, %v56, %v88
  %v105 = vsel %vm73, %v57, %v89
  %v106 = vsel %vm74, %v58, %v90
  %v107 = vsel %vm75, %v59, %v91
  %v108 = vsel %vm76, %v60, %v92
  %v109 = vsel %vm77, %v61, %v93
  %v110 = vsel %vm78, %v62, %v94
  %v111 = vsel %vm79, %v63, %v95
  %v112 = vsel %vm80, %v64, %v96
  %v113 = vsel %vm81, %v65, %v97
  %v114 = vsel %vm82, %v66, %v98
  %v115 = vsel %vm83, %v67, %v99
  %v116 = vsel %vm84, %v68, %v100
  %v117 = vsel %vm85, %v69, %v101
  %118 = vst [vmem:[%s3] sm:$0xff] %v102
  %119 = vst [vmem:[%s3 + $0x8] sm:$0xff] %v103
  %120 = vst [vmem:[%s3 + $0x10] sm:$0xff] %v104
  %121 = vst [vmem:[%s3 + $0x18] sm:$0xff] %v105
  %122 = vst [vmem:[%s3 + $0x20] sm:$0xff] %v106
  %123 = vst [vmem:[%s3 + $0x28] sm:$0xff] %v107
  %124 = vst [vmem:[%s3 + $0x30] sm:$0xff] %v108
  %125 = vst [vmem:[%s3 + $0x38] sm:$0xff] %v109
  %126 = vst [vmem:[%s3 + $0x40] sm:$0xff] %v110
  %127 = vst [vmem:[%s3 + $0x48] sm:$0xff] %v111
  %128 = vst [vmem:[%s3 + $0x50] sm:$0xff] %v112
  %129 = vst [vmem:[%s3 + $0x58] sm:$0xff] %v113
  %130 = vst [vmem:[%s3 + $0x60] sm:$0xff] %v114
  %131 = vst [vmem:[%s3 + $0x68] sm:$0xff] %v115
  %132 = vst [vmem:[%s3 + $0x70] sm:$0xff] %v116
  %133 = vst [vmem:[%s3 + $0x78] sm:$0xff] %v117
  // Predicated region
  $region14: #{encoder_forward.48} parent=0 // pred_check
    _
  $region15: #{encoder_forward.48} parent=0 // pred_check_branch
    %135 = sbr.rel (0) target = $region17
  $region16: #{encoder_forward.48} parent=0 // pred_region
    _
  $region17: #{encoder_forward.48} parent=0 // pred_fallthru
    _
  // Predicated region
  $region18: #{encoder_forward.48} parent=0 // pred_check
    _
  $region19: #{encoder_forward.48} parent=0 // pred_check_branch
    %137 = sbr.rel (0) target = $region21
  $region20: #{encoder_forward.48} parent=0 // pred_region
    _
  $region21: #{encoder_forward.48} parent=0 // pred_fallthru
    _

// kernel: encoder_forward.47
$region0: #{encoder_forward.47}
  #allocation0 [shape = 'u32[]', space=smem, size = 0x4, offset = 0x4, fixed_abs, tag = 'smem constant byte address 0x4 - core index']
  #allocation1 [shape = 'u32[72,128]{1,0:T(1,128)}', space=vmem, size = 0x9000, scoped, tag = 'internal scratch']
  %s0 = inlined_call_operand.vmem [shape: bf16[128,256], index: 0, kind: input, shape index: {}]
  %s1 = inlined_call_operand.vmem [shape: bf16[256,128], index: 1, kind: input, shape index: {}]
  %s2 = inlined_call_operand.vmem [shape: f32[128,128], index: 2, kind: output, shape index: {0}]
  %s3 = inlined_call_operand.vmem [shape: f32[1,2,128], index: 3, kind: output, shape index: {1}]
  %4 = xla_tuple %s2, %s3
  %s5 = sld [smem:[#allocation0]]
  $region26: #{encoder_forward.47} parent=0
    _
  %s7 = ssub.s32 1, %s5
  %s8 = scalar_select 0, %s7, %s5
  // Predicated region
  $region2: #{encoder_forward.47} parent=0 // pred_check
    _
  $region3: #{encoder_forward.47} parent=0 // pred_check_branch
    %10 = sbr.rel (0) target = $region5
  $region4: #{encoder_forward.47} parent=0 // pred_region
    _
  $region5: #{encoder_forward.47} parent=0 // pred_fallthru
    _
  // Predicated region
  $region6: #{encoder_forward.47} parent=0 // pred_check
    _
  $region7: #{encoder_forward.47} parent=0 // pred_check_branch
    %12 = sbr.rel (0) target = $region9
  $region8: #{encoder_forward.47} parent=0 // pred_region
    _
  $region9: #{encoder_forward.47} parent=0 // pred_fallthru
    _
  %v13 = vld [vmem:[%s0] sm:$0xff]
  %v14 = vld [vmem:[%s0 + $0x8] sm:$0xff]
  %v15 = vld [vmem:[%s0 + $0x10] sm:$0xff]
  %v16 = vld [vmem:[%s0 + $0x18] sm:$0xff]
  %v17 = vld [vmem:[%s0 + $0x20] sm:$0xff]
  %v18 = vld [vmem:[%s0 + $0x28] sm:$0xff]
  %v19 = vld [vmem:[%s0 + $0x30] sm:$0xff]
  %v20 = vld [vmem:[%s0 + $0x38] sm:$0xff]
  %v21 = vld [vmem:[%s0 + $0x40] sm:$0xff]
  %v22 = vld [vmem:[%s0 + $0x48] sm:$0xff]
  %v23 = vld [vmem:[%s0 + $0x50] sm:$0xff]
  %v24 = vld [vmem:[%s0 + $0x58] sm:$0xff]
  %v25 = vld [vmem:[%s0 + $0x60] sm:$0xff]
  %v26 = vld [vmem:[%s0 + $0x68] sm:$0xff]
  %v27 = vld [vmem:[%s0 + $0x70] sm:$0xff]
  %v28 = vld [vmem:[%s0 + $0x78] sm:$0xff]
  %v29 = vld [vmem:[%s1] sm:$0xf]
  %v30 = vld [vmem:[%s1 + $0x4] sm:$0xf]
  %v31 = vld [vmem:[%s1 + $0x8] sm:$0xf]
  %v32 = vld [vmem:[%s1 + $0xc] sm:$0xf]
  %v33 = vld [vmem:[%s1 + $0x10] sm:$0xf]
  %v34 = vld [vmem:[%s1 + $0x14] sm:$0xf]
  %v35 = vld [vmem:[%s1 + $0x18] sm:$0xf]
  %v36 = vld [vmem:[%s1 + $0x1c] sm:$0xf]
  %v37 = vld [vmem:[%s1 + $0x20] sm:$0xf]
  %v38 = vld [vmem:[%s1 + $0x24] sm:$0xf]
  %v39 = vld [vmem:[%s1 + $0x28] sm:$0xf]
  %v40 = vld [vmem:[%s1 + $0x2c] sm:$0xf]
  %v41 = vld [vmem:[%s1 + $0x30] sm:$0xf]
  %v42 = vld [vmem:[%s1 + $0x34] sm:$0xf]
  %v43 = vld [vmem:[%s1 + $0x38] sm:$0xf]
  %v44 = vld [vmem:[%s1 + $0x3c] sm:$0xf]
  %v45 = vld [vmem:[%s1 + $0x40] sm:$0xf]
  %v46 = vld [vmem:[%s1 + $0x44] sm:$0xf]
  %v47 = vld [vmem:[%s1 + $0x48] sm:$0xf]
  %v48 = vld [vmem:[%s1 + $0x4c] sm:$0xf]
  %v49 = vld [vmem:[%s1 + $0x50] sm:$0xf]
  %v50 = vld [vmem:[%s1 + $0x54] sm:$0xf]
  %v51 = vld [vmem:[%s1 + $0x58] sm:$0xf]
  %v52 = vld [vmem:[%s1 + $0x5c] sm:$0xf]
  %v53 = vld [vmem:[%s1 + $0x60] sm:$0xf]
  %v54 = vld [vmem:[%s1 + $0x64] sm:$0xf]
  %v55 = vld [vmem:[%s1 + $0x68] sm:$0xf]
  %v56 = vld [vmem:[%s1 + $0x6c] sm:$0xf]
  %v57 = vld [vmem:[%s1 + $0x70] sm:$0xf]
  %v58 = vld [vmem:[%s1 + $0x74] sm:$0xf]
  %v59 = vld [vmem:[%s1 + $0x78] sm:$0xf]
  %v60 = vld [vmem:[%s1 + $0x7c] sm:$0xf]
  %v77 = vunpack.c.l.b16 %v13
  %v78 = vunpack.c.h.b16 %v13
  %v79 = vunpack.c.l.b16 %v14
  %v80 = vunpack.c.h.b16 %v14
  %v81 = vunpack.c.l.b16 %v15
  %v82 = vunpack.c.h.b16 %v15
  %v83 = vunpack.c.l.b16 %v16
  %v84 = vunpack.c.h.b16 %v16
  %v85 = vunpack.c.l.b16 %v17
  %v86 = vunpack.c.h.b16 %v17
  %v87 = vunpack.c.l.b16 %v18
  %v88 = vunpack.c.h.b16 %v18
  %v89 = vunpack.c.l.b16 %v19
  %v90 = vunpack.c.h.b16 %v19
  %v91 = vunpack.c.l.b16 %v20
  %v92 = vunpack.c.h.b16 %v20
  %v93 = vunpack.c.l.b16 %v21
  %v94 = vunpack.c.h.b16 %v21
  %v95 = vunpack.c.l.b16 %v22
  %v96 = vunpack.c.h.b16 %v22
  %v97 = vunpack.c.l.b16 %v23
  %v98 = vunpack.c.h.b16 %v23
  %v99 = vunpack.c.l.b16 %v24
  %v100 = vunpack.c.h.b16 %v24
  %v101 = vunpack.c.l.b16 %v25
  %v102 = vunpack.c.h.b16 %v25
  %v103 = vunpack.c.l.b16 %v26
  %v104 = vunpack.c.h.b16 %v26
  %v105 = vunpack.c.l.b16 %v27
  %v106 = vunpack.c.h.b16 %v27
  %v107 = vunpack.c.l.b16 %v28
  %v108 = vunpack.c.h.b16 %v28
  %v109 = vpack.c.b16 %v79, %v77
  %v110 = vpack.c.b16 %v80, %v78
  %v111 = vpack.c.b16 %v83, %v81
  %v112 = vpack.c.b16 %v84, %v82
  %v113 = vpack.c.b16 %v87, %v85
  %v114 = vpack.c.b16 %v88, %v86
  %v115 = vpack.c.b16 %v91, %v89
  %v116 = vpack.c.b16 %v92, %v90
  %v117 = vpack.c.b16 %v95, %v93
  %v118 = vpack.c.b16 %v96, %v94
  %v119 = vpack.c.b16 %v99, %v97
  %v120 = vpack.c.b16 %v100, %v98
  %v121 = vpack.c.b16 %v103, %v101
  %v122 = vpack.c.b16 %v104, %v102
  %v123 = vpack.c.b16 %v107, %v105
  %v124 = vpack.c.b16 %v108, %v106
  %v173 = vunpack.c.l.b16 %v29
  %v174 = vunpack.c.l.b16 %v30
  %v175 = vunpack.c.l.b16 %v31
  %v176 = vunpack.c.l.b16 %v32
  %v177 = vunpack.c.l.b16 %v33
  %v178 = vunpack.c.l.b16 %v34
  %v179 = vunpack.c.l.b16 %v35
  %v180 = vunpack.c.l.b16 %v36
  %v181 = vunpack.c.l.b16 %v37
  %v182 = vunpack.c.l.b16 %v38
  %v183 = vunpack.c.l.b16 %v39
  %v184 = vunpack.c.l.b16 %v40
  %v185 = vunpack.c.l.b16 %v41
  %v186 = vunpack.c.l.b16 %v42
  %v187 = vunpack.c.l.b16 %v43
  %v188 = vunpack.c.l.b16 %v44
  %v189 = vunpack.c.l.b16 %v45
  %v190 = vunpack.c.l.b16 %v46
  %v191 = vunpack.c.l.b16 %v47
  %v192 = vunpack.c.l.b16 %v48
  %v193 = vunpack.c.l.b16 %v49
  %v194 = vunpack.c.l.b16 %v50
  %v195 = vunpack.c.l.b16 %v51
  %v196 = vunpack.c.l.b16 %v52
  %v197 = vunpack.c.l.b16 %v53
  %v198 = vunpack.c.l.b16 %v54
  %v199 = vunpack.c.l.b16 %v55
  %v200 = vunpack.c.l.b16 %v56
  %v201 = vunpack.c.l.b16 %v57
  %v202 = vunpack.c.l.b16 %v58
  %v203 = vunpack.c.l.b16 %v59
  %v204 = vunpack.c.l.b16 %v60
  %v205 = vpack.c.b16 %v174, %v173
  %v206 = vpack.c.b16 %v176, %v175
  %v207 = vpack.c.b16 %v178, %v177
  %v208 = vpack.c.b16 %v180, %v179
  %v209 = vpack.c.b16 %v182, %v181
  %v210 = vpack.c.b16 %v184, %v183
  %v211 = vpack.c.b16 %v186, %v185
  %v212 = vpack.c.b16 %v188, %v187
  %v213 = vpack.c.b16 %v190, %v189
  %v214 = vpack.c.b16 %v192, %v191
  %v215 = vpack.c.b16 %v194, %v193
  %v216 = vpack.c.b16 %v196, %v195
  %v217 = vpack.c.b16 %v198, %v197
  %v218 = vpack.c.b16 %v200, %v199
  %v219 = vpack.c.b16 %v202, %v201
  %v220 = vpack.c.b16 %v204, %v203
  %237 = vmatpush.bf16.msra.mxu0 %v212
  %238 = vmatpush.bf16.msra.mxu0 %v211
  %239 = vmatpush.bf16.msra.mxu0 %v210
  %240 = vmatpush.bf16.msra.mxu0 %v209
  %241 = vmatpush.bf16.msra.mxu0 %v208
  %242 = vmatpush.bf16.msra.mxu0 %v207
  %243 = vmatpush.bf16.msra.mxu0 %v206
  %244 = vmatpush.bf16.msra.mxu0 %v205
  %245 = vmatmul.bf16.gmra.mxu0 %v109
  %v246 = vpop.f32.mrf.mxu0
  %v247 = vadd.f32 0.0, %v246
  %v248 = vpop.f32.mrf.mxu0
  %v249 = vadd.f32 0.0, %v248
  %250 = vmatmul.bf16.gmra.mxu0 %v111
  %v251 = vpop.f32.mrf.mxu0
  %v252 = vadd.f32 0.0, %v251
  %v253 = vpop.f32.mrf.mxu0
  %v254 = vadd.f32 0.0, %v253
  %255 = vmatmul.bf16.gmra.mxu0 %v113
  %v256 = vpop.f32.mrf.mxu0
  %v257 = vadd.f32 0.0, %v256
  %v258 = vpop.f32.mrf.mxu0
  %v259 = vadd.f32 0.0, %v258
  %260 = vmatmul.bf16.gmra.mxu0 %v115
  %v261 = vpop.f32.mrf.mxu0
  %v262 = vadd.f32 0.0, %v261
  %v263 = vpop.f32.mrf.mxu0
  %v264 = vadd.f32 0.0, %v263
  %265 = vmatmul.bf16.gmra.mxu0 %v117
  %v266 = vpop.f32.mrf.mxu0
  %v267 = vadd.f32 0.0, %v266
  %v268 = vpop.f32.mrf.mxu0
  %v269 = vadd.f32 0.0, %v268
  %270 = vmatmul.bf16.gmra.mxu0 %v119
  %v271 = vpop.f32.mrf.mxu0
  %v272 = vadd.f32 0.0, %v271
  %v273 = vpop.f32.mrf.mxu0
  %v274 = vadd.f32 0.0, %v273
  %275 = vmatmul.bf16.gmra.mxu0 %v121
  %v276 = vpop.f32.mrf.mxu0
  %v277 = vadd.f32 0.0, %v276
  %v278 = vpop.f32.mrf.mxu0
  %v279 = vadd.f32 0.0, %v278
  %280 = vmatmul.bf16.gmra.mxu0 %v123
  %v281 = vpop.f32.mrf.mxu0
  %v282 = vadd.f32 0.0, %v281
  %v283 = vpop.f32.mrf.mxu0
  %v284 = vadd.f32 0.0, %v283
  %285 = vdwg.mxu0
  %286 = vmatpush.bf16.msra.mxu0 %v220
  %287 = vmatpush.bf16.msra.mxu0 %v219
  %288 = vmatpush.bf16.msra.mxu0 %v218
  %289 = vmatpush.bf16.msra.mxu0 %v217
  %290 = vmatpush.bf16.msra.mxu0 %v216
  %291 = vmatpush.bf16.msra.mxu0 %v215
  %292 = vmatpush.bf16.msra.mxu0 %v214
  %293 = vmatpush.bf16.msra.mxu0 %v213
  %294 = vmatmul.bf16.gmra.mxu0 %v110
  %v295 = vpop.f32.mrf.mxu0
  %v296 = vadd.f32 %v247, %v295
  %v297 = vpop.f32.mrf.mxu0
  %v298 = vadd.f32 %v249, %v297
  %299 = vmatmul.bf16.gmra.mxu0 %v112
  %v300 = vpop.f32.mrf.mxu0
  %v301 = vadd.f32 %v252, %v300
  %v302 = vpop.f32.mrf.mxu0
  %v303 = vadd.f32 %v254, %v302
  %304 = vmatmul.bf16.gmra.mxu0 %v114
  %v305 = vpop.f32.mrf.mxu0
  %v306 = vadd.f32 %v257, %v305
  %v307 = vpop.f32.mrf.mxu0
  %v308 = vadd.f32 %v259, %v307
  %309 = vmatmul.bf16.gmra.mxu0 %v116
  %v310 = vpop.f32.mrf.mxu0
  %v311 = vadd.f32 %v262, %v310
  %v312 = vpop.f32.mrf.mxu0
  %v313 = vadd.f32 %v264, %v312
  %314 = vmatmul.bf16.gmra.mxu0 %v118
  %v315 = vpop.f32.mrf.mxu0
  %v316 = vadd.f32 %v267, %v315
  %v317 = vpop.f32.mrf.mxu0
  %v318 = vadd.f32 %v269, %v317
  %319 = vmatmul.bf16.gmra.mxu0 %v120
  %v320 = vpop.f32.mrf.mxu0
  %v321 = vadd.f32 %v272, %v320
  %v322 = vpop.f32.mrf.mxu0
  %v323 = vadd.f32 %v274, %v322
  %324 = vmatmul.bf16.gmra.mxu0 %v122
  %v325 = vpop.f32.mrf.mxu0
  %v326 = vadd.f32 %v277, %v325
  %v327 = vpop.f32.mrf.mxu0
  %v328 = vadd.f32 %v279, %v327
  %329 = vmatmul.bf16.gmra.mxu0 %v124
  %v330 = vpop.f32.mrf.mxu0
  %v331 = vadd.f32 %v282, %v330
  %v332 = vpop.f32.mrf.mxu0
  %v333 = vadd.f32 %v284, %v332
  %334 = vdwg.mxu0
  %335 = vst [vmem:[%s2] sm:$0xff] %v296
  %336 = vst [vmem:[%s2 + $0x8] sm:$0xff] %v298
  %337 = vst [vmem:[%s2 + $0x10] sm:$0xff] %v301
  %338 = vst [vmem:[%s2 + $0x18] sm:$0xff] %v303
  %339 = vst [vmem:[%s2 + $0x20] sm:$0xff] %v306
  %340 = vst [vmem:[%s2 + $0x28] sm:$0xff] %v308
  %341 = vst [vmem:[%s2 + $0x30] sm:$0xff] %v311
  %342 = vst [vmem:[%s2 + $0x38] sm:$0xff] %v313
  %343 = vst [vmem:[%s2 + $0x40] sm:$0xff] %v316
  %344 = vst [vmem:[%s2 + $0x48] sm:$0xff] %v318
  %345 = vst [vmem:[%s2 + $0x50] sm:$0xff] %v321
  %346 = vst [vmem:[%s2 + $0x58] sm:$0xff] %v323
  %347 = vst [vmem:[%s2 + $0x60] sm:$0xff] %v326
  %348 = vst [vmem:[%s2 + $0x68] sm:$0xff] %v328
  %349 = vst [vmem:[%s2 + $0x70] sm:$0xff] %v331
  %350 = vst [vmem:[%s2 + $0x78] sm:$0xff] %v333
  %v351 = vadd.f32 %v296, %v298
  %v352 = vadd.f32 %v351, %v301
  %v353 = vadd.f32 %v352, %v303
  %v354 = vadd.f32 %v353, %v306
  %v355 = vadd.f32 %v354, %v308
  %v356 = vadd.f32 %v355, %v311
  %v357 = vadd.f32 %v356, %v313
  %v358 = vadd.f32 %v357, %v316
  %v359 = vadd.f32 %v358, %v318
  %v360 = vadd.f32 %v359, %v321
  %v361 = vadd.f32 %v360, %v323
  %v362 = vadd.f32 %v361, %v326
  %v363 = vadd.f32 %v362, %v328
  %v364 = vadd.f32 %v363, %v331
  %v365 = vadd.f32 %v364, %v333
  %v366 = vrot.slane %v365, 4
  %v367 = vadd.f32 %v365, %v366
  %v368 = vrot.slane %v367, 2
  %v369 = vadd.f32 %v367, %v368
  %v370 = vrot.slane %v369, 1
  %v371 = vadd.f32 %v369, %v370
  %v372 = vmul.f32 %v296, %v296
  %v373 = vmul.f32 %v298, %v298
  %v374 = vmul.f32 %v301, %v301
  %v375 = vmul.f32 %v303, %v303
  %v376 = vmul.f32 %v306, %v306
  %v377 = vmul.f32 %v308, %v308
  %v378 = vmul.f32 %v311, %v311
  %v379 = vmul.f32 %v313, %v313
  %v380 = vmul.f32 %v316, %v316
  %v381 = vmul.f32 %v318, %v318
  %v382 = vmul.f32 %v321, %v321
  %v383 = vmul.f32 %v323, %v323
  %v384 = vmul.f32 %v326, %v326
  %v385 = vmul.f32 %v328, %v328
  %v386 = vmul.f32 %v331, %v331
  %v387 = vmul.f32 %v333, %v333
  %v388 = vadd.f32 %v372, %v373
  %v389 = vadd.f32 %v388, %v374
  %v390 = vadd.f32 %v389, %v375
  %v391 = vadd.f32 %v390, %v376
  %v392 = vadd.f32 %v391, %v377
  %v393 = vadd.f32 %v392, %v378
  %v394 = vadd.f32 %v393, %v379
  %v395 = vadd.f32 %v394, %v380
  %v396 = vadd.f32 %v395, %v381
  %v397 = vadd.f32 %v396, %v382
  %v398 = vadd.f32 %v397, %v383
  %v399 = vadd.f32 %v398, %v384
  %v400 = vadd.f32 %v399, %v385
  %v401 = vadd.f32 %v400, %v386
  %v402 = vadd.f32 %v401, %v387
  %v403 = vrot.slane %v402, 4
  %v404 = vadd.f32 %v402, %v403
  %v405 = vrot.slane %v404, 2
  %v406 = vadd.f32 %v404, %v405
  %v407 = vrot.slane %v406, 1
  %v408 = vadd.f32 %v406, %v407
  %vm409 = vcmask 1040384
  %v410 = vsel %vm409, %v371, %v408
  %411 = vst [vmem:[%s3] sm:$0x3] %v410
  // Predicated region
  $region10: #{encoder_forward.47} parent=0 // pred_check
    _
  $region11: #{encoder_forward.47} parent=0 // pred_check_branch
    %413 = sbr.rel (0) target = $region13
  $region12: #{encoder_forward.47} parent=0 // pred_region
    _
  $region13: #{encoder_forward.47} parent=0 // pred_fallthru
    _
  // Predicated region
  $region14: #{encoder_forward.47} parent=0 // pred_check
    _
  $region15: #{encoder_forward.47} parent=0 // pred_check_branch
    %415 = sbr.rel (0) target = $region17
  $region16: #{encoder_forward.47} parent=0 // pred_region
    _
  $region17: #{encoder_forward.47} parent=0 // pred_fallthru
    _
  // Predicated region
  $region18: #{encoder_forward.47} parent=0 // pred_check
    _
  $region19: #{encoder_forward.47} parent=0 // pred_check_branch
    %417 = sbr.rel (0) target = $region21
  $region20: #{encoder_forward.47} parent=0 // pred_region
    _
  $region21: #{encoder_forward.47} parent=0 // pred_fallthru
    _
  // Predicated region
  $region22: #{encoder_forward.47} parent=0 // pred_check
    _
  $region23: #{encoder_forward.47} parent=0 // pred_check_branch
    %419 = sbr.rel (0) target = $region25
  $region24: #{encoder_forward.47} parent=0 // pred_region
    _
  $region25: #{encoder_forward.47} parent=0 // pred_fallthru
    _

// kernel: encoder_forward.49
$region0: #{encoder_forward.49}
  #allocation0 [shape = 'u32[]', space=smem, size = 0x4, offset = 0x4, fixed_abs, tag = 'smem constant byte address 0x4 - core index']
  #allocation1 [shape = 'u32[72,128]{1,0:T(1,128)}', space=vmem, size = 0x9000, scoped, tag = 'internal scratch']
  %s0 = inlined_call_operand.vmem [shape: bf16[32,512], index: 0, kind: input, shape index: {}]
  %s1 = inlined_call_operand.vmem [shape: bf16[512,128], index: 1, kind: input, shape index: {}]
  %s2 = inlined_call_operand.vmem [shape: f32[32,128], index: 2, kind: output, shape index: {0}]
  %s3 = inlined_call_operand.vmem [shape: f32[1,2,128], index: 3, kind: output, shape index: {1}]
  %4 = xla_tuple %s2, %s3
  %s5 = sld [smem:[#allocation0]]
  $region26: #{encoder_forward.49} parent=0
    _
  %s7 = ssub.s32 1, %s5
  %s8 = scalar_select 0, %s7, %s5
  // Predicated region
  $region2: #{encoder_forward.49} parent=0 // pred_check
    _
  $region3: #{encoder_forward.49} parent=0 // pred_check_branch
    %10 = sbr.rel (0) target = $region5
  $region4: #{encoder_forward.49} parent=0 // pred_region
    _
  $region5: #{encoder_forward.49} parent=0 // pred_fallthru
    _
  // Predicated region
  $region6: #{encoder_forward.49} parent=0 // pred_check
    _
  $region7: #{encoder_forward.49} parent=0 // pred_check_branch
    %12 = sbr.rel (0) target = $region9
  $region8: #{encoder_forward.49} parent=0 // pred_region
    _
  $region9: #{encoder_forward.49} parent=0 // pred_fallthru
    _
  %v13 = vld [vmem:[%s0] sm:$0xff]
  %v14 = vld [vmem:[%s0 + $0x8] sm:$0xff]
  %v15 = vld [vmem:[%s0 + $0x10] sm:$0xff]
  %v16 = vld [vmem:[%s0 + $0x18] sm:$0xff]
  %v17 = vld [vmem:[%s0 + $0x20] sm:$0xff]
  %v18 = vld [vmem:[%s0 + $0x28] sm:$0xff]
  %v19 = vld [vmem:[%s0 + $0x30] sm:$0xff]
  %v20 = vld [vmem:[%s0 + $0x38] sm:$0xff]
  %v21 = vld [vmem:[%s1] sm:$0xf]
  %v22 = vld [vmem:[%s1 + $0x4] sm:$0xf]
  %v23 = vld [vmem:[%s1 + $0x8] sm:$0xf]
  %v24 = vld [vmem:[%s1 + $0xc] sm:$0xf]
  %v25 = vld [vmem:[%s1 + $0x10] sm:$0xf]
  %v26 = vld [vmem:[%s1 + $0x14] sm:$0xf]
  %v27 = vld [vmem:[%s1 + $0x18] sm:$0xf]
  %v28 = vld [vmem:[%s1 + $0x1c] sm:$0xf]
  %v29 = vld [vmem:[%s1 + $0x20] sm:$0xf]
  %v30 = vld [vmem:[%s1 + $0x24] sm:$0xf]
  %v31 = vld [vmem:[%s1 + $0x28] sm:$0xf]
  %v32 = vld [vmem:[%s1 + $0x2c] sm:$0xf]
  %v33 = vld [vmem:[%s1 + $0x30] sm:$0xf]
  %v34 = vld [vmem:[%s1 + $0x34] sm:$0xf]
  %v35 = vld [vmem:[%s1 + $0x38] sm:$0xf]
  %v36 = vld [vmem:[%s1 + $0x3c] sm:$0xf]
  %v37 = vld [vmem:[%s1 + $0x40] sm:$0xf]
  %v38 = vld [vmem:[%s1 + $0x44] sm:$0xf]
  %v39 = vld [vmem:[%s1 + $0x48] sm:$0xf]
  %v40 = vld [vmem:[%s1 + $0x4c] sm:$0xf]
  %v41 = vld [vmem:[%s1 + $0x50] sm:$0xf]
  %v42 = vld [vmem:[%s1 + $0x54] sm:$0xf]
  %v43 = vld [vmem:[%s1 + $0x58] sm:$0xf]
  %v44 = vld [vmem:[%s1 + $0x5c] sm:$0xf]
  %v45 = vld [vmem:[%s1 + $0x60] sm:$0xf]
  %v46 = vld [vmem:[%s1 + $0x64] sm:$0xf]
  %v47 = vld [vmem:[%s1 + $0x68] sm:$0xf]
  %v48 = vld [vmem:[%s1 + $0x6c] sm:$0xf]
  %v49 = vld [vmem:[%s1 + $0x70] sm:$0xf]
  %v50 = vld [vmem:[%s1 + $0x74] sm:$0xf]
  %v51 = vld [vmem:[%s1 + $0x78] sm:$0xf]
  %v52 = vld [vmem:[%s1 + $0x7c] sm:$0xf]
  %v53 = vld [vmem:[%s1 + $0x80] sm:$0xf]
  %v54 = vld [vmem:[%s1 + $0x84] sm:$0xf]
  %v55 = vld [vmem:[%s1 + $0x88] sm:$0xf]
  %v56 = vld [vmem:[%s1 + $0x8c] sm:$0xf]
  %v57 = vld [vmem:[%s1 + $0x90] sm:$0xf]
  %v58 = vld [vmem:[%s1 + $0x94] sm:$0xf]
  %v59 = vld [vmem:[%s1 + $0x98] sm:$0xf]
  %v60 = vld [vmem:[%s1 + $0x9c] sm:$0xf]
  %v61 = vld [vmem:[%s1 + $0xa0] sm:$0xf]
  %v62 = vld [vmem:[%s1 + $0xa4] sm:$0xf]
  %v63 = vld [vmem:[%s1 + $0xa8] sm:$0xf]
  %v64 = vld [vmem:[%s1 + $0xac] sm:$0xf]
  %v65 = vld [vmem:[%s1 + $0xb0] sm:$0xf]
  %v66 = vld [vmem:[%s1 + $0xb4] sm:$0xf]
  %v67 = vld [vmem:[%s1 + $0xb8] sm:$0xf]
  %v68 = vld [vmem:[%s1 + $0xbc] sm:$0xf]
  %v69 = vld [vmem:[%s1 + $0xc0] sm:$0xf]
  %v70 = vld [vmem:[%s1 + $0xc4] sm:$0xf]
  %v71 = vld [vmem:[%s1 + $0xc8] sm:$0xf]
  %v72 = vld [vmem:[%s1 + $0xcc] sm:$0xf]
  %v73 = vld [vmem:[%s1 + $0xd0] sm:$0xf]
  %v74 = vld [vmem:[%s1 + $0xd4] sm:$0xf]
  %v75 = vld [vmem:[%s1 + $0xd8] sm:$0xf]
  %v76 = vld [vmem:[%s1 + $0xdc] sm:$0xf]
  %v77 = vld [vmem:[%s1 + $0xe0] sm:$0xf]
  %v78 = vld [vmem:[%s1 + $0xe4] sm:$0xf]
  %v79 = vld [vmem:[%s1 + $0xe8] sm:$0xf]
  %v80 = vld [vmem:[%s1 + $0xec] sm:$0xf]
  %v81 = vld [vmem:[%s1 + $0xf0] sm:$0xf]
  %v82 = vld [vmem:[%s1 + $0xf4] sm:$0xf]
  %v83 = vld [vmem:[%s1 + $0xf8] sm:$0xf]
  %v84 = vld [vmem:[%s1 + $0xfc] sm:$0xf]
  %v93 = vunpack.c.l.b16 %v13
  %v94 = vunpack.c.h.b16 %v13
  %v95 = vunpack.c.l.b16 %v14
  %v96 = vunpack.c.h.b16 %v14
  %v97 = vunpack.c.l.b16 %v15
  %v98 = vunpack.c.h.b16 %v15
  %v99 = vunpack.c.l.b16 %v16
  %v100 = vunpack.c.h.b16 %v16
  %v101 = vunpack.c.l.b16 %v17
  %v102 = vunpack.c.h.b16 %v17
  %v103 = vunpack.c.l.b16 %v18
  %v104 = vunpack.c.h.b16 %v18
  %v105 = vunpack.c.l.b16 %v19
  %v106 = vunpack.c.h.b16 %v19
  %v107 = vunpack.c.l.b16 %v20
  %v108 = vunpack.c.h.b16 %v20
  %v109 = vpack.c.b16 %v97, %v93
  %v110 = vpack.c.b16 %v98, %v94
  %v111 = vpack.c.b16 %v99, %v95
  %v112 = vpack.c.b16 %v100, %v96
  %v113 = vpack.c.b16 %v105, %v101
  %v114 = vpack.c.b16 %v106, %v102
  %v115 = vpack.c.b16 %v107, %v103
  %v116 = vpack.c.b16 %v108, %v104
  %v189 = vunpack.c.l.b16 %v21
  %v190 = vunpack.c.l.b16 %v22
  %v191 = vunpack.c.l.b16 %v23
  %v192 = vunpack.c.l.b16 %v24
  %v193 = vunpack.c.l.b16 %v25
  %v194 = vunpack.c.l.b16 %v26
  %v195 = vunpack.c.l.b16 %v27
  %v196 = vunpack.c.l.b16 %v28
  %v197 = vunpack.c.l.b16 %v29
  %v198 = vunpack.c.l.b16 %v30
  %v199 = vunpack.c.l.b16 %v31
  %v200 = vunpack.c.l.b16 %v32
  %v201 = vunpack.c.l.b16 %v33
  %v202 = vunpack.c.l.b16 %v34
  %v203 = vunpack.c.l.b16 %v35
  %v204 = vunpack.c.l.b16 %v36
  %v205 = vunpack.c.l.b16 %v37
  %v206 = vunpack.c.l.b16 %v38
  %v207 = vunpack.c.l.b16 %v39
  %v208 = vunpack.c.l.b16 %v40
  %v209 = vunpack.c.l.b16 %v41
  %v210 = vunpack.c.l.b16 %v42
  %v211 = vunpack.c.l.b16 %v43
  %v212 = vunpack.c.l.b16 %v44
  %v213 = vunpack.c.l.b16 %v45
  %v214 = vunpack.c.l.b16 %v46
  %v215 = vunpack.c.l.b16 %v47
  %v216 = vunpack.c.l.b16 %v48
  %v217 = vunpack.c.l.b16 %v49
  %v218 = vunpack.c.l.b16 %v50
  %v219 = vunpack.c.l.b16 %v51
  %v220 = vunpack.c.l.b16 %v52
  %v221 = vunpack.c.l.b16 %v53
  %v222 = vunpack.c.l.b16 %v54
  %v223 = vunpack.c.l.b16 %v55
  %v224 = vunpack.c.l.b16 %v56
  %v225 = vunpack.c.l.b16 %v57
  %v226 = vunpack.c.l.b16 %v58
  %v227 = vunpack.c.l.b16 %v59
  %v228 = vunpack.c.l.b16 %v60
  %v229 = vunpack.c.l.b16 %v61
  %v230 = vunpack.c.l.b16 %v62
  %v231 = vunpack.c.l.b16 %v63
  %v232 = vunpack.c.l.b16 %v64
  %v233 = vunpack.c.l.b16 %v65
  %v234 = vunpack.c.l.b16 %v66
  %v235 = vunpack.c.l.b16 %v67
  %v236 = vunpack.c.l.b16 %v68
  %v237 = vunpack.c.l.b16 %v69
  %v238 = vunpack.c.l.b16 %v70
  %v239 = vunpack.c.l.b16 %v71
  %v240 = vunpack.c.l.b16 %v72
  %v241 = vunpack.c.l.b16 %v73
  %v242 = vunpack.c.l.b16 %v74
  %v243 = vunpack.c.l.b16 %v75
  %v244 = vunpack.c.l.b16 %v76
  %v245 = vunpack.c.l.b16 %v77
  %v246 = vunpack.c.l.b16 %v78
  %v247 = vunpack.c.l.b16 %v79
  %v248 = vunpack.c.l.b16 %v80
  %v249 = vunpack.c.l.b16 %v81
  %v250 = vunpack.c.l.b16 %v82
  %v251 = vunpack.c.l.b16 %v83
  %v252 = vunpack.c.l.b16 %v84
  %v253 = vpack.c.b16 %v190, %v189
  %v254 = vpack.c.b16 %v192, %v191
  %v255 = vpack.c.b16 %v194, %v193
  %v256 = vpack.c.b16 %v196, %v195
  %v257 = vpack.c.b16 %v198, %v197
  %v258 = vpack.c.b16 %v200, %v199
  %v259 = vpack.c.b16 %v202, %v201
  %v260 = vpack.c.b16 %v204, %v203
  %v261 = vpack.c.b16 %v206, %v205
  %v262 = vpack.c.b16 %v208, %v207
  %v263 = vpack.c.b16 %v210, %v209
  %v264 = vpack.c.b16 %v212, %v211
  %v265 = vpack.c.b16 %v214, %v213
  %v266 = vpack.c.b16 %v216, %v215
  %v267 = vpack.c.b16 %v218, %v217
  %v268 = vpack.c.b16 %v220, %v219
  %v269 = vpack.c.b16 %v222, %v221
  %v270 = vpack.c.b16 %v224, %v223
  %v271 = vpack.c.b16 %v226, %v225
  %v272 = vpack.c.b16 %v228, %v227
  %v273 = vpack.c.b16 %v230, %v229
  %v274 = vpack.c.b16 %v232, %v231
  %v275 = vpack.c.b16 %v234, %v233
  %v276 = vpack.c.b16 %v236, %v235
  %v277 = vpack.c.b16 %v238, %v237
  %v278 = vpack.c.b16 %v240, %v239
  %v279 = vpack.c.b16 %v242, %v241
  %v280 = vpack.c.b16 %v244, %v243
  %v281 = vpack.c.b16 %v246, %v245
  %v282 = vpack.c.b16 %v248, %v247
  %v283 = vpack.c.b16 %v250, %v249
  %v284 = vpack.c.b16 %v252, %v251
  %317 = vmatpush.bf16.msra.mxu0 %v260
  %318 = vmatpush.bf16.msra.mxu0 %v259
  %319 = vmatpush.bf16.msra.mxu0 %v258
  %320 = vmatpush.bf16.msra.mxu0 %v257
  %321 = vmatpush.bf16.msra.mxu0 %v256
  %322 = vmatpush.bf16.msra.mxu0 %v255
  %323 = vmatpush.bf16.msra.mxu0 %v254
  %324 = vmatpush.bf16.msra.mxu0 %v253
  %325 = vmatmul.bf16.gmra.mxu0 %v109
  %v326 = vpop.f32.mrf.mxu0
  %v327 = vadd.f32 0.0, %v326
  %v328 = vpop.f32.mrf.mxu0
  %v329 = vadd.f32 0.0, %v328
  %330 = vmatmul.bf16.gmra.mxu0 %v113
  %v331 = vpop.f32.mrf.mxu0
  %v332 = vadd.f32 0.0, %v331
  %v333 = vpop.f32.mrf.mxu0
  %v334 = vadd.f32 0.0, %v333
  %335 = vdwg.mxu0
  %336 = vmatpush.bf16.msra.mxu0 %v268
  %337 = vmatpush.bf16.msra.mxu0 %v267
  %338 = vmatpush.bf16.msra.mxu0 %v266
  %339 = vmatpush.bf16.msra.mxu0 %v265
  %340 = vmatpush.bf16.msra.mxu0 %v264
  %341 = vmatpush.bf16.msra.mxu0 %v263
  %342 = vmatpush.bf16.msra.mxu0 %v262
  %343 = vmatpush.bf16.msra.mxu0 %v261
  %344 = vmatmul.bf16.gmra.mxu0 %v110
  %v345 = vpop.f32.mrf.mxu0
  %v346 = vadd.f32 %v327, %v345
  %v347 = vpop.f32.mrf.mxu0
  %v348 = vadd.f32 %v329, %v347
  %349 = vmatmul.bf16.gmra.mxu0 %v114
  %v350 = vpop.f32.mrf.mxu0
  %v351 = vadd.f32 %v332, %v350
  %v352 = vpop.f32.mrf.mxu0
  %v353 = vadd.f32 %v334, %v352
  %354 = vdwg.mxu0
  %355 = vmatpush.bf16.msra.mxu0 %v276
  %356 = vmatpush.bf16.msra.mxu0 %v275
  %357 = vmatpush.bf16.msra.mxu0 %v274
  %358 = vmatpush.bf16.msra.mxu0 %v273
  %359 = vmatpush.bf16.msra.mxu0 %v272
  %360 = vmatpush.bf16.msra.mxu0 %v271
  %361 = vmatpush.bf16.msra.mxu0 %v270
  %362 = vmatpush.bf16.msra.mxu0 %v269
  %363 = vmatmul.bf16.gmra.mxu0 %v111
  %v364 = vpop.f32.mrf.mxu0
  %v365 = vadd.f32 %v346, %v364
  %v366 = vpop.f32.mrf.mxu0
  %v367 = vadd.f32 %v348, %v366
  %368 = vmatmul.bf16.gmra.mxu0 %v115
  %v369 = vpop.f32.mrf.mxu0
  %v370 = vadd.f32 %v351, %v369
  %v371 = vpop.f32.mrf.mxu0
  %v372 = vadd.f32 %v353, %v371
  %373 = vdwg.mxu0
  %374 = vmatpush.bf16.msra.mxu0 %v284
  %375 = vmatpush.bf16.msra.mxu0 %v283
  %376 = vmatpush.bf16.msra.mxu0 %v282
  %377 = vmatpush.bf16.msra.mxu0 %v281
  %378 = vmatpush.bf16.msra.mxu0 %v280
  %379 = vmatpush.bf16.msra.mxu0 %v279
  %380 = vmatpush.bf16.msra.mxu0 %v278
  %381 = vmatpush.bf16.msra.mxu0 %v277
  %382 = vmatmul.bf16.gmra.mxu0 %v112
  %v383 = vpop.f32.mrf.mxu0
  %v384 = vadd.f32 %v365, %v383
  %v385 = vpop.f32.mrf.mxu0
  %v386 = vadd.f32 %v367, %v385
  %387 = vmatmul.bf16.gmra.mxu0 %v116
  %v388 = vpop.f32.mrf.mxu0
  %v389 = vadd.f32 %v370, %v388
  %v390 = vpop.f32.mrf.mxu0
  %v391 = vadd.f32 %v372, %v390
  %392 = vdwg.mxu0
  %393 = vst [vmem:[%s2] sm:$0xff] %v384
  %394 = vst [vmem:[%s2 + $0x8] sm:$0xff] %v386
  %395 = vst [vmem:[%s2 + $0x10] sm:$0xff] %v389
  %396 = vst [vmem:[%s2 + $0x18] sm:$0xff] %v391
  %v397 = vadd.f32 %v384, %v386
  %v398 = vadd.f32 %v397, %v389
  %v399 = vadd.f32 %v398, %v391
  %v400 = vrot.slane %v399, 4
  %v401 = vadd.f32 %v399, %v400
  %v402 = vrot.slane %v401, 2
  %v403 = vadd.f32 %v401, %v402
  %v404 = vrot.slane %v403, 1
  %v405 = vadd.f32 %v403, %v404
  %v406 = vmul.f32 %v384, %v384
  %v407 = vmul.f32 %v386, %v386
  %v408 = vmul.f32 %v389, %v389
  %v409 = vmul.f32 %v391, %v391
  %v410 = vadd.f32 %v406, %v407
  %v411 = vadd.f32 %v410, %v408
  %v412 = vadd.f32 %v411, %v409
  %v413 = vrot.slane %v412, 4
  %v414 = vadd.f32 %v412, %v413
  %v415 = vrot.slane %v414, 2
  %v416 = vadd.f32 %v414, %v415
  %v417 = vrot.slane %v416, 1
  %v418 = vadd.f32 %v416, %v417
  %vm419 = vcmask 1040384
  %v420 = vsel %vm419, %v405, %v418
  %421 = vst [vmem:[%s3] sm:$0x3] %v420
  // Predicated region
  $region10: #{encoder_forward.49} parent=0 // pred_check
    _
  $region11: #{encoder_forward.49} parent=0 // pred_check_branch
    %423 = sbr.rel (0) target = $region13
  $region12: #{encoder_forward.49} parent=0 // pred_region
    _
  $region13: #{encoder_forward.49} parent=0 // pred_fallthru
    _
  // Predicated region
  $region14: #{encoder_forward.49} parent=0 // pred_check
    _
  $region15: #{encoder_forward.49} parent=0 // pred_check_branch
    %425 = sbr.rel (0) target = $region17
  $region16: #{encoder_forward.49} parent=0 // pred_region
    _
  $region17: #{encoder_forward.49} parent=0 // pred_fallthru
    _
  // Predicated region
  $region18: #{encoder_forward.49} parent=0 // pred_check
    _
  $region19: #{encoder_forward.49} parent=0 // pred_check_branch
    %427 = sbr.rel (0) target = $region21
  $region20: #{encoder_forward.49} parent=0 // pred_region
    _
  $region21: #{encoder_forward.49} parent=0 // pred_fallthru
    _
  // Predicated region
  $region22: #{encoder_forward.49} parent=0 // pred_check
    _
  $region23: #{encoder_forward.49} parent=0 // pred_check_branch
    %429 = sbr.rel (0) target = $region25
  $region24: #{encoder_forward.49} parent=0 // pred_region
    _
  $region25: #{encoder_forward.49} parent=0 // pred_fallthru
    _

// kernel: encoder_forward.50
$region0: #{encoder_forward.50}
  #allocation0 [shape = 'u32[]', space=smem, size = 0x4, offset = 0x4, fixed_abs, tag = 'smem constant byte address 0x4 - core index']
  #allocation1 [shape = 'u32[72,128]{1,0:T(1,128)}', space=vmem, size = 0x9000, scoped, tag = 'internal scratch']
  %s0 = inlined_call_operand.vmem [shape: f32[32,128], index: 0, kind: input, shape index: {}]
  %s1 = inlined_call_operand.vmem [shape: f32[1,128], index: 1, kind: input, shape index: {}]
  %s2 = inlined_call_operand.vmem [shape: f32[1,128], index: 2, kind: input, shape index: {}]
  %s3 = inlined_call_operand.vmem [shape: f32[32,128], index: 3, kind: output, shape index: {}]
  %s4 = sld [smem:[#allocation0]]
  $region22: #{encoder_forward.50} parent=0
    _
  %s6 = ssub.s32 1, %s4
  %s7 = scalar_select 0, %s6, %s4
  // Predicated region
  $region2: #{encoder_forward.50} parent=0 // pred_check
    _
  $region3: #{encoder_forward.50} parent=0 // pred_check_branch
    %9 = sbr.rel (0) target = $region5
  $region4: #{encoder_forward.50} parent=0 // pred_region
    _
  $region5: #{encoder_forward.50} parent=0 // pred_fallthru
    _
  // Predicated region
  $region6: #{encoder_forward.50} parent=0 // pred_check
    _
  $region7: #{encoder_forward.50} parent=0 // pred_check_branch
    %11 = sbr.rel (0) target = $region9
  $region8: #{encoder_forward.50} parent=0 // pred_region
    _
  $region9: #{encoder_forward.50} parent=0 // pred_fallthru
    _
  // Predicated region
  $region10: #{encoder_forward.50} parent=0 // pred_check
    _
  $region11: #{encoder_forward.50} parent=0 // pred_check_branch
    %13 = sbr.rel (0) target = $region13
  $region12: #{encoder_forward.50} parent=0 // pred_region
    _
  $region13: #{encoder_forward.50} parent=0 // pred_fallthru
    _
  %v14 = vld [vmem:[%s0] sm:$0xff]
  %v15 = vld [vmem:[%s0 + $0x8] sm:$0xff]
  %v16 = vld [vmem:[%s0 + $0x10] sm:$0xff]
  %v17 = vld [vmem:[%s0 + $0x18] sm:$0xff]
  %v18 = vld [vmem:[%s1] sm:$0x1]
  %v20 = vperm.slane %v18, 0
  %v22 = vmul.f32 %v14, %v20
  %v23 = vmul.f32 %v15, %v20
  %v24 = vmul.f32 %v16, %v20
  %v25 = vmul.f32 %v17, %v20
  %v26 = vld [vmem:[%s2] sm:$0x1]
  %v28 = vperm.slane %v26, 0
  %v30 = vadd.f32 %v22, %v28
  %v31 = vadd.f32 %v23, %v28
  %v32 = vadd.f32 %v24, %v28
  %v33 = vadd.f32 %v25, %v28
  %vm34 = vcmp.ge.f32.partialorder %v30, 0.0
  %vm35 = vcmp.ge.f32.partialorder %v31, 0.0
  %vm36 = vcmp.ge.f32.partialorder %v32, 0.0
  %vm37 = vcmp.ge.f32.partialorder %v33, 0.0
  %v38 = vmul.f32 %v30, 0.2
  %v39 = vmul.f32 %v31, 0.2
  %v40 = vmul.f32 %v32, 0.2
  %v41 = vmul.f32 %v33, 0.2
  %v42 = vsel %vm34, %v30, %v38
  %v43 = vsel %vm35, %v31, %v39
  %v44 = vsel %vm36, %v32, %v40
  %v45 = vsel %vm37, %v33, %v41
  %46 = vst [vmem:[%s3] sm:$0xff] %v42
  %47 = vst [vmem:[%s3 + $0x8] sm:$0xff] %v43
  %48 = vst [vmem:[%s3 + $0x10] sm:$0xff] %v44
  %49 = vst [vmem:[%s3 + $0x18] sm:$0xff] %v45
  // Predicated region
  $region14: #{encoder_forward.50} parent=0 // pred_check
    _
  $region15: #{encoder_forward.50} parent=0 // pred_check_branch
    %51 = sbr.rel (0) target = $region17
  $region16: #{encoder_forward.50} parent=0 // pred_region
    _
  $region17: #{encoder_forward.50} parent=0 // pred_fallthru
    _
  // Predicated region
  $region18: #{encoder_forward.50} parent=0 // pred_check
    _
  $region19: #{encoder_forward.50} parent=0 // pred_check_branch
    %53 = sbr.rel (0) target = $region21
  $region20: #{encoder_forward.50} parent=0 // pred_region
    _
  $region21: #{encoder_forward.50} parent=0 // pred_fallthru
    _

// kernel: encoder_forward.52
$region0: #{encoder_forward.52}
  #allocation0 [shape = 'u32[]', space=smem, size = 0x4, offset = 0x4, fixed_abs, tag = 'smem constant byte address 0x4 - core index']
  #allocation1 [shape = 'u32[72,128]{1,0:T(1,128)}', space=vmem, size = 0x9000, scoped, tag = 'internal scratch']
  %s0 = inlined_call_operand.vmem [shape: f32[16,128], index: 0, kind: input, shape index: {}]
  %s1 = inlined_call_operand.vmem [shape: f32[1,128], index: 1, kind: input, shape index: {}]
  %s2 = inlined_call_operand.vmem [shape: f32[1,128], index: 2, kind: input, shape index: {}]
  %s3 = inlined_call_operand.vmem [shape: f32[16,128], index: 3, kind: output, shape index: {}]
  %s4 = sld [smem:[#allocation0]]
  $region22: #{encoder_forward.52} parent=0
    _
  %s6 = ssub.s32 1, %s4
  %s7 = scalar_select 0, %s6, %s4
  // Predicated region
  $region2: #{encoder_forward.52} parent=0 // pred_check
    _
  $region3: #{encoder_forward.52} parent=0 // pred_check_branch
    %9 = sbr.rel (0) target = $region5
  $region4: #{encoder_forward.52} parent=0 // pred_region
    _
  $region5: #{encoder_forward.52} parent=0 // pred_fallthru
    _
  // Predicated region
  $region6: #{encoder_forward.52} parent=0 // pred_check
    _
  $region7: #{encoder_forward.52} parent=0 // pred_check_branch
    %11 = sbr.rel (0) target = $region9
  $region8: #{encoder_forward.52} parent=0 // pred_region
    _
  $region9: #{encoder_forward.52} parent=0 // pred_fallthru
    _
  // Predicated region
  $region10: #{encoder_forward.52} parent=0 // pred_check
    _
  $region11: #{encoder_forward.52} parent=0 // pred_check_branch
    %13 = sbr.rel (0) target = $region13
  $region12: #{encoder_forward.52} parent=0 // pred_region
    _
  $region13: #{encoder_forward.52} parent=0 // pred_fallthru
    _
  %v14 = vld [vmem:[%s0] sm:$0xff]
  %v15 = vld [vmem:[%s0 + $0x8] sm:$0xff]
  %v16 = vld [vmem:[%s1] sm:$0x1]
  %v18 = vperm.slane %v16, 0
  %v20 = vmul.f32 %v14, %v18
  %v21 = vmul.f32 %v15, %v18
  %v22 = vld [vmem:[%s2] sm:$0x1]
  %v24 = vperm.slane %v22, 0
  %v26 = vadd.f32 %v20, %v24
  %v27 = vadd.f32 %v21, %v24
  %vm28 = vcmp.ge.f32.partialorder %v26, 0.0
  %vm29 = vcmp.ge.f32.partialorder %v27, 0.0
  %v30 = vmul.f32 %v26, 0.2
  %v31 = vmul.f32 %v27, 0.2
  %v32 = vsel %vm28, %v26, %v30
  %v33 = vsel %vm29, %v27, %v31
  %34 = vst [vmem:[%s3] sm:$0xff] %v32
  %35 = vst [vmem:[%s3 + $0x8] sm:$0xff] %v33
  // Predicated region
  $region14: #{encoder_forward.52} parent=0 // pred_check
    _
  $region15: #{encoder_forward.52} parent=0 // pred_check_branch
    %37 = sbr.rel (0) target = $region17
  $region16: #{encoder_forward.52} parent=0 // pred_region
    _
  $region17: #{encoder_forward.52} parent=0 // pred_fallthru
    _
  // Predicated region
  $region18: #{encoder_forward.52} parent=0 // pred_check
    _
  $region19: #{encoder_forward.52} parent=0 // pred_check_branch
    %39 = sbr.rel (0) target = $region21
  $region20: #{encoder_forward.52} parent=0 // pred_region
    _
  $region21: #{encoder_forward.52} parent=0 // pred_fallthru
    _

// kernel: encoder_forward.51
$region0: #{encoder_forward.51}
  #allocation0 [shape = 'u32[]', space=smem, size = 0x4, offset = 0x4, fixed_abs, tag = 'smem constant byte address 0x4 - core index']
  #allocation1 [shape = 'u32[72,128]{1,0:T(1,128)}', space=vmem, size = 0x9000, scoped, tag = 'internal scratch']
  %s0 = inlined_call_operand.vmem [shape: bf16[16,1024], index: 0, kind: input, shape index: {}]
  %s1 = inlined_call_operand.vmem [shape: bf16[1024,128], index: 1, kind: input, shape index: {}]
  %s2 = inlined_call_operand.vmem [shape: f32[16,128], index: 2, kind: output, shape index: {0}]
  %s3 = inlined_call_operand.vmem [shape: f32[1,2,128], index: 3, kind: output, shape index: {1}]
  %4 = xla_tuple %s2, %s3
  %s5 = sld [smem:[#allocation0]]
  $region26: #{encoder_forward.51} parent=0
    _
  %s7 = ssub.s32 1, %s5
  %s8 = scalar_select 0, %s7, %s5
  // Predicated region
  $region2: #{encoder_forward.51} parent=0 // pred_check
    _
  $region3: #{encoder_forward.51} parent=0 // pred_check_branch
    %10 = sbr.rel (0) target = $region5
  $region4: #{encoder_forward.51} parent=0 // pred_region
    _
  $region5: #{encoder_forward.51} parent=0 // pred_fallthru
    _
  // Predicated region
  $region6: #{encoder_forward.51} parent=0 // pred_check
    _
  $region7: #{encoder_forward.51} parent=0 // pred_check_branch
    %12 = sbr.rel (0) target = $region9
  $region8: #{encoder_forward.51} parent=0 // pred_region
    _
  $region9: #{encoder_forward.51} parent=0 // pred_fallthru
    _
  %v13 = vld [vmem:[%s0] sm:$0xff]
  %v14 = vld [vmem:[%s0 + $0x8] sm:$0xff]
  %v15 = vld [vmem:[%s0 + $0x10] sm:$0xff]
  %v16 = vld [vmem:[%s0 + $0x18] sm:$0xff]
  %v17 = vld [vmem:[%s0 + $0x20] sm:$0xff]
  %v18 = vld [vmem:[%s0 + $0x28] sm:$0xff]
  %v19 = vld [vmem:[%s0 + $0x30] sm:$0xff]
  %v20 = vld [vmem:[%s0 + $0x38] sm:$0xff]
  %v21 = vld [vmem:[%s1] sm:$0xf]
  %v22 = vld [vmem:[%s1 + $0x4] sm:$0xf]
  %v23 = vld [vmem:[%s1 + $0x8] sm:$0xf]
  %v24 = vld [vmem:[%s1 + $0xc] sm:$0xf]
  %v25 = vld [vmem:[%s1 + $0x10] sm:$0xf]
  %v26 = vld [vmem:[%s1 + $0x14] sm:$0xf]
  %v27 = vld [vmem:[%s1 + $0x18] sm:$0xf]
  %v28 = vld [vmem:[%s1 + $0x1c] sm:$0xf]
  %v29 = vld [vmem:[%s1 + $0x20] sm:$0xf]
  %v30 = vld [vmem:[%s1 + $0x24] sm:$0xf]
  %v31 = vld [vmem:[%s1 + $0x28] sm:$0xf]
  %v32 = vld [vmem:[%s1 + $0x2c] sm:$0xf]
  %v33 = vld [vmem:[%s1 + $0x30] sm:$0xf]
  %v34 = vld [vmem:[%s1 + $0x34] sm:$0xf]
  %v35 = vld [vmem:[%s1 + $0x38] sm:$0xf]
  %v36 = vld [vmem:[%s1 + $0x3c] sm:$0xf]
  %v37 = vld [vmem:[%s1 + $0x40] sm:$0xf]
  %v38 = vld [vmem:[%s1 + $0x44] sm:$0xf]
  %v39 = vld [vmem:[%s1 + $0x48] sm:$0xf]
  %v40 = vld [vmem:[%s1 + $0x4c] sm:$0xf]
  %v41 = vld [vmem:[%s1 + $0x50] sm:$0xf]
  %v42 = vld [vmem:[%s1 + $0x54] sm:$0xf]
  %v43 = vld [vmem:[%s1 + $0x58] sm:$0xf]
  %v44 = vld [vmem:[%s1 + $0x5c] sm:$0xf]
  %v45 = vld [vmem:[%s1 + $0x60] sm:$0xf]
  %v46 = vld [vmem:[%s1 + $0x64] sm:$0xf]
  %v47 = vld [vmem:[%s1 + $0x68] sm:$0xf]
  %v48 = vld [vmem:[%s1 + $0x6c] sm:$0xf]
  %v49 = vld [vmem:[%s1 + $0x70] sm:$0xf]
  %v50 = vld [vmem:[%s1 + $0x74] sm:$0xf]
  %v51 = vld [vmem:[%s1 + $0x78] sm:$0xf]
  %v52 = vld [vmem:[%s1 + $0x7c] sm:$0xf]
  %v53 = vld [vmem:[%s1 + $0x80] sm:$0xf]
  %v54 = vld [vmem:[%s1 + $0x84] sm:$0xf]
  %v55 = vld [vmem:[%s1 + $0x88] sm:$0xf]
  %v56 = vld [vmem:[%s1 + $0x8c] sm:$0xf]
  %v57 = vld [vmem:[%s1 + $0x90] sm:$0xf]
  %v58 = vld [vmem:[%s1 + $0x94] sm:$0xf]
  %v59 = vld [vmem:[%s1 + $0x98] sm:$0xf]
  %v60 = vld [vmem:[%s1 + $0x9c] sm:$0xf]
  %v61 = vld [vmem:[%s1 + $0xa0] sm:$0xf]
  %v62 = vld [vmem:[%s1 + $0xa4] sm:$0xf]
  %v63 = vld [vmem:[%s1 + $0xa8] sm:$0xf]
  %v64 = vld [vmem:[%s1 + $0xac] sm:$0xf]
  %v65 = vld [vmem:[%s1 + $0xb0] sm:$0xf]
  %v66 = vld [vmem:[%s1 + $0xb4] sm:$0xf]
  %v67 = vld [vmem:[%s1 + $0xb8] sm:$0xf]
  %v68 = vld [vmem:[%s1 + $0xbc] sm:$0xf]
  %v69 = vld [vmem:[%s1 + $0xc0] sm:$0xf]
  %v70 = vld [vmem:[%s1 + $0xc4] sm:$0xf]
  %v71 = vld [vmem:[%s1 + $0xc8] sm:$0xf]
  %v72 = vld [vmem:[%s1 + $0xcc] sm:$0xf]
  %v73 = vld [vmem:[%s1 + $0xd0] sm:$0xf]
  %v74 = vld [vmem:[%s1 + $0xd4] sm:$0xf]
  %v75 = vld [vmem:[%s1 + $0xd8] sm:$0xf]
  %v76 = vld [vmem:[%s1 + $0xdc] sm:$0xf]
  %v77 = vld [vmem:[%s1 + $0xe0] sm:$0xf]
  %v78 = vld [vmem:[%s1 + $0xe4] sm:$0xf]
  %v79 = vld [vmem:[%s1 + $0xe8] sm:$0xf]
  %v80 = vld [vmem:[%s1 + $0xec] sm:$0xf]
  %v81 = vld [vmem:[%s1 + $0xf0] sm:$0xf]
  %v82 = vld [vmem:[%s1 + $0xf4] sm:$0xf]
  %v83 = vld [vmem:[%s1 + $0xf8] sm:$0xf]
  %v84 = vld [vmem:[%s1 + $0xfc] sm:$0xf]
  %v85 = vld [vmem:[%s1 + $0x100] sm:$0xf]
  %v86 = vld [vmem:[%s1 + $0x104] sm:$0xf]
  %v87 = vld [vmem:[%s1 + $0x108] sm:$0xf]
  %v88 = vld [vmem:[%s1 + $0x10c] sm:$0xf]
  %v89 = vld [vmem:[%s1 + $0x110] sm:$0xf]
  %v90 = vld [vmem:[%s1 + $0x114] sm:$0xf]
  %v91 = vld [vmem:[%s1 + $0x118] sm:$0xf]
  %v92 = vld [vmem:[%s1 + $0x11c] sm:$0xf]
  %v93 = vld [vmem:[%s1 + $0x120] sm:$0xf]
  %v94 = vld [vmem:[%s1 + $0x124] sm:$0xf]
  %v95 = vld [vmem:[%s1 + $0x128] sm:$0xf]
  %v96 = vld [vmem:[%s1 + $0x12c] sm:$0xf]
  %v97 = vld [vmem:[%s1 + $0x130] sm:$0xf]
  %v98 = vld [vmem:[%s1 + $0x134] sm:$0xf]
  %v99 = vld [vmem:[%s1 + $0x138] sm:$0xf]
  %v100 = vld [vmem:[%s1 + $0x13c] sm:$0xf]
  %v101 = vld [vmem:[%s1 + $0x140] sm:$0xf]
  %v102 = vld [vmem:[%s1 + $0x144] sm:$0xf]
  %v103 = vld [vmem:[%s1 + $0x148] sm:$0xf]
  %v104 = vld [vmem:[%s1 + $0x14c] sm:$0xf]
  %v105 = vld [vmem:[%s1 + $0x150] sm:$0xf]
  %v106 = vld [vmem:[%s1 + $0x154] sm:$0xf]
  %v107 = vld [vmem:[%s1 + $0x158] sm:$0xf]
  %v108 = vld [vmem:[%s1 + $0x15c] sm:$0xf]
  %v109 = vld [vmem:[%s1 + $0x160] sm:$0xf]
  %v110 = vld [vmem:[%s1 + $0x164] sm:$0xf]
  %v111 = vld [vmem:[%s1 + $0x168] sm:$0xf]
  %v112 = vld [vmem:[%s1 + $0x16c] sm:$0xf]
  %v113 = vld [vmem:[%s1 + $0x170] sm:$0xf]
  %v114 = vld [vmem:[%s1 + $0x174] sm:$0xf]
  %v115 = vld [vmem:[%s1 + $0x178] sm:$0xf]
  %v116 = vld [vmem:[%s1 + $0x17c] sm:$0xf]
  %v117 = vld [vmem:[%s1 + $0x180] sm:$0xf]
  %v118 = vld [vmem:[%s1 + $0x184] sm:$0xf]
  %v119 = vld [vmem:[%s1 + $0x188] sm:$0xf]
  %v120 = vld [vmem:[%s1 + $0x18c] sm:$0xf]
  %v121 = vld [vmem:[%s1 + $0x190] sm:$0xf]
  %v122 = vld [vmem:[%s1 + $0x194] sm:$0xf]
  %v123 = vld [vmem:[%s1 + $0x198] sm:$0xf]
  %v124 = vld [vmem:[%s1 + $0x19c] sm:$0xf]
  %v125 = vld [vmem:[%s1 + $0x1a0] sm:$0xf]
  %v126 = vld [vmem:[%s1 + $0x1a4] sm:$0xf]
  %v127 = vld [vmem:[%s1 + $0x1a8] sm:$0xf]
  %v128 = vld [vmem:[%s1 + $0x1ac] sm:$0xf]
  %v129 = vld [vmem:[%s1 + $0x1b0] sm:$0xf]
  %v130 = vld [vmem:[%s1 + $0x1b4] sm:$0xf]
  %v131 = vld [vmem:[%s1 + $0x1b8] sm:$0xf]
  %v132 = vld [vmem:[%s1 + $0x1bc] sm:$0xf]
  %v133 = vld [vmem:[%s1 + $0x1c0] sm:$0xf]
  %v134 = vld [vmem:[%s1 + $0x1c4] sm:$0xf]
  %v135 = vld [vmem:[%s1 + $0x1c8] sm:$0xf]
  %v136 = vld [vmem:[%s1 + $0x1cc] sm:$0xf]
  %v137 = vld [vmem:[%s1 + $0x1d0] sm:$0xf]
  %v138 = vld [vmem:[%s1 + $0x1d4] sm:$0xf]
  %v139 = vld [vmem:[%s1 + $0x1d8] sm:$0xf]
  %v140 = vld [vmem:[%s1 + $0x1dc] sm:$0xf]
  %v141 = vld [vmem:[%s1 + $0x1e0] sm:$0xf]
  %v142 = vld [vmem:[%s1 + $0x1e4] sm:$0xf]
  %v143 = vld [vmem:[%s1 + $0x1e8] sm:$0xf]
  %v144 = vld [vmem:[%s1 + $0x1ec] sm:$0xf]
  %v145 = vld [vmem:[%s1 + $0x1f0] sm:$0xf]
  %v146 = vld [vmem:[%s1 + $0x1f4] sm:$0xf]
  %v147 = vld [vmem:[%s1 + $0x1f8] sm:$0xf]
  %v148 = vld [vmem:[%s1 + $0x1fc] sm:$0xf]
  %v157 = vunpack.c.l.b16 %v13
  %v158 = vunpack.c.h.b16 %v13
  %v159 = vunpack.c.l.b16 %v14
  %v160 = vunpack.c.h.b16 %v14
  %v161 = vunpack.c.l.b16 %v15
  %v162 = vunpack.c.h.b16 %v15
  %v163 = vunpack.c.l.b16 %v16
  %v164 = vunpack.c.h.b16 %v16
  %v165 = vunpack.c.l.b16 %v17
  %v166 = vunpack.c.h.b16 %v17
  %v167 = vunpack.c.l.b16 %v18
  %v168 = vunpack.c.h.b16 %v18
  %v169 = vunpack.c.l.b16 %v19
  %v170 = vunpack.c.h.b16 %v19
  %v171 = vunpack.c.l.b16 %v20
  %v172 = vunpack.c.h.b16 %v20
  %v173 = vpack.c.b16 %v165, %v157
  %v174 = vpack.c.b16 %v166, %v158
  %v175 = vpack.c.b16 %v167, %v159
  %v176 = vpack.c.b16 %v168, %v160
  %v177 = vpack.c.b16 %v169, %v161
  %v178 = vpack.c.b16 %v170, %v162
  %v179 = vpack.c.b16 %v171, %v163
  %v180 = vpack.c.b16 %v172, %v164
  %v317 = vunpack.c.l.b16 %v21
  %v318 = vunpack.c.l.b16 %v22
  %v319 = vunpack.c.l.b16 %v23
  %v320 = vunpack.c.l.b16 %v24
  %v321 = vunpack.c.l.b16 %v25
  %v322 = vunpack.c.l.b16 %v26
  %v323 = vunpack.c.l.b16 %v27
  %v324 = vunpack.c.l.b16 %v28
  %v325 = vunpack.c.l.b16 %v29
  %v326 = vunpack.c.l.b16 %v30
  %v327 = vunpack.c.l.b16 %v31
  %v328 = vunpack.c.l.b16 %v32
  %v329 = vunpack.c.l.b16 %v33
  %v330 = vunpack.c.l.b16 %v34
  %v331 = vunpack.c.l.b16 %v35
  %v332 = vunpack.c.l.b16 %v36
  %v333 = vunpack.c.l.b16 %v37
  %v334 = vunpack.c.l.b16 %v38
  %v335 = vunpack.c.l.b16 %v39
  %v336 = vunpack.c.l.b16 %v40
  %v337 = vunpack.c.l.b16 %v41
  %v338 = vunpack.c.l.b16 %v42
  %v339 = vunpack.c.l.b16 %v43
  %v340 = vunpack.c.l.b16 %v44
  %v341 = vunpack.c.l.b16 %v45
  %v342 = vunpack.c.l.b16 %v46
  %v343 = vunpack.c.l.b16 %v47
  %v344 = vunpack.c.l.b16 %v48
  %v345 = vunpack.c.l.b16 %v49
  %v346 = vunpack.c.l.b16 %v50
  %v347 = vunpack.c.l.b16 %v51
  %v348 = vunpack.c.l.b16 %v52
  %v349 = vunpack.c.l.b16 %v53
  %v350 = vunpack.c.l.b16 %v54
  %v351 = vunpack.c.l.b16 %v55
  %v352 = vunpack.c.l.b16 %v56
  %v353 = vunpack.c.l.b16 %v57
  %v354 = vunpack.c.l.b16 %v58
  %v355 = vunpack.c.l.b16 %v59
  %v356 = vunpack.c.l.b16 %v60
  %v357 = vunpack.c.l.b16 %v61
  %v358 = vunpack.c.l.b16 %v62
  %v359 = vunpack.c.l.b16 %v63
  %v360 = vunpack.c.l.b16 %v64
  %v361 = vunpack.c.l.b16 %v65
  %v362 = vunpack.c.l.b16 %v66
  %v363 = vunpack.c.l.b16 %v67
  %v364 = vunpack.c.l.b16 %v68
  %v365 = vunpack.c.l.b16 %v69
  %v366 = vunpack.c.l.b16 %v70
  %v367 = vunpack.c.l.b16 %v71
  %v368 = vunpack.c.l.b16 %v72
  %v369 = vunpack.c.l.b16 %v73
  %v370 = vunpack.c.l.b16 %v74
  %v371 = vunpack.c.l.b16 %v75
  %v372 = vunpack.c.l.b16 %v76
  %v373 = vunpack.c.l.b16 %v77
  %v374 = vunpack.c.l.b16 %v78
  %v375 = vunpack.c.l.b16 %v79
  %v376 = vunpack.c.l.b16 %v80
  %v377 = vunpack.c.l.b16 %v81
  %v378 = vunpack.c.l.b16 %v82
  %v379 = vunpack.c.l.b16 %v83
  %v380 = vunpack.c.l.b16 %v84
  %v381 = vunpack.c.l.b16 %v85
  %v382 = vunpack.c.l.b16 %v86
  %v383 = vunpack.c.l.b16 %v87
  %v384 = vunpack.c.l.b16 %v88
  %v385 = vunpack.c.l.b16 %v89
  %v386 = vunpack.c.l.b16 %v90
  %v387 = vunpack.c.l.b16 %v91
  %v388 = vunpack.c.l.b16 %v92
  %v389 = vunpack.c.l.b16 %v93
  %v390 = vunpack.c.l.b16 %v94
  %v391 = vunpack.c.l.b16 %v95
  %v392 = vunpack.c.l.b16 %v96
  %v393 = vunpack.c.l.b16 %v97
  %v394 = vunpack.c.l.b16 %v98
  %v395 = vunpack.c.l.b16 %v99
  %v396 = vunpack.c.l.b16 %v100
  %v397 = vunpack.c.l.b16 %v101
  %v398 = vunpack.c.l.b16 %v102
  %v399 = vunpack.c.l.b16 %v103
  %v400 = vunpack.c.l.b16 %v104
  %v401 = vunpack.c.l.b16 %v105
  %v402 = vunpack.c.l.b16 %v106
  %v403 = vunpack.c.l.b16 %v107
  %v404 = vunpack.c.l.b16 %v108
  %v405 = vunpack.c.l.b16 %v109
  %v406 = vunpack.c.l.b16 %v110
  %v407 = vunpack.c.l.b16 %v111
  %v408 = vunpack.c.l.b16 %v112
  %v409 = vunpack.c.l.b16 %v113
  %v410 = vunpack.c.l.b16 %v114
  %v411 = vunpack.c.l.b16 %v115
  %v412 = vunpack.c.l.b16 %v116
  %v413 = vunpack.c.l.b16 %v117
  %v414 = vunpack.c.l.b16 %v118
  %v415 = vunpack.c.l.b16 %v119
  %v416 = vunpack.c.l.b16 %v120
  %v417 = vunpack.c.l.b16 %v121
  %v418 = vunpack.c.l.b16 %v122
  %v419 = vunpack.c.l.b16 %v123
  %v420 = vunpack.c.l.b16 %v124
  %v421 = vunpack.c.l.b16 %v125
  %v422 = vunpack.c.l.b16 %v126
  %v423 = vunpack.c.l.b16 %v127
  %v424 = vunpack.c.l.b16 %v128
  %v425 = vunpack.c.l.b16 %v129
  %v426 = vunpack.c.l.b16 %v130
  %v427 = vunpack.c.l.b16 %v131
  %v428 = vunpack.c.l.b16 %v132
  %v429 = vunpack.c.l.b16 %v133
  %v430 = vunpack.c.l.b16 %v134
  %v431 = vunpack.c.l.b16 %v135
  %v432 = vunpack.c.l.b16 %v136
  %v433 = vunpack.c.l.b16 %v137
  %v434 = vunpack.c.l.b16 %v138
  %v435 = vunpack.c.l.b16 %v139
  %v436 = vunpack.c.l.b16 %v140
  %v437 = vunpack.c.l.b16 %v141
  %v438 = vunpack.c.l.b16 %v142
  %v439 = vunpack.c.l.b16 %v143
  %v440 = vunpack.c.l.b16 %v144
  %v441 = vunpack.c.l.b16 %v145
  %v442 = vunpack.c.l.b16 %v146
  %v443 = vunpack.c.l.b16 %v147
  %v444 = vunpack.c.l.b16 %v148
  %v445 = vpack.c.b16 %v318, %v317
  %v446 = vpack.c.b16 %v320, %v319
  %v447 = vpack.c.b16 %v322, %v321
  %v448 = vpack.c.b16 %v324, %v323
  %v449 = vpack.c.b16 %v326, %v325
  %v450 = vpack.c.b16 %v328, %v327
  %v451 = vpack.c.b16 %v330, %v329
  %v452 = vpack.c.b16 %v332, %v331
  %v453 = vpack.c.b16 %v334, %v333
  %v454 = vpack.c.b16 %v336, %v335
  %v455 = vpack.c.b16 %v338, %v337
  %v456 = vpack.c.b16 %v340, %v339
  %v457 = vpack.c.b16 %v342, %v341
  %v458 = vpack.c.b16 %v344, %v343
  %v459 = vpack.c.b16 %v346, %v345
  %v460 = vpack.c.b16 %v348, %v347
  %v461 = vpack.c.b16 %v350, %v349
  %v462 = vpack.c.b16 %v352, %v351
  %v463 = vpack.c.b16 %v354, %v353
  %v464 = vpack.c.b16 %v356, %v355
  %v465 = vpack.c.b16 %v358, %v357
  %v466 = vpack.c.b16 %v360, %v359
  %v467 = vpack.c.b16 %v362, %v361
  %v468 = vpack.c.b16 %v364, %v363
  %v469 = vpack.c.b16 %v366, %v365
  %v470 = vpack.c.b16 %v368, %v367
  %v471 = vpack.c.b16 %v370, %v369
  %v472 = vpack.c.b16 %v372, %v371
  %v473 = vpack.c.b16 %v374, %v373
  %v474 = vpack.c.b16 %v376, %v375
  %v475 = vpack.c.b16 %v378, %v377
  %v476 = vpack.c.b16 %v380, %v379
  %v477 = vpack.c.b16 %v382, %v381
  %v478 = vpack.c.b16 %v384, %v383
  %v479 = vpack.c.b16 %v386, %v385
  %v480 = vpack.c.b16 %v388, %v387
  %v481 = vpack.c.b16 %v390, %v389
  %v482 = vpack.c.b16 %v392, %v391
  %v483 = vpack.c.b16 %v394, %v393
  %v484 = vpack.c.b16 %v396, %v395
  %v485 = vpack.c.b16 %v398, %v397
  %v486 = vpack.c.b16 %v400, %v399
  %v487 = vpack.c.b16 %v402, %v401
  %v488 = vpack.c.b16 %v404, %v403
  %v489 = vpack.c.b16 %v406, %v405
  %v490 = vpack.c.b16 %v408, %v407
  %v491 = vpack.c.b16 %v410, %v409
  %v492 = vpack.c.b16 %v412, %v411
  %v493 = vpack.c.b16 %v414, %v413
  %v494 = vpack.c.b16 %v416, %v415
  %v495 = vpack.c.b16 %v418, %v417
  %v496 = vpack.c.b16 %v420, %v419
  %v497 = vpack.c.b16 %v422, %v421
  %v498 = vpack.c.b16 %v424, %v423
  %v499 = vpack.c.b16 %v426, %v425
  %v500 = vpack.c.b16 %v428, %v427
  %v501 = vpack.c.b16 %v430, %v429
  %v502 = vpack.c.b16 %v432, %v431
  %v503 = vpack.c.b16 %v434, %v433
  %v504 = vpack.c.b16 %v436, %v435
  %v505 = vpack.c.b16 %v438, %v437
  %v506 = vpack.c.b16 %v440, %v439
  %v507 = vpack.c.b16 %v442, %v441
  %v508 = vpack.c.b16 %v444, %v443
  %573 = vmatpush.bf16.msra.mxu0 %v452
  %574 = vmatpush.bf16.msra.mxu0 %v451
  %575 = vmatpush.bf16.msra.mxu0 %v450
  %576 = vmatpush.bf16.msra.mxu0 %v449
  %577 = vmatpush.bf16.msra.mxu0 %v448
  %578 = vmatpush.bf16.msra.mxu0 %v447
  %579 = vmatpush.bf16.msra.mxu0 %v446
  %580 = vmatpush.bf16.msra.mxu0 %v445
  %581 = vmatmul.bf16.gmra.mxu0 %v173
  %v582 = vpop.f32.mrf.mxu0
  %v583 = vadd.f32 0.0, %v582
  %v584 = vpop.f32.mrf.mxu0
  %v585 = vadd.f32 0.0, %v584
  %586 = vdwg.mxu0
  %587 = vmatpush.bf16.msra.mxu0 %v460
  %588 = vmatpush.bf16.msra.mxu0 %v459
  %589 = vmatpush.bf16.msra.mxu0 %v458
  %590 = vmatpush.bf16.msra.mxu0 %v457
  %591 = vmatpush.bf16.msra.mxu0 %v456
  %592 = vmatpush.bf16.msra.mxu0 %v455
  %593 = vmatpush.bf16.msra.mxu0 %v454
  %594 = vmatpush.bf16.msra.mxu0 %v453
  %595 = vmatmul.bf16.gmra.mxu0 %v174
  %v596 = vpop.f32.mrf.mxu0
  %v597 = vadd.f32 %v583, %v596
  %v598 = vpop.f32.mrf.mxu0
  %v599 = vadd.f32 %v585, %v598
  %600 = vdwg.mxu0
  %601 = vmatpush.bf16.msra.mxu0 %v468
  %602 = vmatpush.bf16.msra.mxu0 %v467
  %603 = vmatpush.bf16.msra.mxu0 %v466
  %604 = vmatpush.bf16.msra.mxu0 %v465
  %605 = vmatpush.bf16.msra.mxu0 %v464
  %606 = vmatpush.bf16.msra.mxu0 %v463
  %607 = vmatpush.bf16.msra.mxu0 %v462
  %608 = vmatpush.bf16.msra.mxu0 %v461
  %609 = vmatmul.bf16.gmra.mxu0 %v175
  %v610 = vpop.f32.mrf.mxu0
  %v611 = vadd.f32 %v597, %v610
  %v612 = vpop.f32.mrf.mxu0
  %v613 = vadd.f32 %v599, %v612
  %614 = vdwg.mxu0
  %615 = vmatpush.bf16.msra.mxu0 %v476
  %616 = vmatpush.bf16.msra.mxu0 %v475
  %617 = vmatpush.bf16.msra.mxu0 %v474
  %618 = vmatpush.bf16.msra.mxu0 %v473
  %619 = vmatpush.bf16.msra.mxu0 %v472
  %620 = vmatpush.bf16.msra.mxu0 %v471
  %621 = vmatpush.bf16.msra.mxu0 %v470
  %622 = vmatpush.bf16.msra.mxu0 %v469
  %623 = vmatmul.bf16.gmra.mxu0 %v176
  %v624 = vpop.f32.mrf.mxu0
  %v625 = vadd.f32 %v611, %v624
  %v626 = vpop.f32.mrf.mxu0
  %v627 = vadd.f32 %v613, %v626
  %628 = vdwg.mxu0
  %629 = vmatpush.bf16.msra.mxu0 %v484
  %630 = vmatpush.bf16.msra.mxu0 %v483
  %631 = vmatpush.bf16.msra.mxu0 %v482
  %632 = vmatpush.bf16.msra.mxu0 %v481
  %633 = vmatpush.bf16.msra.mxu0 %v480
  %634 = vmatpush.bf16.msra.mxu0 %v479
  %635 = vmatpush.bf16.msra.mxu0 %v478
  %636 = vmatpush.bf16.msra.mxu0 %v477
  %637 = vmatmul.bf16.gmra.mxu0 %v177
  %v638 = vpop.f32.mrf.mxu0
  %v639 = vadd.f32 %v625, %v638
  %v640 = vpop.f32.mrf.mxu0
  %v641 = vadd.f32 %v627, %v640
  %642 = vdwg.mxu0
  %643 = vmatpush.bf16.msra.mxu0 %v492
  %644 = vmatpush.bf16.msra.mxu0 %v491
  %645 = vmatpush.bf16.msra.mxu0 %v490
  %646 = vmatpush.bf16.msra.mxu0 %v489
  %647 = vmatpush.bf16.msra.mxu0 %v488
  %648 = vmatpush.bf16.msra.mxu0 %v487
  %649 = vmatpush.bf16.msra.mxu0 %v486
  %650 = vmatpush.bf16.msra.mxu0 %v485
  %651 = vmatmul.bf16.gmra.mxu0 %v178
  %v652 = vpop.f32.mrf.mxu0
  %v653 = vadd.f32 %v639, %v652
  %v654 = vpop.f32.mrf.mxu0
  %v655 = vadd.f32 %v641, %v654
  %656 = vdwg.mxu0
  %657 = vmatpush.bf16.msra.mxu0 %v500
  %658 = vmatpush.bf16.msra.mxu0 %v499
  %659 = vmatpush.bf16.msra.mxu0 %v498
  %660 = vmatpush.bf16.msra.mxu0 %v497
  %661 = vmatpush.bf16.msra.mxu0 %v496
  %662 = vmatpush.bf16.msra.mxu0 %v495
  %663 = vmatpush.bf16.msra.mxu0 %v494
  %664 = vmatpush.bf16.msra.mxu0 %v493
  %665 = vmatmul.bf16.gmra.mxu0 %v179
  %v666 = vpop.f32.mrf.mxu0
  %v667 = vadd.f32 %v653, %v666
  %v668 = vpop.f32.mrf.mxu0
  %v669 = vadd.f32 %v655, %v668
  %670 = vdwg.mxu0
  %671 = vmatpush.bf16.msra.mxu0 %v508
  %672 = vmatpush.bf16.msra.mxu0 %v507
  %673 = vmatpush.bf16.msra.mxu0 %v506
  %674 = vmatpush.bf16.msra.mxu0 %v505
  %675 = vmatpush.bf16.msra.mxu0 %v504
  %676 = vmatpush.bf16.msra.mxu0 %v503
  %677 = vmatpush.bf16.msra.mxu0 %v502
  %678 = vmatpush.bf16.msra.mxu0 %v501
  %679 = vmatmul.bf16.gmra.mxu0 %v180
  %v680 = vpop.f32.mrf.mxu0
  %v681 = vadd.f32 %v667, %v680
  %v682 = vpop.f32.mrf.mxu0
  %v683 = vadd.f32 %v669, %v682
  %684 = vdwg.mxu0
  %685 = vst [vmem:[%s2] sm:$0xff] %v681
  %686 = vst [vmem:[%s2 + $0x8] sm:$0xff] %v683
  %v687 = vadd.f32 %v681, %v683
  %v688 = vrot.slane %v687, 4
  %v689 = vadd.f32 %v687, %v688
  %v690 = vrot.slane %v689, 2
  %v691 = vadd.f32 %v689, %v690
  %v692 = vrot.slane %v691, 1
  %v693 = vadd.f32 %v691, %v692
  %v694 = vmul.f32 %v681, %v681
  %v695 = vmul.f32 %v683, %v683
  %v696 = vadd.f32 %v694, %v695
  %v697 = vrot.slane %v696, 4
  %v698 = vadd.f32 %v696, %v697
  %v699 = vrot.slane %v698, 2
  %v700 = vadd.f32 %v698, %v699
  %v701 = vrot.slane %v700, 1
  %v702 = vadd.f32 %v700, %v701
  %vm703 = vcmask 1040384
  %v704 = vsel %vm703, %v693, %v702
  %705 = vst [vmem:[%s3] sm:$0x3] %v704
  // Predicated region
  $region10: #{encoder_forward.51} parent=0 // pred_check
    _
  $region11: #{encoder_forward.51} parent=0 // pred_check_branch
    %707 = sbr.rel (0) target = $region13
  $region12: #{encoder_forward.51} parent=0 // pred_region
    _
  $region13: #{encoder_forward.51} parent=0 // pred_fallthru
    _
  // Predicated region
  $region14: #{encoder_forward.51} parent=0 // pred_check
    _
  $region15: #{encoder_forward.51} parent=0 // pred_check_branch
    %709 = sbr.rel (0) target = $region17
  $region16: #{encoder_forward.51} parent=0 // pred_region
    _
  $region17: #{encoder_forward.51} parent=0 // pred_fallthru
    _
  // Predicated region
  $region18: #{encoder_forward.51} parent=0 // pred_check
    _
  $region19: #{encoder_forward.51} parent=0 // pred_check_branch
    %711 = sbr.rel (0) target = $region21
  $region20: #{encoder_forward.51} parent=0 // pred_region
    _
  $region21: #{encoder_forward.51} parent=0 // pred_fallthru
    _
  // Predicated region
  $region22: #{encoder_forward.51} parent=0 // pred_check
    _
  $region23: #{encoder_forward.51} parent=0 // pred_check_branch
    %713 = sbr.rel (0) target = $region25
  $region24: #{encoder_forward.51} parent=0 // pred_region
    _
  $region25: #{encoder_forward.51} parent=0 // pred_fallthru
    _

// kernel: encoder_forward.54
$region0: #{encoder_forward.54}
  #allocation0 [shape = 'u32[]', space=smem, size = 0x4, offset = 0x4, fixed_abs, tag = 'smem constant byte address 0x4 - core index']
  #allocation1 [shape = 'u32[72,128]{1,0:T(1,128)}', space=vmem, size = 0x9000, scoped, tag = 'internal scratch']
  %s0 = inlined_call_operand.vmem [shape: f32[16,256], index: 0, kind: input, shape index: {}]
  %s1 = inlined_call_operand.vmem [shape: f32[1,256], index: 1, kind: input, shape index: {}]
  %s2 = inlined_call_operand.vmem [shape: f32[1,256], index: 2, kind: input, shape index: {}]
  %s3 = inlined_call_operand.vmem [shape: f32[16,256], index: 3, kind: output, shape index: {}]
  %s4 = sld [smem:[#allocation0]]
  $region22: #{encoder_forward.54} parent=0
    _
  %s6 = ssub.s32 1, %s4
  %s7 = scalar_select 0, %s6, %s4
  // Predicated region
  $region2: #{encoder_forward.54} parent=0 // pred_check
    _
  $region3: #{encoder_forward.54} parent=0 // pred_check_branch
    %9 = sbr.rel (0) target = $region5
  $region4: #{encoder_forward.54} parent=0 // pred_region
    _
  $region5: #{encoder_forward.54} parent=0 // pred_fallthru
    _
  // Predicated region
  $region6: #{encoder_forward.54} parent=0 // pred_check
    _
  $region7: #{encoder_forward.54} parent=0 // pred_check_branch
    %11 = sbr.rel (0) target = $region9
  $region8: #{encoder_forward.54} parent=0 // pred_region
    _
  $region9: #{encoder_forward.54} parent=0 // pred_fallthru
    _
  // Predicated region
  $region10: #{encoder_forward.54} parent=0 // pred_check
    _
  $region11: #{encoder_forward.54} parent=0 // pred_check_branch
    %13 = sbr.rel (0) target = $region13
  $region12: #{encoder_forward.54} parent=0 // pred_region
    _
  $region13: #{encoder_forward.54} parent=0 // pred_fallthru
    _
  %v14 = vld [vmem:[%s0] sm:$0xff]
  %v15 = vld [vmem:[%s0 + $0x8] sm:$0xff]
  %v16 = vld [vmem:[%s0 + $0x10] sm:$0xff]
  %v17 = vld [vmem:[%s0 + $0x18] sm:$0xff]
  %v18 = vld [vmem:[%s1] sm:$0x3]
  %v20 = vperm.slane %v18, 0
  %v21 = vperm.slane %v18, 1
  %v24 = vmul.f32 %v14, %v20
  %v25 = vmul.f32 %v15, %v21
  %v26 = vmul.f32 %v16, %v20
  %v27 = vmul.f32 %v17, %v21
  %v28 = vld [vmem:[%s2] sm:$0x3]
  %v30 = vperm.slane %v28, 0
  %v31 = vperm.slane %v28, 1
  %v34 = vadd.f32 %v24, %v30
  %v35 = vadd.f32 %v25, %v31
  %v36 = vadd.f32 %v26, %v30
  %v37 = vadd.f32 %v27, %v31
  %vm38 = vcmp.ge.f32.partialorder %v34, 0.0
  %vm39 = vcmp.ge.f32.partialorder %v35, 0.0
  %vm40 = vcmp.ge.f32.partialorder %v36, 0.0
  %vm41 = vcmp.ge.f32.partialorder %v37, 0.0
  %v42 = vmul.f32 %v34, 0.2
  %v43 = vmul.f32 %v35, 0.2
  %v44 = vmul.f32 %v36, 0.2
  %v45 = vmul.f32 %v37, 0.2
  %v46 = vsel %vm38, %v34, %v42
  %v47 = vsel %vm39, %v35, %v43
  %v48 = vsel %vm40, %v36, %v44
  %v49 = vsel %vm41, %v37, %v45
  %50 = vst [vmem:[%s3] sm:$0xff] %v46
  %51 = vst [vmem:[%s3 + $0x8] sm:$0xff] %v47
  %52 = vst [vmem:[%s3 + $0x10] sm:$0xff] %v48
  %53 = vst [vmem:[%s3 + $0x18] sm:$0xff] %v49
  // Predicated region
  $region14: #{encoder_forward.54} parent=0 // pred_check
    _
  $region15: #{encoder_forward.54} parent=0 // pred_check_branch
    %55 = sbr.rel (0) target = $region17
  $region16: #{encoder_forward.54} parent=0 // pred_region
    _
  $region17: #{encoder_forward.54} parent=0 // pred_fallthru
    _
  // Predicated region
  $region18: #{encoder_forward.54} parent=0 // pred_check
    _
  $region19: #{encoder_forward.54} parent=0 // pred_check_branch
    %57 = sbr.rel (0) target = $region21
  $region20: #{encoder_forward.54} parent=0 // pred_region
    _
  $region21: #{encoder_forward.54} parent=0 // pred_fallthru
    _

// kernel: encoder_forward.53
$region0: #{encoder_forward.53}
  #allocation0 [shape = 'u32[]', space=smem, size = 0x4, offset = 0x4, fixed_abs, tag = 'smem constant byte address 0x4 - core index']
  #allocation1 [shape = 'u32[72,128]{1,0:T(1,128)}', space=vmem, size = 0x9000, scoped, tag = 'internal scratch']
  %s0 = inlined_call_operand.vmem [shape: bf16[16,2048], index: 0, kind: input, shape index: {}]
  %s1 = inlined_call_operand.vmem [shape: bf16[2048,256], index: 1, kind: input, shape index: {}]
  %s2 = inlined_call_operand.vmem [shape: f32[16,256], index: 2, kind: output, shape index: {0}]
  %s3 = inlined_call_operand.vmem [shape: f32[1,2,256], index: 3, kind: output, shape index: {1}]
  %4 = xla_tuple %s2, %s3
  %s5 = sld [smem:[#allocation0]]
  $region26: #{encoder_forward.53} parent=0
    _
  %s7 = ssub.s32 1, %s5
  %s8 = scalar_select 0, %s7, %s5
  // Predicated region
  $region2: #{encoder_forward.53} parent=0 // pred_check
    _
  $region3: #{encoder_forward.53} parent=0 // pred_check_branch
    %10 = sbr.rel (0) target = $region5
  $region4: #{encoder_forward.53} parent=0 // pred_region
    _
  $region5: #{encoder_forward.53} parent=0 // pred_fallthru
    _
  // Predicated region
  $region6: #{encoder_forward.53} parent=0 // pred_check
    _
  $region7: #{encoder_forward.53} parent=0 // pred_check_branch
    %12 = sbr.rel (0) target = $region9
  $region8: #{encoder_forward.53} parent=0 // pred_region
    _
  $region9: #{encoder_forward.53} parent=0 // pred_fallthru
    _
  %v13 = vld [vmem:[%s0] sm:$0xff]
  %v14 = vld [vmem:[%s0 + $0x8] sm:$0xff]
  %v15 = vld [vmem:[%s0 + $0x10] sm:$0xff]
  %v16 = vld [vmem:[%s0 + $0x18] sm:$0xff]
  %v17 = vld [vmem:[%s0 + $0x20] sm:$0xff]
  %v18 = vld [vmem:[%s0 + $0x28] sm:$0xff]
  %v19 = vld [vmem:[%s0 + $0x30] sm:$0xff]
  %v20 = vld [vmem:[%s0 + $0x38] sm:$0xff]
  %v21 = vld [vmem:[%s0 + $0x40] sm:$0xff]
  %v22 = vld [vmem:[%s0 + $0x48] sm:$0xff]
  %v23 = vld [vmem:[%s0 + $0x50] sm:$0xff]
  %v24 = vld [vmem:[%s0 + $0x58] sm:$0xff]
  %v25 = vld [vmem:[%s0 + $0x60] sm:$0xff]
  %v26 = vld [vmem:[%s0 + $0x68] sm:$0xff]
  %v27 = vld [vmem:[%s0 + $0x70] sm:$0xff]
  %v28 = vld [vmem:[%s0 + $0x78] sm:$0xff]
  %v29 = vld [vmem:[%s1] sm:$0xff]
  %v30 = vld [vmem:[%s1 + $0x8] sm:$0xff]
  %v31 = vld [vmem:[%s1 + $0x10] sm:$0xff]
  %v32 = vld [vmem:[%s1 + $0x18] sm:$0xff]
  %v33 = vld [vmem:[%s1 + $0x20] sm:$0xff]
  %v34 = vld [vmem:[%s1 + $0x28] sm:$0xff]
  %v35 = vld [vmem:[%s1 + $0x30] sm:$0xff]
  %v36 = vld [vmem:[%s1 + $0x38] sm:$0xff]
  %v37 = vld [vmem:[%s1 + $0x40] sm:$0xff]
  %v38 = vld [vmem:[%s1 + $0x48] sm:$0xff]
  %v39 = vld [vmem:[%s1 + $0x50] sm:$0xff]
  %v40 = vld [vmem:[%s1 + $0x58] sm:$0xff]
  %v41 = vld [vmem:[%s1 + $0x60] sm:$0xff]
  %v42 = vld [vmem:[%s1 + $0x68] sm:$0xff]
  %v43 = vld [vmem:[%s1 + $0x70] sm:$0xff]
  %v44 = vld [vmem:[%s1 + $0x78] sm:$0xff]
  %v45 = vld [vmem:[%s1 + $0x80] sm:$0xff]
  %v46 = vld [vmem:[%s1 + $0x88] sm:$0xff]
  %v47 = vld [vmem:[%s1 + $0x90] sm:$0xff]
  %v48 = vld [vmem:[%s1 + $0x98] sm:$0xff]
  %v49 = vld [vmem:[%s1 + $0xa0] sm:$0xff]
  %v50 = vld [vmem:[%s1 + $0xa8] sm:$0xff]
  %v51 = vld [vmem:[%s1 + $0xb0] sm:$0xff]
  %v52 = vld [vmem:[%s1 + $0xb8] sm:$0xff]
  %v53 = vld [vmem:[%s1 + $0xc0] sm:$0xff]
  %v54 = vld [vmem:[%s1 + $0xc8] sm:$0xff]
  %v55 = vld [vmem:[%s1 + $0xd0] sm:$0xff]
  %v56 = vld [vmem:[%s1 + $0xd8] sm:$0xff]
  %v57 = vld [vmem:[%s1 + $0xe0] sm:$0xff]
  %v58 = vld [vmem:[%s1 + $0xe8] sm:$0xff]
  %v59 = vld [vmem:[%s1 + $0xf0] sm:$0xff]
  %v60 = vld [vmem:[%s1 + $0xf8] sm:$0xff]
  %v61 = vld [vmem:[%s1 + $0x100] sm:$0xff]
  %v62 = vld [vmem:[%s1 + $0x108] sm:$0xff]
  %v63 = vld [vmem:[%s1 + $0x110] sm:$0xff]
  %v64 = vld [vmem:[%s1 + $0x118] sm:$0xff]
  %v65 = vld [vmem:[%s1 + $0x120] sm:$0xff]
  %v66 = vld [vmem:[%s1 + $0x128] sm:$0xff]
  %v67 = vld [vmem:[%s1 + $0x130] sm:$0xff]
  %v68 = vld [vmem:[%s1 + $0x138] sm:$0xff]
  %v69 = vld [vmem:[%s1 + $0x140] sm:$0xff]
  %v70 = vld [vmem:[%s1 + $0x148] sm:$0xff]
  %v71 = vld [vmem:[%s1 + $0x150] sm:$0xff]
  %v72 = vld [vmem:[%s1 + $0x158] sm:$0xff]
  %v73 = vld [vmem:[%s1 + $0x160] sm:$0xff]
  %v74 = vld [vmem:[%s1 + $0x168] sm:$0xff]
  %v75 = vld [vmem:[%s1 + $0x170] sm:$0xff]
  %v76 = vld [vmem:[%s1 + $0x178] sm:$0xff]
  %v77 = vld [vmem:[%s1 + $0x180] sm:$0xff]
  %v78 = vld [vmem:[%s1 + $0x188] sm:$0xff]
  %v79 = vld [vmem:[%s1 + $0x190] sm:$0xff]
  %v80 = vld [vmem:[%s1 + $0x198] sm:$0xff]
  %v81 = vld [vmem:[%s1 + $0x1a0] sm:$0xff]
  %v82 = vld [vmem:[%s1 + $0x1a8] sm:$0xff]
  %v83 = vld [vmem:[%s1 + $0x1b0] sm:$0xff]
  %v84 = vld [vmem:[%s1 + $0x1b8] sm:$0xff]
  %v85 = vld [vmem:[%s1 + $0x1c0] sm:$0xff]
  %v86 = vld [vmem:[%s1 + $0x1c8] sm:$0xff]
  %v87 = vld [vmem:[%s1 + $0x1d0] sm:$0xff]
  %v88 = vld [vmem:[%s1 + $0x1d8] sm:$0xff]
  %v89 = vld [vmem:[%s1 + $0x1e0] sm:$0xff]
  %v90 = vld [vmem:[%s1 + $0x1e8] sm:$0xff]
  %v91 = vld [vmem:[%s1 + $0x1f0] sm:$0xff]
  %v92 = vld [vmem:[%s1 + $0x1f8] sm:$0xff]
  %v93 = vld [vmem:[%s1 + $0x200] sm:$0xff]
  %v94 = vld [vmem:[%s1 + $0x208] sm:$0xff]
  %v95 = vld [vmem:[%s1 + $0x210] sm:$0xff]
  %v96 = vld [vmem:[%s1 + $0x218] sm:$0xff]
  %v97 = vld [vmem:[%s1 + $0x220] sm:$0xff]
  %v98 = vld [vmem:[%s1 + $0x228] sm:$0xff]
  %v99 = vld [vmem:[%s1 + $0x230] sm:$0xff]
  %v100 = vld [vmem:[%s1 + $0x238] sm:$0xff]
  %v101 = vld [vmem:[%s1 + $0x240] sm:$0xff]
  %v102 = vld [vmem:[%s1 + $0x248] sm:$0xff]
  %v103 = vld [vmem:[%s1 + $0x250] sm:$0xff]
  %v104 = vld [vmem:[%s1 + $0x258] sm:$0xff]
  %v105 = vld [vmem:[%s1 + $0x260] sm:$0xff]
  %v106 = vld [vmem:[%s1 + $0x268] sm:$0xff]
  %v107 = vld [vmem:[%s1 + $0x270] sm:$0xff]
  %v108 = vld [vmem:[%s1 + $0x278] sm:$0xff]
  %v109 = vld [vmem:[%s1 + $0x280] sm:$0xff]
  %v110 = vld [vmem:[%s1 + $0x288] sm:$0xff]
  %v111 = vld [vmem:[%s1 + $0x290] sm:$0xff]
  %v112 = vld [vmem:[%s1 + $0x298] sm:$0xff]
  %v113 = vld [vmem:[%s1 + $0x2a0] sm:$0xff]
  %v114 = vld [vmem:[%s1 + $0x2a8] sm:$0xff]
  %v115 = vld [vmem:[%s1 + $0x2b0] sm:$0xff]
  %v116 = vld [vmem:[%s1 + $0x2b8] sm:$0xff]
  %v117 = vld [vmem:[%s1 + $0x2c0] sm:$0xff]
  %v118 = vld [vmem:[%s1 + $0x2c8] sm:$0xff]
  %v119 = vld [vmem:[%s1 + $0x2d0] sm:$0xff]
  %v120 = vld [vmem:[%s1 + $0x2d8] sm:$0xff]
  %v121 = vld [vmem:[%s1 + $0x2e0] sm:$0xff]
  %v122 = vld [vmem:[%s1 + $0x2e8] sm:$0xff]
  %v123 = vld [vmem:[%s1 + $0x2f0] sm:$0xff]
  %v124 = vld [vmem:[%s1 + $0x2f8] sm:$0xff]
  %v125 = vld [vmem:[%s1 + $0x300] sm:$0xff]
  %v126 = vld [vmem:[%s1 + $0x308] sm:$0xff]
  %v127 = vld [vmem:[%s1 + $0x310] sm:$0xff]
  %v128 = vld [vmem:[%s1 + $0x318] sm:$0xff]
  %v129 = vld [vmem:[%s1 + $0x320] sm:$0xff]
  %v130 = vld [vmem:[%s1 + $0x328] sm:$0xff]
  %v131 = vld [vmem:[%s1 + $0x330] sm:$0xff]
  %v132 = vld [vmem:[%s1 + $0x338] sm:$0xff]
  %v133 = vld [vmem:[%s1 + $0x340] sm:$0xff]
  %v134 = vld [vmem:[%s1 + $0x348] sm:$0xff]
  %v135 = vld [vmem:[%s1 + $0x350] sm:$0xff]
  %v136 = vld [vmem:[%s1 + $0x358] sm:$0xff]
  %v137 = vld [vmem:[%s1 + $0x360] sm:$0xff]
  %v138 = vld [vmem:[%s1 + $0x368] sm:$0xff]
  %v139 = vld [vmem:[%s1 + $0x370] sm:$0xff]
  %v140 = vld [vmem:[%s1 + $0x378] sm:$0xff]
  %v141 = vld [vmem:[%s1 + $0x380] sm:$0xff]
  %v142 = vld [vmem:[%s1 + $0x388] sm:$0xff]
  %v143 = vld [vmem:[%s1 + $0x390] sm:$0xff]
  %v144 = vld [vmem:[%s1 + $0x398] sm:$0xff]
  %v145 = vld [vmem:[%s1 + $0x3a0] sm:$0xff]
  %v146 = vld [vmem:[%s1 + $0x3a8] sm:$0xff]
  %v147 = vld [vmem:[%s1 + $0x3b0] sm:$0xff]
  %v148 = vld [vmem:[%s1 + $0x3b8] sm:$0xff]
  %v149 = vld [vmem:[%s1 + $0x3c0] sm:$0xff]
  %v150 = vld [vmem:[%s1 + $0x3c8] sm:$0xff]
  %v151 = vld [vmem:[%s1 + $0x3d0] sm:$0xff]
  %v152 = vld [vmem:[%s1 + $0x3d8] sm:$0xff]
  %v153 = vld [vmem:[%s1 + $0x3e0] sm:$0xff]
  %v154 = vld [vmem:[%s1 + $0x3e8] sm:$0xff]
  %v155 = vld [vmem:[%s1 + $0x3f0] sm:$0xff]
  %v156 = vld [vmem:[%s1 + $0x3f8] sm:$0xff]
  %v157 = vld [vmem:[%s1 + $0x400] sm:$0xff]
  %v158 = vld [vmem:[%s1 + $0x408] sm:$0xff]
  %v159 = vld [vmem:[%s1 + $0x410] sm:$0xff]
  %v160 = vld [vmem:[%s1 + $0x418] sm:$0xff]
  %v161 = vld [vmem:[%s1 + $0x420] sm:$0xff]
  %v162 = vld [vmem:[%s1 + $0x428] sm:$0xff]
  %v163 = vld [vmem:[%s1 + $0x430] sm:$0xff]
  %v164 = vld [vmem:[%s1 + $0x438] sm:$0xff]
  %v165 = vld [vmem:[%s1 + $0x440] sm:$0xff]
  %v166 = vld [vmem:[%s1 + $0x448] sm:$0xff]
  %v167 = vld [vmem:[%s1 + $0x450] sm:$0xff]
  %v168 = vld [vmem:[%s1 + $0x458] sm:$0xff]
  %v169 = vld [vmem:[%s1 + $0x460] sm:$0xff]
  %v170 = vld [vmem:[%s1 + $0x468] sm:$0xff]
  %v171 = vld [vmem:[%s1 + $0x470] sm:$0xff]
  %v172 = vld [vmem:[%s1 + $0x478] sm:$0xff]
  %v173 = vld [vmem:[%s1 + $0x480] sm:$0xff]
  %v174 = vld [vmem:[%s1 + $0x488] sm:$0xff]
  %v175 = vld [vmem:[%s1 + $0x490] sm:$0xff]
  %v176 = vld [vmem:[%s1 + $0x498] sm:$0xff]
  %v177 = vld [vmem:[%s1 + $0x4a0] sm:$0xff]
  %v178 = vld [vmem:[%s1 + $0x4a8] sm:$0xff]
  %v179 = vld [vmem:[%s1 + $0x4b0] sm:$0xff]
  %v180 = vld [vmem:[%s1 + $0x4b8] sm:$0xff]
  %v181 = vld [vmem:[%s1 + $0x4c0] sm:$0xff]
  %v182 = vld [vmem:[%s1 + $0x4c8] sm:$0xff]
  %v183 = vld [vmem:[%s1 + $0x4d0] sm:$0xff]
  %v184 = vld [vmem:[%s1 + $0x4d8] sm:$0xff]
  %v185 = vld [vmem:[%s1 + $0x4e0] sm:$0xff]
  %v186 = vld [vmem:[%s1 + $0x4e8] sm:$0xff]
  %v187 = vld [vmem:[%s1 + $0x4f0] sm:$0xff]
  %v188 = vld [vmem:[%s1 + $0x4f8] sm:$0xff]
  %v189 = vld [vmem:[%s1 + $0x500] sm:$0xff]
  %v190 = vld [vmem:[%s1 + $0x508] sm:$0xff]
  %v191 = vld [vmem:[%s1 + $0x510] sm:$0xff]
  %v192 = vld [vmem:[%s1 + $0x518] sm:$0xff]
  %v193 = vld [vmem:[%s1 + $0x520] sm:$0xff]
  %v194 = vld [vmem:[%s1 + $0x528] sm:$0xff]
  %v195 = vld [vmem:[%s1 + $0x530] sm:$0xff]
  %v196 = vld [vmem:[%s1 + $0x538] sm:$0xff]
  %v197 = vld [vmem:[%s1 + $0x540] sm:$0xff]
  %v198 = vld [vmem:[%s1 + $0x548] sm:$0xff]
  %v199 = vld [vmem:[%s1 + $0x550] sm:$0xff]
  %v200 = vld [vmem:[%s1 + $0x558] sm:$0xff]
  %v201 = vld [vmem:[%s1 + $0x560] sm:$0xff]
  %v202 = vld [vmem:[%s1 + $0x568] sm:$0xff]
  %v203 = vld [vmem:[%s1 + $0x570] sm:$0xff]
  %v204 = vld [vmem:[%s1 + $0x578] sm:$0xff]
  %v205 = vld [vmem:[%s1 + $0x580] sm:$0xff]
  %v206 = vld [vmem:[%s1 + $0x588] sm:$0xff]
  %v207 = vld [vmem:[%s1 + $0x590] sm:$0xff]
  %v208 = vld [vmem:[%s1 + $0x598] sm:$0xff]
  %v209 = vld [vmem:[%s1 + $0x5a0] sm:$0xff]
  %v210 = vld [vmem:[%s1 + $0x5a8] sm:$0xff]
  %v211 = vld [vmem:[%s1 + $0x5b0] sm:$0xff]
  %v212 = vld [vmem:[%s1 + $0x5b8] sm:$0xff]
  %v213 = vld [vmem:[%s1 + $0x5c0] sm:$0xff]
  %v214 = vld [vmem:[%s1 + $0x5c8] sm:$0xff]
  %v215 = vld [vmem:[%s1 + $0x5d0] sm:$0xff]
  %v216 = vld [vmem:[%s1 + $0x5d8] sm:$0xff]
  %v217 = vld [vmem:[%s1 + $0x5e0] sm:$0xff]
  %v218 = vld [vmem:[%s1 + $0x5e8] sm:$0xff]
  %v219 = vld [vmem:[%s1 + $0x5f0] sm:$0xff]
  %v220 = vld [vmem:[%s1 + $0x5f8] sm:$0xff]
  %v221 = vld [vmem:[%s1 + $0x600] sm:$0xff]
  %v222 = vld [vmem:[%s1 + $0x608] sm:$0xff]
  %v223 = vld [vmem:[%s1 + $0x610] sm:$0xff]
  %v224 = vld [vmem:[%s1 + $0x618] sm:$0xff]
  %v225 = vld [vmem:[%s1 + $0x620] sm:$0xff]
  %v226 = vld [vmem:[%s1 + $0x628] sm:$0xff]
  %v227 = vld [vmem:[%s1 + $0x630] sm:$0xff]
  %v228 = vld [vmem:[%s1 + $0x638] sm:$0xff]
  %v229 = vld [vmem:[%s1 + $0x640] sm:$0xff]
  %v230 = vld [vmem:[%s1 + $0x648] sm:$0xff]
  %v231 = vld [vmem:[%s1 + $0x650] sm:$0xff]
  %v232 = vld [vmem:[%s1 + $0x658] sm:$0xff]
  %v233 = vld [vmem:[%s1 + $0x660] sm:$0xff]
  %v234 = vld [vmem:[%s1 + $0x668] sm:$0xff]
  %v235 = vld [vmem:[%s1 + $0x670] sm:$0xff]
  %v236 = vld [vmem:[%s1 + $0x678] sm:$0xff]
  %v237 = vld [vmem:[%s1 + $0x680] sm:$0xff]
  %v238 = vld [vmem:[%s1 + $0x688] sm:$0xff]
  %v239 = vld [vmem:[%s1 + $0x690] sm:$0xff]
  %v240 = vld [vmem:[%s1 + $0x698] sm:$0xff]
  %v241 = vld [vmem:[%s1 + $0x6a0] sm:$0xff]
  %v242 = vld [vmem:[%s1 + $0x6a8] sm:$0xff]
  %v243 = vld [vmem:[%s1 + $0x6b0] sm:$0xff]
  %v244 = vld [vmem:[%s1 + $0x6b8] sm:$0xff]
  %v245 = vld [vmem:[%s1 + $0x6c0] sm:$0xff]
  %v246 = vld [vmem:[%s1 + $0x6c8] sm:$0xff]
  %v247 = vld [vmem:[%s1 + $0x6d0] sm:$0xff]
  %v248 = vld [vmem:[%s1 + $0x6d8] sm:$0xff]
  %v249 = vld [vmem:[%s1 + $0x6e0] sm:$0xff]
  %v250 = vld [vmem:[%s1 + $0x6e8] sm:$0xff]
  %v251 = vld [vmem:[%s1 + $0x6f0] sm:$0xff]
  %v252 = vld [vmem:[%s1 + $0x6f8] sm:$0xff]
  %v253 = vld [vmem:[%s1 + $0x700] sm:$0xff]
  %v254 = vld [vmem:[%s1 + $0x708] sm:$0xff]
  %v255 = vld [vmem:[%s1 + $0x710] sm:$0xff]
  %v256 = vld [vmem:[%s1 + $0x718] sm:$0xff]
  %v257 = vld [vmem:[%s1 + $0x720] sm:$0xff]
  %v258 = vld [vmem:[%s1 + $0x728] sm:$0xff]
  %v259 = vld [vmem:[%s1 + $0x730] sm:$0xff]
  %v260 = vld [vmem:[%s1 + $0x738] sm:$0xff]
  %v261 = vld [vmem:[%s1 + $0x740] sm:$0xff]
  %v262 = vld [vmem:[%s1 + $0x748] sm:$0xff]
  %v263 = vld [vmem:[%s1 + $0x750] sm:$0xff]
  %v264 = vld [vmem:[%s1 + $0x758] sm:$0xff]
  %v265 = vld [vmem:[%s1 + $0x760] sm:$0xff]
  %v266 = vld [vmem:[%s1 + $0x768] sm:$0xff]
  %v267 = vld [vmem:[%s1 + $0x770] sm:$0xff]
  %v268 = vld [vmem:[%s1 + $0x778] sm:$0xff]
  %v269 = vld [vmem:[%s1 + $0x780] sm:$0xff]
  %v270 = vld [vmem:[%s1 + $0x788] sm:$0xff]
  %v271 = vld [vmem:[%s1 + $0x790] sm:$0xff]
  %v272 = vld [vmem:[%s1 + $0x798] sm:$0xff]
  %v273 = vld [vmem:[%s1 + $0x7a0] sm:$0xff]
  %v274 = vld [vmem:[%s1 + $0x7a8] sm:$0xff]
  %v275 = vld [vmem:[%s1 + $0x7b0] sm:$0xff]
  %v276 = vld [vmem:[%s1 + $0x7b8] sm:$0xff]
  %v277 = vld [vmem:[%s1 + $0x7c0] sm:$0xff]
  %v278 = vld [vmem:[%s1 + $0x7c8] sm:$0xff]
  %v279 = vld [vmem:[%s1 + $0x7d0] sm:$0xff]
  %v280 = vld [vmem:[%s1 + $0x7d8] sm:$0xff]
  %v281 = vld [vmem:[%s1 + $0x7e0] sm:$0xff]
  %v282 = vld [vmem:[%s1 + $0x7e8] sm:$0xff]
  %v283 = vld [vmem:[%s1 + $0x7f0] sm:$0xff]
  %v284 = vld [vmem:[%s1 + $0x7f8] sm:$0xff]
  %v301 = vunpack.c.l.b16 %v13
  %v302 = vunpack.c.h.b16 %v13
  %v303 = vunpack.c.l.b16 %v14
  %v304 = vunpack.c.h.b16 %v14
  %v305 = vunpack.c.l.b16 %v15
  %v306 = vunpack.c.h.b16 %v15
  %v307 = vunpack.c.l.b16 %v16
  %v308 = vunpack.c.h.b16 %v16
  %v309 = vunpack.c.l.b16 %v17
  %v310 = vunpack.c.h.b16 %v17
  %v311 = vunpack.c.l.b16 %v18
  %v312 = vunpack.c.h.b16 %v18
  %v313 = vunpack.c.l.b16 %v19
  %v314 = vunpack.c.h.b16 %v19
  %v315 = vunpack.c.l.b16 %v20
  %v316 = vunpack.c.h.b16 %v20
  %v317 = vunpack.c.l.b16 %v21
  %v318 = vunpack.c.h.b16 %v21
  %v319 = vunpack.c.l.b16 %v22
  %v320 = vunpack.c.h.b16 %v22
  %v321 = vunpack.c.l.b16 %v23
  %v322 = vunpack.c.h.b16 %v23
  %v323 = vunpack.c.l.b16 %v24
  %v324 = vunpack.c.h.b16 %v24
  %v325 = vunpack.c.l.b16 %v25
  %v326 = vunpack.c.h.b16 %v25
  %v327 = vunpack.c.l.b16 %v26
  %v328 = vunpack.c.h.b16 %v26
  %v329 = vunpack.c.l.b16 %v27
  %v330 = vunpack.c.h.b16 %v27
  %v331 = vunpack.c.l.b16 %v28
  %v332 = vunpack.c.h.b16 %v28
  %v333 = vpack.c.b16 %v317, %v301
  %v334 = vpack.c.b16 %v318, %v302
  %v335 = vpack.c.b16 %v319, %v303
  %v336 = vpack.c.b16 %v320, %v304
  %v337 = vpack.c.b16 %v321, %v305
  %v338 = vpack.c.b16 %v322, %v306
  %v339 = vpack.c.b16 %v323, %v307
  %v340 = vpack.c.b16 %v324, %v308
  %v341 = vpack.c.b16 %v325, %v309
  %v342 = vpack.c.b16 %v326, %v310
  %v343 = vpack.c.b16 %v327, %v311
  %v344 = vpack.c.b16 %v328, %v312
  %v345 = vpack.c.b16 %v329, %v313
  %v346 = vpack.c.b16 %v330, %v314
  %v347 = vpack.c.b16 %v331, %v315
  %v348 = vpack.c.b16 %v332, %v316
  %v621 = vunpack.c.l.b16 %v29
  %v622 = vunpack.c.h.b16 %v29
  %v623 = vunpack.c.l.b16 %v30
  %v624 = vunpack.c.h.b16 %v30
  %v625 = vunpack.c.l.b16 %v31
  %v626 = vunpack.c.h.b16 %v31
  %v627 = vunpack.c.l.b16 %v32
  %v628 = vunpack.c.h.b16 %v32
  %v629 = vunpack.c.l.b16 %v33
  %v630 = vunpack.c.h.b16 %v33
  %v631 = vunpack.c.l.b16 %v34
  %v632 = vunpack.c.h.b16 %v34
  %v633 = vunpack.c.l.b16 %v35
  %v634 = vunpack.c.h.b16 %v35
  %v635 = vunpack.c.l.b16 %v36
  %v636 = vunpack.c.h.b16 %v36
  %v637 = vunpack.c.l.b16 %v37
  %v638 = vunpack.c.h.b16 %v37
  %v639 = vunpack.c.l.b16 %v38
  %v640 = vunpack.c.h.b16 %v38
  %v641 = vunpack.c.l.b16 %v39
  %v642 = vunpack.c.h.b16 %v39
  %v643 = vunpack.c.l.b16 %v40
  %v644 = vunpack.c.h.b16 %v40
  %v645 = vunpack.c.l.b16 %v41
  %v646 = vunpack.c.h.b16 %v41
  %v647 = vunpack.c.l.b16 %v42
  %v648 = vunpack.c.h.b16 %v42
  %v649 = vunpack.c.l.b16 %v43
  %v650 = vunpack.c.h.b16 %v43
  %v651 = vunpack.c.l.b16 %v44
  %v652 = vunpack.c.h.b16 %v44
  %v653 = vunpack.c.l.b16 %v45
  %v654 = vunpack.c.h.b16 %v45
  %v655 = vunpack.c.l.b16 %v46
  %v656 = vunpack.c.h.b16 %v46
  %v657 = vunpack.c.l.b16 %v47
  %v658 = vunpack.c.h.b16 %v47
  %v659 = vunpack.c.l.b16 %v48
  %v660 = vunpack.c.h.b16 %v48
  %v661 = vunpack.c.l.b16 %v49
  %v662 = vunpack.c.h.b16 %v49
  %v663 = vunpack.c.l.b16 %v50
  %v664 = vunpack.c.h.b16 %v50
  %v665 = vunpack.c.l.b16 %v51
  %v666 = vunpack.c.h.b16 %v51
  %v667 = vunpack.c.l.b16 %v52
  %v668 = vunpack.c.h.b16 %v52
  %v669 = vunpack.c.l.b16 %v53
  %v670 = vunpack.c.h.b16 %v53
  %v671 = vunpack.c.l.b16 %v54
  %v672 = vunpack.c.h.b16 %v54
  %v673 = vunpack.c.l.b16 %v55
  %v674 = vunpack.c.h.b16 %v55
  %v675 = vunpack.c.l.b16 %v56
  %v676 = vunpack.c.h.b16 %v56
  %v677 = vunpack.c.l.b16 %v57
  %v678 = vunpack.c.h.b16 %v57
  %v679 = vunpack.c.l.b16 %v58
  %v680 = vunpack.c.h.b16 %v58
  %v681 = vunpack.c.l.b16 %v59
  %v682 = vunpack.c.h.b16 %v59
  %v683 = vunpack.c.l.b16 %v60
  %v684 = vunpack.c.h.b16 %v60
  %v685 = vunpack.c.l.b16 %v61
  %v686 = vunpack.c.h.b16 %v61
  %v687 = vunpack.c.l.b16 %v62
  %v688 = vunpack.c.h.b16 %v62
  %v689 = vunpack.c.l.b16 %v63
  %v690 = vunpack.c.h.b16 %v63
  %v691 = vunpack.c.l.b16 %v64
  %v692 = vunpack.c.h.b16 %v64
  %v693 = vunpack.c.l.b16 %v65
  %v694 = vunpack.c.h.b16 %v65
  %v695 = vunpack.c.l.b16 %v66
  %v696 = vunpack.c.h.b16 %v66
  %v697 = vunpack.c.l.b16 %v67
  %v698 = vunpack.c.h.b16 %v67
  %v699 = vunpack.c.l.b16 %v68
  %v700 = vunpack.c.h.b16 %v68
  %v701 = vunpack.c.l.b16 %v69
  %v702 = vunpack.c.h.b16 %v69
  %v703 = vunpack.c.l.b16 %v70
  %v704 = vunpack.c.h.b16 %v70
  %v705 = vunpack.c.l.b16 %v71
  %v706 = vunpack.c.h.b16 %v71
  %v707 = vunpack.c.l.b16 %v72
  %v708 = vunpack.c.h.b16 %v72
  %v709 = vunpack.c.l.b16 %v73
  %v710 = vunpack.c.h.b16 %v73
  %v711 = vunpack.c.l.b16 %v74
  %v712 = vunpack.c.h.b16 %v74
  %v713 = vunpack.c.l.b16 %v75
  %v714 = vunpack.c.h.b16 %v75
  %v715 = vunpack.c.l.b16 %v76
  %v716 = vunpack.c.h.b16 %v76
  %v717 = vunpack.c.l.b16 %v77
  %v718 = vunpack.c.h.b16 %v77
  %v719 = vunpack.c.l.b16 %v78
  %v720 = vunpack.c.h.b16 %v78
  %v721 = vunpack.c.l.b16 %v79
  %v722 = vunpack.c.h.b16 %v79
  %v723 = vunpack.c.l.b16 %v80
  %v724 = vunpack.c.h.b16 %v80
  %v725 = vunpack.c.l.b16 %v81
  %v726 = vunpack.c.h.b16 %v81
  %v727 = vunpack.c.l.b16 %v82
  %v728 = vunpack.c.h.b16 %v82
  %v729 = vunpack.c.l.b16 %v83
  %v730 = vunpack.c.h.b16 %v83
  %v731 = vunpack.c.l.b16 %v84
  %v732 = vunpack.c.h.b16 %v84
  %v733 = vunpack.c.l.b16 %v85
  %v734 = vunpack.c.h.b16 %v85
  %v735 = vunpack.c.l.b16 %v86
  %v736 = vunpack.c.h.b16 %v86
  %v737 = vunpack.c.l.b16 %v87
  %v738 = vunpack.c.h.b16 %v87
  %v739 = vunpack.c.l.b16 %v88
  %v740 = vunpack.c.h.b16 %v88
  %v741 = vunpack.c.l.b16 %v89
  %v742 = vunpack.c.h.b16 %v89
  %v743 = vunpack.c.l.b16 %v90
  %v744 = vunpack.c.h.b16 %v90
  %v745 = vunpack.c.l.b16 %v91
  %v746 = vunpack.c.h.b16 %v91
  %v747 = vunpack.c.l.b16 %v92
  %v748 = vunpack.c.h.b16 %v92
  %v749 = vunpack.c.l.b16 %v93
  %v750 = vunpack.c.h.b16 %v93
  %v751 = vunpack.c.l.b16 %v94
  %v752 = vunpack.c.h.b16 %v94
  %v753 = vunpack.c.l.b16 %v95
  %v754 = vunpack.c.h.b16 %v95
  %v755 = vunpack.c.l.b16 %v96
  %v756 = vunpack.c.h.b16 %v96
  %v757 = vunpack.c.l.b16 %v97
  %v758 = vunpack.c.h.b16 %v97
  %v759 = vunpack.c.l.b16 %v98
  %v760 = vunpack.c.h.b16 %v98
  %v761 = vunpack.c.l.b16 %v99
  %v762 = vunpack.c.h.b16 %v99
  %v763 = vunpack.c.l.b16 %v100
  %v764 = vunpack.c.h.b16 %v100
  %v765 = vunpack.c.l.b16 %v101
  %v766 = vunpack.c.h.b16 %v101
  %v767 = vunpack.c.l.b16 %v102
  %v768 = vunpack.c.h.b16 %v102
  %v769 = vunpack.c.l.b16 %v103
  %v770 = vunpack.c.h.b16 %v103
  %v771 = vunpack.c.l.b16 %v104
  %v772 = vunpack.c.h.b16 %v104
  %v773 = vunpack.c.l.b16 %v105
  %v774 = vunpack.c.h.b16 %v105
  %v775 = vunpack.c.l.b16 %v106
  %v776 = vunpack.c.h.b16 %v106
  %v777 = vunpack.c.l.b16 %v107
  %v778 = vunpack.c.h.b16 %v107
  %v779 = vunpack.c.l.b16 %v108
  %v780 = vunpack.c.h.b16 %v108
  %v781 = vunpack.c.l.b16 %v109
  %v782 = vunpack.c.h.b16 %v109
  %v783 = vunpack.c.l.b16 %v110
  %v784 = vunpack.c.h.b16 %v110
  %v785 = vunpack.c.l.b16 %v111
  %v786 = vunpack.c.h.b16 %v111
  %v787 = vunpack.c.l.b16 %v112
  %v788 = vunpack.c.h.b16 %v112
  %v789 = vunpack.c.l.b16 %v113
  %v790 = vunpack.c.h.b16 %v113
  %v791 = vunpack.c.l.b16 %v114
  %v792 = vunpack.c.h.b16 %v114
  %v793 = vunpack.c.l.b16 %v115
  %v794 = vunpack.c.h.b16 %v115
  %v795 = vunpack.c.l.b16 %v116
  %v796 = vunpack.c.h.b16 %v116
  %v797 = vunpack.c.l.b16 %v117
  %v798 = vunpack.c.h.b16 %v117
  %v799 = vunpack.c.l.b16 %v118
  %v800 = vunpack.c.h.b16 %v118
  %v801 = vunpack.c.l.b16 %v119
  %v802 = vunpack.c.h.b16 %v119
  %v803 = vunpack.c.l.b16 %v120
  %v804 = vunpack.c.h.b16 %v120
  %v805 = vunpack.c.l.b16 %v121
  %v806 = vunpack.c.h.b16 %v121
  %v807 = vunpack.c.l.b16 %v122
  %v808 = vunpack.c.h.b16 %v122
  %v809 = vunpack.c.l.b16 %v123
  %v810 = vunpack.c.h.b16 %v123
  %v811 = vunpack.c.l.b16 %v124
  %v812 = vunpack.c.h.b16 %v124
  %v813 = vunpack.c.l.b16 %v125
  %v814 = vunpack.c.h.b16 %v125
  %v815 = vunpack.c.l.b16 %v126
  %v816 = vunpack.c.h.b16 %v126
  %v817 = vunpack.c.l.b16 %v127
  %v818 = vunpack.c.h.b16 %v127
  %v819 = vunpack.c.l.b16 %v128
  %v820 = vunpack.c.h.b16 %v128
  %v821 = vunpack.c.l.b16 %v129
  %v822 = vunpack.c.h.b16 %v129
  %v823 = vunpack.c.l.b16 %v130
  %v824 = vunpack.c.h.b16 %v130
  %v825 = vunpack.c.l.b16 %v131
  %v826 = vunpack.c.h.b16 %v131
  %v827 = vunpack.c.l.b16 %v132
  %v828 = vunpack.c.h.b16 %v132
  %v829 = vunpack.c.l.b16 %v133
  %v830 = vunpack.c.h.b16 %v133
  %v831 = vunpack.c.l.b16 %v134
  %v832 = vunpack.c.h.b16 %v134
  %v833 = vunpack.c.l.b16 %v135
  %v834 = vunpack.c.h.b16 %v135
  %v835 = vunpack.c.l.b16 %v136
  %v836 = vunpack.c.h.b16 %v136
  %v837 = vunpack.c.l.b16 %v137
  %v838 = vunpack.c.h.b16 %v137
  %v839 = vunpack.c.l.b16 %v138
  %v840 = vunpack.c.h.b16 %v138
  %v841 = vunpack.c.l.b16 %v139
  %v842 = vunpack.c.h.b16 %v139
  %v843 = vunpack.c.l.b16 %v140
  %v844 = vunpack.c.h.b16 %v140
  %v845 = vunpack.c.l.b16 %v141
  %v846 = vunpack.c.h.b16 %v141
  %v847 = vunpack.c.l.b16 %v142
  %v848 = vunpack.c.h.b16 %v142
  %v849 = vunpack.c.l.b16 %v143
  %v850 = vunpack.c.h.b16 %v143
  %v851 = vunpack.c.l.b16 %v144
  %v852 = vunpack.c.h.b16 %v144
  %v853 = vunpack.c.l.b16 %v145
  %v854 = vunpack.c.h.b16 %v145
  %v855 = vunpack.c.l.b16 %v146
  %v856 = vunpack.c.h.b16 %v146
  %v857 = vunpack.c.l.b16 %v147
  %v858 = vunpack.c.h.b16 %v147
  %v859 = vunpack.c.l.b16 %v148
  %v860 = vunpack.c.h.b16 %v148
  %v861 = vunpack.c.l.b16 %v149
  %v862 = vunpack.c.h.b16 %v149
  %v863 = vunpack.c.l.b16 %v150
  %v864 = vunpack.c.h.b16 %v150
  %v865 = vunpack.c.l.b16 %v151
  %v866 = vunpack.c.h.b16 %v151
  %v867 = vunpack.c.l.b16 %v152
  %v868 = vunpack.c.h.b16 %v152
  %v869 = vunpack.c.l.b16 %v153
  %v870 = vunpack.c.h.b16 %v153
  %v871 = vunpack.c.l.b16 %v154
  %v872 = vunpack.c.h.b16 %v154
  %v873 = vunpack.c.l.b16 %v155
  %v874 = vunpack.c.h.b16 %v155
  %v875 = vunpack.c.l.b16 %v156
  %v876 = vunpack.c.h.b16 %v156
  %v877 = vunpack.c.l.b16 %v157
  %v878 = vunpack.c.h.b16 %v157
  %v879 = vunpack.c.l.b16 %v158
  %v880 = vunpack.c.h.b16 %v158
  %v881 = vunpack.c.l.b16 %v159
  %v882 = vunpack.c.h.b16 %v159
  %v883 = vunpack.c.l.b16 %v160
  %v884 = vunpack.c.h.b16 %v160
  %v885 = vunpack.c.l.b16 %v161
  %v886 = vunpack.c.h.b16 %v161
  %v887 = vunpack.c.l.b16 %v162
  %v888 = vunpack.c.h.b16 %v162
  %v889 = vunpack.c.l.b16 %v163
  %v890 = vunpack.c.h.b16 %v163
  %v891 = vunpack.c.l.b16 %v164
  %v892 = vunpack.c.h.b16 %v164
  %v893 = vunpack.c.l.b16 %v165
  %v894 = vunpack.c.h.b16 %v165
  %v895 = vunpack.c.l.b16 %v166
  %v896 = vunpack.c.h.b16 %v166
  %v897 = vunpack.c.l.b16 %v167
  %v898 = vunpack.c.h.b16 %v167
  %v899 = vunpack.c.l.b16 %v168
  %v900 = vunpack.c.h.b16 %v168
  %v901 = vunpack.c.l.b16 %v169
  %v902 = vunpack.c.h.b16 %v169
  %v903 = vunpack.c.l.b16 %v170
  %v904 = vunpack.c.h.b16 %v170
  %v905 = vunpack.c.l.b16 %v171
  %v906 = vunpack.c.h.b16 %v171
  %v907 = vunpack.c.l.b16 %v172
  %v908 = vunpack.c.h.b16 %v172
  %v909 = vunpack.c.l.b16 %v173
  %v910 = vunpack.c.h.b16 %v173
  %v911 = vunpack.c.l.b16 %v174
  %v912 = vunpack.c.h.b16 %v174
  %v913 = vunpack.c.l.b16 %v175
  %v914 = vunpack.c.h.b16 %v175
  %v915 = vunpack.c.l.b16 %v176
  %v916 = vunpack.c.h.b16 %v176
  %v917 = vunpack.c.l.b16 %v177
  %v918 = vunpack.c.h.b16 %v177
  %v919 = vunpack.c.l.b16 %v178
  %v920 = vunpack.c.h.b16 %v178
  %v921 = vunpack.c.l.b16 %v179
  %v922 = vunpack.c.h.b16 %v179
  %v923 = vunpack.c.l.b16 %v180
  %v924 = vunpack.c.h.b16 %v180
  %v925 = vunpack.c.l.b16 %v181
  %v926 = vunpack.c.h.b16 %v181
  %v927 = vunpack.c.l.b16 %v182
  %v928 = vunpack.c.h.b16 %v182
  %v929 = vunpack.c.l.b16 %v183
  %v930 = vunpack.c.h.b16 %v183
  %v931 = vunpack.c.l.b16 %v184
  %v932 = vunpack.c.h.b16 %v184
  %v933 = vunpack.c.l.b16 %v185
  %v934 = vunpack.c.h.b16 %v185
  %v935 = vunpack.c.l.b16 %v186
  %v936 = vunpack.c.h.b16 %v186
  %v937 = vunpack.c.l.b16 %v187
  %v938 = vunpack.c.h.b16 %v187
  %v939 = vunpack.c.l.b16 %v188
  %v940 = vunpack.c.h.b16 %v188
  %v941 = vunpack.c.l.b16 %v189
  %v942 = vunpack.c.h.b16 %v189
  %v943 = vunpack.c.l.b16 %v190
  %v944 = vunpack.c.h.b16 %v190
  %v945 = vunpack.c.l.b16 %v191
  %v946 = vunpack.c.h.b16 %v191
  %v947 = vunpack.c.l.b16 %v192
  %v948 = vunpack.c.h.b16 %v192
  %v949 = vunpack.c.l.b16 %v193
  %v950 = vunpack.c.h.b16 %v193
  %v951 = vunpack.c.l.b16 %v194
  %v952 = vunpack.c.h.b16 %v194
  %v953 = vunpack.c.l.b16 %v195
  %v954 = vunpack.c.h.b16 %v195
  %v955 = vunpack.c.l.b16 %v196
  %v956 = vunpack.c.h.b16 %v196
  %v957 = vunpack.c.l.b16 %v197
  %v958 = vunpack.c.h.b16 %v197
  %v959 = vunpack.c.l.b16 %v198
  %v960 = vunpack.c.h.b16 %v198
  %v961 = vunpack.c.l.b16 %v199
  %v962 = vunpack.c.h.b16 %v199
  %v963 = vunpack.c.l.b16 %v200
  %v964 = vunpack.c.h.b16 %v200
  %v965 = vunpack.c.l.b16 %v201
  %v966 = vunpack.c.h.b16 %v201
  %v967 = vunpack.c.l.b16 %v202
  %v968 = vunpack.c.h.b16 %v202
  %v969 = vunpack.c.l.b16 %v203
  %v970 = vunpack.c.h.b16 %v203
  %v971 = vunpack.c.l.b16 %v204
  %v972 = vunpack.c.h.b16 %v204
  %v973 = vunpack.c.l.b16 %v205
  %v974 = vunpack.c.h.b16 %v205
  %v975 = vunpack.c.l.b16 %v206
  %v976 = vunpack.c.h.b16 %v206
  %v977 = vunpack.c.l.b16 %v207
  %v978 = vunpack.c.h.b16 %v207
  %v979 = vunpack.c.l.b16 %v208
  %v980 = vunpack.c.h.b16 %v208
  %v981 = vunpack.c.l.b16 %v209
  %v982 = vunpack.c.h.b16 %v209
  %v983 = vunpack.c.l.b16 %v210
  %v984 = vunpack.c.h.b16 %v210
  %v985 = vunpack.c.l.b16 %v211
  %v986 = vunpack.c.h.b16 %v211
  %v987 = vunpack.c.l.b16 %v212
  %v988 = vunpack.c.h.b16 %v212
  %v989 = vunpack.c.l.b16 %v213
  %v990 = vunpack.c.h.b16 %v213
  %v991 = vunpack.c.l.b16 %v214
  %v992 = vunpack.c.h.b16 %v214
  %v993 = vunpack.c.l.b16 %v215
  %v994 = vunpack.c.h.b16 %v215
  %v995 = vunpack.c.l.b16 %v216
  %v996 = vunpack.c.h.b16 %v216
  %v997 = vunpack.c.l.b16 %v217
  %v998 = vunpack.c.h.b16 %v217
  %v999 = vunpack.c.l.b16 %v218
  %v1000 = vunpack.c.h.b16 %v218
  %v1001 = vunpack.c.l.b16 %v219
  %v1002 = vunpack.c.h.b16 %v219
  %v1003 = vunpack.c.l.b16 %v220
  %v1004 = vunpack.c.h.b16 %v220
  %v1005 = vunpack.c.l.b16 %v221
  %v1006 = vunpack.c.h.b16 %v221
  %v1007 = vunpack.c.l.b16 %v222
  %v1008 = vunpack.c.h.b16 %v222
  %v1009 = vunpack.c.l.b16 %v223
  %v1010 = vunpack.c.h.b16 %v223
  %v1011 = vunpack.c.l.b16 %v224
  %v1012 = vunpack.c.h.b16 %v224
  %v1013 = vunpack.c.l.b16 %v225
  %v1014 = vunpack.c.h.b16 %v225
  %v1015 = vunpack.c.l.b16 %v226
  %v1016 = vunpack.c.h.b16 %v226
  %v1017 = vunpack.c.l.b16 %v227
  %v1018 = vunpack.c.h.b16 %v227
  %v1019 = vunpack.c.l.b16 %v228
  %v1020 = vunpack.c.h.b16 %v228
  %v1021 = vunpack.c.l.b16 %v229
  %v1022 = vunpack.c.h.b16 %v229
  %v1023 = vunpack.c.l.b16 %v230
  %v1024 = vunpack.c.h.b16 %v230
  %v1025 = vunpack.c.l.b16 %v231
  %v1026 = vunpack.c.h.b16 %v231
  %v1027 = vunpack.c.l.b16 %v232
  %v1028 = vunpack.c.h.b16 %v232
  %v1029 = vunpack.c.l.b16 %v233
  %v1030 = vunpack.c.h.b16 %v233
  %v1031 = vunpack.c.l.b16 %v234
  %v1032 = vunpack.c.h.b16 %v234
  %v1033 = vunpack.c.l.b16 %v235
  %v1034 = vunpack.c.h.b16 %v235
  %v1035 = vunpack.c.l.b16 %v236
  %v1036 = vunpack.c.h.b16 %v236
  %v1037 = vunpack.c.l.b16 %v237
  %v1038 = vunpack.c.h.b16 %v237
  %v1039 = vunpack.c.l.b16 %v238
  %v1040 = vunpack.c.h.b16 %v238
  %v1041 = vunpack.c.l.b16 %v239
  %v1042 = vunpack.c.h.b16 %v239
  %v1043 = vunpack.c.l.b16 %v240
  %v1044 = vunpack.c.h.b16 %v240
  %v1045 = vunpack.c.l.b16 %v241
  %v1046 = vunpack.c.h.b16 %v241
  %v1047 = vunpack.c.l.b16 %v242
  %v1048 = vunpack.c.h.b16 %v242
  %v1049 = vunpack.c.l.b16 %v243
  %v1050 = vunpack.c.h.b16 %v243
  %v1051 = vunpack.c.l.b16 %v244
  %v1052 = vunpack.c.h.b16 %v244
  %v1053 = vunpack.c.l.b16 %v245
  %v1054 = vunpack.c.h.b16 %v245
  %v1055 = vunpack.c.l.b16 %v246
  %v1056 = vunpack.c.h.b16 %v246
  %v1057 = vunpack.c.l.b16 %v247
  %v1058 = vunpack.c.h.b16 %v247
  %v1059 = vunpack.c.l.b16 %v248
  %v1060 = vunpack.c.h.b16 %v248
  %v1061 = vunpack.c.l.b16 %v249
  %v1062 = vunpack.c.h.b16 %v249
  %v1063 = vunpack.c.l.b16 %v250
  %v1064 = vunpack.c.h.b16 %v250
  %v1065 = vunpack.c.l.b16 %v251
  %v1066 = vunpack.c.h.b16 %v251
  %v1067 = vunpack.c.l.b16 %v252
  %v1068 = vunpack.c.h.b16 %v252
  %v1069 = vunpack.c.l.b16 %v253
  %v1070 = vunpack.c.h.b16 %v253
  %v1071 = vunpack.c.l.b16 %v254
  %v1072 = vunpack.c.h.b16 %v254
  %v1073 = vunpack.c.l.b16 %v255
  %v1074 = vunpack.c.h.b16 %v255
  %v1075 = vunpack.c.l.b16 %v256
  %v1076 = vunpack.c.h.b16 %v256
  %v1077 = vunpack.c.l.b16 %v257
  %v1078 = vunpack.c.h.b16 %v257
  %v1079 = vunpack.c.l.b16 %v258
  %v1080 = vunpack.c.h.b16 %v258
  %v1081 = vunpack.c.l.b16 %v259
  %v1082 = vunpack.c.h.b16 %v259
  %v1083 = vunpack.c.l.b16 %v260
  %v1084 = vunpack.c.h.b16 %v260
  %v1085 = vunpack.c.l.b16 %v261
  %v1086 = vunpack.c.h.b16 %v261
  %v1087 = vunpack.c.l.b16 %v262
  %v1088 = vunpack.c.h.b16 %v262
  %v1089 = vunpack.c.l.b16 %v263
  %v1090 = vunpack.c.h.b16 %v263
  %v1091 = vunpack.c.l.b16 %v264
  %v1092 = vunpack.c.h.b16 %v264
  %v1093 = vunpack.c.l.b16 %v265
  %v1094 = vunpack.c.h.b16 %v265
  %v1095 = vunpack.c.l.b16 %v266
  %v1096 = vunpack.c.h.b16 %v266
  %v1097 = vunpack.c.l.b16 %v267
  %v1098 = vunpack.c.h.b16 %v267
  %v1099 = vunpack.c.l.b16 %v268
  %v1100 = vunpack.c.h.b16 %v268
  %v1101 = vunpack.c.l.b16 %v269
  %v1102 = vunpack.c.h.b16 %v269
  %v1103 = vunpack.c.l.b16 %v270
  %v1104 = vunpack.c.h.b16 %v270
  %v1105 = vunpack.c.l.b16 %v271
  %v1106 = vunpack.c.h.b16 %v271
  %v1107 = vunpack.c.l.b16 %v272
  %v1108 = vunpack.c.h.b16 %v272
  %v1109 = vunpack.c.l.b16 %v273
  %v1110 = vunpack.c.h.b16 %v273
  %v1111 = vunpack.c.l.b16 %v274
  %v1112 = vunpack.c.h.b16 %v274
  %v1113 = vunpack.c.l.b16 %v275
  %v1114 = vunpack.c.h.b16 %v275
  %v1115 = vunpack.c.l.b16 %v276
  %v1116 = vunpack.c.h.b16 %v276
  %v1117 = vunpack.c.l.b16 %v277
  %v1118 = vunpack.c.h.b16 %v277
  %v1119 = vunpack.c.l.b16 %v278
  %v1120 = vunpack.c.h.b16 %v278
  %v1121 = vunpack.c.l.b16 %v279
  %v1122 = vunpack.c.h.b16 %v279
  %v1123 = vunpack.c.l.b16 %v280
  %v1124 = vunpack.c.h.b16 %v280
  %v1125 = vunpack.c.l.b16 %v281
  %v1126 = vunpack.c.h.b16 %v281
  %v1127 = vunpack.c.l.b16 %v282
  %v1128 = vunpack.c.h.b16 %v282
  %v1129 = vunpack.c.l.b16 %v283
  %v1130 = vunpack.c.h.b16 %v283
  %v1131 = vunpack.c.l.b16 %v284
  %v1132 = vunpack.c.h.b16 %v284
  %v1133 = vpack.c.b16 %v623, %v621
  %v1134 = vpack.c.b16 %v624, %v622
  %v1135 = vpack.c.b16 %v627, %v625
  %v1136 = vpack.c.b16 %v628, %v626
  %v1137 = vpack.c.b16 %v631, %v629
  %v1138 = vpack.c.b16 %v632, %v630
  %v1139 = vpack.c.b16 %v635, %v633
  %v1140 = vpack.c.b16 %v636, %v634
  %v1141 = vpack.c.b16 %v639, %v637
  %v1142 = vpack.c.b16 %v640, %v638
  %v1143 = vpack.c.b16 %v643, %v641
  %v1144 = vpack.c.b16 %v644, %v642
  %v1145 = vpack.c.b16 %v647, %v645
  %v1146 = vpack.c.b16 %v648, %v646
  %v1147 = vpack.c.b16 %v651, %v649
  %v1148 = vpack.c.b16 %v652, %v650
  %v1149 = vpack.c.b16 %v655, %v653
  %v1150 = vpack.c.b16 %v656, %v654
  %v1151 = vpack.c.b16 %v659, %v657
  %v1152 = vpack.c.b16 %v660, %v658
  %v1153 = vpack.c.b16 %v663, %v661
  %v1154 = vpack.c.b16 %v664, %v662
  %v1155 = vpack.c.b16 %v667, %v665
  %v1156 = vpack.c.b16 %v668, %v666
  %v1157 = vpack.c.b16 %v671, %v669
  %v1158 = vpack.c.b16 %v672, %v670
  %v1159 = vpack.c.b16 %v675, %v673
  %v1160 = vpack.c.b16 %v676, %v674
  %v1161 = vpack.c.b16 %v679, %v677
  %v1162 = vpack.c.b16 %v680, %v678
  %v1163 = vpack.c.b16 %v683, %v681
  %v1164 = vpack.c.b16 %v684, %v682
  %v1165 = vpack.c.b16 %v687, %v685
  %v1166 = vpack.c.b16 %v688, %v686
  %v1167 = vpack.c.b16 %v691, %v689
  %v1168 = vpack.c.b16 %v692, %v690
  %v1169 = vpack.c.b16 %v695, %v693
  %v1170 = vpack.c.b16 %v696, %v694
  %v1171 = vpack.c.b16 %v699, %v697
  %v1172 = vpack.c.b16 %v700, %v698
  %v1173 = vpack.c.b16 %v703, %v701
  %v1174 = vpack.c.b16 %v704, %v702
  %v1175 = vpack.c.b16 %v707, %v705
  %v1176 = vpack.c.b16 %v708, %v706
  %v1177 = vpack.c.b16 %v711, %v709
  %v1178 = vpack.c.b16 %v712, %v710
  %v1179 = vpack.c.b16 %v715, %v713
  %v1180 = vpack.c.b16 %v716, %v714
  %v1181 = vpack.c.b16 %v719, %v717
  %v1182 = vpack.c.b16 %v720, %v718
  %v1183 = vpack.c.b16 %v723, %v721
  %v1184 = vpack.c.b16 %v724, %v722
  %v1185 = vpack.c.b16 %v727, %v725
  %v1186 = vpack.c.b16 %v728, %v726
  %v1187 = vpack.c.b16 %v731, %v729
  %v1188 = vpack.c.b16 %v732, %v730
  %v1189 = vpack.c.b16 %v735, %v733
  %v1190 = vpack.c.b16 %v736, %v734
  %v1191 = vpack.c.b16 %v739, %v737
  %v1192 = vpack.c.b16 %v740, %v738
  %v1193 = vpack.c.b16 %v743, %v741
  %v1194 = vpack.c.b16 %v744, %v742
  %v1195 = vpack.c.b16 %v747, %v745
  %v1196 = vpack.c.b16 %v748, %v746
  %v1197 = vpack.c.b16 %v751, %v749
  %v1198 = vpack.c.b16 %v752, %v750
  %v1199 = vpack.c.b16 %v755, %v753
  %v1200 = vpack.c.b16 %v756, %v754
  %v1201 = vpack.c.b16 %v759, %v757
  %v1202 = vpack.c.b16 %v760, %v758
  %v1203 = vpack.c.b16 %v763, %v761
  %v1204 = vpack.c.b16 %v764, %v762
  %v1205 = vpack.c.b16 %v767, %v765
  %v1206 = vpack.c.b16 %v768, %v766
  %v1207 = vpack.c.b16 %v771, %v769
  %v1208 = vpack.c.b16 %v772, %v770
  %v1209 = vpack.c.b16 %v775, %v773
  %v1210 = vpack.c.b16 %v776, %v774
  %v1211 = vpack.c.b16 %v779, %v777
  %v1212 = vpack.c.b16 %v780, %v778
  %v1213 = vpack.c.b16 %v783, %v781
  %v1214 = vpack.c.b16 %v784, %v782
  %v1215 = vpack.c.b16 %v787, %v785
  %v1216 = vpack.c.b16 %v788, %v786
  %v1217 = vpack.c.b16 %v791, %v789
  %v1218 = vpack.c.b16 %v792, %v790
  %v1219 = vpack.c.b16 %v795, %v793
  %v1220 = vpack.c.b16 %v796, %v794
  %v1221 = vpack.c.b16 %v799, %v797
  %v1222 = vpack.c.b16 %v800, %v798
  %v1223 = vpack.c.b16 %v803, %v801
  %v1224 = vpack.c.b16 %v804, %v802
  %v1225 = vpack.c.b16 %v807, %v805
  %v1226 = vpack.c.b16 %v808, %v806
  %v1227 = vpack.c.b16 %v811, %v809
  %v1228 = vpack.c.b16 %v812, %v810
  %v1229 = vpack.c.b16 %v815, %v813
  %v1230 = vpack.c.b16 %v816, %v814
  %v1231 = vpack.c.b16 %v819, %v817
  %v1232 = vpack.c.b16 %v820, %v818
  %v1233 = vpack.c.b16 %v823, %v821
  %v1234 = vpack.c.b16 %v824, %v822
  %v1235 = vpack.c.b16 %v827, %v825
  %v1236 = vpack.c.b16 %v828, %v826
  %v1237 = vpack.c.b16 %v831, %v829
  %v1238 = vpack.c.b16 %v832, %v830
  %v1239 = vpack.c.b16 %v835, %v833
  %v1240 = vpack.c.b16 %v836, %v834
  %v1241 = vpack.c.b16 %v839, %v837
  %v1242 = vpack.c.b16 %v840, %v838
  %v1243 = vpack.c.b16 %v843, %v841
  %v1244 = vpack.c.b16 %v844, %v842
  %v1245 = vpack.c.b16 %v847, %v845
  %v1246 = vpack.c.b16 %v848, %v846
  %v1247 = vpack.c.b16 %v851, %v849
  %v1248 = vpack.c.b16 %v852, %v850
  %v1249 = vpack.c.b16 %v855, %v853
  %v1250 = vpack.c.b16 %v856, %v854
  %v1251 = vpack.c.b16 %v859, %v857
  %v1252 = vpack.c.b16 %v860, %v858
  %v1253 = vpack.c.b16 %v863, %v861
  %v1254 = vpack.c.b16 %v864, %v862
  %v1255 = vpack.c.b16 %v867, %v865
  %v1256 = vpack.c.b16 %v868, %v866
  %v1257 = vpack.c.b16 %v871, %v869
  %v1258 = vpack.c.b16 %v872, %v870
  %v1259 = vpack.c.b16 %v875, %v873
  %v1260 = vpack.c.b16 %v876, %v874
  %v1261 = vpack.c.b16 %v879, %v877
  %v1262 = vpack.c.b16 %v880, %v878
  %v1263 = vpack.c.b16 %v883, %v881
  %v1264 = vpack.c.b16 %v884, %v882
  %v1265 = vpack.c.b16 %v887, %v885
  %v1266 = vpack.c.b16 %v888, %v886
  %v1267 = vpack.c.b16 %v891, %v889
  %v1268 = vpack.c.b16 %v892, %v890
  %v1269 = vpack.c.b16 %v895, %v893
  %v1270 = vpack.c.b16 %v896, %v894
  %v1271 = vpack.c.b16 %v899, %v897
  %v1272 = vpack.c.b16 %v900, %v898
  %v1273 = vpack.c.b16 %v903, %v901
  %v1274 = vpack.c.b16 %v904, %v902
  %v1275 = vpack.c.b16 %v907, %v905
  %v1276 = vpack.c.b16 %v908, %v906
  %v1277 = vpack.c.b16 %v911, %v909
  %v1278 = vpack.c.b16 %v912, %v910
  %v1279 = vpack.c.b16 %v915, %v913
  %v1280 = vpack.c.b16 %v916, %v914
  %v1281 = vpack.c.b16 %v919, %v917
  %v1282 = vpack.c.b16 %v920, %v918
  %v1283 = vpack.c.b16 %v923, %v921
  %v1284 = vpack.c.b16 %v924, %v922
  %v1285 = vpack.c.b16 %v927, %v925
  %v1286 = vpack.c.b16 %v928, %v926
  %v1287 = vpack.c.b16 %v931, %v929
  %v1288 = vpack.c.b16 %v932, %v930
  %v1289 = vpack.c.b16 %v935, %v933
  %v1290 = vpack.c.b16 %v936, %v934
  %v1291 = vpack.c.b16 %v939, %v937
  %v1292 = vpack.c.b16 %v940, %v938
  %v1293 = vpack.c.b16 %v943, %v941
  %v1294 = vpack.c.b16 %v944, %v942
  %v1295 = vpack.c.b16 %v947, %v945
  %v1296 = vpack.c.b16 %v948, %v946
  %v1297 = vpack.c.b16 %v951, %v949
  %v1298 = vpack.c.b16 %v952, %v950
  %v1299 = vpack.c.b16 %v955, %v953
  %v1300 = vpack.c.b16 %v956, %v954
  %v1301 = vpack.c.b16 %v959, %v957
  %v1302 = vpack.c.b16 %v960, %v958
  %v1303 = vpack.c.b16 %v963, %v961
  %v1304 = vpack.c.b16 %v964, %v962
  %v1305 = vpack.c.b16 %v967, %v965
  %v1306 = vpack.c.b16 %v968, %v966
  %v1307 = vpack.c.b16 %v971, %v969
  %v1308 = vpack.c.b16 %v972, %v970
  %v1309 = vpack.c.b16 %v975, %v973
  %v1310 = vpack.c.b16 %v976, %v974
  %v1311 = vpack.c.b16 %v979, %v977
  %v1312 = vpack.c.b16 %v980, %v978
  %v1313 = vpack.c.b16 %v983, %v981
  %v1314 = vpack.c.b16 %v984, %v982
  %v1315 = vpack.c.b16 %v987, %v985
  %v1316 = vpack.c.b16 %v988, %v986
  %v1317 = vpack.c.b16 %v991, %v989
  %v1318 = vpack.c.b16 %v992, %v990
  %v1319 = vpack.c.b16 %v995, %v993
  %v1320 = vpack.c.b16 %v996, %v994
  %v1321 = vpack.c.b16 %v999, %v997
  %v1322 = vpack.c.b16 %v1000, %v998
  %v1323 = vpack.c.b16 %v1003, %v1001
  %v1324 = vpack.c.b16 %v1004, %v1002
  %v1325 = vpack.c.b16 %v1007, %v1005
  %v1326 = vpack.c.b16 %v1008, %v1006
  %v1327 = vpack.c.b16 %v1011, %v1009
  %v1328 = vpack.c.b16 %v1012, %v1010
  %v1329 = vpack.c.b16 %v1015, %v1013
  %v1330 = vpack.c.b16 %v1016, %v1014
  %v1331 = vpack.c.b16 %v1019, %v1017
  %v1332 = vpack.c.b16 %v1020, %v1018
  %v1333 = vpack.c.b16 %v1023, %v1021
  %v1334 = vpack.c.b16 %v1024, %v1022
  %v1335 = vpack.c.b16 %v1027, %v1025
  %v1336 = vpack.c.b16 %v1028, %v1026
  %v1337 = vpack.c.b16 %v1031, %v1029
  %v1338 = vpack.c.b16 %v1032, %v1030
  %v1339 = vpack.c.b16 %v1035, %v1033
  %v1340 = vpack.c.b16 %v1036, %v1034
  %v1341 = vpack.c.b16 %v1039, %v1037
  %v1342 = vpack.c.b16 %v1040, %v1038
  %v1343 = vpack.c.b16 %v1043, %v1041
  %v1344 = vpack.c.b16 %v1044, %v1042
  %v1345 = vpack.c.b16 %v1047, %v1045
  %v1346 = vpack.c.b16 %v1048, %v1046
  %v1347 = vpack.c.b16 %v1051, %v1049
  %v1348 = vpack.c.b16 %v1052, %v1050
  %v1349 = vpack.c.b16 %v1055, %v1053
  %v1350 = vpack.c.b16 %v1056, %v1054
  %v1351 = vpack.c.b16 %v1059, %v1057
  %v1352 = vpack.c.b16 %v1060, %v1058
  %v1353 = vpack.c.b16 %v1063, %v1061
  %v1354 = vpack.c.b16 %v1064, %v1062
  %v1355 = vpack.c.b16 %v1067, %v1065
  %v1356 = vpack.c.b16 %v1068, %v1066
  %v1357 = vpack.c.b16 %v1071, %v1069
  %v1358 = vpack.c.b16 %v1072, %v1070
  %v1359 = vpack.c.b16 %v1075, %v1073
  %v1360 = vpack.c.b16 %v1076, %v1074
  %v1361 = vpack.c.b16 %v1079, %v1077
  %v1362 = vpack.c.b16 %v1080, %v1078
  %v1363 = vpack.c.b16 %v1083, %v1081
  %v1364 = vpack.c.b16 %v1084, %v1082
  %v1365 = vpack.c.b16 %v1087, %v1085
  %v1366 = vpack.c.b16 %v1088, %v1086
  %v1367 = vpack.c.b16 %v1091, %v1089
  %v1368 = vpack.c.b16 %v1092, %v1090
  %v1369 = vpack.c.b16 %v1095, %v1093
  %v1370 = vpack.c.b16 %v1096, %v1094
  %v1371 = vpack.c.b16 %v1099, %v1097
  %v1372 = vpack.c.b16 %v1100, %v1098
  %v1373 = vpack.c.b16 %v1103, %v1101
  %v1374 = vpack.c.b16 %v1104, %v1102
  %v1375 = vpack.c.b16 %v1107, %v1105
  %v1376 = vpack.c.b16 %v1108, %v1106
  %v1377 = vpack.c.b16 %v1111, %v1109
  %v1378 = vpack.c.b16 %v1112, %v1110
  %v1379 = vpack.c.b16 %v1115, %v1113
  %v1380 = vpack.c.b16 %v1116, %v1114
  %v1381 = vpack.c.b16 %v1119, %v1117
  %v1382 = vpack.c.b16 %v1120, %v1118
  %v1383 = vpack.c.b16 %v1123, %v1121
  %v1384 = vpack.c.b16 %v1124, %v1122
  %v1385 = vpack.c.b16 %v1127, %v1125
  %v1386 = vpack.c.b16 %v1128, %v1126
  %v1387 = vpack.c.b16 %v1131, %v1129
  %v1388 = vpack.c.b16 %v1132, %v1130
  %1645 = vmatpush.bf16.msra.mxu0 %v1147
  %1646 = vmatpush.bf16.msra.mxu0 %v1145
  %1647 = vmatpush.bf16.msra.mxu0 %v1143
  %1648 = vmatpush.bf16.msra.mxu0 %v1141
  %1649 = vmatpush.bf16.msra.mxu0 %v1139
  %1650 = vmatpush.bf16.msra.mxu0 %v1137
  %1651 = vmatpush.bf16.msra.mxu0 %v1135
  %1652 = vmatpush.bf16.msra.mxu0 %v1133
  %1653 = vmatmul.bf16.gmra.mxu0 %v333
  %v1654 = vpop.f32.mrf.mxu0
  %v1655 = vadd.f32 0.0, %v1654
  %v1656 = vpop.f32.mrf.mxu0
  %v1657 = vadd.f32 0.0, %v1656
  %1658 = vdwg.mxu0
  %1659 = vmatpush.bf16.msra.mxu0 %v1163
  %1660 = vmatpush.bf16.msra.mxu0 %v1161
  %1661 = vmatpush.bf16.msra.mxu0 %v1159
  %1662 = vmatpush.bf16.msra.mxu0 %v1157
  %1663 = vmatpush.bf16.msra.mxu0 %v1155
  %1664 = vmatpush.bf16.msra.mxu0 %v1153
  %1665 = vmatpush.bf16.msra.mxu0 %v1151
  %1666 = vmatpush.bf16.msra.mxu0 %v1149
  %1667 = vmatmul.bf16.gmra.mxu0 %v334
  %v1668 = vpop.f32.mrf.mxu0
  %v1669 = vadd.f32 %v1655, %v1668
  %v1670 = vpop.f32.mrf.mxu0
  %v1671 = vadd.f32 %v1657, %v1670
  %1672 = vdwg.mxu0
  %1673 = vmatpush.bf16.msra.mxu0 %v1179
  %1674 = vmatpush.bf16.msra.mxu0 %v1177
  %1675 = vmatpush.bf16.msra.mxu0 %v1175
  %1676 = vmatpush.bf16.msra.mxu0 %v1173
  %1677 = vmatpush.bf16.msra.mxu0 %v1171
  %1678 = vmatpush.bf16.msra.mxu0 %v1169
  %1679 = vmatpush.bf16.msra.mxu0 %v1167
  %1680 = vmatpush.bf16.msra.mxu0 %v1165
  %1681 = vmatmul.bf16.gmra.mxu0 %v335
  %v1682 = vpop.f32.mrf.mxu0
  %v1683 = vadd.f32 %v1669, %v1682
  %v1684 = vpop.f32.mrf.mxu0
  %v1685 = vadd.f32 %v1671, %v1684
  %1686 = vdwg.mxu0
  %1687 = vmatpush.bf16.msra.mxu0 %v1195
  %1688 = vmatpush.bf16.msra.mxu0 %v1193
  %1689 = vmatpush.bf16.msra.mxu0 %v1191
  %1690 = vmatpush.bf16.msra.mxu0 %v1189
  %1691 = vmatpush.bf16.msra.mxu0 %v1187
  %1692 = vmatpush.bf16.msra.mxu0 %v1185
  %1693 = vmatpush.bf16.msra.mxu0 %v1183
  %1694 = vmatpush.bf16.msra.mxu0 %v1181
  %1695 = vmatmul.bf16.gmra.mxu0 %v336
  %v1696 = vpop.f32.mrf.mxu0
  %v1697 = vadd.f32 %v1683, %v1696
  %v1698 = vpop.f32.mrf.mxu0
  %v1699 = vadd.f32 %v1685, %v1698
  %1700 = vdwg.mxu0
  %1701 = vmatpush.bf16.msra.mxu0 %v1211
  %1702 = vmatpush.bf16.msra.mxu0 %v1209
  %1703 = vmatpush.bf16.msra.mxu0 %v1207
  %1704 = vmatpush.bf16.msra.mxu0 %v1205
  %1705 = vmatpush.bf16.msra.mxu0 %v1203
  %1706 = vmatpush.bf16.msra.mxu0 %v1201
  %1707 = vmatpush.bf16.msra.mxu0 %v1199
  %1708 = vmatpush.bf16.msra.mxu0 %v1197
  %1709 = vmatmul.bf16.gmra.mxu0 %v337
  %v1710 = vpop.f32.mrf.mxu0
  %v1711 = vadd.f32 %v1697, %v1710
  %v1712 = vpop.f32.mrf.mxu0
  %v1713 = vadd.f32 %v1699, %v1712
  %1714 = vdwg.mxu0
  %1715 = vmatpush.bf16.msra.mxu0 %v1227
  %1716 = vmatpush.bf16.msra.mxu0 %v1225
  %1717 = vmatpush.bf16.msra.mxu0 %v1223
  %1718 = vmatpush.bf16.msra.mxu0 %v1221
  %1719 = vmatpush.bf16.msra.mxu0 %v1219
  %1720 = vmatpush.bf16.msra.mxu0 %v1217
  %1721 = vmatpush.bf16.msra.mxu0 %v1215
  %1722 = vmatpush.bf16.msra.mxu0 %v1213
  %1723 = vmatmul.bf16.gmra.mxu0 %v338
  %v1724 = vpop.f32.mrf.mxu0
  %v1725 = vadd.f32 %v1711, %v1724
  %v1726 = vpop.f32.mrf.mxu0
  %v1727 = vadd.f32 %v1713, %v1726
  %1728 = vdwg.mxu0
  %1729 = vmatpush.bf16.msra.mxu0 %v1243
  %1730 = vmatpush.bf16.msra.mxu0 %v1241
  %1731 = vmatpush.bf16.msra.mxu0 %v1239
  %1732 = vmatpush.bf16.msra.mxu0 %v1237
  %1733 = vmatpush.bf16.msra.mxu0 %v1235
  %1734 = vmatpush.bf16.msra.mxu0 %v1233
  %1735 = vmatpush.bf16.msra.mxu0 %v1231
  %1736 = vmatpush.bf16.msra.mxu0 %v1229
  %1737 = vmatmul.bf16.gmra.mxu0 %v339
  %v1738 = vpop.f32.mrf.mxu0
  %v1739 = vadd.f32 %v1725, %v1738
  %v1740 = vpop.f32.mrf.mxu0
  %v1741 = vadd.f32 %v1727, %v1740
  %1742 = vdwg.mxu0
  %1743 = vmatpush.bf16.msra.mxu0 %v1259
  %1744 = vmatpush.bf16.msra.mxu0 %v1257
  %1745 = vmatpush.bf16.msra.mxu0 %v1255
  %1746 = vmatpush.bf16.msra.mxu0 %v1253
  %1747 = vmatpush.bf16.msra.mxu0 %v1251
  %1748 = vmatpush.bf16.msra.mxu0 %v1249
  %1749 = vmatpush.bf16.msra.mxu0 %v1247
  %1750 = vmatpush.bf16.msra.mxu0 %v1245
  %1751 = vmatmul.bf16.gmra.mxu0 %v340
  %v1752 = vpop.f32.mrf.mxu0
  %v1753 = vadd.f32 %v1739, %v1752
  %v1754 = vpop.f32.mrf.mxu0
  %v1755 = vadd.f32 %v1741, %v1754
  %1756 = vdwg.mxu0
  %1757 = vmatpush.bf16.msra.mxu0 %v1275
  %1758 = vmatpush.bf16.msra.mxu0 %v1273
  %1759 = vmatpush.bf16.msra.mxu0 %v1271
  %1760 = vmatpush.bf16.msra.mxu0 %v1269
  %1761 = vmatpush.bf16.msra.mxu0 %v1267
  %1762 = vmatpush.bf16.msra.mxu0 %v1265
  %1763 = vmatpush.bf16.msra.mxu0 %v1263
  %1764 = vmatpush.bf16.msra.mxu0 %v1261
  %1765 = vmatmul.bf16.gmra.mxu0 %v341
  %v1766 = vpop.f32.mrf.mxu0
  %v1767 = vadd.f32 %v1753, %v1766
  %v1768 = vpop.f32.mrf.mxu0
  %v1769 = vadd.f32 %v1755, %v1768
  %1770 = vdwg.mxu0
  %1771 = vmatpush.bf16.msra.mxu0 %v1291
  %1772 = vmatpush.bf16.msra.mxu0 %v1289
  %1773 = vmatpush.bf16.msra.mxu0 %v1287
  %1774 = vmatpush.bf16.msra.mxu0 %v1285
  %1775 = vmatpush.bf16.msra.mxu0 %v1283
  %1776 = vmatpush.bf16.msra.mxu0 %v1281
  %1777 = vmatpush.bf16.msra.mxu0 %v1279
  %1778 = vmatpush.bf16.msra.mxu0 %v1277
  %1779 = vmatmul.bf16.gmra.mxu0 %v342
  %v1780 = vpop.f32.mrf.mxu0
  %v1781 = vadd.f32 %v1767, %v1780
  %v1782 = vpop.f32.mrf.mxu0
  %v1783 = vadd.f32 %v1769, %v1782
  %1784 = vdwg.mxu0
  %1785 = vmatpush.bf16.msra.mxu0 %v1307
  %1786 = vmatpush.bf16.msra.mxu0 %v1305
  %1787 = vmatpush.bf16.msra.mxu0 %v1303
  %1788 = vmatpush.bf16.msra.mxu0 %v1301
  %1789 = vmatpush.bf16.msra.mxu0 %v1299
  %1790 = vmatpush.bf16.msra.mxu0 %v1297
  %1791 = vmatpush.bf16.msra.mxu0 %v1295
  %1792 = vmatpush.bf16.msra.mxu0 %v1293
  %1793 = vmatmul.bf16.gmra.mxu0 %v343
  %v1794 = vpop.f32.mrf.mxu0
  %v1795 = vadd.f32 %v1781, %v1794
  %v1796 = vpop.f32.mrf.mxu0
  %v1797 = vadd.f32 %v1783, %v1796
  %1798 = vdwg.mxu0
  %1799 = vmatpush.bf16.msra.mxu0 %v1323
  %1800 = vmatpush.bf16.msra.mxu0 %v1321
  %1801 = vmatpush.bf16.msra.mxu0 %v1319
  %1802 = vmatpush.bf16.msra.mxu0 %v1317
  %1803 = vmatpush.bf16.msra.mxu0 %v1315
  %1804 = vmatpush.bf16.msra.mxu0 %v1313
  %1805 = vmatpush.bf16.msra.mxu0 %v1311
  %1806 = vmatpush.bf16.msra.mxu0 %v1309
  %1807 = vmatmul.bf16.gmra.mxu0 %v344
  %v1808 = vpop.f32.mrf.mxu0
  %v1809 = vadd.f32 %v1795, %v1808
  %v1810 = vpop.f32.mrf.mxu0
  %v1811 = vadd.f32 %v1797, %v1810
  %1812 = vdwg.mxu0
  %1813 = vmatpush.bf16.msra.mxu0 %v1339
  %1814 = vmatpush.bf16.msra.mxu0 %v1337
  %1815 = vmatpush.bf16.msra.mxu0 %v1335
  %1816 = vmatpush.bf16.msra.mxu0 %v1333
  %1817 = vmatpush.bf16.msra.mxu0 %v1331
  %1818 = vmatpush.bf16.msra.mxu0 %v1329
  %1819 = vmatpush.bf16.msra.mxu0 %v1327
  %1820 = vmatpush.bf16.msra.mxu0 %v1325
  %1821 = vmatmul.bf16.gmra.mxu0 %v345
  %v1822 = vpop.f32.mrf.mxu0
  %v1823 = vadd.f32 %v1809, %v1822
  %v1824 = vpop.f32.mrf.mxu0
  %v1825 = vadd.f32 %v1811, %v1824
  %1826 = vdwg.mxu0
  %1827 = vmatpush.bf16.msra.mxu0 %v1355
  %1828 = vmatpush.bf16.msra.mxu0 %v1353
  %1829 = vmatpush.bf16.msra.mxu0 %v1351
  %1830 = vmatpush.bf16.msra.mxu0 %v1349
  %1831 = vmatpush.bf16.msra.mxu0 %v1347
  %1832 = vmatpush.bf16.msra.mxu0 %v1345
  %1833 = vmatpush.bf16.msra.mxu0 %v1343
  %1834 = vmatpush.bf16.msra.mxu0 %v1341
  %1835 = vmatmul.bf16.gmra.mxu0 %v346
  %v1836 = vpop.f32.mrf.mxu0
  %v1837 = vadd.f32 %v1823, %v1836
  %v1838 = vpop.f32.mrf.mxu0
  %v1839 = vadd.f32 %v1825, %v1838
  %1840 = vdwg.mxu0
  %1841 = vmatpush.bf16.msra.mxu0 %v1371
  %1842 = vmatpush.bf16.msra.mxu0 %v1369
  %1843 = vmatpush.bf16.msra.mxu0 %v1367
  %1844 = vmatpush.bf16.msra.mxu0 %v1365
  %1845 = vmatpush.bf16.msra.mxu0 %v1363
  %1846 = vmatpush.bf16.msra.mxu0 %v1361
  %1847 = vmatpush.bf16.msra.mxu0 %v1359
  %1848 = vmatpush.bf16.msra.mxu0 %v1357
  %1849 = vmatmul.bf16.gmra.mxu0 %v347
  %v1850 = vpop.f32.mrf.mxu0
  %v1851 = vadd.f32 %v1837, %v1850
  %v1852 = vpop.f32.mrf.mxu0
  %v1853 = vadd.f32 %v1839, %v1852
  %1854 = vdwg.mxu0
  %1855 = vmatpush.bf16.msra.mxu0 %v1387
  %1856 = vmatpush.bf16.msra.mxu0 %v1385
  %1857 = vmatpush.bf16.msra.mxu0 %v1383
  %1858 = vmatpush.bf16.msra.mxu0 %v1381
  %1859 = vmatpush.bf16.msra.mxu0 %v1379
  %1860 = vmatpush.bf16.msra.mxu0 %v1377
  %1861 = vmatpush.bf16.msra.mxu0 %v1375
  %1862 = vmatpush.bf16.msra.mxu0 %v1373
  %1863 = vmatmul.bf16.gmra.mxu0 %v348
  %v1864 = vpop.f32.mrf.mxu0
  %v1865 = vadd.f32 %v1851, %v1864
  %v1866 = vpop.f32.mrf.mxu0
  %v1867 = vadd.f32 %v1853, %v1866
  %1868 = vdwg.mxu0
  %1869 = vmatpush.bf16.msra.mxu0 %v1148
  %1870 = vmatpush.bf16.msra.mxu0 %v1146
  %1871 = vmatpush.bf16.msra.mxu0 %v1144
  %1872 = vmatpush.bf16.msra.mxu0 %v1142
  %1873 = vmatpush.bf16.msra.mxu0 %v1140
  %1874 = vmatpush.bf16.msra.mxu0 %v1138
  %1875 = vmatpush.bf16.msra.mxu0 %v1136
  %1876 = vmatpush.bf16.msra.mxu0 %v1134
  %1877 = vmatmul.bf16.gmra.mxu0 %v333
  %v1878 = vpop.f32.mrf.mxu0
  %v1879 = vadd.f32 0.0, %v1878
  %v1880 = vpop.f32.mrf.mxu0
  %v1881 = vadd.f32 0.0, %v1880
  %1882 = vdwg.mxu0
  %1883 = vmatpush.bf16.msra.mxu0 %v1164
  %1884 = vmatpush.bf16.msra.mxu0 %v1162
  %1885 = vmatpush.bf16.msra.mxu0 %v1160
  %1886 = vmatpush.bf16.msra.mxu0 %v1158
  %1887 = vmatpush.bf16.msra.mxu0 %v1156
  %1888 = vmatpush.bf16.msra.mxu0 %v1154
  %1889 = vmatpush.bf16.msra.mxu0 %v1152
  %1890 = vmatpush.bf16.msra.mxu0 %v1150
  %1891 = vmatmul.bf16.gmra.mxu0 %v334
  %v1892 = vpop.f32.mrf.mxu0
  %v1893 = vadd.f32 %v1879, %v1892
  %v1894 = vpop.f32.mrf.mxu0
  %v1895 = vadd.f32 %v1881, %v1894
  %1896 = vdwg.mxu0
  %1897 = vmatpush.bf16.msra.mxu0 %v1180
  %1898 = vmatpush.bf16.msra.mxu0 %v1178
  %1899 = vmatpush.bf16.msra.mxu0 %v1176
  %1900 = vmatpush.bf16.msra.mxu0 %v1174
  %1901 = vmatpush.bf16.msra.mxu0 %v1172
  %1902 = vmatpush.bf16.msra.mxu0 %v1170
  %1903 = vmatpush.bf16.msra.mxu0 %v1168
  %1904 = vmatpush.bf16.msra.mxu0 %v1166
  %1905 = vmatmul.bf16.gmra.mxu0 %v335
  %v1906 = vpop.f32.mrf.mxu0
  %v1907 = vadd.f32 %v1893, %v1906
  %v1908 = vpop.f32.mrf.mxu0
  %v1909 = vadd.f32 %v1895, %v1908
  %1910 = vdwg.mxu0
  %1911 = vmatpush.bf16.msra.mxu0 %v1196
  %1912 = vmatpush.bf16.msra.mxu0 %v1194
  %1913 = vmatpush.bf16.msra.mxu0 %v1192
  %1914 = vmatpush.bf16.msra.mxu0 %v1190
  %1915 = vmatpush.bf16.msra.mxu0 %v1188
  %1916 = vmatpush.bf16.msra.mxu0 %v1186
  %1917 = vmatpush.bf16.msra.mxu0 %v1184
  %1918 = vmatpush.bf16.msra.mxu0 %v1182
  %1919 = vmatmul.bf16.gmra.mxu0 %v336
  %v1920 = vpop.f32.mrf.mxu0
  %v1921 = vadd.f32 %v1907, %v1920
  %v1922 = vpop.f32.mrf.mxu0
  %v1923 = vadd.f32 %v1909, %v1922
  %1924 = vdwg.mxu0
  %1925 = vmatpush.bf16.msra.mxu0 %v1212
  %1926 = vmatpush.bf16.msra.mxu0 %v1210
  %1927 = vmatpush.bf16.msra.mxu0 %v1208
  %1928 = vmatpush.bf16.msra.mxu0 %v1206
  %1929 = vmatpush.bf16.msra.mxu0 %v1204
  %1930 = vmatpush.bf16.msra.mxu0 %v1202
  %1931 = vmatpush.bf16.msra.mxu0 %v1200
  %1932 = vmatpush.bf16.msra.mxu0 %v1198
  %1933 = vmatmul.bf16.gmra.mxu0 %v337
  %v1934 = vpop.f32.mrf.mxu0
  %v1935 = vadd.f32 %v1921, %v1934
  %v1936 = vpop.f32.mrf.mxu0
  %v1937 = vadd.f32 %v1923, %v1936
  %1938 = vdwg.mxu0
  %1939 = vmatpush.bf16.msra.mxu0 %v1228
  %1940 = vmatpush.bf16.msra.mxu0 %v1226
  %1941 = vmatpush.bf16.msra.mxu0 %v1224
  %1942 = vmatpush.bf16.msra.mxu0 %v1222
  %1943 = vmatpush.bf16.msra.mxu0 %v1220
  %1944 = vmatpush.bf16.msra.mxu0 %v1218
  %1945 = vmatpush.bf16.msra.mxu0 %v1216
  %1946 = vmatpush.bf16.msra.mxu0 %v1214
  %1947 = vmatmul.bf16.gmra.mxu0 %v338
  %v1948 = vpop.f32.mrf.mxu0
  %v1949 = vadd.f32 %v1935, %v1948
  %v1950 = vpop.f32.mrf.mxu0
  %v1951 = vadd.f32 %v1937, %v1950
  %1952 = vdwg.mxu0
  %1953 = vmatpush.bf16.msra.mxu0 %v1244
  %1954 = vmatpush.bf16.msra.mxu0 %v1242
  %1955 = vmatpush.bf16.msra.mxu0 %v1240
  %1956 = vmatpush.bf16.msra.mxu0 %v1238
  %1957 = vmatpush.bf16.msra.mxu0 %v1236
  %1958 = vmatpush.bf16.msra.mxu0 %v1234
  %1959 = vmatpush.bf16.msra.mxu0 %v1232
  %1960 = vmatpush.bf16.msra.mxu0 %v1230
  %1961 = vmatmul.bf16.gmra.mxu0 %v339
  %v1962 = vpop.f32.mrf.mxu0
  %v1963 = vadd.f32 %v1949, %v1962
  %v1964 = vpop.f32.mrf.mxu0
  %v1965 = vadd.f32 %v1951, %v1964
  %1966 = vdwg.mxu0
  %1967 = vmatpush.bf16.msra.mxu0 %v1260
  %1968 = vmatpush.bf16.msra.mxu0 %v1258
  %1969 = vmatpush.bf16.msra.mxu0 %v1256
  %1970 = vmatpush.bf16.msra.mxu0 %v1254
  %1971 = vmatpush.bf16.msra.mxu0 %v1252
  %1972 = vmatpush.bf16.msra.mxu0 %v1250
  %1973 = vmatpush.bf16.msra.mxu0 %v1248
  %1974 = vmatpush.bf16.msra.mxu0 %v1246
  %1975 = vmatmul.bf16.gmra.mxu0 %v340
  %v1976 = vpop.f32.mrf.mxu0
  %v1977 = vadd.f32 %v1963, %v1976
  %v1978 = vpop.f32.mrf.mxu0
  %v1979 = vadd.f32 %v1965, %v1978
  %1980 = vdwg.mxu0
  %1981 = vmatpush.bf16.msra.mxu0 %v1276
  %1982 = vmatpush.bf16.msra.mxu0 %v1274
  %1983 = vmatpush.bf16.msra.mxu0 %v1272
  %1984 = vmatpush.bf16.msra.mxu0 %v1270
  %1985 = vmatpush.bf16.msra.mxu0 %v1268
  %1986 = vmatpush.bf16.msra.mxu0 %v1266
  %1987 = vmatpush.bf16.msra.mxu0 %v1264
  %1988 = vmatpush.bf16.msra.mxu0 %v1262
  %1989 = vmatmul.bf16.gmra.mxu0 %v341
  %v1990 = vpop.f32.mrf.mxu0
  %v1991 = vadd.f32 %v1977, %v1990
  %v1992 = vpop.f32.mrf.mxu0
  %v1993 = vadd.f32 %v1979, %v1992
  %1994 = vdwg.mxu0
  %1995 = vmatpush.bf16.msra.mxu0 %v1292
  %1996 = vmatpush.bf16.msra.mxu0 %v1290
  %1997 = vmatpush.bf16.msra.mxu0 %v1288
  %1998 = vmatpush.bf16.msra.mxu0 %v1286
  %1999 = vmatpush.bf16.msra.mxu0 %v1284
  %2000 = vmatpush.bf16.msra.mxu0 %v1282
  %2001 = vmatpush.bf16.msra.mxu0 %v1280
  %2002 = vmatpush.bf16.msra.mxu0 %v1278
  %2003 = vmatmul.bf16.gmra.mxu0 %v342
  %v2004 = vpop.f32.mrf.mxu0
  %v2005 = vadd.f32 %v1991, %v2004
  %v2006 = vpop.f32.mrf.mxu0
  %v2007 = vadd.f32 %v1993, %v2006
  %2008 = vdwg.mxu0
  %2009 = vmatpush.bf16.msra.mxu0 %v1308
  %2010 = vmatpush.bf16.msra.mxu0 %v1306
  %2011 = vmatpush.bf16.msra.mxu0 %v1304
  %2012 = vmatpush.bf16.msra.mxu0 %v1302
  %2013 = vmatpush.bf16.msra.mxu0 %v1300
  %2014 = vmatpush.bf16.msra.mxu0 %v1298
  %2015 = vmatpush.bf16.msra.mxu0 %v1296
  %2016 = vmatpush.bf16.msra.mxu0 %v1294
  %2017 = vmatmul.bf16.gmra.mxu0 %v343
  %v2018 = vpop.f32.mrf.mxu0
  %v2019 = vadd.f32 %v2005, %v2018
  %v2020 = vpop.f32.mrf.mxu0
  %v2021 = vadd.f32 %v2007, %v2020
  %2022 = vdwg.mxu0
  %2023 = vmatpush.bf16.msra.mxu0 %v1324
  %2024 = vmatpush.bf16.msra.mxu0 %v1322
  %2025 = vmatpush.bf16.msra.mxu0 %v1320
  %2026 = vmatpush.bf16.msra.mxu0 %v1318
  %2027 = vmatpush.bf16.msra.mxu0 %v1316
  %2028 = vmatpush.bf16.msra.mxu0 %v1314
  %2029 = vmatpush.bf16.msra.mxu0 %v1312
  %2030 = vmatpush.bf16.msra.mxu0 %v1310
  %2031 = vmatmul.bf16.gmra.mxu0 %v344
  %v2032 = vpop.f32.mrf.mxu0
  %v2033 = vadd.f32 %v2019, %v2032
  %v2034 = vpop.f32.mrf.mxu0
  %v2035 = vadd.f32 %v2021, %v2034
  %2036 = vdwg.mxu0
  %2037 = vmatpush.bf16.msra.mxu0 %v1340
  %2038 = vmatpush.bf16.msra.mxu0 %v1338
  %2039 = vmatpush.bf16.msra.mxu0 %v1336
  %2040 = vmatpush.bf16.msra.mxu0 %v1334
  %2041 = vmatpush.bf16.msra.mxu0 %v1332
  %2042 = vmatpush.bf16.msra.mxu0 %v1330
  %2043 = vmatpush.bf16.msra.mxu0 %v1328
  %2044 = vmatpush.bf16.msra.mxu0 %v1326
  %2045 = vmatmul.bf16.gmra.mxu0 %v345
  %v2046 = vpop.f32.mrf.mxu0
  %v2047 = vadd.f32 %v2033, %v2046
  %v2048 = vpop.f32.mrf.mxu0
  %v2049 = vadd.f32 %v2035, %v2048
  %2050 = vdwg.mxu0
  %2051 = vmatpush.bf16.msra.mxu0 %v1356
  %2052 = vmatpush.bf16.msra.mxu0 %v1354
  %2053 = vmatpush.bf16.msra.mxu0 %v1352
  %2054 = vmatpush.bf16.msra.mxu0 %v1350
  %2055 = vmatpush.bf16.msra.mxu0 %v1348
  %2056 = vmatpush.bf16.msra.mxu0 %v1346
  %2057 = vmatpush.bf16.msra.mxu0 %v1344
  %2058 = vmatpush.bf16.msra.mxu0 %v1342
  %2059 = vmatmul.bf16.gmra.mxu0 %v346
  %v2060 = vpop.f32.mrf.mxu0
  %v2061 = vadd.f32 %v2047, %v2060
  %v2062 = vpop.f32.mrf.mxu0
  %v2063 = vadd.f32 %v2049, %v2062
  %2064 = vdwg.mxu0
  %2065 = vmatpush.bf16.msra.mxu0 %v1372
  %2066 = vmatpush.bf16.msra.mxu0 %v1370
  %2067 = vmatpush.bf16.msra.mxu0 %v1368
  %2068 = vmatpush.bf16.msra.mxu0 %v1366
  %2069 = vmatpush.bf16.msra.mxu0 %v1364
  %2070 = vmatpush.bf16.msra.mxu0 %v1362
  %2071 = vmatpush.bf16.msra.mxu0 %v1360
  %2072 = vmatpush.bf16.msra.mxu0 %v1358
  %2073 = vmatmul.bf16.gmra.mxu0 %v347
  %v2074 = vpop.f32.mrf.mxu0
  %v2075 = vadd.f32 %v2061, %v2074
  %v2076 = vpop.f32.mrf.mxu0
  %v2077 = vadd.f32 %v2063, %v2076
  %2078 = vdwg.mxu0
  %2079 = vmatpush.bf16.msra.mxu0 %v1388
  %2080 = vmatpush.bf16.msra.mxu0 %v1386
  %2081 = vmatpush.bf16.msra.mxu0 %v1384
  %2082 = vmatpush.bf16.msra.mxu0 %v1382
  %2083 = vmatpush.bf16.msra.mxu0 %v1380
  %2084 = vmatpush.bf16.msra.mxu0 %v1378
  %2085 = vmatpush.bf16.msra.mxu0 %v1376
  %2086 = vmatpush.bf16.msra.mxu0 %v1374
  %2087 = vmatmul.bf16.gmra.mxu0 %v348
  %v2088 = vpop.f32.mrf.mxu0
  %v2089 = vadd.f32 %v2075, %v2088
  %v2090 = vpop.f32.mrf.mxu0
  %v2091 = vadd.f32 %v2077, %v2090
  %2092 = vdwg.mxu0
  %2093 = vst [vmem:[%s2] sm:$0xff] %v1865
  %2094 = vst [vmem:[%s2 + $0x8] sm:$0xff] %v2089
  %2095 = vst [vmem:[%s2 + $0x10] sm:$0xff] %v1867
  %2096 = vst [vmem:[%s2 + $0x18] sm:$0xff] %v2091
  %v2097 = vadd.f32 %v1865, %v1867
  %v2098 = vrot.slane %v2097, 4
  %v2099 = vadd.f32 %v2097, %v2098
  %v2100 = vrot.slane %v2099, 2
  %v2101 = vadd.f32 %v2099, %v2100
  %v2102 = vrot.slane %v2101, 1
  %v2103 = vadd.f32 %v2101, %v2102
  %v2104 = vadd.f32 %v2089, %v2091
  %v2105 = vrot.slane %v2104, 4
  %v2106 = vadd.f32 %v2104, %v2105
  %v2107 = vrot.slane %v2106, 2
  %v2108 = vadd.f32 %v2106, %v2107
  %v2109 = vrot.slane %v2108, 1
  %v2110 = vadd.f32 %v2108, %v2109
  %v2111 = vmul.f32 %v1865, %v1865
  %v2112 = vmul.f32 %v2089, %v2089
  %v2113 = vmul.f32 %v1867, %v1867
  %v2114 = vmul.f32 %v2091, %v2091
  %v2115 = vadd.f32 %v2111, %v2113
  %v2116 = vrot.slane %v2115, 4
  %v2117 = vadd.f32 %v2115, %v2116
  %v2118 = vrot.slane %v2117, 2
  %v2119 = vadd.f32 %v2117, %v2118
  %v2120 = vrot.slane %v2119, 1
  %v2121 = vadd.f32 %v2119, %v2120
  %v2122 = vadd.f32 %v2112, %v2114
  %v2123 = vrot.slane %v2122, 4
  %v2124 = vadd.f32 %v2122, %v2123
  %v2125 = vrot.slane %v2124, 2
  %v2126 = vadd.f32 %v2124, %v2125
  %v2127 = vrot.slane %v2126, 1
  %v2128 = vadd.f32 %v2126, %v2127
  %vm2129 = vcmask 1040384
  %v2130 = vsel %vm2129, %v2103, %v2121
  %v2131 = vsel %vm2129, %v2110, %v2128
  %v2134 = vrot.slane %v2131, 6
  %vm2135 = vcmask 1041408
  %v2136 = vsel %vm2135, %v2130, %v2134
  %2138 = vst [vmem:[%s3] sm:$0xf] %v2136
  // Predicated region
  $region10: #{encoder_forward.53} parent=0 // pred_check
    _
  $region11: #{encoder_forward.53} parent=0 // pred_check_branch
    %2140 = sbr.rel (0) target = $region13
  $region12: #{encoder_forward.53} parent=0 // pred_region
    _
  $region13: #{encoder_forward.53} parent=0 // pred_fallthru
    _
  // Predicated region
  $region14: #{encoder_forward.53} parent=0 // pred_check
    _
  $region15: #{encoder_forward.53} parent=0 // pred_check_branch
    %2142 = sbr.rel (0) target = $region17
  $region16: #{encoder_forward.53} parent=0 // pred_region
    _
  $region17: #{encoder_forward.53} parent=0 // pred_fallthru
    _
  // Predicated region
  $region18: #{encoder_forward.53} parent=0 // pred_check
    _
  $region19: #{encoder_forward.53} parent=0 // pred_check_branch
    %2144 = sbr.rel (0) target = $region21
  $region20: #{encoder_forward.53} parent=0 // pred_region
    _
  $region21: #{encoder_forward.53} parent=0 // pred_fallthru
    _
  // Predicated region
  $region22: #{encoder_forward.53} parent=0 // pred_check
    _
  $region23: #{encoder_forward.53} parent=0 // pred_check_branch
    %2146 = sbr.rel (0) target = $region25
  $region24: #{encoder_forward.53} parent=0 // pred_region
    _
  $region25: #{encoder_forward.53} parent=0 // pred_fallthru
    _

// kernel: encoder_forward.55
$region0: #{encoder_forward.55}
  #allocation0 [shape = 'u32[]', space=smem, size = 0x4, offset = 0x4, fixed_abs, tag = 'smem constant byte address 0x4 - core index']
  #allocation1 [shape = 'u32[72,128]{1,0:T(1,128)}', space=vmem, size = 0x9000, scoped, tag = 'internal scratch']
  %s0 = inlined_call_operand.vmem [shape: bf16[16,256], index: 0, kind: input, shape index: {}]
  %s1 = inlined_call_operand.vmem [shape: bf16[128,256], index: 1, kind: input, shape index: {}]
  %s2 = inlined_call_operand.vmem [shape: f32[16,256], index: 2, kind: output, shape index: {0}]
  %s3 = inlined_call_operand.vmem [shape: f32[16,128], index: 3, kind: output, shape index: {1}]
  %4 = xla_tuple %s2, %s3
  %s5 = sld [smem:[#allocation0]]
  $region26: #{encoder_forward.55} parent=0
    _
  %s7 = ssub.s32 1, %s5
  %s8 = scalar_select 0, %s7, %s5
  // Predicated region
  $region2: #{encoder_forward.55} parent=0 // pred_check
    _
  $region3: #{encoder_forward.55} parent=0 // pred_check_branch
    %10 = sbr.rel (0) target = $region5
  $region4: #{encoder_forward.55} parent=0 // pred_region
    _
  $region5: #{encoder_forward.55} parent=0 // pred_fallthru
    _
  // Predicated region
  $region6: #{encoder_forward.55} parent=0 // pred_check
    _
  $region7: #{encoder_forward.55} parent=0 // pred_check_branch
    %12 = sbr.rel (0) target = $region9
  $region8: #{encoder_forward.55} parent=0 // pred_region
    _
  $region9: #{encoder_forward.55} parent=0 // pred_fallthru
    _
  %v13 = vld [vmem:[%s0] sm:$0xff]
  %v14 = vld [vmem:[%s0 + $0x8] sm:$0xff]
  %v15 = vld [vmem:[%s1] sm:$0xff]
  %v16 = vld [vmem:[%s1 + $0x8] sm:$0xff]
  %v17 = vld [vmem:[%s1 + $0x10] sm:$0xff]
  %v18 = vld [vmem:[%s1 + $0x18] sm:$0xff]
  %v19 = vld [vmem:[%s1 + $0x20] sm:$0xff]
  %v20 = vld [vmem:[%s1 + $0x28] sm:$0xff]
  %v21 = vld [vmem:[%s1 + $0x30] sm:$0xff]
  %v22 = vld [vmem:[%s1 + $0x38] sm:$0xff]
  %v23 = vld [vmem:[%s1 + $0x40] sm:$0xff]
  %v24 = vld [vmem:[%s1 + $0x48] sm:$0xff]
  %v25 = vld [vmem:[%s1 + $0x50] sm:$0xff]
  %v26 = vld [vmem:[%s1 + $0x58] sm:$0xff]
  %v27 = vld [vmem:[%s1 + $0x60] sm:$0xff]
  %v28 = vld [vmem:[%s1 + $0x68] sm:$0xff]
  %v29 = vld [vmem:[%s1 + $0x70] sm:$0xff]
  %v30 = vld [vmem:[%s1 + $0x78] sm:$0xff]
  %v33 = vunpack.c.l.b16 %v13
  %v34 = vunpack.c.h.b16 %v13
  %v35 = vunpack.c.l.b16 %v14
  %v36 = vunpack.c.h.b16 %v14
  %v37 = vpack.c.b16 %v35, %v33
  %v38 = vpack.c.b16 %v36, %v34
  %v57 = vunpack.c.l.b16 %v15
  %v58 = vunpack.c.h.b16 %v15
  %v59 = vunpack.c.l.b16 %v16
  %v60 = vunpack.c.h.b16 %v16
  %v61 = vunpack.c.l.b16 %v17
  %v62 = vunpack.c.h.b16 %v17
  %v63 = vunpack.c.l.b16 %v18
  %v64 = vunpack.c.h.b16 %v18
  %v65 = vunpack.c.l.b16 %v19
  %v66 = vunpack.c.h.b16 %v19
  %v67 = vunpack.c.l.b16 %v20
  %v68 = vunpack.c.h.b16 %v20
  %v69 = vunpack.c.l.b16 %v21
  %v70 = vunpack.c.h.b16 %v21
  %v71 = vunpack.c.l.b16 %v22
  %v72 = vunpack.c.h.b16 %v22
  %v73 = vunpack.c.l.b16 %v23
  %v74 = vunpack.c.h.b16 %v23
  %v75 = vunpack.c.l.b16 %v24
  %v76 = vunpack.c.h.b16 %v24
  %v77 = vunpack.c.l.b16 %v25
  %v78 = vunpack.c.h.b16 %v25
  %v79 = vunpack.c.l.b16 %v26
  %v80 = vunpack.c.h.b16 %v26
  %v81 = vunpack.c.l.b16 %v27
  %v82 = vunpack.c.h.b16 %v27
  %v83 = vunpack.c.l.b16 %v28
  %v84 = vunpack.c.h.b16 %v28
  %v85 = vunpack.c.l.b16 %v29
  %v86 = vunpack.c.h.b16 %v29
  %v87 = vunpack.c.l.b16 %v30
  %v88 = vunpack.c.h.b16 %v30
  %v89 = vpack.c.b16 %v59, %v57
  %v90 = vpack.c.b16 %v60, %v58
  %v91 = vpack.c.b16 %v63, %v61
  %v92 = vpack.c.b16 %v64, %v62
  %v93 = vpack.c.b16 %v67, %v65
  %v94 = vpack.c.b16 %v68, %v66
  %v95 = vpack.c.b16 %v71, %v69
  %v96 = vpack.c.b16 %v72, %v70
  %v97 = vpack.c.b16 %v75, %v73
  %v98 = vpack.c.b16 %v76, %v74
  %v99 = vpack.c.b16 %v79, %v77
  %v100 = vpack.c.b16 %v80, %v78
  %v101 = vpack.c.b16 %v83, %v81
  %v102 = vpack.c.b16 %v84, %v82
  %v103 = vpack.c.b16 %v87, %v85
  %v104 = vpack.c.b16 %v88, %v86
  %121 = vmatpush.bf16.xpose.msra.mxu0 %v103
  %122 = vmatpush.bf16.xpose.msra.mxu0 %v101
  %123 = vmatpush.bf16.xpose.msra.mxu0 %v99
  %124 = vmatpush.bf16.xpose.msra.mxu0 %v97
  %125 = vmatpush.bf16.xpose.msra.mxu0 %v95
  %126 = vmatpush.bf16.xpose.msra.mxu0 %v93
  %127 = vmatpush.bf16.xpose.msra.mxu0 %v91
  %128 = vmatpush.bf16.xpose.msra.mxu0 %v89
  %129 = vmatmul.bf16.gmra.mxu0 %v37
  %v130 = vpop.f32.mrf.mxu0
  %v131 = vadd.f32 0.0, %v130
  %v132 = vpop.f32.mrf.mxu0
  %v133 = vadd.f32 0.0, %v132
  %134 = vdwg.mxu0
  %135 = vmatpush.bf16.xpose.msra.mxu0 %v104
  %136 = vmatpush.bf16.xpose.msra.mxu0 %v102
  %137 = vmatpush.bf16.xpose.msra.mxu0 %v100
  %138 = vmatpush.bf16.xpose.msra.mxu0 %v98
  %139 = vmatpush.bf16.xpose.msra.mxu0 %v96
  %140 = vmatpush.bf16.xpose.msra.mxu0 %v94
  %141 = vmatpush.bf16.xpose.msra.mxu0 %v92
  %142 = vmatpush.bf16.xpose.msra.mxu0 %v90
  %143 = vmatmul.bf16.gmra.mxu0 %v38
  %v144 = vpop.f32.mrf.mxu0
  %v145 = vadd.f32 %v131, %v144
  %v146 = vpop.f32.mrf.mxu0
  %v147 = vadd.f32 %v133, %v146
  %148 = vdwg.mxu0
  %v149 = vlaneseq
  %v150 = vand.u32 %v149, 127
  %vm151 = vcmp.lt.s32.totalorder %v150, 64
  %v152 = vsel %vm151, %v145, -1e+30
  %v153 = vsel %vm151, %v147, -1e+30
  %154 = vmax.xlane.f32.xlu0 %v152
  %v155 = vpop.xlane.xlu0 %154
  %156 = vmax.xlane.f32.xlu0 %v153
  %v157 = vpop.xlane.xlu0 %156
  %v158 = vsub.f32 %v152, %v155
  %v159 = vsub.f32 %v153, %v157
  %v160 = vmul.f32 %v158, 1.442695
  %v161 = vpow.pop %v160
  %v162 = vmul.f32 %v159, 1.442695
  %v163 = vpow.pop %v162
  %164 = vadd.xlane.f32.xlu0 %v161
  %v165 = vpop.xlane.xlu0 %164
  %166 = vadd.xlane.f32.xlu0 %v163
  %v167 = vpop.xlane.xlu0 %166
  %v168 = vrcp.pop %v165
  %v169 = vrcp.pop %v167
  %v170 = vmul.f32 %v161, %v168
  %v171 = vmul.f32 %v163, %v169
  %v172 = vsub.f32 %v170, 0.0025
  %v173 = vsub.f32 %v171, 0.0025
  %v174 = vmax.f32 %v172, 0.0
  %v175 = vmax.f32 %v173, 0.0
  %v176 = vmul.f32 %v174, %v170
  %v177 = vmul.f32 %v175, %v171
  %v178 = vand.u32 2147483647, %v172
  %v179 = vand.u32 2147483647, %v173
  %v180 = vadd.f32 %v178, 1e-12
  %v181 = vadd.f32 %v179, 1e-12
  %v182 = vrcp.pop %v180
  %v183 = vmul.f32 %v180, %v182
  %v184 = vsub.f32 1.0, %v183
  %v185 = vmul.f32 %v182, %v184
  %v186 = vadd.f32 %v182, %v185
  %vm187 = vweird.f32 %v180
  %vm188 = vweird.f32 %v182
  %vm189 = vmor %vm187, %vm188
  %v190 = vsel %vm189, %v182, %v186
  %v191 = vand.u32 2147483647, %v180
  %vm192 = vcmp.eq.f32.partialorder %v191, 8.507059e+37
  %v193 = vand.u32 %v180, 2147483648
  %v194 = vor.u32 1.1754944e-38, %v193
  %v195 = vsel %vm192, %v194, %v190
  %v196 = vmul.f32 %v176, %v195
  %v197 = vrcp.pop %v181
  %v198 = vmul.f32 %v181, %v197
  %v199 = vsub.f32 1.0, %v198
  %v200 = vmul.f32 %v197, %v199
  %v201 = vadd.f32 %v197, %v200
  %vm202 = vweird.f32 %v181
  %vm203 = vweird.f32 %v197
  %vm204 = vmor %vm202, %vm203
  %v205 = vsel %vm204, %v197, %v201
  %v206 = vand.u32 2147483647, %v181
  %vm207 = vcmp.eq.f32.partialorder %v206, 8.507059e+37
  %v208 = vand.u32 %v181, 2147483648
  %v209 = vor.u32 1.1754944e-38, %v208
  %v210 = vsel %vm207, %v209, %v205
  %v211 = vmul.f32 %v177, %v210
  %v212 = vand.u32 2147483647, %v196
  %v213 = vand.u32 2147483647, %v211
  %214 = vadd.xlane.f32.xlu0 %v212
  %v215 = vpop.xlane.xlu0 %214
  %216 = vadd.xlane.f32.xlu0 %v213
  %v217 = vpop.xlane.xlu0 %216
  %v218 = vmax.f32 %v215, 1e-12
  %v219 = vmax.f32 %v217, 1e-12
  %v220 = vrcp.pop %v218
  %v221 = vrcp.pop %v219
  %v222 = vmul.f32 %v196, %v220
  %v223 = vmul.f32 %v211, %v221
  %v224 = vpack.c.bf16 %v223, %v222
  %225 = vmatpush.bf16.msra.mxu0 %v103
  %226 = vmatpush.bf16.msra.mxu0 %v101
  %227 = vmatpush.bf16.msra.mxu0 %v99
  %228 = vmatpush.bf16.msra.mxu0 %v97
  %229 = vmatpush.bf16.msra.mxu0 %v95
  %230 = vmatpush.bf16.msra.mxu0 %v93
  %231 = vmatpush.bf16.msra.mxu0 %v91
  %232 = vmatpush.bf16.msra.mxu0 %v89
  %233 = vmatmul.bf16.gmra.mxu0 %v224
  %v234 = vpop.f32.mrf.mxu0
  %v235 = vadd.f32 0.0, %v234
  %v236 = vpop.f32.mrf.mxu0
  %v237 = vadd.f32 0.0, %v236
  %238 = vdwg.mxu0
  %239 = vmatpush.bf16.msra.mxu0 %v104
  %240 = vmatpush.bf16.msra.mxu0 %v102
  %241 = vmatpush.bf16.msra.mxu0 %v100
  %242 = vmatpush.bf16.msra.mxu0 %v98
  %243 = vmatpush.bf16.msra.mxu0 %v96
  %244 = vmatpush.bf16.msra.mxu0 %v94
  %245 = vmatpush.bf16.msra.mxu0 %v92
  %246 = vmatpush.bf16.msra.mxu0 %v90
  %247 = vmatmul.bf16.gmra.mxu0 %v224
  %v248 = vpop.f32.mrf.mxu0
  %v249 = vadd.f32 0.0, %v248
  %v250 = vpop.f32.mrf.mxu0
  %v251 = vadd.f32 0.0, %v250
  %252 = vdwg.mxu0
  %253 = vst [vmem:[%s2] sm:$0xff] %v235
  %254 = vst [vmem:[%s2 + $0x8] sm:$0xff] %v249
  %255 = vst [vmem:[%s2 + $0x10] sm:$0xff] %v237
  %256 = vst [vmem:[%s2 + $0x18] sm:$0xff] %v251
  %257 = vst [vmem:[%s3] sm:$0xff] %v222
  %258 = vst [vmem:[%s3 + $0x8] sm:$0xff] %v223
  // Predicated region
  $region10: #{encoder_forward.55} parent=0 // pred_check
    _
  $region11: #{encoder_forward.55} parent=0 // pred_check_branch
    %260 = sbr.rel (0) target = $region13
  $region12: #{encoder_forward.55} parent=0 // pred_region
    _
  $region13: #{encoder_forward.55} parent=0 // pred_fallthru
    _
  // Predicated region
  $region14: #{encoder_forward.55} parent=0 // pred_check
    _
  $region15: #{encoder_forward.55} parent=0 // pred_check_branch
    %262 = sbr.rel (0) target = $region17
  $region16: #{encoder_forward.55} parent=0 // pred_region
    _
  $region17: #{encoder_forward.55} parent=0 // pred_fallthru
    _
  // Predicated region
  $region18: #{encoder_forward.55} parent=0 // pred_check
    _
  $region19: #{encoder_forward.55} parent=0 // pred_check_branch
    %264 = sbr.rel (0) target = $region21
  $region20: #{encoder_forward.55} parent=0 // pred_region
    _
  $region21: #{encoder_forward.55} parent=0 // pred_fallthru
    _
  // Predicated region
  $region22: #{encoder_forward.55} parent=0 // pred_check
    _
  $region23: #{encoder_forward.55} parent=0 // pred_check_branch
    %266 = sbr.rel (0) target = $region25
  $region24: #{encoder_forward.55} parent=0 // pred_region
    _
  $region25: #{encoder_forward.55} parent=0 // pred_fallthru
    _

// kernel: encoder_forward.60
$region0: #{encoder_forward.60}
  #allocation0 [shape = 'u32[]', space=smem, size = 0x4, offset = 0x4, fixed_abs, tag = 'smem constant byte address 0x4 - core index']
  #allocation1 [shape = 'u32[72,128]{1,0:T(1,128)}', space=vmem, size = 0x9000, scoped, tag = 'internal scratch']
  %s0 = inlined_call_operand.vmem [shape: f32[16,128], index: 0, kind: input, shape index: {}]
  %s1 = inlined_call_operand.vmem [shape: f32[1,128], index: 1, kind: input, shape index: {}]
  %s2 = inlined_call_operand.vmem [shape: f32[1,128], index: 2, kind: input, shape index: {}]
  %s3 = inlined_call_operand.vmem [shape: f32[16,128], index: 3, kind: output, shape index: {}]
  %s4 = sld [smem:[#allocation0]]
  $region22: #{encoder_forward.60} parent=0
    _
  %s6 = ssub.s32 1, %s4
  %s7 = scalar_select 0, %s6, %s4
  // Predicated region
  $region2: #{encoder_forward.60} parent=0 // pred_check
    _
  $region3: #{encoder_forward.60} parent=0 // pred_check_branch
    %9 = sbr.rel (0) target = $region5
  $region4: #{encoder_forward.60} parent=0 // pred_region
    _
  $region5: #{encoder_forward.60} parent=0 // pred_fallthru
    _
  // Predicated region
  $region6: #{encoder_forward.60} parent=0 // pred_check
    _
  $region7: #{encoder_forward.60} parent=0 // pred_check_branch
    %11 = sbr.rel (0) target = $region9
  $region8: #{encoder_forward.60} parent=0 // pred_region
    _
  $region9: #{encoder_forward.60} parent=0 // pred_fallthru
    _
  // Predicated region
  $region10: #{encoder_forward.60} parent=0 // pred_check
    _
  $region11: #{encoder_forward.60} parent=0 // pred_check_branch
    %13 = sbr.rel (0) target = $region13
  $region12: #{encoder_forward.60} parent=0 // pred_region
    _
  $region13: #{encoder_forward.60} parent=0 // pred_fallthru
    _
  %v14 = vld [vmem:[%s0] sm:$0xff]
  %v15 = vld [vmem:[%s0 + $0x8] sm:$0xff]
  %v16 = vld [vmem:[%s1] sm:$0x1]
  %v18 = vperm.slane %v16, 0
  %v20 = vmul.f32 %v14, %v18
  %v21 = vmul.f32 %v15, %v18
  %v22 = vld [vmem:[%s2] sm:$0x1]
  %v24 = vperm.slane %v22, 0
  %v26 = vadd.f32 %v20, %v24
  %v27 = vadd.f32 %v21, %v24
  %v28 = vmax.f32 %v26, 0.0
  %v29 = vmax.f32 %v27, 0.0
  %30 = vst [vmem:[%s3] sm:$0xff] %v28
  %31 = vst [vmem:[%s3 + $0x8] sm:$0xff] %v29
  // Predicated region
  $region14: #{encoder_forward.60} parent=0 // pred_check
    _
  $region15: #{encoder_forward.60} parent=0 // pred_check_branch
    %33 = sbr.rel (0) target = $region17
  $region16: #{encoder_forward.60} parent=0 // pred_region
    _
  $region17: #{encoder_forward.60} parent=0 // pred_fallthru
    _
  // Predicated region
  $region18: #{encoder_forward.60} parent=0 // pred_check
    _
  $region19: #{encoder_forward.60} parent=0 // pred_check_branch
    %35 = sbr.rel (0) target = $region21
  $region20: #{encoder_forward.60} parent=0 // pred_region
    _
  $region21: #{encoder_forward.60} parent=0 // pred_fallthru
    _

// kernel: encoder_forward.61
$region0: #{encoder_forward.61}
  #allocation0 [shape = 'u32[]', space=smem, size = 0x4, offset = 0x4, fixed_abs, tag = 'smem constant byte address 0x4 - core index']
  #allocation1 [shape = 'u32[72,128]{1,0:T(1,128)}', space=vmem, size = 0x9000, scoped, tag = 'internal scratch']
  %s0 = inlined_call_operand.vmem [shape: bf16[16,2304], index: 0, kind: input, shape index: {}]
  %s1 = inlined_call_operand.vmem [shape: bf16[2304,128], index: 1, kind: input, shape index: {}]
  %s2 = inlined_call_operand.vmem [shape: f32[16,128], index: 2, kind: output, shape index: {0}]
  %s3 = inlined_call_operand.vmem [shape: f32[1,2,128], index: 3, kind: output, shape index: {1}]
  %4 = xla_tuple %s2, %s3
  %s5 = sld [smem:[#allocation0]]
  $region26: #{encoder_forward.61} parent=0
    _
  %s7 = ssub.s32 1, %s5
  %s8 = scalar_select 0, %s7, %s5
  // Predicated region
  $region2: #{encoder_forward.61} parent=0 // pred_check
    _
  $region3: #{encoder_forward.61} parent=0 // pred_check_branch
    %10 = sbr.rel (0) target = $region5
  $region4: #{encoder_forward.61} parent=0 // pred_region
    _
  $region5: #{encoder_forward.61} parent=0 // pred_fallthru
    _
  // Predicated region
  $region6: #{encoder_forward.61} parent=0 // pred_check
    _
  $region7: #{encoder_forward.61} parent=0 // pred_check_branch
    %12 = sbr.rel (0) target = $region9
  $region8: #{encoder_forward.61} parent=0 // pred_region
    _
  $region9: #{encoder_forward.61} parent=0 // pred_fallthru
    _
  %v13 = vld [vmem:[%s0] sm:$0xff]
  %v14 = vld [vmem:[%s0 + $0x8] sm:$0xff]
  %v15 = vld [vmem:[%s0 + $0x10] sm:$0xff]
  %v16 = vld [vmem:[%s0 + $0x18] sm:$0xff]
  %v17 = vld [vmem:[%s0 + $0x20] sm:$0xff]
  %v18 = vld [vmem:[%s0 + $0x28] sm:$0xff]
  %v19 = vld [vmem:[%s0 + $0x30] sm:$0xff]
  %v20 = vld [vmem:[%s0 + $0x38] sm:$0xff]
  %v21 = vld [vmem:[%s0 + $0x40] sm:$0xff]
  %v22 = vld [vmem:[%s0 + $0x48] sm:$0xff]
  %v23 = vld [vmem:[%s0 + $0x50] sm:$0xff]
  %v24 = vld [vmem:[%s0 + $0x58] sm:$0xff]
  %v25 = vld [vmem:[%s0 + $0x60] sm:$0xff]
  %v26 = vld [vmem:[%s0 + $0x68] sm:$0xff]
  %v27 = vld [vmem:[%s0 + $0x70] sm:$0xff]
  %v28 = vld [vmem:[%s0 + $0x78] sm:$0xff]
  %v29 = vld [vmem:[%s0 + $0x80] sm:$0xff]
  %v30 = vld [vmem:[%s0 + $0x88] sm:$0xff]
  %v31 = vld [vmem:[%s1] sm:$0xf]
  %v32 = vld [vmem:[%s1 + $0x4] sm:$0xf]
  %v33 = vld [vmem:[%s1 + $0x8] sm:$0xf]
  %v34 = vld [vmem:[%s1 + $0xc] sm:$0xf]
  %v35 = vld [vmem:[%s1 + $0x10] sm:$0xf]
  %v36 = vld [vmem:[%s1 + $0x14] sm:$0xf]
  %v37 = vld [vmem:[%s1 + $0x18] sm:$0xf]
  %v38 = vld [vmem:[%s1 + $0x1c] sm:$0xf]
  %v39 = vld [vmem:[%s1 + $0x20] sm:$0xf]
  %v40 = vld [vmem:[%s1 + $0x24] sm:$0xf]
  %v41 = vld [vmem:[%s1 + $0x28] sm:$0xf]
  %v42 = vld [vmem:[%s1 + $0x2c] sm:$0xf]
  %v43 = vld [vmem:[%s1 + $0x30] sm:$0xf]
  %v44 = vld [vmem:[%s1 + $0x34] sm:$0xf]
  %v45 = vld [vmem:[%s1 + $0x38] sm:$0xf]
  %v46 = vld [vmem:[%s1 + $0x3c] sm:$0xf]
  %v47 = vld [vmem:[%s1 + $0x40] sm:$0xf]
  %v48 = vld [vmem:[%s1 + $0x44] sm:$0xf]
  %v49 = vld [vmem:[%s1 + $0x48] sm:$0xf]
  %v50 = vld [vmem:[%s1 + $0x4c] sm:$0xf]
  %v51 = vld [vmem:[%s1 + $0x50] sm:$0xf]
  %v52 = vld [vmem:[%s1 + $0x54] sm:$0xf]
  %v53 = vld [vmem:[%s1 + $0x58] sm:$0xf]
  %v54 = vld [vmem:[%s1 + $0x5c] sm:$0xf]
  %v55 = vld [vmem:[%s1 + $0x60] sm:$0xf]
  %v56 = vld [vmem:[%s1 + $0x64] sm:$0xf]
  %v57 = vld [vmem:[%s1 + $0x68] sm:$0xf]
  %v58 = vld [vmem:[%s1 + $0x6c] sm:$0xf]
  %v59 = vld [vmem:[%s1 + $0x70] sm:$0xf]
  %v60 = vld [vmem:[%s1 + $0x74] sm:$0xf]
  %v61 = vld [vmem:[%s1 + $0x78] sm:$0xf]
  %v62 = vld [vmem:[%s1 + $0x7c] sm:$0xf]
  %v63 = vld [vmem:[%s1 + $0x80] sm:$0xf]
  %v64 = vld [vmem:[%s1 + $0x84] sm:$0xf]
  %v65 = vld [vmem:[%s1 + $0x88] sm:$0xf]
  %v66 = vld [vmem:[%s1 + $0x8c] sm:$0xf]
  %v67 = vld [vmem:[%s1 + $0x90] sm:$0xf]
  %v68 = vld [vmem:[%s1 + $0x94] sm:$0xf]
  %v69 = vld [vmem:[%s1 + $0x98] sm:$0xf]
  %v70 = vld [vmem:[%s1 + $0x9c] sm:$0xf]
  %v71 = vld [vmem:[%s1 + $0xa0] sm:$0xf]
  %v72 = vld [vmem:[%s1 + $0xa4] sm:$0xf]
  %v73 = vld [vmem:[%s1 + $0xa8] sm:$0xf]
  %v74 = vld [vmem:[%s1 + $0xac] sm:$0xf]
  %v75 = vld [vmem:[%s1 + $0xb0] sm:$0xf]
  %v76 = vld [vmem:[%s1 + $0xb4] sm:$0xf]
  %v77 = vld [vmem:[%s1 + $0xb8] sm:$0xf]
  %v78 = vld [vmem:[%s1 + $0xbc] sm:$0xf]
  %v79 = vld [vmem:[%s1 + $0xc0] sm:$0xf]
  %v80 = vld [vmem:[%s1 + $0xc4] sm:$0xf]
  %v81 = vld [vmem:[%s1 + $0xc8] sm:$0xf]
  %v82 = vld [vmem:[%s1 + $0xcc] sm:$0xf]
  %v83 = vld [vmem:[%s1 + $0xd0] sm:$0xf]
  %v84 = vld [vmem:[%s1 + $0xd4] sm:$0xf]
  %v85 = vld [vmem:[%s1 + $0xd8] sm:$0xf]
  %v86 = vld [vmem:[%s1 + $0xdc] sm:$0xf]
  %v87 = vld [vmem:[%s1 + $0xe0] sm:$0xf]
  %v88 = vld [vmem:[%s1 + $0xe4] sm:$0xf]
  %v89 = vld [vmem:[%s1 + $0xe8] sm:$0xf]
  %v90 = vld [vmem:[%s1 + $0xec] sm:$0xf]
  %v91 = vld [vmem:[%s1 + $0xf0] sm:$0xf]
  %v92 = vld [vmem:[%s1 + $0xf4] sm:$0xf]
  %v93 = vld [vmem:[%s1 + $0xf8] sm:$0xf]
  %v94 = vld [vmem:[%s1 + $0xfc] sm:$0xf]
  %v95 = vld [vmem:[%s1 + $0x100] sm:$0xf]
  %v96 = vld [vmem:[%s1 + $0x104] sm:$0xf]
  %v97 = vld [vmem:[%s1 + $0x108] sm:$0xf]
  %v98 = vld [vmem:[%s1 + $0x10c] sm:$0xf]
  %v99 = vld [vmem:[%s1 + $0x110] sm:$0xf]
  %v100 = vld [vmem:[%s1 + $0x114] sm:$0xf]
  %v101 = vld [vmem:[%s1 + $0x118] sm:$0xf]
  %v102 = vld [vmem:[%s1 + $0x11c] sm:$0xf]
  %v103 = vld [vmem:[%s1 + $0x120] sm:$0xf]
  %v104 = vld [vmem:[%s1 + $0x124] sm:$0xf]
  %v105 = vld [vmem:[%s1 + $0x128] sm:$0xf]
  %v106 = vld [vmem:[%s1 + $0x12c] sm:$0xf]
  %v107 = vld [vmem:[%s1 + $0x130] sm:$0xf]
  %v108 = vld [vmem:[%s1 + $0x134] sm:$0xf]
  %v109 = vld [vmem:[%s1 + $0x138] sm:$0xf]
  %v110 = vld [vmem:[%s1 + $0x13c] sm:$0xf]
  %v111 = vld [vmem:[%s1 + $0x140] sm:$0xf]
  %v112 = vld [vmem:[%s1 + $0x144] sm:$0xf]
  %v113 = vld [vmem:[%s1 + $0x148] sm:$0xf]
  %v114 = vld [vmem:[%s1 + $0x14c] sm:$0xf]
  %v115 = vld [vmem:[%s1 + $0x150] sm:$0xf]
  %v116 = vld [vmem:[%s1 + $0x154] sm:$0xf]
  %v117 = vld [vmem:[%s1 + $0x158] sm:$0xf]
  %v118 = vld [vmem:[%s1 + $0x15c] sm:$0xf]
  %v119 = vld [vmem:[%s1 + $0x160] sm:$0xf]
  %v120 = vld [vmem:[%s1 + $0x164] sm:$0xf]
  %v121 = vld [vmem:[%s1 + $0x168] sm:$0xf]
  %v122 = vld [vmem:[%s1 + $0x16c] sm:$0xf]
  %v123 = vld [vmem:[%s1 + $0x170] sm:$0xf]
  %v124 = vld [vmem:[%s1 + $0x174] sm:$0xf]
  %v125 = vld [vmem:[%s1 + $0x178] sm:$0xf]
  %v126 = vld [vmem:[%s1 + $0x17c] sm:$0xf]
  %v127 = vld [vmem:[%s1 + $0x180] sm:$0xf]
  %v128 = vld [vmem:[%s1 + $0x184] sm:$0xf]
  %v129 = vld [vmem:[%s1 + $0x188] sm:$0xf]
  %v130 = vld [vmem:[%s1 + $0x18c] sm:$0xf]
  %v131 = vld [vmem:[%s1 + $0x190] sm:$0xf]
  %v132 = vld [vmem:[%s1 + $0x194] sm:$0xf]
  %v133 = vld [vmem:[%s1 + $0x198] sm:$0xf]
  %v134 = vld [vmem:[%s1 + $0x19c] sm:$0xf]
  %v135 = vld [vmem:[%s1 + $0x1a0] sm:$0xf]
  %v136 = vld [vmem:[%s1 + $0x1a4] sm:$0xf]
  %v137 = vld [vmem:[%s1 + $0x1a8] sm:$0xf]
  %v138 = vld [vmem:[%s1 + $0x1ac] sm:$0xf]
  %v139 = vld [vmem:[%s1 + $0x1b0] sm:$0xf]
  %v140 = vld [vmem:[%s1 + $0x1b4] sm:$0xf]
  %v141 = vld [vmem:[%s1 + $0x1b8] sm:$0xf]
  %v142 = vld [vmem:[%s1 + $0x1bc] sm:$0xf]
  %v143 = vld [vmem:[%s1 + $0x1c0] sm:$0xf]
  %v144 = vld [vmem:[%s1 + $0x1c4] sm:$0xf]
  %v145 = vld [vmem:[%s1 + $0x1c8] sm:$0xf]
  %v146 = vld [vmem:[%s1 + $0x1cc] sm:$0xf]
  %v147 = vld [vmem:[%s1 + $0x1d0] sm:$0xf]
  %v148 = vld [vmem:[%s1 + $0x1d4] sm:$0xf]
  %v149 = vld [vmem:[%s1 + $0x1d8] sm:$0xf]
  %v150 = vld [vmem:[%s1 + $0x1dc] sm:$0xf]
  %v151 = vld [vmem:[%s1 + $0x1e0] sm:$0xf]
  %v152 = vld [vmem:[%s1 + $0x1e4] sm:$0xf]
  %v153 = vld [vmem:[%s1 + $0x1e8] sm:$0xf]
  %v154 = vld [vmem:[%s1 + $0x1ec] sm:$0xf]
  %v155 = vld [vmem:[%s1 + $0x1f0] sm:$0xf]
  %v156 = vld [vmem:[%s1 + $0x1f4] sm:$0xf]
  %v157 = vld [vmem:[%s1 + $0x1f8] sm:$0xf]
  %v158 = vld [vmem:[%s1 + $0x1fc] sm:$0xf]
  %v159 = vld [vmem:[%s1 + $0x200] sm:$0xf]
  %v160 = vld [vmem:[%s1 + $0x204] sm:$0xf]
  %v161 = vld [vmem:[%s1 + $0x208] sm:$0xf]
  %v162 = vld [vmem:[%s1 + $0x20c] sm:$0xf]
  %v163 = vld [vmem:[%s1 + $0x210] sm:$0xf]
  %v164 = vld [vmem:[%s1 + $0x214] sm:$0xf]
  %v165 = vld [vmem:[%s1 + $0x218] sm:$0xf]
  %v166 = vld [vmem:[%s1 + $0x21c] sm:$0xf]
  %v167 = vld [vmem:[%s1 + $0x220] sm:$0xf]
  %v168 = vld [vmem:[%s1 + $0x224] sm:$0xf]
  %v169 = vld [vmem:[%s1 + $0x228] sm:$0xf]
  %v170 = vld [vmem:[%s1 + $0x22c] sm:$0xf]
  %v171 = vld [vmem:[%s1 + $0x230] sm:$0xf]
  %v172 = vld [vmem:[%s1 + $0x234] sm:$0xf]
  %v173 = vld [vmem:[%s1 + $0x238] sm:$0xf]
  %v174 = vld [vmem:[%s1 + $0x23c] sm:$0xf]
  %v175 = vld [vmem:[%s1 + $0x240] sm:$0xf]
  %v176 = vld [vmem:[%s1 + $0x244] sm:$0xf]
  %v177 = vld [vmem:[%s1 + $0x248] sm:$0xf]
  %v178 = vld [vmem:[%s1 + $0x24c] sm:$0xf]
  %v179 = vld [vmem:[%s1 + $0x250] sm:$0xf]
  %v180 = vld [vmem:[%s1 + $0x254] sm:$0xf]
  %v181 = vld [vmem:[%s1 + $0x258] sm:$0xf]
  %v182 = vld [vmem:[%s1 + $0x25c] sm:$0xf]
  %v183 = vld [vmem:[%s1 + $0x260] sm:$0xf]
  %v184 = vld [vmem:[%s1 + $0x264] sm:$0xf]
  %v185 = vld [vmem:[%s1 + $0x268] sm:$0xf]
  %v186 = vld [vmem:[%s1 + $0x26c] sm:$0xf]
  %v187 = vld [vmem:[%s1 + $0x270] sm:$0xf]
  %v188 = vld [vmem:[%s1 + $0x274] sm:$0xf]
  %v189 = vld [vmem:[%s1 + $0x278] sm:$0xf]
  %v190 = vld [vmem:[%s1 + $0x27c] sm:$0xf]
  %v191 = vld [vmem:[%s1 + $0x280] sm:$0xf]
  %v192 = vld [vmem:[%s1 + $0x284] sm:$0xf]
  %v193 = vld [vmem:[%s1 + $0x288] sm:$0xf]
  %v194 = vld [vmem:[%s1 + $0x28c] sm:$0xf]
  %v195 = vld [vmem:[%s1 + $0x290] sm:$0xf]
  %v196 = vld [vmem:[%s1 + $0x294] sm:$0xf]
  %v197 = vld [vmem:[%s1 + $0x298] sm:$0xf]
  %v198 = vld [vmem:[%s1 + $0x29c] sm:$0xf]
  %v199 = vld [vmem:[%s1 + $0x2a0] sm:$0xf]
  %v200 = vld [vmem:[%s1 + $0x2a4] sm:$0xf]
  %v201 = vld [vmem:[%s1 + $0x2a8] sm:$0xf]
  %v202 = vld [vmem:[%s1 + $0x2ac] sm:$0xf]
  %v203 = vld [vmem:[%s1 + $0x2b0] sm:$0xf]
  %v204 = vld [vmem:[%s1 + $0x2b4] sm:$0xf]
  %v205 = vld [vmem:[%s1 + $0x2b8] sm:$0xf]
  %v206 = vld [vmem:[%s1 + $0x2bc] sm:$0xf]
  %v207 = vld [vmem:[%s1 + $0x2c0] sm:$0xf]
  %v208 = vld [vmem:[%s1 + $0x2c4] sm:$0xf]
  %v209 = vld [vmem:[%s1 + $0x2c8] sm:$0xf]
  %v210 = vld [vmem:[%s1 + $0x2cc] sm:$0xf]
  %v211 = vld [vmem:[%s1 + $0x2d0] sm:$0xf]
  %v212 = vld [vmem:[%s1 + $0x2d4] sm:$0xf]
  %v213 = vld [vmem:[%s1 + $0x2d8] sm:$0xf]
  %v214 = vld [vmem:[%s1 + $0x2dc] sm:$0xf]
  %v215 = vld [vmem:[%s1 + $0x2e0] sm:$0xf]
  %v216 = vld [vmem:[%s1 + $0x2e4] sm:$0xf]
  %v217 = vld [vmem:[%s1 + $0x2e8] sm:$0xf]
  %v218 = vld [vmem:[%s1 + $0x2ec] sm:$0xf]
  %v219 = vld [vmem:[%s1 + $0x2f0] sm:$0xf]
  %v220 = vld [vmem:[%s1 + $0x2f4] sm:$0xf]
  %v221 = vld [vmem:[%s1 + $0x2f8] sm:$0xf]
  %v222 = vld [vmem:[%s1 + $0x2fc] sm:$0xf]
  %v223 = vld [vmem:[%s1 + $0x300] sm:$0xf]
  %v224 = vld [vmem:[%s1 + $0x304] sm:$0xf]
  %v225 = vld [vmem:[%s1 + $0x308] sm:$0xf]
  %v226 = vld [vmem:[%s1 + $0x30c] sm:$0xf]
  %v227 = vld [vmem:[%s1 + $0x310] sm:$0xf]
  %v228 = vld [vmem:[%s1 + $0x314] sm:$0xf]
  %v229 = vld [vmem:[%s1 + $0x318] sm:$0xf]
  %v230 = vld [vmem:[%s1 + $0x31c] sm:$0xf]
  %v231 = vld [vmem:[%s1 + $0x320] sm:$0xf]
  %v232 = vld [vmem:[%s1 + $0x324] sm:$0xf]
  %v233 = vld [vmem:[%s1 + $0x328] sm:$0xf]
  %v234 = vld [vmem:[%s1 + $0x32c] sm:$0xf]
  %v235 = vld [vmem:[%s1 + $0x330] sm:$0xf]
  %v236 = vld [vmem:[%s1 + $0x334] sm:$0xf]
  %v237 = vld [vmem:[%s1 + $0x338] sm:$0xf]
  %v238 = vld [vmem:[%s1 + $0x33c] sm:$0xf]
  %v239 = vld [vmem:[%s1 + $0x340] sm:$0xf]
  %v240 = vld [vmem:[%s1 + $0x344] sm:$0xf]
  %v241 = vld [vmem:[%s1 + $0x348] sm:$0xf]
  %v242 = vld [vmem:[%s1 + $0x34c] sm:$0xf]
  %v243 = vld [vmem:[%s1 + $0x350] sm:$0xf]
  %v244 = vld [vmem:[%s1 + $0x354] sm:$0xf]
  %v245 = vld [vmem:[%s1 + $0x358] sm:$0xf]
  %v246 = vld [vmem:[%s1 + $0x35c] sm:$0xf]
  %v247 = vld [vmem:[%s1 + $0x360] sm:$0xf]
  %v248 = vld [vmem:[%s1 + $0x364] sm:$0xf]
  %v249 = vld [vmem:[%s1 + $0x368] sm:$0xf]
  %v250 = vld [vmem:[%s1 + $0x36c] sm:$0xf]
  %v251 = vld [vmem:[%s1 + $0x370] sm:$0xf]
  %v252 = vld [vmem:[%s1 + $0x374] sm:$0xf]
  %v253 = vld [vmem:[%s1 + $0x378] sm:$0xf]
  %v254 = vld [vmem:[%s1 + $0x37c] sm:$0xf]
  %v255 = vld [vmem:[%s1 + $0x380] sm:$0xf]
  %v256 = vld [vmem:[%s1 + $0x384] sm:$0xf]
  %v257 = vld [vmem:[%s1 + $0x388] sm:$0xf]
  %v258 = vld [vmem:[%s1 + $0x38c] sm:$0xf]
  %v259 = vld [vmem:[%s1 + $0x390] sm:$0xf]
  %v260 = vld [vmem:[%s1 + $0x394] sm:$0xf]
  %v261 = vld [vmem:[%s1 + $0x398] sm:$0xf]
  %v262 = vld [vmem:[%s1 + $0x39c] sm:$0xf]
  %v263 = vld [vmem:[%s1 + $0x3a0] sm:$0xf]
  %v264 = vld [vmem:[%s1 + $0x3a4] sm:$0xf]
  %v265 = vld [vmem:[%s1 + $0x3a8] sm:$0xf]
  %v266 = vld [vmem:[%s1 + $0x3ac] sm:$0xf]
  %v267 = vld [vmem:[%s1 + $0x3b0] sm:$0xf]
  %v268 = vld [vmem:[%s1 + $0x3b4] sm:$0xf]
  %v269 = vld [vmem:[%s1 + $0x3b8] sm:$0xf]
  %v270 = vld [vmem:[%s1 + $0x3bc] sm:$0xf]
  %v271 = vld [vmem:[%s1 + $0x3c0] sm:$0xf]
  %v272 = vld [vmem:[%s1 + $0x3c4] sm:$0xf]
  %v273 = vld [vmem:[%s1 + $0x3c8] sm:$0xf]
  %v274 = vld [vmem:[%s1 + $0x3cc] sm:$0xf]
  %v275 = vld [vmem:[%s1 + $0x3d0] sm:$0xf]
  %v276 = vld [vmem:[%s1 + $0x3d4] sm:$0xf]
  %v277 = vld [vmem:[%s1 + $0x3d8] sm:$0xf]
  %v278 = vld [vmem:[%s1 + $0x3dc] sm:$0xf]
  %v279 = vld [vmem:[%s1 + $0x3e0] sm:$0xf]
  %v280 = vld [vmem:[%s1 + $0x3e4] sm:$0xf]
  %v281 = vld [vmem:[%s1 + $0x3e8] sm:$0xf]
  %v282 = vld [vmem:[%s1 + $0x3ec] sm:$0xf]
  %v283 = vld [vmem:[%s1 + $0x3f0] sm:$0xf]
  %v284 = vld [vmem:[%s1 + $0x3f4] sm:$0xf]
  %v285 = vld [vmem:[%s1 + $0x3f8] sm:$0xf]
  %v286 = vld [vmem:[%s1 + $0x3fc] sm:$0xf]
  %v287 = vld [vmem:[%s1 + $0x400] sm:$0xf]
  %v288 = vld [vmem:[%s1 + $0x404] sm:$0xf]
  %v289 = vld [vmem:[%s1 + $0x408] sm:$0xf]
  %v290 = vld [vmem:[%s1 + $0x40c] sm:$0xf]
  %v291 = vld [vmem:[%s1 + $0x410] sm:$0xf]
  %v292 = vld [vmem:[%s1 + $0x414] sm:$0xf]
  %v293 = vld [vmem:[%s1 + $0x418] sm:$0xf]
  %v294 = vld [vmem:[%s1 + $0x41c] sm:$0xf]
  %v295 = vld [vmem:[%s1 + $0x420] sm:$0xf]
  %v296 = vld [vmem:[%s1 + $0x424] sm:$0xf]
  %v297 = vld [vmem:[%s1 + $0x428] sm:$0xf]
  %v298 = vld [vmem:[%s1 + $0x42c] sm:$0xf]
  %v299 = vld [vmem:[%s1 + $0x430] sm:$0xf]
  %v300 = vld [vmem:[%s1 + $0x434] sm:$0xf]
  %v301 = vld [vmem:[%s1 + $0x438] sm:$0xf]
  %v302 = vld [vmem:[%s1 + $0x43c] sm:$0xf]
  %v303 = vld [vmem:[%s1 + $0x440] sm:$0xf]
  %v304 = vld [vmem:[%s1 + $0x444] sm:$0xf]
  %v305 = vld [vmem:[%s1 + $0x448] sm:$0xf]
  %v306 = vld [vmem:[%s1 + $0x44c] sm:$0xf]
  %v307 = vld [vmem:[%s1 + $0x450] sm:$0xf]
  %v308 = vld [vmem:[%s1 + $0x454] sm:$0xf]
  %v309 = vld [vmem:[%s1 + $0x458] sm:$0xf]
  %v310 = vld [vmem:[%s1 + $0x45c] sm:$0xf]
  %v311 = vld [vmem:[%s1 + $0x460] sm:$0xf]
  %v312 = vld [vmem:[%s1 + $0x464] sm:$0xf]
  %v313 = vld [vmem:[%s1 + $0x468] sm:$0xf]
  %v314 = vld [vmem:[%s1 + $0x46c] sm:$0xf]
  %v315 = vld [vmem:[%s1 + $0x470] sm:$0xf]
  %v316 = vld [vmem:[%s1 + $0x474] sm:$0xf]
  %v317 = vld [vmem:[%s1 + $0x478] sm:$0xf]
  %v318 = vld [vmem:[%s1 + $0x47c] sm:$0xf]
  %v337 = vunpack.c.l.b16 %v13
  %v338 = vunpack.c.h.b16 %v13
  %v339 = vunpack.c.l.b16 %v14
  %v340 = vunpack.c.h.b16 %v14
  %v341 = vunpack.c.l.b16 %v15
  %v342 = vunpack.c.h.b16 %v15
  %v343 = vunpack.c.l.b16 %v16
  %v344 = vunpack.c.h.b16 %v16
  %v345 = vunpack.c.l.b16 %v17
  %v346 = vunpack.c.h.b16 %v17
  %v347 = vunpack.c.l.b16 %v18
  %v348 = vunpack.c.h.b16 %v18
  %v349 = vunpack.c.l.b16 %v19
  %v350 = vunpack.c.h.b16 %v19
  %v351 = vunpack.c.l.b16 %v20
  %v352 = vunpack.c.h.b16 %v20
  %v353 = vunpack.c.l.b16 %v21
  %v354 = vunpack.c.h.b16 %v21
  %v355 = vunpack.c.l.b16 %v22
  %v356 = vunpack.c.h.b16 %v22
  %v357 = vunpack.c.l.b16 %v23
  %v358 = vunpack.c.h.b16 %v23
  %v359 = vunpack.c.l.b16 %v24
  %v360 = vunpack.c.h.b16 %v24
  %v361 = vunpack.c.l.b16 %v25
  %v362 = vunpack.c.h.b16 %v25
  %v363 = vunpack.c.l.b16 %v26
  %v364 = vunpack.c.h.b16 %v26
  %v365 = vunpack.c.l.b16 %v27
  %v366 = vunpack.c.h.b16 %v27
  %v367 = vunpack.c.l.b16 %v28
  %v368 = vunpack.c.h.b16 %v28
  %v369 = vunpack.c.l.b16 %v29
  %v370 = vunpack.c.h.b16 %v29
  %v371 = vunpack.c.l.b16 %v30
  %v372 = vunpack.c.h.b16 %v30
  %v373 = vpack.c.b16 %v355, %v337
  %v374 = vpack.c.b16 %v356, %v338
  %v375 = vpack.c.b16 %v357, %v339
  %v376 = vpack.c.b16 %v358, %v340
  %v377 = vpack.c.b16 %v359, %v341
  %v378 = vpack.c.b16 %v360, %v342
  %v379 = vpack.c.b16 %v361, %v343
  %v380 = vpack.c.b16 %v362, %v344
  %v381 = vpack.c.b16 %v363, %v345
  %v382 = vpack.c.b16 %v364, %v346
  %v383 = vpack.c.b16 %v365, %v347
  %v384 = vpack.c.b16 %v366, %v348
  %v385 = vpack.c.b16 %v367, %v349
  %v386 = vpack.c.b16 %v368, %v350
  %v387 = vpack.c.b16 %v369, %v351
  %v388 = vpack.c.b16 %v370, %v352
  %v389 = vpack.c.b16 %v371, %v353
  %v390 = vpack.c.b16 %v372, %v354
  %v697 = vunpack.c.l.b16 %v31
  %v698 = vunpack.c.l.b16 %v32
  %v699 = vunpack.c.l.b16 %v33
  %v700 = vunpack.c.l.b16 %v34
  %v701 = vunpack.c.l.b16 %v35
  %v702 = vunpack.c.l.b16 %v36
  %v703 = vunpack.c.l.b16 %v37
  %v704 = vunpack.c.l.b16 %v38
  %v705 = vunpack.c.l.b16 %v39
  %v706 = vunpack.c.l.b16 %v40
  %v707 = vunpack.c.l.b16 %v41
  %v708 = vunpack.c.l.b16 %v42
  %v709 = vunpack.c.l.b16 %v43
  %v710 = vunpack.c.l.b16 %v44
  %v711 = vunpack.c.l.b16 %v45
  %v712 = vunpack.c.l.b16 %v46
  %v713 = vunpack.c.l.b16 %v47
  %v714 = vunpack.c.l.b16 %v48
  %v715 = vunpack.c.l.b16 %v49
  %v716 = vunpack.c.l.b16 %v50
  %v717 = vunpack.c.l.b16 %v51
  %v718 = vunpack.c.l.b16 %v52
  %v719 = vunpack.c.l.b16 %v53
  %v720 = vunpack.c.l.b16 %v54
  %v721 = vunpack.c.l.b16 %v55
  %v722 = vunpack.c.l.b16 %v56
  %v723 = vunpack.c.l.b16 %v57
  %v724 = vunpack.c.l.b16 %v58
  %v725 = vunpack.c.l.b16 %v59
  %v726 = vunpack.c.l.b16 %v60
  %v727 = vunpack.c.l.b16 %v61
  %v728 = vunpack.c.l.b16 %v62
  %v729 = vunpack.c.l.b16 %v63
  %v730 = vunpack.c.l.b16 %v64
  %v731 = vunpack.c.l.b16 %v65
  %v732 = vunpack.c.l.b16 %v66
  %v733 = vunpack.c.l.b16 %v67
  %v734 = vunpack.c.l.b16 %v68
  %v735 = vunpack.c.l.b16 %v69
  %v736 = vunpack.c.l.b16 %v70
  %v737 = vunpack.c.l.b16 %v71
  %v738 = vunpack.c.l.b16 %v72
  %v739 = vunpack.c.l.b16 %v73
  %v740 = vunpack.c.l.b16 %v74
  %v741 = vunpack.c.l.b16 %v75
  %v742 = vunpack.c.l.b16 %v76
  %v743 = vunpack.c.l.b16 %v77
  %v744 = vunpack.c.l.b16 %v78
  %v745 = vunpack.c.l.b16 %v79
  %v746 = vunpack.c.l.b16 %v80
  %v747 = vunpack.c.l.b16 %v81
  %v748 = vunpack.c.l.b16 %v82
  %v749 = vunpack.c.l.b16 %v83
  %v750 = vunpack.c.l.b16 %v84
  %v751 = vunpack.c.l.b16 %v85
  %v752 = vunpack.c.l.b16 %v86
  %v753 = vunpack.c.l.b16 %v87
  %v754 = vunpack.c.l.b16 %v88
  %v755 = vunpack.c.l.b16 %v89
  %v756 = vunpack.c.l.b16 %v90
  %v757 = vunpack.c.l.b16 %v91
  %v758 = vunpack.c.l.b16 %v92
  %v759 = vunpack.c.l.b16 %v93
  %v760 = vunpack.c.l.b16 %v94
  %v761 = vunpack.c.l.b16 %v95
  %v762 = vunpack.c.l.b16 %v96
  %v763 = vunpack.c.l.b16 %v97
  %v764 = vunpack.c.l.b16 %v98
  %v765 = vunpack.c.l.b16 %v99
  %v766 = vunpack.c.l.b16 %v100
  %v767 = vunpack.c.l.b16 %v101
  %v768 = vunpack.c.l.b16 %v102
  %v769 = vunpack.c.l.b16 %v103
  %v770 = vunpack.c.l.b16 %v104
  %v771 = vunpack.c.l.b16 %v105
  %v772 = vunpack.c.l.b16 %v106
  %v773 = vunpack.c.l.b16 %v107
  %v774 = vunpack.c.l.b16 %v108
  %v775 = vunpack.c.l.b16 %v109
  %v776 = vunpack.c.l.b16 %v110
  %v777 = vunpack.c.l.b16 %v111
  %v778 = vunpack.c.l.b16 %v112
  %v779 = vunpack.c.l.b16 %v113
  %v780 = vunpack.c.l.b16 %v114
  %v781 = vunpack.c.l.b16 %v115
  %v782 = vunpack.c.l.b16 %v116
  %v783 = vunpack.c.l.b16 %v117
  %v784 = vunpack.c.l.b16 %v118
  %v785 = vunpack.c.l.b16 %v119
  %v786 = vunpack.c.l.b16 %v120
  %v787 = vunpack.c.l.b16 %v121
  %v788 = vunpack.c.l.b16 %v122
  %v789 = vunpack.c.l.b16 %v123
  %v790 = vunpack.c.l.b16 %v124
  %v791 = vunpack.c.l.b16 %v125
  %v792 = vunpack.c.l.b16 %v126
  %v793 = vunpack.c.l.b16 %v127
  %v794 = vunpack.c.l.b16 %v128
  %v795 = vunpack.c.l.b16 %v129
  %v796 = vunpack.c.l.b16 %v130
  %v797 = vunpack.c.l.b16 %v131
  %v798 = vunpack.c.l.b16 %v132
  %v799 = vunpack.c.l.b16 %v133
  %v800 = vunpack.c.l.b16 %v134
  %v801 = vunpack.c.l.b16 %v135
  %v802 = vunpack.c.l.b16 %v136
  %v803 = vunpack.c.l.b16 %v137
  %v804 = vunpack.c.l.b16 %v138
  %v805 = vunpack.c.l.b16 %v139
  %v806 = vunpack.c.l.b16 %v140
  %v807 = vunpack.c.l.b16 %v141
  %v808 = vunpack.c.l.b16 %v142
  %v809 = vunpack.c.l.b16 %v143
  %v810 = vunpack.c.l.b16 %v144
  %v811 = vunpack.c.l.b16 %v145
  %v812 = vunpack.c.l.b16 %v146
  %v813 = vunpack.c.l.b16 %v147
  %v814 = vunpack.c.l.b16 %v148
  %v815 = vunpack.c.l.b16 %v149
  %v816 = vunpack.c.l.b16 %v150
  %v817 = vunpack.c.l.b16 %v151
  %v818 = vunpack.c.l.b16 %v152
  %v819 = vunpack.c.l.b16 %v153
  %v820 = vunpack.c.l.b16 %v154
  %v821 = vunpack.c.l.b16 %v155
  %v822 = vunpack.c.l.b16 %v156
  %v823 = vunpack.c.l.b16 %v157
  %v824 = vunpack.c.l.b16 %v158
  %v825 = vunpack.c.l.b16 %v159
  %v826 = vunpack.c.l.b16 %v160
  %v827 = vunpack.c.l.b16 %v161
  %v828 = vunpack.c.l.b16 %v162
  %v829 = vunpack.c.l.b16 %v163
  %v830 = vunpack.c.l.b16 %v164
  %v831 = vunpack.c.l.b16 %v165
  %v832 = vunpack.c.l.b16 %v166
  %v833 = vunpack.c.l.b16 %v167
  %v834 = vunpack.c.l.b16 %v168
  %v835 = vunpack.c.l.b16 %v169
  %v836 = vunpack.c.l.b16 %v170
  %v837 = vunpack.c.l.b16 %v171
  %v838 = vunpack.c.l.b16 %v172
  %v839 = vunpack.c.l.b16 %v173
  %v840 = vunpack.c.l.b16 %v174
  %v841 = vunpack.c.l.b16 %v175
  %v842 = vunpack.c.l.b16 %v176
  %v843 = vunpack.c.l.b16 %v177
  %v844 = vunpack.c.l.b16 %v178
  %v845 = vunpack.c.l.b16 %v179
  %v846 = vunpack.c.l.b16 %v180
  %v847 = vunpack.c.l.b16 %v181
  %v848 = vunpack.c.l.b16 %v182
  %v849 = vunpack.c.l.b16 %v183
  %v850 = vunpack.c.l.b16 %v184
  %v851 = vunpack.c.l.b16 %v185
  %v852 = vunpack.c.l.b16 %v186
  %v853 = vunpack.c.l.b16 %v187
  %v854 = vunpack.c.l.b16 %v188
  %v855 = vunpack.c.l.b16 %v189
  %v856 = vunpack.c.l.b16 %v190
  %v857 = vunpack.c.l.b16 %v191
  %v858 = vunpack.c.l.b16 %v192
  %v859 = vunpack.c.l.b16 %v193
  %v860 = vunpack.c.l.b16 %v194
  %v861 = vunpack.c.l.b16 %v195
  %v862 = vunpack.c.l.b16 %v196
  %v863 = vunpack.c.l.b16 %v197
  %v864 = vunpack.c.l.b16 %v198
  %v865 = vunpack.c.l.b16 %v199
  %v866 = vunpack.c.l.b16 %v200
  %v867 = vunpack.c.l.b16 %v201
  %v868 = vunpack.c.l.b16 %v202
  %v869 = vunpack.c.l.b16 %v203
  %v870 = vunpack.c.l.b16 %v204
  %v871 = vunpack.c.l.b16 %v205
  %v872 = vunpack.c.l.b16 %v206
  %v873 = vunpack.c.l.b16 %v207
  %v874 = vunpack.c.l.b16 %v208
  %v875 = vunpack.c.l.b16 %v209
  %v876 = vunpack.c.l.b16 %v210
  %v877 = vunpack.c.l.b16 %v211
  %v878 = vunpack.c.l.b16 %v212
  %v879 = vunpack.c.l.b16 %v213
  %v880 = vunpack.c.l.b16 %v214
  %v881 = vunpack.c.l.b16 %v215
  %v882 = vunpack.c.l.b16 %v216
  %v883 = vunpack.c.l.b16 %v217
  %v884 = vunpack.c.l.b16 %v218
  %v885 = vunpack.c.l.b16 %v219
  %v886 = vunpack.c.l.b16 %v220
  %v887 = vunpack.c.l.b16 %v221
  %v888 = vunpack.c.l.b16 %v222
  %v889 = vunpack.c.l.b16 %v223
  %v890 = vunpack.c.l.b16 %v224
  %v891 = vunpack.c.l.b16 %v225
  %v892 = vunpack.c.l.b16 %v226
  %v893 = vunpack.c.l.b16 %v227
  %v894 = vunpack.c.l.b16 %v228
  %v895 = vunpack.c.l.b16 %v229
  %v896 = vunpack.c.l.b16 %v230
  %v897 = vunpack.c.l.b16 %v231
  %v898 = vunpack.c.l.b16 %v232
  %v899 = vunpack.c.l.b16 %v233
  %v900 = vunpack.c.l.b16 %v234
  %v901 = vunpack.c.l.b16 %v235
  %v902 = vunpack.c.l.b16 %v236
  %v903 = vunpack.c.l.b16 %v237
  %v904 = vunpack.c.l.b16 %v238
  %v905 = vunpack.c.l.b16 %v239
  %v906 = vunpack.c.l.b16 %v240
  %v907 = vunpack.c.l.b16 %v241
  %v908 = vunpack.c.l.b16 %v242
  %v909 = vunpack.c.l.b16 %v243
  %v910 = vunpack.c.l.b16 %v244
  %v911 = vunpack.c.l.b16 %v245
  %v912 = vunpack.c.l.b16 %v246
  %v913 = vunpack.c.l.b16 %v247
  %v914 = vunpack.c.l.b16 %v248
  %v915 = vunpack.c.l.b16 %v249
  %v916 = vunpack.c.l.b16 %v250
  %v917 = vunpack.c.l.b16 %v251
  %v918 = vunpack.c.l.b16 %v252
  %v919 = vunpack.c.l.b16 %v253
  %v920 = vunpack.c.l.b16 %v254
  %v921 = vunpack.c.l.b16 %v255
  %v922 = vunpack.c.l.b16 %v256
  %v923 = vunpack.c.l.b16 %v257
  %v924 = vunpack.c.l.b16 %v258
  %v925 = vunpack.c.l.b16 %v259
  %v926 = vunpack.c.l.b16 %v260
  %v927 = vunpack.c.l.b16 %v261
  %v928 = vunpack.c.l.b16 %v262
  %v929 = vunpack.c.l.b16 %v263
  %v930 = vunpack.c.l.b16 %v264
  %v931 = vunpack.c.l.b16 %v265
  %v932 = vunpack.c.l.b16 %v266
  %v933 = vunpack.c.l.b16 %v267
  %v934 = vunpack.c.l.b16 %v268
  %v935 = vunpack.c.l.b16 %v269
  %v936 = vunpack.c.l.b16 %v270
  %v937 = vunpack.c.l.b16 %v271
  %v938 = vunpack.c.l.b16 %v272
  %v939 = vunpack.c.l.b16 %v273
  %v940 = vunpack.c.l.b16 %v274
  %v941 = vunpack.c.l.b16 %v275
  %v942 = vunpack.c.l.b16 %v276
  %v943 = vunpack.c.l.b16 %v277
  %v944 = vunpack.c.l.b16 %v278
  %v945 = vunpack.c.l.b16 %v279
  %v946 = vunpack.c.l.b16 %v280
  %v947 = vunpack.c.l.b16 %v281
  %v948 = vunpack.c.l.b16 %v282
  %v949 = vunpack.c.l.b16 %v283
  %v950 = vunpack.c.l.b16 %v284
  %v951 = vunpack.c.l.b16 %v285
  %v952 = vunpack.c.l.b16 %v286
  %v953 = vunpack.c.l.b16 %v287
  %v954 = vunpack.c.l.b16 %v288
  %v955 = vunpack.c.l.b16 %v289
  %v956 = vunpack.c.l.b16 %v290
  %v957 = vunpack.c.l.b16 %v291
  %v958 = vunpack.c.l.b16 %v292
  %v959 = vunpack.c.l.b16 %v293
  %v960 = vunpack.c.l.b16 %v294
  %v961 = vunpack.c.l.b16 %v295
  %v962 = vunpack.c.l.b16 %v296
  %v963 = vunpack.c.l.b16 %v297
  %v964 = vunpack.c.l.b16 %v298
  %v965 = vunpack.c.l.b16 %v299
  %v966 = vunpack.c.l.b16 %v300
  %v967 = vunpack.c.l.b16 %v301
  %v968 = vunpack.c.l.b16 %v302
  %v969 = vunpack.c.l.b16 %v303
  %v970 = vunpack.c.l.b16 %v304
  %v971 = vunpack.c.l.b16 %v305
  %v972 = vunpack.c.l.b16 %v306
  %v973 = vunpack.c.l.b16 %v307
  %v974 = vunpack.c.l.b16 %v308
  %v975 = vunpack.c.l.b16 %v309
  %v976 = vunpack.c.l.b16 %v310
  %v977 = vunpack.c.l.b16 %v311
  %v978 = vunpack.c.l.b16 %v312
  %v979 = vunpack.c.l.b16 %v313
  %v980 = vunpack.c.l.b16 %v314
  %v981 = vunpack.c.l.b16 %v315
  %v982 = vunpack.c.l.b16 %v316
  %v983 = vunpack.c.l.b16 %v317
  %v984 = vunpack.c.l.b16 %v318
  %v985 = vpack.c.b16 %v698, %v697
  %v986 = vpack.c.b16 %v700, %v699
  %v987 = vpack.c.b16 %v702, %v701
  %v988 = vpack.c.b16 %v704, %v703
  %v989 = vpack.c.b16 %v706, %v705
  %v990 = vpack.c.b16 %v708, %v707
  %v991 = vpack.c.b16 %v710, %v709
  %v992 = vpack.c.b16 %v712, %v711
  %v993 = vpack.c.b16 %v714, %v713
  %v994 = vpack.c.b16 %v716, %v715
  %v995 = vpack.c.b16 %v718, %v717
  %v996 = vpack.c.b16 %v720, %v719
  %v997 = vpack.c.b16 %v722, %v721
  %v998 = vpack.c.b16 %v724, %v723
  %v999 = vpack.c.b16 %v726, %v725
  %v1000 = vpack.c.b16 %v728, %v727
  %v1001 = vpack.c.b16 %v730, %v729
  %v1002 = vpack.c.b16 %v732, %v731
  %v1003 = vpack.c.b16 %v734, %v733
  %v1004 = vpack.c.b16 %v736, %v735
  %v1005 = vpack.c.b16 %v738, %v737
  %v1006 = vpack.c.b16 %v740, %v739
  %v1007 = vpack.c.b16 %v742, %v741
  %v1008 = vpack.c.b16 %v744, %v743
  %v1009 = vpack.c.b16 %v746, %v745
  %v1010 = vpack.c.b16 %v748, %v747
  %v1011 = vpack.c.b16 %v750, %v749
  %v1012 = vpack.c.b16 %v752, %v751
  %v1013 = vpack.c.b16 %v754, %v753
  %v1014 = vpack.c.b16 %v756, %v755
  %v1015 = vpack.c.b16 %v758, %v757
  %v1016 = vpack.c.b16 %v760, %v759
  %v1017 = vpack.c.b16 %v762, %v761
  %v1018 = vpack.c.b16 %v764, %v763
  %v1019 = vpack.c.b16 %v766, %v765
  %v1020 = vpack.c.b16 %v768, %v767
  %v1021 = vpack.c.b16 %v770, %v769
  %v1022 = vpack.c.b16 %v772, %v771
  %v1023 = vpack.c.b16 %v774, %v773
  %v1024 = vpack.c.b16 %v776, %v775
  %v1025 = vpack.c.b16 %v778, %v777
  %v1026 = vpack.c.b16 %v780, %v779
  %v1027 = vpack.c.b16 %v782, %v781
  %v1028 = vpack.c.b16 %v784, %v783
  %v1029 = vpack.c.b16 %v786, %v785
  %v1030 = vpack.c.b16 %v788, %v787
  %v1031 = vpack.c.b16 %v790, %v789
  %v1032 = vpack.c.b16 %v792, %v791
  %v1033 = vpack.c.b16 %v794, %v793
  %v1034 = vpack.c.b16 %v796, %v795
  %v1035 = vpack.c.b16 %v798, %v797
  %v1036 = vpack.c.b16 %v800, %v799
  %v1037 = vpack.c.b16 %v802, %v801
  %v1038 = vpack.c.b16 %v804, %v803
  %v1039 = vpack.c.b16 %v806, %v805
  %v1040 = vpack.c.b16 %v808, %v807
  %v1041 = vpack.c.b16 %v810, %v809
  %v1042 = vpack.c.b16 %v812, %v811
  %v1043 = vpack.c.b16 %v814, %v813
  %v1044 = vpack.c.b16 %v816, %v815
  %v1045 = vpack.c.b16 %v818, %v817
  %v1046 = vpack.c.b16 %v820, %v819
  %v1047 = vpack.c.b16 %v822, %v821
  %v1048 = vpack.c.b16 %v824, %v823
  %v1049 = vpack.c.b16 %v826, %v825
  %v1050 = vpack.c.b16 %v828, %v827
  %v1051 = vpack.c.b16 %v830, %v829
  %v1052 = vpack.c.b16 %v832, %v831
  %v1053 = vpack.c.b16 %v834, %v833
  %v1054 = vpack.c.b16 %v836, %v835
  %v1055 = vpack.c.b16 %v838, %v837
  %v1056 = vpack.c.b16 %v840, %v839
  %v1057 = vpack.c.b16 %v842, %v841
  %v1058 = vpack.c.b16 %v844, %v843
  %v1059 = vpack.c.b16 %v846, %v845
  %v1060 = vpack.c.b16 %v848, %v847
  %v1061 = vpack.c.b16 %v850, %v849
  %v1062 = vpack.c.b16 %v852, %v851
  %v1063 = vpack.c.b16 %v854, %v853
  %v1064 = vpack.c.b16 %v856, %v855
  %v1065 = vpack.c.b16 %v858, %v857
  %v1066 = vpack.c.b16 %v860, %v859
  %v1067 = vpack.c.b16 %v862, %v861
  %v1068 = vpack.c.b16 %v864, %v863
  %v1069 = vpack.c.b16 %v866, %v865
  %v1070 = vpack.c.b16 %v868, %v867
  %v1071 = vpack.c.b16 %v870, %v869
  %v1072 = vpack.c.b16 %v872, %v871
  %v1073 = vpack.c.b16 %v874, %v873
  %v1074 = vpack.c.b16 %v876, %v875
  %v1075 = vpack.c.b16 %v878, %v877
  %v1076 = vpack.c.b16 %v880, %v879
  %v1077 = vpack.c.b16 %v882, %v881
  %v1078 = vpack.c.b16 %v884, %v883
  %v1079 = vpack.c.b16 %v886, %v885
  %v1080 = vpack.c.b16 %v888, %v887
  %v1081 = vpack.c.b16 %v890, %v889
  %v1082 = vpack.c.b16 %v892, %v891
  %v1083 = vpack.c.b16 %v894, %v893
  %v1084 = vpack.c.b16 %v896, %v895
  %v1085 = vpack.c.b16 %v898, %v897
  %v1086 = vpack.c.b16 %v900, %v899
  %v1087 = vpack.c.b16 %v902, %v901
  %v1088 = vpack.c.b16 %v904, %v903
  %v1089 = vpack.c.b16 %v906, %v905
  %v1090 = vpack.c.b16 %v908, %v907
  %v1091 = vpack.c.b16 %v910, %v909
  %v1092 = vpack.c.b16 %v912, %v911
  %v1093 = vpack.c.b16 %v914, %v913
  %v1094 = vpack.c.b16 %v916, %v915
  %v1095 = vpack.c.b16 %v918, %v917
  %v1096 = vpack.c.b16 %v920, %v919
  %v1097 = vpack.c.b16 %v922, %v921
  %v1098 = vpack.c.b16 %v924, %v923
  %v1099 = vpack.c.b16 %v926, %v925
  %v1100 = vpack.c.b16 %v928, %v927
  %v1101 = vpack.c.b16 %v930, %v929
  %v1102 = vpack.c.b16 %v932, %v931
  %v1103 = vpack.c.b16 %v934, %v933
  %v1104 = vpack.c.b16 %v936, %v935
  %v1105 = vpack.c.b16 %v938, %v937
  %v1106 = vpack.c.b16 %v940, %v939
  %v1107 = vpack.c.b16 %v942, %v941
  %v1108 = vpack.c.b16 %v944, %v943
  %v1109 = vpack.c.b16 %v946, %v945
  %v1110 = vpack.c.b16 %v948, %v947
  %v1111 = vpack.c.b16 %v950, %v949
  %v1112 = vpack.c.b16 %v952, %v951
  %v1113 = vpack.c.b16 %v954, %v953
  %v1114 = vpack.c.b16 %v956, %v955
  %v1115 = vpack.c.b16 %v958, %v957
  %v1116 = vpack.c.b16 %v960, %v959
  %v1117 = vpack.c.b16 %v962, %v961
  %v1118 = vpack.c.b16 %v964, %v963
  %v1119 = vpack.c.b16 %v966, %v965
  %v1120 = vpack.c.b16 %v968, %v967
  %v1121 = vpack.c.b16 %v970, %v969
  %v1122 = vpack.c.b16 %v972, %v971
  %v1123 = vpack.c.b16 %v974, %v973
  %v1124 = vpack.c.b16 %v976, %v975
  %v1125 = vpack.c.b16 %v978, %v977
  %v1126 = vpack.c.b16 %v980, %v979
  %v1127 = vpack.c.b16 %v982, %v981
  %v1128 = vpack.c.b16 %v984, %v983
  %1273 = vmatpush.bf16.msra.mxu0 %v992
  %1274 = vmatpush.bf16.msra.mxu0 %v991
  %1275 = vmatpush.bf16.msra.mxu0 %v990
  %1276 = vmatpush.bf16.msra.mxu0 %v989
  %1277 = vmatpush.bf16.msra.mxu0 %v988
  %1278 = vmatpush.bf16.msra.mxu0 %v987
  %1279 = vmatpush.bf16.msra.mxu0 %v986
  %1280 = vmatpush.bf16.msra.mxu0 %v985
  %1281 = vmatmul.bf16.gmra.mxu0 %v373
  %v1282 = vpop.f32.mrf.mxu0
  %v1283 = vadd.f32 0.0, %v1282
  %v1284 = vpop.f32.mrf.mxu0
  %v1285 = vadd.f32 0.0, %v1284
  %1286 = vdwg.mxu0
  %1287 = vmatpush.bf16.msra.mxu0 %v1000
  %1288 = vmatpush.bf16.msra.mxu0 %v999
  %1289 = vmatpush.bf16.msra.mxu0 %v998
  %1290 = vmatpush.bf16.msra.mxu0 %v997
  %1291 = vmatpush.bf16.msra.mxu0 %v996
  %1292 = vmatpush.bf16.msra.mxu0 %v995
  %1293 = vmatpush.bf16.msra.mxu0 %v994
  %1294 = vmatpush.bf16.msra.mxu0 %v993
  %1295 = vmatmul.bf16.gmra.mxu0 %v374
  %v1296 = vpop.f32.mrf.mxu0
  %v1297 = vadd.f32 %v1283, %v1296
  %v1298 = vpop.f32.mrf.mxu0
  %v1299 = vadd.f32 %v1285, %v1298
  %1300 = vdwg.mxu0
  %1301 = vmatpush.bf16.msra.mxu0 %v1008
  %1302 = vmatpush.bf16.msra.mxu0 %v1007
  %1303 = vmatpush.bf16.msra.mxu0 %v1006
  %1304 = vmatpush.bf16.msra.mxu0 %v1005
  %1305 = vmatpush.bf16.msra.mxu0 %v1004
  %1306 = vmatpush.bf16.msra.mxu0 %v1003
  %1307 = vmatpush.bf16.msra.mxu0 %v1002
  %1308 = vmatpush.bf16.msra.mxu0 %v1001
  %1309 = vmatmul.bf16.gmra.mxu0 %v375
  %v1310 = vpop.f32.mrf.mxu0
  %v1311 = vadd.f32 %v1297, %v1310
  %v1312 = vpop.f32.mrf.mxu0
  %v1313 = vadd.f32 %v1299, %v1312
  %1314 = vdwg.mxu0
  %1315 = vmatpush.bf16.msra.mxu0 %v1016
  %1316 = vmatpush.bf16.msra.mxu0 %v1015
  %1317 = vmatpush.bf16.msra.mxu0 %v1014
  %1318 = vmatpush.bf16.msra.mxu0 %v1013
  %1319 = vmatpush.bf16.msra.mxu0 %v1012
  %1320 = vmatpush.bf16.msra.mxu0 %v1011
  %1321 = vmatpush.bf16.msra.mxu0 %v1010
  %1322 = vmatpush.bf16.msra.mxu0 %v1009
  %1323 = vmatmul.bf16.gmra.mxu0 %v376
  %v1324 = vpop.f32.mrf.mxu0
  %v1325 = vadd.f32 %v1311, %v1324
  %v1326 = vpop.f32.mrf.mxu0
  %v1327 = vadd.f32 %v1313, %v1326
  %1328 = vdwg.mxu0
  %1329 = vmatpush.bf16.msra.mxu0 %v1024
  %1330 = vmatpush.bf16.msra.mxu0 %v1023
  %1331 = vmatpush.bf16.msra.mxu0 %v1022
  %1332 = vmatpush.bf16.msra.mxu0 %v1021
  %1333 = vmatpush.bf16.msra.mxu0 %v1020
  %1334 = vmatpush.bf16.msra.mxu0 %v1019
  %1335 = vmatpush.bf16.msra.mxu0 %v1018
  %1336 = vmatpush.bf16.msra.mxu0 %v1017
  %1337 = vmatmul.bf16.gmra.mxu0 %v377
  %v1338 = vpop.f32.mrf.mxu0
  %v1339 = vadd.f32 %v1325, %v1338
  %v1340 = vpop.f32.mrf.mxu0
  %v1341 = vadd.f32 %v1327, %v1340
  %1342 = vdwg.mxu0
  %1343 = vmatpush.bf16.msra.mxu0 %v1032
  %1344 = vmatpush.bf16.msra.mxu0 %v1031
  %1345 = vmatpush.bf16.msra.mxu0 %v1030
  %1346 = vmatpush.bf16.msra.mxu0 %v1029
  %1347 = vmatpush.bf16.msra.mxu0 %v1028
  %1348 = vmatpush.bf16.msra.mxu0 %v1027
  %1349 = vmatpush.bf16.msra.mxu0 %v1026
  %1350 = vmatpush.bf16.msra.mxu0 %v1025
  %1351 = vmatmul.bf16.gmra.mxu0 %v378
  %v1352 = vpop.f32.mrf.mxu0
  %v1353 = vadd.f32 %v1339, %v1352
  %v1354 = vpop.f32.mrf.mxu0
  %v1355 = vadd.f32 %v1341, %v1354
  %1356 = vdwg.mxu0
  %1357 = vmatpush.bf16.msra.mxu0 %v1040
  %1358 = vmatpush.bf16.msra.mxu0 %v1039
  %1359 = vmatpush.bf16.msra.mxu0 %v1038
  %1360 = vmatpush.bf16.msra.mxu0 %v1037
  %1361 = vmatpush.bf16.msra.mxu0 %v1036
  %1362 = vmatpush.bf16.msra.mxu0 %v1035
  %1363 = vmatpush.bf16.msra.mxu0 %v1034
  %1364 = vmatpush.bf16.msra.mxu0 %v1033
  %1365 = vmatmul.bf16.gmra.mxu0 %v379
  %v1366 = vpop.f32.mrf.mxu0
  %v1367 = vadd.f32 %v1353, %v1366
  %v1368 = vpop.f32.mrf.mxu0
  %v1369 = vadd.f32 %v1355, %v1368
  %1370 = vdwg.mxu0
  %1371 = vmatpush.bf16.msra.mxu0 %v1048
  %1372 = vmatpush.bf16.msra.mxu0 %v1047
  %1373 = vmatpush.bf16.msra.mxu0 %v1046
  %1374 = vmatpush.bf16.msra.mxu0 %v1045
  %1375 = vmatpush.bf16.msra.mxu0 %v1044
  %1376 = vmatpush.bf16.msra.mxu0 %v1043
  %1377 = vmatpush.bf16.msra.mxu0 %v1042
  %1378 = vmatpush.bf16.msra.mxu0 %v1041
  %1379 = vmatmul.bf16.gmra.mxu0 %v380
  %v1380 = vpop.f32.mrf.mxu0
  %v1381 = vadd.f32 %v1367, %v1380
  %v1382 = vpop.f32.mrf.mxu0
  %v1383 = vadd.f32 %v1369, %v1382
  %1384 = vdwg.mxu0
  %1385 = vmatpush.bf16.msra.mxu0 %v1056
  %1386 = vmatpush.bf16.msra.mxu0 %v1055
  %1387 = vmatpush.bf16.msra.mxu0 %v1054
  %1388 = vmatpush.bf16.msra.mxu0 %v1053
  %1389 = vmatpush.bf16.msra.mxu0 %v1052
  %1390 = vmatpush.bf16.msra.mxu0 %v1051
  %1391 = vmatpush.bf16.msra.mxu0 %v1050
  %1392 = vmatpush.bf16.msra.mxu0 %v1049
  %1393 = vmatmul.bf16.gmra.mxu0 %v381
  %v1394 = vpop.f32.mrf.mxu0
  %v1395 = vadd.f32 %v1381, %v1394
  %v1396 = vpop.f32.mrf.mxu0
  %v1397 = vadd.f32 %v1383, %v1396
  %1398 = vdwg.mxu0
  %1399 = vmatpush.bf16.msra.mxu0 %v1064
  %1400 = vmatpush.bf16.msra.mxu0 %v1063
  %1401 = vmatpush.bf16.msra.mxu0 %v1062
  %1402 = vmatpush.bf16.msra.mxu0 %v1061
  %1403 = vmatpush.bf16.msra.mxu0 %v1060
  %1404 = vmatpush.bf16.msra.mxu0 %v1059
  %1405 = vmatpush.bf16.msra.mxu0 %v1058
  %1406 = vmatpush.bf16.msra.mxu0 %v1057
  %1407 = vmatmul.bf16.gmra.mxu0 %v382
  %v1408 = vpop.f32.mrf.mxu0
  %v1409 = vadd.f32 %v1395, %v1408
  %v1410 = vpop.f32.mrf.mxu0
  %v1411 = vadd.f32 %v1397, %v1410
  %1412 = vdwg.mxu0
  %1413 = vmatpush.bf16.msra.mxu0 %v1072
  %1414 = vmatpush.bf16.msra.mxu0 %v1071
  %1415 = vmatpush.bf16.msra.mxu0 %v1070
  %1416 = vmatpush.bf16.msra.mxu0 %v1069
  %1417 = vmatpush.bf16.msra.mxu0 %v1068
  %1418 = vmatpush.bf16.msra.mxu0 %v1067
  %1419 = vmatpush.bf16.msra.mxu0 %v1066
  %1420 = vmatpush.bf16.msra.mxu0 %v1065
  %1421 = vmatmul.bf16.gmra.mxu0 %v383
  %v1422 = vpop.f32.mrf.mxu0
  %v1423 = vadd.f32 %v1409, %v1422
  %v1424 = vpop.f32.mrf.mxu0
  %v1425 = vadd.f32 %v1411, %v1424
  %1426 = vdwg.mxu0
  %1427 = vmatpush.bf16.msra.mxu0 %v1080
  %1428 = vmatpush.bf16.msra.mxu0 %v1079
  %1429 = vmatpush.bf16.msra.mxu0 %v1078
  %1430 = vmatpush.bf16.msra.mxu0 %v1077
  %1431 = vmatpush.bf16.msra.mxu0 %v1076
  %1432 = vmatpush.bf16.msra.mxu0 %v1075
  %1433 = vmatpush.bf16.msra.mxu0 %v1074
  %1434 = vmatpush.bf16.msra.mxu0 %v1073
  %1435 = vmatmul.bf16.gmra.mxu0 %v384
  %v1436 = vpop.f32.mrf.mxu0
  %v1437 = vadd.f32 %v1423, %v1436
  %v1438 = vpop.f32.mrf.mxu0
  %v1439 = vadd.f32 %v1425, %v1438
  %1440 = vdwg.mxu0
  %1441 = vmatpush.bf16.msra.mxu0 %v1088
  %1442 = vmatpush.bf16.msra.mxu0 %v1087
  %1443 = vmatpush.bf16.msra.mxu0 %v1086
  %1444 = vmatpush.bf16.msra.mxu0 %v1085
  %1445 = vmatpush.bf16.msra.mxu0 %v1084
  %1446 = vmatpush.bf16.msra.mxu0 %v1083
  %1447 = vmatpush.bf16.msra.mxu0 %v1082
  %1448 = vmatpush.bf16.msra.mxu0 %v1081
  %1449 = vmatmul.bf16.gmra.mxu0 %v385
  %v1450 = vpop.f32.mrf.mxu0
  %v1451 = vadd.f32 %v1437, %v1450
  %v1452 = vpop.f32.mrf.mxu0
  %v1453 = vadd.f32 %v1439, %v1452
  %1454 = vdwg.mxu0
  %1455 = vmatpush.bf16.msra.mxu0 %v1096
  %1456 = vmatpush.bf16.msra.mxu0 %v1095
  %1457 = vmatpush.bf16.msra.mxu0 %v1094
  %1458 = vmatpush.bf16.msra.mxu0 %v1093
  %1459 = vmatpush.bf16.msra.mxu0 %v1092
  %1460 = vmatpush.bf16.msra.mxu0 %v1091
  %1461 = vmatpush.bf16.msra.mxu0 %v1090
  %1462 = vmatpush.bf16.msra.mxu0 %v1089
  %1463 = vmatmul.bf16.gmra.mxu0 %v386
  %v1464 = vpop.f32.mrf.mxu0
  %v1465 = vadd.f32 %v1451, %v1464
  %v1466 = vpop.f32.mrf.mxu0
  %v1467 = vadd.f32 %v1453, %v1466
  %1468 = vdwg.mxu0
  %1469 = vmatpush.bf16.msra.mxu0 %v1104
  %1470 = vmatpush.bf16.msra.mxu0 %v1103
  %1471 = vmatpush.bf16.msra.mxu0 %v1102
  %1472 = vmatpush.bf16.msra.mxu0 %v1101
  %1473 = vmatpush.bf16.msra.mxu0 %v1100
  %1474 = vmatpush.bf16.msra.mxu0 %v1099
  %1475 = vmatpush.bf16.msra.mxu0 %v1098
  %1476 = vmatpush.bf16.msra.mxu0 %v1097
  %1477 = vmatmul.bf16.gmra.mxu0 %v387
  %v1478 = vpop.f32.mrf.mxu0
  %v1479 = vadd.f32 %v1465, %v1478
  %v1480 = vpop.f32.mrf.mxu0
  %v1481 = vadd.f32 %v1467, %v1480
  %1482 = vdwg.mxu0
  %1483 = vmatpush.bf16.msra.mxu0 %v1112
  %1484 = vmatpush.bf16.msra.mxu0 %v1111
  %1485 = vmatpush.bf16.msra.mxu0 %v1110
  %1486 = vmatpush.bf16.msra.mxu0 %v1109
  %1487 = vmatpush.bf16.msra.mxu0 %v1108
  %1488 = vmatpush.bf16.msra.mxu0 %v1107
  %1489 = vmatpush.bf16.msra.mxu0 %v1106
  %1490 = vmatpush.bf16.msra.mxu0 %v1105
  %1491 = vmatmul.bf16.gmra.mxu0 %v388
  %v1492 = vpop.f32.mrf.mxu0
  %v1493 = vadd.f32 %v1479, %v1492
  %v1494 = vpop.f32.mrf.mxu0
  %v1495 = vadd.f32 %v1481, %v1494
  %1496 = vdwg.mxu0
  %1497 = vmatpush.bf16.msra.mxu0 %v1120
  %1498 = vmatpush.bf16.msra.mxu0 %v1119
  %1499 = vmatpush.bf16.msra.mxu0 %v1118
  %1500 = vmatpush.bf16.msra.mxu0 %v1117
  %1501 = vmatpush.bf16.msra.mxu0 %v1116
  %1502 = vmatpush.bf16.msra.mxu0 %v1115
  %1503 = vmatpush.bf16.msra.mxu0 %v1114
  %1504 = vmatpush.bf16.msra.mxu0 %v1113
  %1505 = vmatmul.bf16.gmra.mxu0 %v389
  %v1506 = vpop.f32.mrf.mxu0
  %v1507 = vadd.f32 %v1493, %v1506
  %v1508 = vpop.f32.mrf.mxu0
  %v1509 = vadd.f32 %v1495, %v1508
  %1510 = vdwg.mxu0
  %1511 = vmatpush.bf16.msra.mxu0 %v1128
  %1512 = vmatpush.bf16.msra.mxu0 %v1127
  %1513 = vmatpush.bf16.msra.mxu0 %v1126
  %1514 = vmatpush.bf16.msra.mxu0 %v1125
  %1515 = vmatpush.bf16.msra.mxu0 %v1124
  %1516 = vmatpush.bf16.msra.mxu0 %v1123
  %1517 = vmatpush.bf16.msra.mxu0 %v1122
  %1518 = vmatpush.bf16.msra.mxu0 %v1121
  %1519 = vmatmul.bf16.gmra.mxu0 %v390
  %v1520 = vpop.f32.mrf.mxu0
  %v1521 = vadd.f32 %v1507, %v1520
  %v1522 = vpop.f32.mrf.mxu0
  %v1523 = vadd.f32 %v1509, %v1522
  %1524 = vdwg.mxu0
  %1525 = vst [vmem:[%s2] sm:$0xff] %v1521
  %1526 = vst [vmem:[%s2 + $0x8] sm:$0xff] %v1523
  %v1527 = vadd.f32 %v1521, %v1523
  %v1528 = vrot.slane %v1527, 4
  %v1529 = vadd.f32 %v1527, %v1528
  %v1530 = vrot.slane %v1529, 2
  %v1531 = vadd.f32 %v1529, %v1530
  %v1532 = vrot.slane %v1531, 1
  %v1533 = vadd.f32 %v1531, %v1532
  %v1534 = vmul.f32 %v1521, %v1521
  %v1535 = vmul.f32 %v1523, %v1523
  %v1536 = vadd.f32 %v1534, %v1535
  %v1537 = vrot.slane %v1536, 4
  %v1538 = vadd.f32 %v1536, %v1537
  %v1539 = vrot.slane %v1538, 2
  %v1540 = vadd.f32 %v1538, %v1539
  %v1541 = vrot.slane %v1540, 1
  %v1542 = vadd.f32 %v1540, %v1541
  %vm1543 = vcmask 1040384
  %v1544 = vsel %vm1543, %v1533, %v1542
  %1545 = vst [vmem:[%s3] sm:$0x3] %v1544
  // Predicated region
  $region10: #{encoder_forward.61} parent=0 // pred_check
    _
  $region11: #{encoder_forward.61} parent=0 // pred_check_branch
    %1547 = sbr.rel (0) target = $region13
  $region12: #{encoder_forward.61} parent=0 // pred_region
    _
  $region13: #{encoder_forward.61} parent=0 // pred_fallthru
    _
  // Predicated region
  $region14: #{encoder_forward.61} parent=0 // pred_check
    _
  $region15: #{encoder_forward.61} parent=0 // pred_check_branch
    %1549 = sbr.rel (0) target = $region17
  $region16: #{encoder_forward.61} parent=0 // pred_region
    _
  $region17: #{encoder_forward.61} parent=0 // pred_fallthru
    _
  // Predicated region
  $region18: #{encoder_forward.61} parent=0 // pred_check
    _
  $region19: #{encoder_forward.61} parent=0 // pred_check_branch
    %1551 = sbr.rel (0) target = $region21
  $region20: #{encoder_forward.61} parent=0 // pred_region
    _
  $region21: #{encoder_forward.61} parent=0 // pred_fallthru
    _
  // Predicated region
  $region22: #{encoder_forward.61} parent=0 // pred_check
    _
  $region23: #{encoder_forward.61} parent=0 // pred_check_branch
    %1553 = sbr.rel (0) target = $region25
  $region24: #{encoder_forward.61} parent=0 // pred_region
    _
  $region25: #{encoder_forward.61} parent=0 // pred_fallthru
    _

// kernel: encoder_forward.63
$region0: #{encoder_forward.63}
  #allocation0 [shape = 'u32[]', space=smem, size = 0x4, offset = 0x4, fixed_abs, tag = 'smem constant byte address 0x4 - core index']
  #allocation1 [shape = 'u32[72,128]{1,0:T(1,128)}', space=vmem, size = 0x9000, scoped, tag = 'internal scratch']
  %s0 = inlined_call_operand.vmem [shape: bf16[16,1152], index: 0, kind: input, shape index: {}]
  %s1 = inlined_call_operand.vmem [shape: bf16[1152,128], index: 1, kind: input, shape index: {}]
  %s2 = inlined_call_operand.vmem [shape: f32[16,128], index: 2, kind: output, shape index: {0}]
  %s3 = inlined_call_operand.vmem [shape: f32[1,2,128], index: 3, kind: output, shape index: {1}]
  %4 = xla_tuple %s2, %s3
  %s5 = sld [smem:[#allocation0]]
  $region26: #{encoder_forward.63} parent=0
    _
  %s7 = ssub.s32 1, %s5
  %s8 = scalar_select 0, %s7, %s5
  // Predicated region
  $region2: #{encoder_forward.63} parent=0 // pred_check
    _
  $region3: #{encoder_forward.63} parent=0 // pred_check_branch
    %10 = sbr.rel (0) target = $region5
  $region4: #{encoder_forward.63} parent=0 // pred_region
    _
  $region5: #{encoder_forward.63} parent=0 // pred_fallthru
    _
  // Predicated region
  $region6: #{encoder_forward.63} parent=0 // pred_check
    _
  $region7: #{encoder_forward.63} parent=0 // pred_check_branch
    %12 = sbr.rel (0) target = $region9
  $region8: #{encoder_forward.63} parent=0 // pred_region
    _
  $region9: #{encoder_forward.63} parent=0 // pred_fallthru
    _
  %v13 = vld [vmem:[%s0] sm:$0xff]
  %v14 = vld [vmem:[%s0 + $0x8] sm:$0xff]
  %v15 = vld [vmem:[%s0 + $0x10] sm:$0xff]
  %v16 = vld [vmem:[%s0 + $0x18] sm:$0xff]
  %v17 = vld [vmem:[%s0 + $0x20] sm:$0xf]
  %v18 = vld [vmem:[%s0 + $0x24] sm:$0xff]
  %v19 = vld [vmem:[%s0 + $0x2c] sm:$0xff]
  %v20 = vld [vmem:[%s0 + $0x34] sm:$0xff]
  %v21 = vld [vmem:[%s0 + $0x3c] sm:$0xff]
  %v22 = vld [vmem:[%s0 + $0x44] sm:$0xf]
  %v23 = vld [vmem:[%s1] sm:$0xf]
  %v24 = vld [vmem:[%s1 + $0x4] sm:$0xf]
  %v25 = vld [vmem:[%s1 + $0x8] sm:$0xf]
  %v26 = vld [vmem:[%s1 + $0xc] sm:$0xf]
  %v27 = vld [vmem:[%s1 + $0x10] sm:$0xf]
  %v28 = vld [vmem:[%s1 + $0x14] sm:$0xf]
  %v29 = vld [vmem:[%s1 + $0x18] sm:$0xf]
  %v30 = vld [vmem:[%s1 + $0x1c] sm:$0xf]
  %v31 = vld [vmem:[%s1 + $0x20] sm:$0xf]
  %v32 = vld [vmem:[%s1 + $0x24] sm:$0xf]
  %v33 = vld [vmem:[%s1 + $0x28] sm:$0xf]
  %v34 = vld [vmem:[%s1 + $0x2c] sm:$0xf]
  %v35 = vld [vmem:[%s1 + $0x30] sm:$0xf]
  %v36 = vld [vmem:[%s1 + $0x34] sm:$0xf]
  %v37 = vld [vmem:[%s1 + $0x38] sm:$0xf]
  %v38 = vld [vmem:[%s1 + $0x3c] sm:$0xf]
  %v39 = vld [vmem:[%s1 + $0x40] sm:$0xf]
  %v40 = vld [vmem:[%s1 + $0x44] sm:$0xf]
  %v41 = vld [vmem:[%s1 + $0x48] sm:$0xf]
  %v42 = vld [vmem:[%s1 + $0x4c] sm:$0xf]
  %v43 = vld [vmem:[%s1 + $0x50] sm:$0xf]
  %v44 = vld [vmem:[%s1 + $0x54] sm:$0xf]
  %v45 = vld [vmem:[%s1 + $0x58] sm:$0xf]
  %v46 = vld [vmem:[%s1 + $0x5c] sm:$0xf]
  %v47 = vld [vmem:[%s1 + $0x60] sm:$0xf]
  %v48 = vld [vmem:[%s1 + $0x64] sm:$0xf]
  %v49 = vld [vmem:[%s1 + $0x68] sm:$0xf]
  %v50 = vld [vmem:[%s1 + $0x6c] sm:$0xf]
  %v51 = vld [vmem:[%s1 + $0x70] sm:$0xf]
  %v52 = vld [vmem:[%s1 + $0x74] sm:$0xf]
  %v53 = vld [vmem:[%s1 + $0x78] sm:$0xf]
  %v54 = vld [vmem:[%s1 + $0x7c] sm:$0xf]
  %v55 = vld [vmem:[%s1 + $0x80] sm:$0xf]
  %v56 = vld [vmem:[%s1 + $0x84] sm:$0xf]
  %v57 = vld [vmem:[%s1 + $0x88] sm:$0xf]
  %v58 = vld [vmem:[%s1 + $0x8c] sm:$0xf]
  %v59 = vld [vmem:[%s1 + $0x90] sm:$0xf]
  %v60 = vld [vmem:[%s1 + $0x94] sm:$0xf]
  %v61 = vld [vmem:[%s1 + $0x98] sm:$0xf]
  %v62 = vld [vmem:[%s1 + $0x9c] sm:$0xf]
  %v63 = vld [vmem:[%s1 + $0xa0] sm:$0xf]
  %v64 = vld [vmem:[%s1 + $0xa4] sm:$0xf]
  %v65 = vld [vmem:[%s1 + $0xa8] sm:$0xf]
  %v66 = vld [vmem:[%s1 + $0xac] sm:$0xf]
  %v67 = vld [vmem:[%s1 + $0xb0] sm:$0xf]
  %v68 = vld [vmem:[%s1 + $0xb4] sm:$0xf]
  %v69 = vld [vmem:[%s1 + $0xb8] sm:$0xf]
  %v70 = vld [vmem:[%s1 + $0xbc] sm:$0xf]
  %v71 = vld [vmem:[%s1 + $0xc0] sm:$0xf]
  %v72 = vld [vmem:[%s1 + $0xc4] sm:$0xf]
  %v73 = vld [vmem:[%s1 + $0xc8] sm:$0xf]
  %v74 = vld [vmem:[%s1 + $0xcc] sm:$0xf]
  %v75 = vld [vmem:[%s1 + $0xd0] sm:$0xf]
  %v76 = vld [vmem:[%s1 + $0xd4] sm:$0xf]
  %v77 = vld [vmem:[%s1 + $0xd8] sm:$0xf]
  %v78 = vld [vmem:[%s1 + $0xdc] sm:$0xf]
  %v79 = vld [vmem:[%s1 + $0xe0] sm:$0xf]
  %v80 = vld [vmem:[%s1 + $0xe4] sm:$0xf]
  %v81 = vld [vmem:[%s1 + $0xe8] sm:$0xf]
  %v82 = vld [vmem:[%s1 + $0xec] sm:$0xf]
  %v83 = vld [vmem:[%s1 + $0xf0] sm:$0xf]
  %v84 = vld [vmem:[%s1 + $0xf4] sm:$0xf]
  %v85 = vld [vmem:[%s1 + $0xf8] sm:$0xf]
  %v86 = vld [vmem:[%s1 + $0xfc] sm:$0xf]
  %v87 = vld [vmem:[%s1 + $0x100] sm:$0xf]
  %v88 = vld [vmem:[%s1 + $0x104] sm:$0xf]
  %v89 = vld [vmem:[%s1 + $0x108] sm:$0xf]
  %v90 = vld [vmem:[%s1 + $0x10c] sm:$0xf]
  %v91 = vld [vmem:[%s1 + $0x110] sm:$0xf]
  %v92 = vld [vmem:[%s1 + $0x114] sm:$0xf]
  %v93 = vld [vmem:[%s1 + $0x118] sm:$0xf]
  %v94 = vld [vmem:[%s1 + $0x11c] sm:$0xf]
  %v95 = vld [vmem:[%s1 + $0x120] sm:$0xf]
  %v96 = vld [vmem:[%s1 + $0x124] sm:$0xf]
  %v97 = vld [vmem:[%s1 + $0x128] sm:$0xf]
  %v98 = vld [vmem:[%s1 + $0x12c] sm:$0xf]
  %v99 = vld [vmem:[%s1 + $0x130] sm:$0xf]
  %v100 = vld [vmem:[%s1 + $0x134] sm:$0xf]
  %v101 = vld [vmem:[%s1 + $0x138] sm:$0xf]
  %v102 = vld [vmem:[%s1 + $0x13c] sm:$0xf]
  %v103 = vld [vmem:[%s1 + $0x140] sm:$0xf]
  %v104 = vld [vmem:[%s1 + $0x144] sm:$0xf]
  %v105 = vld [vmem:[%s1 + $0x148] sm:$0xf]
  %v106 = vld [vmem:[%s1 + $0x14c] sm:$0xf]
  %v107 = vld [vmem:[%s1 + $0x150] sm:$0xf]
  %v108 = vld [vmem:[%s1 + $0x154] sm:$0xf]
  %v109 = vld [vmem:[%s1 + $0x158] sm:$0xf]
  %v110 = vld [vmem:[%s1 + $0x15c] sm:$0xf]
  %v111 = vld [vmem:[%s1 + $0x160] sm:$0xf]
  %v112 = vld [vmem:[%s1 + $0x164] sm:$0xf]
  %v113 = vld [vmem:[%s1 + $0x168] sm:$0xf]
  %v114 = vld [vmem:[%s1 + $0x16c] sm:$0xf]
  %v115 = vld [vmem:[%s1 + $0x170] sm:$0xf]
  %v116 = vld [vmem:[%s1 + $0x174] sm:$0xf]
  %v117 = vld [vmem:[%s1 + $0x178] sm:$0xf]
  %v118 = vld [vmem:[%s1 + $0x17c] sm:$0xf]
  %v119 = vld [vmem:[%s1 + $0x180] sm:$0xf]
  %v120 = vld [vmem:[%s1 + $0x184] sm:$0xf]
  %v121 = vld [vmem:[%s1 + $0x188] sm:$0xf]
  %v122 = vld [vmem:[%s1 + $0x18c] sm:$0xf]
  %v123 = vld [vmem:[%s1 + $0x190] sm:$0xf]
  %v124 = vld [vmem:[%s1 + $0x194] sm:$0xf]
  %v125 = vld [vmem:[%s1 + $0x198] sm:$0xf]
  %v126 = vld [vmem:[%s1 + $0x19c] sm:$0xf]
  %v127 = vld [vmem:[%s1 + $0x1a0] sm:$0xf]
  %v128 = vld [vmem:[%s1 + $0x1a4] sm:$0xf]
  %v129 = vld [vmem:[%s1 + $0x1a8] sm:$0xf]
  %v130 = vld [vmem:[%s1 + $0x1ac] sm:$0xf]
  %v131 = vld [vmem:[%s1 + $0x1b0] sm:$0xf]
  %v132 = vld [vmem:[%s1 + $0x1b4] sm:$0xf]
  %v133 = vld [vmem:[%s1 + $0x1b8] sm:$0xf]
  %v134 = vld [vmem:[%s1 + $0x1bc] sm:$0xf]
  %v135 = vld [vmem:[%s1 + $0x1c0] sm:$0xf]
  %v136 = vld [vmem:[%s1 + $0x1c4] sm:$0xf]
  %v137 = vld [vmem:[%s1 + $0x1c8] sm:$0xf]
  %v138 = vld [vmem:[%s1 + $0x1cc] sm:$0xf]
  %v139 = vld [vmem:[%s1 + $0x1d0] sm:$0xf]
  %v140 = vld [vmem:[%s1 + $0x1d4] sm:$0xf]
  %v141 = vld [vmem:[%s1 + $0x1d8] sm:$0xf]
  %v142 = vld [vmem:[%s1 + $0x1dc] sm:$0xf]
  %v143 = vld [vmem:[%s1 + $0x1e0] sm:$0xf]
  %v144 = vld [vmem:[%s1 + $0x1e4] sm:$0xf]
  %v145 = vld [vmem:[%s1 + $0x1e8] sm:$0xf]
  %v146 = vld [vmem:[%s1 + $0x1ec] sm:$0xf]
  %v147 = vld [vmem:[%s1 + $0x1f0] sm:$0xf]
  %v148 = vld [vmem:[%s1 + $0x1f4] sm:$0xf]
  %v149 = vld [vmem:[%s1 + $0x1f8] sm:$0xf]
  %v150 = vld [vmem:[%s1 + $0x1fc] sm:$0xf]
  %v151 = vld [vmem:[%s1 + $0x200] sm:$0xf]
  %v152 = vld [vmem:[%s1 + $0x204] sm:$0xf]
  %v153 = vld [vmem:[%s1 + $0x208] sm:$0xf]
  %v154 = vld [vmem:[%s1 + $0x20c] sm:$0xf]
  %v155 = vld [vmem:[%s1 + $0x210] sm:$0xf]
  %v156 = vld [vmem:[%s1 + $0x214] sm:$0xf]
  %v157 = vld [vmem:[%s1 + $0x218] sm:$0xf]
  %v158 = vld [vmem:[%s1 + $0x21c] sm:$0xf]
  %v159 = vld [vmem:[%s1 + $0x220] sm:$0xf]
  %v160 = vld [vmem:[%s1 + $0x224] sm:$0xf]
  %v161 = vld [vmem:[%s1 + $0x228] sm:$0xf]
  %v162 = vld [vmem:[%s1 + $0x22c] sm:$0xf]
  %v163 = vld [vmem:[%s1 + $0x230] sm:$0xf]
  %v164 = vld [vmem:[%s1 + $0x234] sm:$0xf]
  %v165 = vld [vmem:[%s1 + $0x238] sm:$0xf]
  %v166 = vld [vmem:[%s1 + $0x23c] sm:$0xf]
  %v177 = vunpack.c.l.b16 %v13
  %v178 = vunpack.c.h.b16 %v13
  %v179 = vunpack.c.l.b16 %v14
  %v180 = vunpack.c.h.b16 %v14
  %v181 = vunpack.c.l.b16 %v15
  %v182 = vunpack.c.h.b16 %v15
  %v183 = vunpack.c.l.b16 %v16
  %v184 = vunpack.c.h.b16 %v16
  %v185 = vunpack.c.l.b16 %v17
  %v186 = vunpack.c.l.b16 %v18
  %v187 = vunpack.c.h.b16 %v18
  %v188 = vunpack.c.l.b16 %v19
  %v189 = vunpack.c.h.b16 %v19
  %v190 = vunpack.c.l.b16 %v20
  %v191 = vunpack.c.h.b16 %v20
  %v192 = vunpack.c.l.b16 %v21
  %v193 = vunpack.c.h.b16 %v21
  %v194 = vunpack.c.l.b16 %v22
  %v195 = vpack.c.b16 %v186, %v177
  %v196 = vpack.c.b16 %v187, %v178
  %v197 = vpack.c.b16 %v188, %v179
  %v198 = vpack.c.b16 %v189, %v180
  %v199 = vpack.c.b16 %v190, %v181
  %v200 = vpack.c.b16 %v191, %v182
  %v201 = vpack.c.b16 %v192, %v183
  %v202 = vpack.c.b16 %v193, %v184
  %v203 = vpack.c.b16 %v194, %v185
  %v357 = vunpack.c.l.b16 %v23
  %v358 = vunpack.c.l.b16 %v24
  %v359 = vunpack.c.l.b16 %v25
  %v360 = vunpack.c.l.b16 %v26
  %v361 = vunpack.c.l.b16 %v27
  %v362 = vunpack.c.l.b16 %v28
  %v363 = vunpack.c.l.b16 %v29
  %v364 = vunpack.c.l.b16 %v30
  %v365 = vunpack.c.l.b16 %v31
  %v366 = vunpack.c.l.b16 %v32
  %v367 = vunpack.c.l.b16 %v33
  %v368 = vunpack.c.l.b16 %v34
  %v369 = vunpack.c.l.b16 %v35
  %v370 = vunpack.c.l.b16 %v36
  %v371 = vunpack.c.l.b16 %v37
  %v372 = vunpack.c.l.b16 %v38
  %v373 = vunpack.c.l.b16 %v39
  %v374 = vunpack.c.l.b16 %v40
  %v375 = vunpack.c.l.b16 %v41
  %v376 = vunpack.c.l.b16 %v42
  %v377 = vunpack.c.l.b16 %v43
  %v378 = vunpack.c.l.b16 %v44
  %v379 = vunpack.c.l.b16 %v45
  %v380 = vunpack.c.l.b16 %v46
  %v381 = vunpack.c.l.b16 %v47
  %v382 = vunpack.c.l.b16 %v48
  %v383 = vunpack.c.l.b16 %v49
  %v384 = vunpack.c.l.b16 %v50
  %v385 = vunpack.c.l.b16 %v51
  %v386 = vunpack.c.l.b16 %v52
  %v387 = vunpack.c.l.b16 %v53
  %v388 = vunpack.c.l.b16 %v54
  %v389 = vunpack.c.l.b16 %v55
  %v390 = vunpack.c.l.b16 %v56
  %v391 = vunpack.c.l.b16 %v57
  %v392 = vunpack.c.l.b16 %v58
  %v393 = vunpack.c.l.b16 %v59
  %v394 = vunpack.c.l.b16 %v60
  %v395 = vunpack.c.l.b16 %v61
  %v396 = vunpack.c.l.b16 %v62
  %v397 = vunpack.c.l.b16 %v63
  %v398 = vunpack.c.l.b16 %v64
  %v399 = vunpack.c.l.b16 %v65
  %v400 = vunpack.c.l.b16 %v66
  %v401 = vunpack.c.l.b16 %v67
  %v402 = vunpack.c.l.b16 %v68
  %v403 = vunpack.c.l.b16 %v69
  %v404 = vunpack.c.l.b16 %v70
  %v405 = vunpack.c.l.b16 %v71
  %v406 = vunpack.c.l.b16 %v72
  %v407 = vunpack.c.l.b16 %v73
  %v408 = vunpack.c.l.b16 %v74
  %v409 = vunpack.c.l.b16 %v75
  %v410 = vunpack.c.l.b16 %v76
  %v411 = vunpack.c.l.b16 %v77
  %v412 = vunpack.c.l.b16 %v78
  %v413 = vunpack.c.l.b16 %v79
  %v414 = vunpack.c.l.b16 %v80
  %v415 = vunpack.c.l.b16 %v81
  %v416 = vunpack.c.l.b16 %v82
  %v417 = vunpack.c.l.b16 %v83
  %v418 = vunpack.c.l.b16 %v84
  %v419 = vunpack.c.l.b16 %v85
  %v420 = vunpack.c.l.b16 %v86
  %v421 = vunpack.c.l.b16 %v87
  %v422 = vunpack.c.l.b16 %v88
  %v423 = vunpack.c.l.b16 %v89
  %v424 = vunpack.c.l.b16 %v90
  %v425 = vunpack.c.l.b16 %v91
  %v426 = vunpack.c.l.b16 %v92
  %v427 = vunpack.c.l.b16 %v93
  %v428 = vunpack.c.l.b16 %v94
  %v429 = vunpack.c.l.b16 %v95
  %v430 = vunpack.c.l.b16 %v96
  %v431 = vunpack.c.l.b16 %v97
  %v432 = vunpack.c.l.b16 %v98
  %v433 = vunpack.c.l.b16 %v99
  %v434 = vunpack.c.l.b16 %v100
  %v435 = vunpack.c.l.b16 %v101
  %v436 = vunpack.c.l.b16 %v102
  %v437 = vunpack.c.l.b16 %v103
  %v438 = vunpack.c.l.b16 %v104
  %v439 = vunpack.c.l.b16 %v105
  %v440 = vunpack.c.l.b16 %v106
  %v441 = vunpack.c.l.b16 %v107
  %v442 = vunpack.c.l.b16 %v108
  %v443 = vunpack.c.l.b16 %v109
  %v444 = vunpack.c.l.b16 %v110
  %v445 = vunpack.c.l.b16 %v111
  %v446 = vunpack.c.l.b16 %v112
  %v447 = vunpack.c.l.b16 %v113
  %v448 = vunpack.c.l.b16 %v114
  %v449 = vunpack.c.l.b16 %v115
  %v450 = vunpack.c.l.b16 %v116
  %v451 = vunpack.c.l.b16 %v117
  %v452 = vunpack.c.l.b16 %v118
  %v453 = vunpack.c.l.b16 %v119
  %v454 = vunpack.c.l.b16 %v120
  %v455 = vunpack.c.l.b16 %v121
  %v456 = vunpack.c.l.b16 %v122
  %v457 = vunpack.c.l.b16 %v123
  %v458 = vunpack.c.l.b16 %v124
  %v459 = vunpack.c.l.b16 %v125
  %v460 = vunpack.c.l.b16 %v126
  %v461 = vunpack.c.l.b16 %v127
  %v462 = vunpack.c.l.b16 %v128
  %v463 = vunpack.c.l.b16 %v129
  %v464 = vunpack.c.l.b16 %v130
  %v465 = vunpack.c.l.b16 %v131
  %v466 = vunpack.c.l.b16 %v132
  %v467 = vunpack.c.l.b16 %v133
  %v468 = vunpack.c.l.b16 %v134
  %v469 = vunpack.c.l.b16 %v135
  %v470 = vunpack.c.l.b16 %v136
  %v471 = vunpack.c.l.b16 %v137
  %v472 = vunpack.c.l.b16 %v138
  %v473 = vunpack.c.l.b16 %v139
  %v474 = vunpack.c.l.b16 %v140
  %v475 = vunpack.c.l.b16 %v141
  %v476 = vunpack.c.l.b16 %v142
  %v477 = vunpack.c.l.b16 %v143
  %v478 = vunpack.c.l.b16 %v144
  %v479 = vunpack.c.l.b16 %v145
  %v480 = vunpack.c.l.b16 %v146
  %v481 = vunpack.c.l.b16 %v147
  %v482 = vunpack.c.l.b16 %v148
  %v483 = vunpack.c.l.b16 %v149
  %v484 = vunpack.c.l.b16 %v150
  %v485 = vunpack.c.l.b16 %v151
  %v486 = vunpack.c.l.b16 %v152
  %v487 = vunpack.c.l.b16 %v153
  %v488 = vunpack.c.l.b16 %v154
  %v489 = vunpack.c.l.b16 %v155
  %v490 = vunpack.c.l.b16 %v156
  %v491 = vunpack.c.l.b16 %v157
  %v492 = vunpack.c.l.b16 %v158
  %v493 = vunpack.c.l.b16 %v159
  %v494 = vunpack.c.l.b16 %v160
  %v495 = vunpack.c.l.b16 %v161
  %v496 = vunpack.c.l.b16 %v162
  %v497 = vunpack.c.l.b16 %v163
  %v498 = vunpack.c.l.b16 %v164
  %v499 = vunpack.c.l.b16 %v165
  %v500 = vunpack.c.l.b16 %v166
  %v501 = vpack.c.b16 %v358, %v357
  %v502 = vpack.c.b16 %v360, %v359
  %v503 = vpack.c.b16 %v362, %v361
  %v504 = vpack.c.b16 %v364, %v363
  %v505 = vpack.c.b16 %v366, %v365
  %v506 = vpack.c.b16 %v368, %v367
  %v507 = vpack.c.b16 %v370, %v369
  %v508 = vpack.c.b16 %v372, %v371
  %v509 = vpack.c.b16 %v374, %v373
  %v510 = vpack.c.b16 %v376, %v375
  %v511 = vpack.c.b16 %v378, %v377
  %v512 = vpack.c.b16 %v380, %v379
  %v513 = vpack.c.b16 %v382, %v381
  %v514 = vpack.c.b16 %v384, %v383
  %v515 = vpack.c.b16 %v386, %v385
  %v516 = vpack.c.b16 %v388, %v387
  %v517 = vpack.c.b16 %v390, %v389
  %v518 = vpack.c.b16 %v392, %v391
  %v519 = vpack.c.b16 %v394, %v393
  %v520 = vpack.c.b16 %v396, %v395
  %v521 = vpack.c.b16 %v398, %v397
  %v522 = vpack.c.b16 %v400, %v399
  %v523 = vpack.c.b16 %v402, %v401
  %v524 = vpack.c.b16 %v404, %v403
  %v525 = vpack.c.b16 %v406, %v405
  %v526 = vpack.c.b16 %v408, %v407
  %v527 = vpack.c.b16 %v410, %v409
  %v528 = vpack.c.b16 %v412, %v411
  %v529 = vpack.c.b16 %v414, %v413
  %v530 = vpack.c.b16 %v416, %v415
  %v531 = vpack.c.b16 %v418, %v417
  %v532 = vpack.c.b16 %v420, %v419
  %v533 = vpack.c.b16 %v422, %v421
  %v534 = vpack.c.b16 %v424, %v423
  %v535 = vpack.c.b16 %v426, %v425
  %v536 = vpack.c.b16 %v428, %v427
  %v537 = vpack.c.b16 %v430, %v429
  %v538 = vpack.c.b16 %v432, %v431
  %v539 = vpack.c.b16 %v434, %v433
  %v540 = vpack.c.b16 %v436, %v435
  %v541 = vpack.c.b16 %v438, %v437
  %v542 = vpack.c.b16 %v440, %v439
  %v543 = vpack.c.b16 %v442, %v441
  %v544 = vpack.c.b16 %v444, %v443
  %v545 = vpack.c.b16 %v446, %v445
  %v546 = vpack.c.b16 %v448, %v447
  %v547 = vpack.c.b16 %v450, %v449
  %v548 = vpack.c.b16 %v452, %v451
  %v549 = vpack.c.b16 %v454, %v453
  %v550 = vpack.c.b16 %v456, %v455
  %v551 = vpack.c.b16 %v458, %v457
  %v552 = vpack.c.b16 %v460, %v459
  %v553 = vpack.c.b16 %v462, %v461
  %v554 = vpack.c.b16 %v464, %v463
  %v555 = vpack.c.b16 %v466, %v465
  %v556 = vpack.c.b16 %v468, %v467
  %v557 = vpack.c.b16 %v470, %v469
  %v558 = vpack.c.b16 %v472, %v471
  %v559 = vpack.c.b16 %v474, %v473
  %v560 = vpack.c.b16 %v476, %v475
  %v561 = vpack.c.b16 %v478, %v477
  %v562 = vpack.c.b16 %v480, %v479
  %v563 = vpack.c.b16 %v482, %v481
  %v564 = vpack.c.b16 %v484, %v483
  %v565 = vpack.c.b16 %v486, %v485
  %v566 = vpack.c.b16 %v488, %v487
  %v567 = vpack.c.b16 %v490, %v489
  %v568 = vpack.c.b16 %v492, %v491
  %v569 = vpack.c.b16 %v494, %v493
  %v570 = vpack.c.b16 %v496, %v495
  %v571 = vpack.c.b16 %v498, %v497
  %v572 = vpack.c.b16 %v500, %v499
  %645 = vmatpush.bf16.msra.mxu0 %v508
  %646 = vmatpush.bf16.msra.mxu0 %v507
  %647 = vmatpush.bf16.msra.mxu0 %v506
  %648 = vmatpush.bf16.msra.mxu0 %v505
  %649 = vmatpush.bf16.msra.mxu0 %v504
  %650 = vmatpush.bf16.msra.mxu0 %v503
  %651 = vmatpush.bf16.msra.mxu0 %v502
  %652 = vmatpush.bf16.msra.mxu0 %v501
  %653 = vmatmul.bf16.gmra.mxu0 %v195
  %v654 = vpop.f32.mrf.mxu0
  %v655 = vadd.f32 0.0, %v654
  %v656 = vpop.f32.mrf.mxu0
  %v657 = vadd.f32 0.0, %v656
  %658 = vdwg.mxu0
  %659 = vmatpush.bf16.msra.mxu0 %v516
  %660 = vmatpush.bf16.msra.mxu0 %v515
  %661 = vmatpush.bf16.msra.mxu0 %v514
  %662 = vmatpush.bf16.msra.mxu0 %v513
  %663 = vmatpush.bf16.msra.mxu0 %v512
  %664 = vmatpush.bf16.msra.mxu0 %v511
  %665 = vmatpush.bf16.msra.mxu0 %v510
  %666 = vmatpush.bf16.msra.mxu0 %v509
  %667 = vmatmul.bf16.gmra.mxu0 %v196
  %v668 = vpop.f32.mrf.mxu0
  %v669 = vadd.f32 %v655, %v668
  %v670 = vpop.f32.mrf.mxu0
  %v671 = vadd.f32 %v657, %v670
  %672 = vdwg.mxu0
  %673 = vmatpush.bf16.msra.mxu0 %v524
  %674 = vmatpush.bf16.msra.mxu0 %v523
  %675 = vmatpush.bf16.msra.mxu0 %v522
  %676 = vmatpush.bf16.msra.mxu0 %v521
  %677 = vmatpush.bf16.msra.mxu0 %v520
  %678 = vmatpush.bf16.msra.mxu0 %v519
  %679 = vmatpush.bf16.msra.mxu0 %v518
  %680 = vmatpush.bf16.msra.mxu0 %v517
  %681 = vmatmul.bf16.gmra.mxu0 %v197
  %v682 = vpop.f32.mrf.mxu0
  %v683 = vadd.f32 %v669, %v682
  %v684 = vpop.f32.mrf.mxu0
  %v685 = vadd.f32 %v671, %v684
  %686 = vdwg.mxu0
  %687 = vmatpush.bf16.msra.mxu0 %v532
  %688 = vmatpush.bf16.msra.mxu0 %v531
  %689 = vmatpush.bf16.msra.mxu0 %v530
  %690 = vmatpush.bf16.msra.mxu0 %v529
  %691 = vmatpush.bf16.msra.mxu0 %v528
  %692 = vmatpush.bf16.msra.mxu0 %v527
  %693 = vmatpush.bf16.msra.mxu0 %v526
  %694 = vmatpush.bf16.msra.mxu0 %v525
  %695 = vmatmul.bf16.gmra.mxu0 %v198
  %v696 = vpop.f32.mrf.mxu0
  %v697 = vadd.f32 %v683, %v696
  %v698 = vpop.f32.mrf.mxu0
  %v699 = vadd.f32 %v685, %v698
  %700 = vdwg.mxu0
  %701 = vmatpush.bf16.msra.mxu0 %v540
  %702 = vmatpush.bf16.msra.mxu0 %v539
  %703 = vmatpush.bf16.msra.mxu0 %v538
  %704 = vmatpush.bf16.msra.mxu0 %v537
  %705 = vmatpush.bf16.msra.mxu0 %v536
  %706 = vmatpush.bf16.msra.mxu0 %v535
  %707 = vmatpush.bf16.msra.mxu0 %v534
  %708 = vmatpush.bf16.msra.mxu0 %v533
  %709 = vmatmul.bf16.gmra.mxu0 %v199
  %v710 = vpop.f32.mrf.mxu0
  %v711 = vadd.f32 %v697, %v710
  %v712 = vpop.f32.mrf.mxu0
  %v713 = vadd.f32 %v699, %v712
  %714 = vdwg.mxu0
  %715 = vmatpush.bf16.msra.mxu0 %v548
  %716 = vmatpush.bf16.msra.mxu0 %v547
  %717 = vmatpush.bf16.msra.mxu0 %v546
  %718 = vmatpush.bf16.msra.mxu0 %v545
  %719 = vmatpush.bf16.msra.mxu0 %v544
  %720 = vmatpush.bf16.msra.mxu0 %v543
  %721 = vmatpush.bf16.msra.mxu0 %v542
  %722 = vmatpush.bf16.msra.mxu0 %v541
  %723 = vmatmul.bf16.gmra.mxu0 %v200
  %v724 = vpop.f32.mrf.mxu0
  %v725 = vadd.f32 %v711, %v724
  %v726 = vpop.f32.mrf.mxu0
  %v727 = vadd.f32 %v713, %v726
  %728 = vdwg.mxu0
  %729 = vmatpush.bf16.msra.mxu0 %v556
  %730 = vmatpush.bf16.msra.mxu0 %v555
  %731 = vmatpush.bf16.msra.mxu0 %v554
  %732 = vmatpush.bf16.msra.mxu0 %v553
  %733 = vmatpush.bf16.msra.mxu0 %v552
  %734 = vmatpush.bf16.msra.mxu0 %v551
  %735 = vmatpush.bf16.msra.mxu0 %v550
  %736 = vmatpush.bf16.msra.mxu0 %v549
  %737 = vmatmul.bf16.gmra.mxu0 %v201
  %v738 = vpop.f32.mrf.mxu0
  %v739 = vadd.f32 %v725, %v738
  %v740 = vpop.f32.mrf.mxu0
  %v741 = vadd.f32 %v727, %v740
  %742 = vdwg.mxu0
  %743 = vmatpush.bf16.msra.mxu0 %v564
  %744 = vmatpush.bf16.msra.mxu0 %v563
  %745 = vmatpush.bf16.msra.mxu0 %v562
  %746 = vmatpush.bf16.msra.mxu0 %v561
  %747 = vmatpush.bf16.msra.mxu0 %v560
  %748 = vmatpush.bf16.msra.mxu0 %v559
  %749 = vmatpush.bf16.msra.mxu0 %v558
  %750 = vmatpush.bf16.msra.mxu0 %v557
  %751 = vmatmul.bf16.gmra.mxu0 %v202
  %v752 = vpop.f32.mrf.mxu0
  %v753 = vadd.f32 %v739, %v752
  %v754 = vpop.f32.mrf.mxu0
  %v755 = vadd.f32 %v741, %v754
  %756 = vdwg.mxu0
  %757 = vmatpush.bf16.msra.mxu0 %v572
  %758 = vmatpush.bf16.msra.mxu0 %v571
  %759 = vmatpush.bf16.msra.mxu0 %v570
  %760 = vmatpush.bf16.msra.mxu0 %v569
  %761 = vmatpush.bf16.msra.mxu0 %v568
  %762 = vmatpush.bf16.msra.mxu0 %v567
  %763 = vmatpush.bf16.msra.mxu0 %v566
  %764 = vmatpush.bf16.msra.mxu0 %v565
  %765 = vmatmul.bf16.gmra.mxu0 %v203
  %v766 = vpop.f32.mrf.mxu0
  %v767 = vadd.f32 %v753, %v766
  %v768 = vpop.f32.mrf.mxu0
  %v769 = vadd.f32 %v755, %v768
  %770 = vdwg.mxu0
  %771 = vst [vmem:[%s2] sm:$0xff] %v767
  %772 = vst [vmem:[%s2 + $0x8] sm:$0xff] %v769
  %v773 = vadd.f32 %v767, %v769
  %v774 = vrot.slane %v773, 4
  %v775 = vadd.f32 %v773, %v774
  %v776 = vrot.slane %v775, 2
  %v777 = vadd.f32 %v775, %v776
  %v778 = vrot.slane %v777, 1
  %v779 = vadd.f32 %v777, %v778
  %v780 = vmul.f32 %v767, %v767
  %v781 = vmul.f32 %v769, %v769
  %v782 = vadd.f32 %v780, %v781
  %v783 = vrot.slane %v782, 4
  %v784 = vadd.f32 %v782, %v783
  %v785 = vrot.slane %v784, 2
  %v786 = vadd.f32 %v784, %v785
  %v787 = vrot.slane %v786, 1
  %v788 = vadd.f32 %v786, %v787
  %vm789 = vcmask 1040384
  %v790 = vsel %vm789, %v779, %v788
  %791 = vst [vmem:[%s3] sm:$0x3] %v790
  // Predicated region
  $region10: #{encoder_forward.63} parent=0 // pred_check
    _
  $region11: #{encoder_forward.63} parent=0 // pred_check_branch
    %793 = sbr.rel (0) target = $region13
  $region12: #{encoder_forward.63} parent=0 // pred_region
    _
  $region13: #{encoder_forward.63} parent=0 // pred_fallthru
    _
  // Predicated region
  $region14: #{encoder_forward.63} parent=0 // pred_check
    _
  $region15: #{encoder_forward.63} parent=0 // pred_check_branch
    %795 = sbr.rel (0) target = $region17
  $region16: #{encoder_forward.63} parent=0 // pred_region
    _
  $region17: #{encoder_forward.63} parent=0 // pred_fallthru
    _
  // Predicated region
  $region18: #{encoder_forward.63} parent=0 // pred_check
    _
  $region19: #{encoder_forward.63} parent=0 // pred_check_branch
    %797 = sbr.rel (0) target = $region21
  $region20: #{encoder_forward.63} parent=0 // pred_region
    _
  $region21: #{encoder_forward.63} parent=0 // pred_fallthru
    _
  // Predicated region
  $region22: #{encoder_forward.63} parent=0 // pred_check
    _
  $region23: #{encoder_forward.63} parent=0 // pred_check_branch
    %799 = sbr.rel (0) target = $region25
  $region24: #{encoder_forward.63} parent=0 // pred_region
    _
  $region25: #{encoder_forward.63} parent=0 // pred_fallthru
    _

// kernel: encoder_forward.65
$region0: #{encoder_forward.65}
  #allocation0 [shape = 'u32[]', space=smem, size = 0x4, offset = 0x4, fixed_abs, tag = 'smem constant byte address 0x4 - core index']
  #allocation1 [shape = 'u32[72,128]{1,0:T(1,128)}', space=vmem, size = 0x9000, scoped, tag = 'internal scratch']
  %s0 = inlined_call_operand.vmem [shape: bf16[16,128], index: 0, kind: input, shape index: {}]
  %s1 = inlined_call_operand.vmem [shape: bf16[128,128], index: 1, kind: input, shape index: {}]
  %s2 = inlined_call_operand.vmem [shape: f32[16,128], index: 2, kind: output, shape index: {0}]
  %s3 = inlined_call_operand.vmem [shape: f32[16,128], index: 3, kind: output, shape index: {1}]
  %4 = xla_tuple %s2, %s3
  %s5 = sld [smem:[#allocation0]]
  $region26: #{encoder_forward.65} parent=0
    _
  %s7 = ssub.s32 1, %s5
  %s8 = scalar_select 0, %s7, %s5
  // Predicated region
  $region2: #{encoder_forward.65} parent=0 // pred_check
    _
  $region3: #{encoder_forward.65} parent=0 // pred_check_branch
    %10 = sbr.rel (0) target = $region5
  $region4: #{encoder_forward.65} parent=0 // pred_region
    _
  $region5: #{encoder_forward.65} parent=0 // pred_fallthru
    _
  // Predicated region
  $region6: #{encoder_forward.65} parent=0 // pred_check
    _
  $region7: #{encoder_forward.65} parent=0 // pred_check_branch
    %12 = sbr.rel (0) target = $region9
  $region8: #{encoder_forward.65} parent=0 // pred_region
    _
  $region9: #{encoder_forward.65} parent=0 // pred_fallthru
    _
  %v13 = vld [vmem:[%s0] sm:$0xf]
  %v14 = vld [vmem:[%s0 + $0x4] sm:$0xf]
  %v15 = vld [vmem:[%s1] sm:$0xf]
  %v16 = vld [vmem:[%s1 + $0x4] sm:$0xf]
  %v17 = vld [vmem:[%s1 + $0x8] sm:$0xf]
  %v18 = vld [vmem:[%s1 + $0xc] sm:$0xf]
  %v19 = vld [vmem:[%s1 + $0x10] sm:$0xf]
  %v20 = vld [vmem:[%s1 + $0x14] sm:$0xf]
  %v21 = vld [vmem:[%s1 + $0x18] sm:$0xf]
  %v22 = vld [vmem:[%s1 + $0x1c] sm:$0xf]
  %v23 = vld [vmem:[%s1 + $0x20] sm:$0xf]
  %v24 = vld [vmem:[%s1 + $0x24] sm:$0xf]
  %v25 = vld [vmem:[%s1 + $0x28] sm:$0xf]
  %v26 = vld [vmem:[%s1 + $0x2c] sm:$0xf]
  %v27 = vld [vmem:[%s1 + $0x30] sm:$0xf]
  %v28 = vld [vmem:[%s1 + $0x34] sm:$0xf]
  %v29 = vld [vmem:[%s1 + $0x38] sm:$0xf]
  %v30 = vld [vmem:[%s1 + $0x3c] sm:$0xf]
  %v33 = vunpack.c.l.b16 %v13
  %v34 = vunpack.c.l.b16 %v14
  %v35 = vpack.c.b16 %v34, %v33
  %v53 = vunpack.c.l.b16 %v15
  %v54 = vunpack.c.l.b16 %v16
  %v55 = vunpack.c.l.b16 %v17
  %v56 = vunpack.c.l.b16 %v18
  %v57 = vunpack.c.l.b16 %v19
  %v58 = vunpack.c.l.b16 %v20
  %v59 = vunpack.c.l.b16 %v21
  %v60 = vunpack.c.l.b16 %v22
  %v61 = vunpack.c.l.b16 %v23
  %v62 = vunpack.c.l.b16 %v24
  %v63 = vunpack.c.l.b16 %v25
  %v64 = vunpack.c.l.b16 %v26
  %v65 = vunpack.c.l.b16 %v27
  %v66 = vunpack.c.l.b16 %v28
  %v67 = vunpack.c.l.b16 %v29
  %v68 = vunpack.c.l.b16 %v30
  %v69 = vpack.c.b16 %v54, %v53
  %v70 = vpack.c.b16 %v56, %v55
  %v71 = vpack.c.b16 %v58, %v57
  %v72 = vpack.c.b16 %v60, %v59
  %v73 = vpack.c.b16 %v62, %v61
  %v74 = vpack.c.b16 %v64, %v63
  %v75 = vpack.c.b16 %v66, %v65
  %v76 = vpack.c.b16 %v68, %v67
  %85 = vmatpush.bf16.xpose.msra.mxu0 %v76
  %86 = vmatpush.bf16.xpose.msra.mxu0 %v75
  %87 = vmatpush.bf16.xpose.msra.mxu0 %v74
  %88 = vmatpush.bf16.xpose.msra.mxu0 %v73
  %89 = vmatpush.bf16.xpose.msra.mxu0 %v72
  %90 = vmatpush.bf16.xpose.msra.mxu0 %v71
  %91 = vmatpush.bf16.xpose.msra.mxu0 %v70
  %92 = vmatpush.bf16.xpose.msra.mxu0 %v69
  %93 = vmatmul.bf16.gmra.mxu0 %v35
  %v94 = vpop.f32.mrf.mxu0
  %v95 = vadd.f32 0.0, %v94
  %v96 = vpop.f32.mrf.mxu0
  %v97 = vadd.f32 0.0, %v96
  %98 = vdwg.mxu0
  %v99 = vlaneseq
  %v100 = vand.u32 %v99, 127
  %vm101 = vcmp.lt.s32.totalorder %v100, 64
  %v102 = vsel %vm101, %v95, -1e+30
  %v103 = vsel %vm101, %v97, -1e+30
  %104 = vmax.xlane.f32.xlu0 %v102
  %v105 = vpop.xlane.xlu0 %104
  %106 = vmax.xlane.f32.xlu0 %v103
  %v107 = vpop.xlane.xlu0 %106
  %v108 = vsub.f32 %v102, %v105
  %v109 = vsub.f32 %v103, %v107
  %v110 = vmul.f32 %v108, 1.442695
  %v111 = vpow.pop %v110
  %v112 = vmul.f32 %v109, 1.442695
  %v113 = vpow.pop %v112
  %114 = vadd.xlane.f32.xlu0 %v111
  %v115 = vpop.xlane.xlu0 %114
  %116 = vadd.xlane.f32.xlu0 %v113
  %v117 = vpop.xlane.xlu0 %116
  %v118 = vrcp.pop %v115
  %v119 = vrcp.pop %v117
  %v120 = vmul.f32 %v111, %v118
  %v121 = vmul.f32 %v113, %v119
  %v122 = vsub.f32 %v120, 0.0025
  %v123 = vsub.f32 %v121, 0.0025
  %v124 = vmax.f32 %v122, 0.0
  %v125 = vmax.f32 %v123, 0.0
  %v126 = vmul.f32 %v124, %v120
  %v127 = vmul.f32 %v125, %v121
  %v128 = vand.u32 2147483647, %v122
  %v129 = vand.u32 2147483647, %v123
  %v130 = vadd.f32 %v128, 1e-12
  %v131 = vadd.f32 %v129, 1e-12
  %v132 = vrcp.pop %v130
  %v133 = vmul.f32 %v130, %v132
  %v134 = vsub.f32 1.0, %v133
  %v135 = vmul.f32 %v132, %v134
  %v136 = vadd.f32 %v132, %v135
  %vm137 = vweird.f32 %v130
  %vm138 = vweird.f32 %v132
  %vm139 = vmor %vm137, %vm138
  %v140 = vsel %vm139, %v132, %v136
  %v141 = vand.u32 2147483647, %v130
  %vm142 = vcmp.eq.f32.partialorder %v141, 8.507059e+37
  %v143 = vand.u32 %v130, 2147483648
  %v144 = vor.u32 1.1754944e-38, %v143
  %v145 = vsel %vm142, %v144, %v140
  %v146 = vmul.f32 %v126, %v145
  %v147 = vrcp.pop %v131
  %v148 = vmul.f32 %v131, %v147
  %v149 = vsub.f32 1.0, %v148
  %v150 = vmul.f32 %v147, %v149
  %v151 = vadd.f32 %v147, %v150
  %vm152 = vweird.f32 %v131
  %vm153 = vweird.f32 %v147
  %vm154 = vmor %vm152, %vm153
  %v155 = vsel %vm154, %v147, %v151
  %v156 = vand.u32 2147483647, %v131
  %vm157 = vcmp.eq.f32.partialorder %v156, 8.507059e+37
  %v158 = vand.u32 %v131, 2147483648
  %v159 = vor.u32 1.1754944e-38, %v158
  %v160 = vsel %vm157, %v159, %v155
  %v161 = vmul.f32 %v127, %v160
  %v162 = vand.u32 2147483647, %v146
  %v163 = vand.u32 2147483647, %v161
  %164 = vadd.xlane.f32.xlu0 %v162
  %v165 = vpop.xlane.xlu0 %164
  %166 = vadd.xlane.f32.xlu0 %v163
  %v167 = vpop.xlane.xlu0 %166
  %v168 = vmax.f32 %v165, 1e-12
  %v169 = vmax.f32 %v167, 1e-12
  %v170 = vrcp.pop %v168
  %v171 = vrcp.pop %v169
  %v172 = vmul.f32 %v146, %v170
  %v173 = vmul.f32 %v161, %v171
  %v174 = vpack.c.bf16 %v173, %v172
  %175 = vmatpush.bf16.msra.mxu0 %v76
  %176 = vmatpush.bf16.msra.mxu0 %v75
  %177 = vmatpush.bf16.msra.mxu0 %v74
  %178 = vmatpush.bf16.msra.mxu0 %v73
  %179 = vmatpush.bf16.msra.mxu0 %v72
  %180 = vmatpush.bf16.msra.mxu0 %v71
  %181 = vmatpush.bf16.msra.mxu0 %v70
  %182 = vmatpush.bf16.msra.mxu0 %v69
  %183 = vmatmul.bf16.gmra.mxu0 %v174
  %v184 = vpop.f32.mrf.mxu0
  %v185 = vadd.f32 0.0, %v184
  %v186 = vpop.f32.mrf.mxu0
  %v187 = vadd.f32 0.0, %v186
  %188 = vdwg.mxu0
  %189 = vst [vmem:[%s2] sm:$0xff] %v185
  %190 = vst [vmem:[%s2 + $0x8] sm:$0xff] %v187
  %191 = vst [vmem:[%s3] sm:$0xff] %v172
  %192 = vst [vmem:[%s3 + $0x8] sm:$0xff] %v173
  // Predicated region
  $region10: #{encoder_forward.65} parent=0 // pred_check
    _
  $region11: #{encoder_forward.65} parent=0 // pred_check_branch
    %194 = sbr.rel (0) target = $region13
  $region12: #{encoder_forward.65} parent=0 // pred_region
    _
  $region13: #{encoder_forward.65} parent=0 // pred_fallthru
    _
  // Predicated region
  $region14: #{encoder_forward.65} parent=0 // pred_check
    _
  $region15: #{encoder_forward.65} parent=0 // pred_check_branch
    %196 = sbr.rel (0) target = $region17
  $region16: #{encoder_forward.65} parent=0 // pred_region
    _
  $region17: #{encoder_forward.65} parent=0 // pred_fallthru
    _
  // Predicated region
  $region18: #{encoder_forward.65} parent=0 // pred_check
    _
  $region19: #{encoder_forward.65} parent=0 // pred_check_branch
    %198 = sbr.rel (0) target = $region21
  $region20: #{encoder_forward.65} parent=0 // pred_region
    _
  $region21: #{encoder_forward.65} parent=0 // pred_fallthru
    _
  // Predicated region
  $region22: #{encoder_forward.65} parent=0 // pred_check
    _
  $region23: #{encoder_forward.65} parent=0 // pred_check_branch
    %200 = sbr.rel (0) target = $region25
  $region24: #{encoder_forward.65} parent=0 // pred_region
    _
  $region25: #{encoder_forward.65} parent=0 // pred_fallthru
    _

// kernel: encoder_forward.70
$region0: #{encoder_forward.70}
  #allocation0 [shape = 'u32[]', space=smem, size = 0x4, offset = 0x4, fixed_abs, tag = 'smem constant byte address 0x4 - core index']
  #allocation1 [shape = 'u32[72,128]{1,0:T(1,128)}', space=vmem, size = 0x9000, scoped, tag = 'internal scratch']
  %s0 = inlined_call_operand.vmem [shape: f32[32,128], index: 0, kind: input, shape index: {}]
  %s1 = inlined_call_operand.vmem [shape: f32[1,128], index: 1, kind: input, shape index: {}]
  %s2 = inlined_call_operand.vmem [shape: f32[1,128], index: 2, kind: input, shape index: {}]
  %s3 = inlined_call_operand.vmem [shape: f32[32,128], index: 3, kind: output, shape index: {}]
  %s4 = sld [smem:[#allocation0]]
  $region22: #{encoder_forward.70} parent=0
    _
  %s6 = ssub.s32 1, %s4
  %s7 = scalar_select 0, %s6, %s4
  // Predicated region
  $region2: #{encoder_forward.70} parent=0 // pred_check
    _
  $region3: #{encoder_forward.70} parent=0 // pred_check_branch
    %9 = sbr.rel (0) target = $region5
  $region4: #{encoder_forward.70} parent=0 // pred_region
    _
  $region5: #{encoder_forward.70} parent=0 // pred_fallthru
    _
  // Predicated region
  $region6: #{encoder_forward.70} parent=0 // pred_check
    _
  $region7: #{encoder_forward.70} parent=0 // pred_check_branch
    %11 = sbr.rel (0) target = $region9
  $region8: #{encoder_forward.70} parent=0 // pred_region
    _
  $region9: #{encoder_forward.70} parent=0 // pred_fallthru
    _
  // Predicated region
  $region10: #{encoder_forward.70} parent=0 // pred_check
    _
  $region11: #{encoder_forward.70} parent=0 // pred_check_branch
    %13 = sbr.rel (0) target = $region13
  $region12: #{encoder_forward.70} parent=0 // pred_region
    _
  $region13: #{encoder_forward.70} parent=0 // pred_fallthru
    _
  %v14 = vld [vmem:[%s0] sm:$0xff]
  %v15 = vld [vmem:[%s0 + $0x8] sm:$0xff]
  %v16 = vld [vmem:[%s0 + $0x10] sm:$0xff]
  %v17 = vld [vmem:[%s0 + $0x18] sm:$0xff]
  %v18 = vld [vmem:[%s1] sm:$0x1]
  %v20 = vperm.slane %v18, 0
  %v22 = vmul.f32 %v14, %v20
  %v23 = vmul.f32 %v15, %v20
  %v24 = vmul.f32 %v16, %v20
  %v25 = vmul.f32 %v17, %v20
  %v26 = vld [vmem:[%s2] sm:$0x1]
  %v28 = vperm.slane %v26, 0
  %v30 = vadd.f32 %v22, %v28
  %v31 = vadd.f32 %v23, %v28
  %v32 = vadd.f32 %v24, %v28
  %v33 = vadd.f32 %v25, %v28
  %v34 = vmax.f32 %v30, 0.0
  %v35 = vmax.f32 %v31, 0.0
  %v36 = vmax.f32 %v32, 0.0
  %v37 = vmax.f32 %v33, 0.0
  %38 = vst [vmem:[%s3] sm:$0xff] %v34
  %39 = vst [vmem:[%s3 + $0x8] sm:$0xff] %v35
  %40 = vst [vmem:[%s3 + $0x10] sm:$0xff] %v36
  %41 = vst [vmem:[%s3 + $0x18] sm:$0xff] %v37
  // Predicated region
  $region14: #{encoder_forward.70} parent=0 // pred_check
    _
  $region15: #{encoder_forward.70} parent=0 // pred_check_branch
    %43 = sbr.rel (0) target = $region17
  $region16: #{encoder_forward.70} parent=0 // pred_region
    _
  $region17: #{encoder_forward.70} parent=0 // pred_fallthru
    _
  // Predicated region
  $region18: #{encoder_forward.70} parent=0 // pred_check
    _
  $region19: #{encoder_forward.70} parent=0 // pred_check_branch
    %45 = sbr.rel (0) target = $region21
  $region20: #{encoder_forward.70} parent=0 // pred_region
    _
  $region21: #{encoder_forward.70} parent=0 // pred_fallthru
    _

// kernel: encoder_forward.66
$region0: #{encoder_forward.66}
  #allocation0 [shape = 'u32[]', space=smem, size = 0x4, offset = 0x4, fixed_abs, tag = 'smem constant byte address 0x4 - core index']
  #allocation1 [shape = 'u32[72,128]{1,0:T(1,128)}', space=vmem, size = 0x9000, scoped, tag = 'internal scratch']
  %s0 = inlined_call_operand.vmem [shape: bf16[16,512], index: 0, kind: input, shape index: {}]
  %s1 = inlined_call_operand.vmem [shape: bf16[512,128], index: 1, kind: input, shape index: {}]
  %s2 = inlined_call_operand.vmem [shape: f32[16,128], index: 2, kind: output, shape index: {0}]
  %s3 = inlined_call_operand.vmem [shape: f32[1,2,128], index: 3, kind: output, shape index: {1}]
  %4 = xla_tuple %s2, %s3
  %s5 = sld [smem:[#allocation0]]
  $region26: #{encoder_forward.66} parent=0
    _
  %s7 = ssub.s32 1, %s5
  %s8 = scalar_select 0, %s7, %s5
  // Predicated region
  $region2: #{encoder_forward.66} parent=0 // pred_check
    _
  $region3: #{encoder_forward.66} parent=0 // pred_check_branch
    %10 = sbr.rel (0) target = $region5
  $region4: #{encoder_forward.66} parent=0 // pred_region
    _
  $region5: #{encoder_forward.66} parent=0 // pred_fallthru
    _
  // Predicated region
  $region6: #{encoder_forward.66} parent=0 // pred_check
    _
  $region7: #{encoder_forward.66} parent=0 // pred_check_branch
    %12 = sbr.rel (0) target = $region9
  $region8: #{encoder_forward.66} parent=0 // pred_region
    _
  $region9: #{encoder_forward.66} parent=0 // pred_fallthru
    _
  %v13 = vld [vmem:[%s0] sm:$0xff]
  %v14 = vld [vmem:[%s0 + $0x8] sm:$0xff]
  %v15 = vld [vmem:[%s0 + $0x10] sm:$0xff]
  %v16 = vld [vmem:[%s0 + $0x18] sm:$0xff]
  %v17 = vld [vmem:[%s1] sm:$0xf]
  %v18 = vld [vmem:[%s1 + $0x4] sm:$0xf]
  %v19 = vld [vmem:[%s1 + $0x8] sm:$0xf]
  %v20 = vld [vmem:[%s1 + $0xc] sm:$0xf]
  %v21 = vld [vmem:[%s1 + $0x10] sm:$0xf]
  %v22 = vld [vmem:[%s1 + $0x14] sm:$0xf]
  %v23 = vld [vmem:[%s1 + $0x18] sm:$0xf]
  %v24 = vld [vmem:[%s1 + $0x1c] sm:$0xf]
  %v25 = vld [vmem:[%s1 + $0x20] sm:$0xf]
  %v26 = vld [vmem:[%s1 + $0x24] sm:$0xf]
  %v27 = vld [vmem:[%s1 + $0x28] sm:$0xf]
  %v28 = vld [vmem:[%s1 + $0x2c] sm:$0xf]
  %v29 = vld [vmem:[%s1 + $0x30] sm:$0xf]
  %v30 = vld [vmem:[%s1 + $0x34] sm:$0xf]
  %v31 = vld [vmem:[%s1 + $0x38] sm:$0xf]
  %v32 = vld [vmem:[%s1 + $0x3c] sm:$0xf]
  %v33 = vld [vmem:[%s1 + $0x40] sm:$0xf]
  %v34 = vld [vmem:[%s1 + $0x44] sm:$0xf]
  %v35 = vld [vmem:[%s1 + $0x48] sm:$0xf]
  %v36 = vld [vmem:[%s1 + $0x4c] sm:$0xf]
  %v37 = vld [vmem:[%s1 + $0x50] sm:$0xf]
  %v38 = vld [vmem:[%s1 + $0x54] sm:$0xf]
  %v39 = vld [vmem:[%s1 + $0x58] sm:$0xf]
  %v40 = vld [vmem:[%s1 + $0x5c] sm:$0xf]
  %v41 = vld [vmem:[%s1 + $0x60] sm:$0xf]
  %v42 = vld [vmem:[%s1 + $0x64] sm:$0xf]
  %v43 = vld [vmem:[%s1 + $0x68] sm:$0xf]
  %v44 = vld [vmem:[%s1 + $0x6c] sm:$0xf]
  %v45 = vld [vmem:[%s1 + $0x70] sm:$0xf]
  %v46 = vld [vmem:[%s1 + $0x74] sm:$0xf]
  %v47 = vld [vmem:[%s1 + $0x78] sm:$0xf]
  %v48 = vld [vmem:[%s1 + $0x7c] sm:$0xf]
  %v49 = vld [vmem:[%s1 + $0x80] sm:$0xf]
  %v50 = vld [vmem:[%s1 + $0x84] sm:$0xf]
  %v51 = vld [vmem:[%s1 + $0x88] sm:$0xf]
  %v52 = vld [vmem:[%s1 + $0x8c] sm:$0xf]
  %v53 = vld [vmem:[%s1 + $0x90] sm:$0xf]
  %v54 = vld [vmem:[%s1 + $0x94] sm:$0xf]
  %v55 = vld [vmem:[%s1 + $0x98] sm:$0xf]
  %v56 = vld [vmem:[%s1 + $0x9c] sm:$0xf]
  %v57 = vld [vmem:[%s1 + $0xa0] sm:$0xf]
  %v58 = vld [vmem:[%s1 + $0xa4] sm:$0xf]
  %v59 = vld [vmem:[%s1 + $0xa8] sm:$0xf]
  %v60 = vld [vmem:[%s1 + $0xac] sm:$0xf]
  %v61 = vld [vmem:[%s1 + $0xb0] sm:$0xf]
  %v62 = vld [vmem:[%s1 + $0xb4] sm:$0xf]
  %v63 = vld [vmem:[%s1 + $0xb8] sm:$0xf]
  %v64 = vld [vmem:[%s1 + $0xbc] sm:$0xf]
  %v65 = vld [vmem:[%s1 + $0xc0] sm:$0xf]
  %v66 = vld [vmem:[%s1 + $0xc4] sm:$0xf]
  %v67 = vld [vmem:[%s1 + $0xc8] sm:$0xf]
  %v68 = vld [vmem:[%s1 + $0xcc] sm:$0xf]
  %v69 = vld [vmem:[%s1 + $0xd0] sm:$0xf]
  %v70 = vld [vmem:[%s1 + $0xd4] sm:$0xf]
  %v71 = vld [vmem:[%s1 + $0xd8] sm:$0xf]
  %v72 = vld [vmem:[%s1 + $0xdc] sm:$0xf]
  %v73 = vld [vmem:[%s1 + $0xe0] sm:$0xf]
  %v74 = vld [vmem:[%s1 + $0xe4] sm:$0xf]
  %v75 = vld [vmem:[%s1 + $0xe8] sm:$0xf]
  %v76 = vld [vmem:[%s1 + $0xec] sm:$0xf]
  %v77 = vld [vmem:[%s1 + $0xf0] sm:$0xf]
  %v78 = vld [vmem:[%s1 + $0xf4] sm:$0xf]
  %v79 = vld [vmem:[%s1 + $0xf8] sm:$0xf]
  %v80 = vld [vmem:[%s1 + $0xfc] sm:$0xf]
  %v85 = vunpack.c.l.b16 %v13
  %v86 = vunpack.c.h.b16 %v13
  %v87 = vunpack.c.l.b16 %v14
  %v88 = vunpack.c.h.b16 %v14
  %v89 = vunpack.c.l.b16 %v15
  %v90 = vunpack.c.h.b16 %v15
  %v91 = vunpack.c.l.b16 %v16
  %v92 = vunpack.c.h.b16 %v16
  %v93 = vpack.c.b16 %v89, %v85
  %v94 = vpack.c.b16 %v90, %v86
  %v95 = vpack.c.b16 %v91, %v87
  %v96 = vpack.c.b16 %v92, %v88
  %v165 = vunpack.c.l.b16 %v17
  %v166 = vunpack.c.l.b16 %v18
  %v167 = vunpack.c.l.b16 %v19
  %v168 = vunpack.c.l.b16 %v20
  %v169 = vunpack.c.l.b16 %v21
  %v170 = vunpack.c.l.b16 %v22
  %v171 = vunpack.c.l.b16 %v23
  %v172 = vunpack.c.l.b16 %v24
  %v173 = vunpack.c.l.b16 %v25
  %v174 = vunpack.c.l.b16 %v26
  %v175 = vunpack.c.l.b16 %v27
  %v176 = vunpack.c.l.b16 %v28
  %v177 = vunpack.c.l.b16 %v29
  %v178 = vunpack.c.l.b16 %v30
  %v179 = vunpack.c.l.b16 %v31
  %v180 = vunpack.c.l.b16 %v32
  %v181 = vunpack.c.l.b16 %v33
  %v182 = vunpack.c.l.b16 %v34
  %v183 = vunpack.c.l.b16 %v35
  %v184 = vunpack.c.l.b16 %v36
  %v185 = vunpack.c.l.b16 %v37
  %v186 = vunpack.c.l.b16 %v38
  %v187 = vunpack.c.l.b16 %v39
  %v188 = vunpack.c.l.b16 %v40
  %v189 = vunpack.c.l.b16 %v41
  %v190 = vunpack.c.l.b16 %v42
  %v191 = vunpack.c.l.b16 %v43
  %v192 = vunpack.c.l.b16 %v44
  %v193 = vunpack.c.l.b16 %v45
  %v194 = vunpack.c.l.b16 %v46
  %v195 = vunpack.c.l.b16 %v47
  %v196 = vunpack.c.l.b16 %v48
  %v197 = vunpack.c.l.b16 %v49
  %v198 = vunpack.c.l.b16 %v50
  %v199 = vunpack.c.l.b16 %v51
  %v200 = vunpack.c.l.b16 %v52
  %v201 = vunpack.c.l.b16 %v53
  %v202 = vunpack.c.l.b16 %v54
  %v203 = vunpack.c.l.b16 %v55
  %v204 = vunpack.c.l.b16 %v56
  %v205 = vunpack.c.l.b16 %v57
  %v206 = vunpack.c.l.b16 %v58
  %v207 = vunpack.c.l.b16 %v59
  %v208 = vunpack.c.l.b16 %v60
  %v209 = vunpack.c.l.b16 %v61
  %v210 = vunpack.c.l.b16 %v62
  %v211 = vunpack.c.l.b16 %v63
  %v212 = vunpack.c.l.b16 %v64
  %v213 = vunpack.c.l.b16 %v65
  %v214 = vunpack.c.l.b16 %v66
  %v215 = vunpack.c.l.b16 %v67
  %v216 = vunpack.c.l.b16 %v68
  %v217 = vunpack.c.l.b16 %v69
  %v218 = vunpack.c.l.b16 %v70
  %v219 = vunpack.c.l.b16 %v71
  %v220 = vunpack.c.l.b16 %v72
  %v221 = vunpack.c.l.b16 %v73
  %v222 = vunpack.c.l.b16 %v74
  %v223 = vunpack.c.l.b16 %v75
  %v224 = vunpack.c.l.b16 %v76
  %v225 = vunpack.c.l.b16 %v77
  %v226 = vunpack.c.l.b16 %v78
  %v227 = vunpack.c.l.b16 %v79
  %v228 = vunpack.c.l.b16 %v80
  %v229 = vpack.c.b16 %v166, %v165
  %v230 = vpack.c.b16 %v168, %v167
  %v231 = vpack.c.b16 %v170, %v169
  %v232 = vpack.c.b16 %v172, %v171
  %v233 = vpack.c.b16 %v174, %v173
  %v234 = vpack.c.b16 %v176, %v175
  %v235 = vpack.c.b16 %v178, %v177
  %v236 = vpack.c.b16 %v180, %v179
  %v237 = vpack.c.b16 %v182, %v181
  %v238 = vpack.c.b16 %v184, %v183
  %v239 = vpack.c.b16 %v186, %v185
  %v240 = vpack.c.b16 %v188, %v187
  %v241 = vpack.c.b16 %v190, %v189
  %v242 = vpack.c.b16 %v192, %v191
  %v243 = vpack.c.b16 %v194, %v193
  %v244 = vpack.c.b16 %v196, %v195
  %v245 = vpack.c.b16 %v198, %v197
  %v246 = vpack.c.b16 %v200, %v199
  %v247 = vpack.c.b16 %v202, %v201
  %v248 = vpack.c.b16 %v204, %v203
  %v249 = vpack.c.b16 %v206, %v205
  %v250 = vpack.c.b16 %v208, %v207
  %v251 = vpack.c.b16 %v210, %v209
  %v252 = vpack.c.b16 %v212, %v211
  %v253 = vpack.c.b16 %v214, %v213
  %v254 = vpack.c.b16 %v216, %v215
  %v255 = vpack.c.b16 %v218, %v217
  %v256 = vpack.c.b16 %v220, %v219
  %v257 = vpack.c.b16 %v222, %v221
  %v258 = vpack.c.b16 %v224, %v223
  %v259 = vpack.c.b16 %v226, %v225
  %v260 = vpack.c.b16 %v228, %v227
  %293 = vmatpush.bf16.msra.mxu0 %v236
  %294 = vmatpush.bf16.msra.mxu0 %v235
  %295 = vmatpush.bf16.msra.mxu0 %v234
  %296 = vmatpush.bf16.msra.mxu0 %v233
  %297 = vmatpush.bf16.msra.mxu0 %v232
  %298 = vmatpush.bf16.msra.mxu0 %v231
  %299 = vmatpush.bf16.msra.mxu0 %v230
  %300 = vmatpush.bf16.msra.mxu0 %v229
  %301 = vmatmul.bf16.gmra.mxu0 %v93
  %v302 = vpop.f32.mrf.mxu0
  %v303 = vadd.f32 0.0, %v302
  %v304 = vpop.f32.mrf.mxu0
  %v305 = vadd.f32 0.0, %v304
  %306 = vdwg.mxu0
  %307 = vmatpush.bf16.msra.mxu0 %v244
  %308 = vmatpush.bf16.msra.mxu0 %v243
  %309 = vmatpush.bf16.msra.mxu0 %v242
  %310 = vmatpush.bf16.msra.mxu0 %v241
  %311 = vmatpush.bf16.msra.mxu0 %v240
  %312 = vmatpush.bf16.msra.mxu0 %v239
  %313 = vmatpush.bf16.msra.mxu0 %v238
  %314 = vmatpush.bf16.msra.mxu0 %v237
  %315 = vmatmul.bf16.gmra.mxu0 %v94
  %v316 = vpop.f32.mrf.mxu0
  %v317 = vadd.f32 %v303, %v316
  %v318 = vpop.f32.mrf.mxu0
  %v319 = vadd.f32 %v305, %v318
  %320 = vdwg.mxu0
  %321 = vmatpush.bf16.msra.mxu0 %v252
  %322 = vmatpush.bf16.msra.mxu0 %v251
  %323 = vmatpush.bf16.msra.mxu0 %v250
  %324 = vmatpush.bf16.msra.mxu0 %v249
  %325 = vmatpush.bf16.msra.mxu0 %v248
  %326 = vmatpush.bf16.msra.mxu0 %v247
  %327 = vmatpush.bf16.msra.mxu0 %v246
  %328 = vmatpush.bf16.msra.mxu0 %v245
  %329 = vmatmul.bf16.gmra.mxu0 %v95
  %v330 = vpop.f32.mrf.mxu0
  %v331 = vadd.f32 %v317, %v330
  %v332 = vpop.f32.mrf.mxu0
  %v333 = vadd.f32 %v319, %v332
  %334 = vdwg.mxu0
  %335 = vmatpush.bf16.msra.mxu0 %v260
  %336 = vmatpush.bf16.msra.mxu0 %v259
  %337 = vmatpush.bf16.msra.mxu0 %v258
  %338 = vmatpush.bf16.msra.mxu0 %v257
  %339 = vmatpush.bf16.msra.mxu0 %v256
  %340 = vmatpush.bf16.msra.mxu0 %v255
  %341 = vmatpush.bf16.msra.mxu0 %v254
  %342 = vmatpush.bf16.msra.mxu0 %v253
  %343 = vmatmul.bf16.gmra.mxu0 %v96
  %v344 = vpop.f32.mrf.mxu0
  %v345 = vadd.f32 %v331, %v344
  %v346 = vpop.f32.mrf.mxu0
  %v347 = vadd.f32 %v333, %v346
  %348 = vdwg.mxu0
  %349 = vst [vmem:[%s2] sm:$0xff] %v345
  %350 = vst [vmem:[%s2 + $0x8] sm:$0xff] %v347
  %v351 = vadd.f32 %v345, %v347
  %v352 = vrot.slane %v351, 4
  %v353 = vadd.f32 %v351, %v352
  %v354 = vrot.slane %v353, 2
  %v355 = vadd.f32 %v353, %v354
  %v356 = vrot.slane %v355, 1
  %v357 = vadd.f32 %v355, %v356
  %v358 = vmul.f32 %v345, %v345
  %v359 = vmul.f32 %v347, %v347
  %v360 = vadd.f32 %v358, %v359
  %v361 = vrot.slane %v360, 4
  %v362 = vadd.f32 %v360, %v361
  %v363 = vrot.slane %v362, 2
  %v364 = vadd.f32 %v362, %v363
  %v365 = vrot.slane %v364, 1
  %v366 = vadd.f32 %v364, %v365
  %vm367 = vcmask 1040384
  %v368 = vsel %vm367, %v357, %v366
  %369 = vst [vmem:[%s3] sm:$0x3] %v368
  // Predicated region
  $region10: #{encoder_forward.66} parent=0 // pred_check
    _
  $region11: #{encoder_forward.66} parent=0 // pred_check_branch
    %371 = sbr.rel (0) target = $region13
  $region12: #{encoder_forward.66} parent=0 // pred_region
    _
  $region13: #{encoder_forward.66} parent=0 // pred_fallthru
    _
  // Predicated region
  $region14: #{encoder_forward.66} parent=0 // pred_check
    _
  $region15: #{encoder_forward.66} parent=0 // pred_check_branch
    %373 = sbr.rel (0) target = $region17
  $region16: #{encoder_forward.66} parent=0 // pred_region
    _
  $region17: #{encoder_forward.66} parent=0 // pred_fallthru
    _
  // Predicated region
  $region18: #{encoder_forward.66} parent=0 // pred_check
    _
  $region19: #{encoder_forward.66} parent=0 // pred_check_branch
    %375 = sbr.rel (0) target = $region21
  $region20: #{encoder_forward.66} parent=0 // pred_region
    _
  $region21: #{encoder_forward.66} parent=0 // pred_fallthru
    _
  // Predicated region
  $region22: #{encoder_forward.66} parent=0 // pred_check
    _
  $region23: #{encoder_forward.66} parent=0 // pred_check_branch
    %377 = sbr.rel (0) target = $region25
  $region24: #{encoder_forward.66} parent=0 // pred_region
    _
  $region25: #{encoder_forward.66} parent=0 // pred_fallthru
    _

// kernel: encoder_forward.71
$region0: #{encoder_forward.71}
  #allocation0 [shape = 'u32[]', space=smem, size = 0x4, offset = 0x4, fixed_abs, tag = 'smem constant byte address 0x4 - core index']
  #allocation1 [shape = 'u32[72,128]{1,0:T(1,128)}', space=vmem, size = 0x9000, scoped, tag = 'internal scratch']
  %s0 = inlined_call_operand.vmem [shape: bf16[32,1152], index: 0, kind: input, shape index: {}]
  %s1 = inlined_call_operand.vmem [shape: bf16[1152,128], index: 1, kind: input, shape index: {}]
  %s2 = inlined_call_operand.vmem [shape: f32[32,128], index: 2, kind: output, shape index: {0}]
  %s3 = inlined_call_operand.vmem [shape: f32[1,2,128], index: 3, kind: output, shape index: {1}]
  %4 = xla_tuple %s2, %s3
  %s5 = sld [smem:[#allocation0]]
  $region26: #{encoder_forward.71} parent=0
    _
  %s7 = ssub.s32 1, %s5
  %s8 = scalar_select 0, %s7, %s5
  // Predicated region
  $region2: #{encoder_forward.71} parent=0 // pred_check
    _
  $region3: #{encoder_forward.71} parent=0 // pred_check_branch
    %10 = sbr.rel (0) target = $region5
  $region4: #{encoder_forward.71} parent=0 // pred_region
    _
  $region5: #{encoder_forward.71} parent=0 // pred_fallthru
    _
  // Predicated region
  $region6: #{encoder_forward.71} parent=0 // pred_check
    _
  $region7: #{encoder_forward.71} parent=0 // pred_check_branch
    %12 = sbr.rel (0) target = $region9
  $region8: #{encoder_forward.71} parent=0 // pred_region
    _
  $region9: #{encoder_forward.71} parent=0 // pred_fallthru
    _
  %v13 = vld [vmem:[%s0] sm:$0xff]
  %v14 = vld [vmem:[%s0 + $0x8] sm:$0xff]
  %v15 = vld [vmem:[%s0 + $0x10] sm:$0xff]
  %v16 = vld [vmem:[%s0 + $0x18] sm:$0xff]
  %v17 = vld [vmem:[%s0 + $0x20] sm:$0xf]
  %v18 = vld [vmem:[%s0 + $0x24] sm:$0xff]
  %v19 = vld [vmem:[%s0 + $0x2c] sm:$0xff]
  %v20 = vld [vmem:[%s0 + $0x34] sm:$0xff]
  %v21 = vld [vmem:[%s0 + $0x3c] sm:$0xff]
  %v22 = vld [vmem:[%s0 + $0x44] sm:$0xf]
  %v23 = vld [vmem:[%s0 + $0x48] sm:$0xff]
  %v24 = vld [vmem:[%s0 + $0x50] sm:$0xff]
  %v25 = vld [vmem:[%s0 + $0x58] sm:$0xff]
  %v26 = vld [vmem:[%s0 + $0x60] sm:$0xff]
  %v27 = vld [vmem:[%s0 + $0x68] sm:$0xf]
  %v28 = vld [vmem:[%s0 + $0x6c] sm:$0xff]
  %v29 = vld [vmem:[%s0 + $0x74] sm:$0xff]
  %v30 = vld [vmem:[%s0 + $0x7c] sm:$0xff]
  %v31 = vld [vmem:[%s0 + $0x84] sm:$0xff]
  %v32 = vld [vmem:[%s0 + $0x8c] sm:$0xf]
  %v33 = vld [vmem:[%s1] sm:$0xf]
  %v34 = vld [vmem:[%s1 + $0x4] sm:$0xf]
  %v35 = vld [vmem:[%s1 + $0x8] sm:$0xf]
  %v36 = vld [vmem:[%s1 + $0xc] sm:$0xf]
  %v37 = vld [vmem:[%s1 + $0x10] sm:$0xf]
  %v38 = vld [vmem:[%s1 + $0x14] sm:$0xf]
  %v39 = vld [vmem:[%s1 + $0x18] sm:$0xf]
  %v40 = vld [vmem:[%s1 + $0x1c] sm:$0xf]
  %v41 = vld [vmem:[%s1 + $0x20] sm:$0xf]
  %v42 = vld [vmem:[%s1 + $0x24] sm:$0xf]
  %v43 = vld [vmem:[%s1 + $0x28] sm:$0xf]
  %v44 = vld [vmem:[%s1 + $0x2c] sm:$0xf]
  %v45 = vld [vmem:[%s1 + $0x30] sm:$0xf]
  %v46 = vld [vmem:[%s1 + $0x34] sm:$0xf]
  %v47 = vld [vmem:[%s1 + $0x38] sm:$0xf]
  %v48 = vld [vmem:[%s1 + $0x3c] sm:$0xf]
  %v49 = vld [vmem:[%s1 + $0x40] sm:$0xf]
  %v50 = vld [vmem:[%s1 + $0x44] sm:$0xf]
  %v51 = vld [vmem:[%s1 + $0x48] sm:$0xf]
  %v52 = vld [vmem:[%s1 + $0x4c] sm:$0xf]
  %v53 = vld [vmem:[%s1 + $0x50] sm:$0xf]
  %v54 = vld [vmem:[%s1 + $0x54] sm:$0xf]
  %v55 = vld [vmem:[%s1 + $0x58] sm:$0xf]
  %v56 = vld [vmem:[%s1 + $0x5c] sm:$0xf]
  %v57 = vld [vmem:[%s1 + $0x60] sm:$0xf]
  %v58 = vld [vmem:[%s1 + $0x64] sm:$0xf]
  %v59 = vld [vmem:[%s1 + $0x68] sm:$0xf]
  %v60 = vld [vmem:[%s1 + $0x6c] sm:$0xf]
  %v61 = vld [vmem:[%s1 + $0x70] sm:$0xf]
  %v62 = vld [vmem:[%s1 + $0x74] sm:$0xf]
  %v63 = vld [vmem:[%s1 + $0x78] sm:$0xf]
  %v64 = vld [vmem:[%s1 + $0x7c] sm:$0xf]
  %v65 = vld [vmem:[%s1 + $0x80] sm:$0xf]
  %v66 = vld [vmem:[%s1 + $0x84] sm:$0xf]
  %v67 = vld [vmem:[%s1 + $0x88] sm:$0xf]
  %v68 = vld [vmem:[%s1 + $0x8c] sm:$0xf]
  %v69 = vld [vmem:[%s1 + $0x90] sm:$0xf]
  %v70 = vld [vmem:[%s1 + $0x94] sm:$0xf]
  %v71 = vld [vmem:[%s1 + $0x98] sm:$0xf]
  %v72 = vld [vmem:[%s1 + $0x9c] sm:$0xf]
  %v73 = vld [vmem:[%s1 + $0xa0] sm:$0xf]
  %v74 = vld [vmem:[%s1 + $0xa4] sm:$0xf]
  %v75 = vld [vmem:[%s1 + $0xa8] sm:$0xf]
  %v76 = vld [vmem:[%s1 + $0xac] sm:$0xf]
  %v77 = vld [vmem:[%s1 + $0xb0] sm:$0xf]
  %v78 = vld [vmem:[%s1 + $0xb4] sm:$0xf]
  %v79 = vld [vmem:[%s1 + $0xb8] sm:$0xf]
  %v80 = vld [vmem:[%s1 + $0xbc] sm:$0xf]
  %v81 = vld [vmem:[%s1 + $0xc0] sm:$0xf]
  %v82 = vld [vmem:[%s1 + $0xc4] sm:$0xf]
  %v83 = vld [vmem:[%s1 + $0xc8] sm:$0xf]
  %v84 = vld [vmem:[%s1 + $0xcc] sm:$0xf]
  %v85 = vld [vmem:[%s1 + $0xd0] sm:$0xf]
  %v86 = vld [vmem:[%s1 + $0xd4] sm:$0xf]
  %v87 = vld [vmem:[%s1 + $0xd8] sm:$0xf]
  %v88 = vld [vmem:[%s1 + $0xdc] sm:$0xf]
  %v89 = vld [vmem:[%s1 + $0xe0] sm:$0xf]
  %v90 = vld [vmem:[%s1 + $0xe4] sm:$0xf]
  %v91 = vld [vmem:[%s1 + $0xe8] sm:$0xf]
  %v92 = vld [vmem:[%s1 + $0xec] sm:$0xf]
  %v93 = vld [vmem:[%s1 + $0xf0] sm:$0xf]
  %v94 = vld [vmem:[%s1 + $0xf4] sm:$0xf]
  %v95 = vld [vmem:[%s1 + $0xf8] sm:$0xf]
  %v96 = vld [vmem:[%s1 + $0xfc] sm:$0xf]
  %v97 = vld [vmem:[%s1 + $0x100] sm:$0xf]
  %v98 = vld [vmem:[%s1 + $0x104] sm:$0xf]
  %v99 = vld [vmem:[%s1 + $0x108] sm:$0xf]
  %v100 = vld [vmem:[%s1 + $0x10c] sm:$0xf]
  %v101 = vld [vmem:[%s1 + $0x110] sm:$0xf]
  %v102 = vld [vmem:[%s1 + $0x114] sm:$0xf]
  %v103 = vld [vmem:[%s1 + $0x118] sm:$0xf]
  %v104 = vld [vmem:[%s1 + $0x11c] sm:$0xf]
  %v105 = vld [vmem:[%s1 + $0x120] sm:$0xf]
  %v106 = vld [vmem:[%s1 + $0x124] sm:$0xf]
  %v107 = vld [vmem:[%s1 + $0x128] sm:$0xf]
  %v108 = vld [vmem:[%s1 + $0x12c] sm:$0xf]
  %v109 = vld [vmem:[%s1 + $0x130] sm:$0xf]
  %v110 = vld [vmem:[%s1 + $0x134] sm:$0xf]
  %v111 = vld [vmem:[%s1 + $0x138] sm:$0xf]
  %v112 = vld [vmem:[%s1 + $0x13c] sm:$0xf]
  %v113 = vld [vmem:[%s1 + $0x140] sm:$0xf]
  %v114 = vld [vmem:[%s1 + $0x144] sm:$0xf]
  %v115 = vld [vmem:[%s1 + $0x148] sm:$0xf]
  %v116 = vld [vmem:[%s1 + $0x14c] sm:$0xf]
  %v117 = vld [vmem:[%s1 + $0x150] sm:$0xf]
  %v118 = vld [vmem:[%s1 + $0x154] sm:$0xf]
  %v119 = vld [vmem:[%s1 + $0x158] sm:$0xf]
  %v120 = vld [vmem:[%s1 + $0x15c] sm:$0xf]
  %v121 = vld [vmem:[%s1 + $0x160] sm:$0xf]
  %v122 = vld [vmem:[%s1 + $0x164] sm:$0xf]
  %v123 = vld [vmem:[%s1 + $0x168] sm:$0xf]
  %v124 = vld [vmem:[%s1 + $0x16c] sm:$0xf]
  %v125 = vld [vmem:[%s1 + $0x170] sm:$0xf]
  %v126 = vld [vmem:[%s1 + $0x174] sm:$0xf]
  %v127 = vld [vmem:[%s1 + $0x178] sm:$0xf]
  %v128 = vld [vmem:[%s1 + $0x17c] sm:$0xf]
  %v129 = vld [vmem:[%s1 + $0x180] sm:$0xf]
  %v130 = vld [vmem:[%s1 + $0x184] sm:$0xf]
  %v131 = vld [vmem:[%s1 + $0x188] sm:$0xf]
  %v132 = vld [vmem:[%s1 + $0x18c] sm:$0xf]
  %v133 = vld [vmem:[%s1 + $0x190] sm:$0xf]
  %v134 = vld [vmem:[%s1 + $0x194] sm:$0xf]
  %v135 = vld [vmem:[%s1 + $0x198] sm:$0xf]
  %v136 = vld [vmem:[%s1 + $0x19c] sm:$0xf]
  %v137 = vld [vmem:[%s1 + $0x1a0] sm:$0xf]
  %v138 = vld [vmem:[%s1 + $0x1a4] sm:$0xf]
  %v139 = vld [vmem:[%s1 + $0x1a8] sm:$0xf]
  %v140 = vld [vmem:[%s1 + $0x1ac] sm:$0xf]
  %v141 = vld [vmem:[%s1 + $0x1b0] sm:$0xf]
  %v142 = vld [vmem:[%s1 + $0x1b4] sm:$0xf]
  %v143 = vld [vmem:[%s1 + $0x1b8] sm:$0xf]
  %v144 = vld [vmem:[%s1 + $0x1bc] sm:$0xf]
  %v145 = vld [vmem:[%s1 + $0x1c0] sm:$0xf]
  %v146 = vld [vmem:[%s1 + $0x1c4] sm:$0xf]
  %v147 = vld [vmem:[%s1 + $0x1c8] sm:$0xf]
  %v148 = vld [vmem:[%s1 + $0x1cc] sm:$0xf]
  %v149 = vld [vmem:[%s1 + $0x1d0] sm:$0xf]
  %v150 = vld [vmem:[%s1 + $0x1d4] sm:$0xf]
  %v151 = vld [vmem:[%s1 + $0x1d8] sm:$0xf]
  %v152 = vld [vmem:[%s1 + $0x1dc] sm:$0xf]
  %v153 = vld [vmem:[%s1 + $0x1e0] sm:$0xf]
  %v154 = vld [vmem:[%s1 + $0x1e4] sm:$0xf]
  %v155 = vld [vmem:[%s1 + $0x1e8] sm:$0xf]
  %v156 = vld [vmem:[%s1 + $0x1ec] sm:$0xf]
  %v157 = vld [vmem:[%s1 + $0x1f0] sm:$0xf]
  %v158 = vld [vmem:[%s1 + $0x1f4] sm:$0xf]
  %v159 = vld [vmem:[%s1 + $0x1f8] sm:$0xf]
  %v160 = vld [vmem:[%s1 + $0x1fc] sm:$0xf]
  %v161 = vld [vmem:[%s1 + $0x200] sm:$0xf]
  %v162 = vld [vmem:[%s1 + $0x204] sm:$0xf]
  %v163 = vld [vmem:[%s1 + $0x208] sm:$0xf]
  %v164 = vld [vmem:[%s1 + $0x20c] sm:$0xf]
  %v165 = vld [vmem:[%s1 + $0x210] sm:$0xf]
  %v166 = vld [vmem:[%s1 + $0x214] sm:$0xf]
  %v167 = vld [vmem:[%s1 + $0x218] sm:$0xf]
  %v168 = vld [vmem:[%s1 + $0x21c] sm:$0xf]
  %v169 = vld [vmem:[%s1 + $0x220] sm:$0xf]
  %v170 = vld [vmem:[%s1 + $0x224] sm:$0xf]
  %v171 = vld [vmem:[%s1 + $0x228] sm:$0xf]
  %v172 = vld [vmem:[%s1 + $0x22c] sm:$0xf]
  %v173 = vld [vmem:[%s1 + $0x230] sm:$0xf]
  %v174 = vld [vmem:[%s1 + $0x234] sm:$0xf]
  %v175 = vld [vmem:[%s1 + $0x238] sm:$0xf]
  %v176 = vld [vmem:[%s1 + $0x23c] sm:$0xf]
  %v197 = vunpack.c.l.b16 %v13
  %v198 = vunpack.c.h.b16 %v13
  %v199 = vunpack.c.l.b16 %v14
  %v200 = vunpack.c.h.b16 %v14
  %v201 = vunpack.c.l.b16 %v15
  %v202 = vunpack.c.h.b16 %v15
  %v203 = vunpack.c.l.b16 %v16
  %v204 = vunpack.c.h.b16 %v16
  %v205 = vunpack.c.l.b16 %v17
  %v206 = vunpack.c.l.b16 %v18
  %v207 = vunpack.c.h.b16 %v18
  %v208 = vunpack.c.l.b16 %v19
  %v209 = vunpack.c.h.b16 %v19
  %v210 = vunpack.c.l.b16 %v20
  %v211 = vunpack.c.h.b16 %v20
  %v212 = vunpack.c.l.b16 %v21
  %v213 = vunpack.c.h.b16 %v21
  %v214 = vunpack.c.l.b16 %v22
  %v215 = vunpack.c.l.b16 %v23
  %v216 = vunpack.c.h.b16 %v23
  %v217 = vunpack.c.l.b16 %v24
  %v218 = vunpack.c.h.b16 %v24
  %v219 = vunpack.c.l.b16 %v25
  %v220 = vunpack.c.h.b16 %v25
  %v221 = vunpack.c.l.b16 %v26
  %v222 = vunpack.c.h.b16 %v26
  %v223 = vunpack.c.l.b16 %v27
  %v224 = vunpack.c.l.b16 %v28
  %v225 = vunpack.c.h.b16 %v28
  %v226 = vunpack.c.l.b16 %v29
  %v227 = vunpack.c.h.b16 %v29
  %v228 = vunpack.c.l.b16 %v30
  %v229 = vunpack.c.h.b16 %v30
  %v230 = vunpack.c.l.b16 %v31
  %v231 = vunpack.c.h.b16 %v31
  %v232 = vunpack.c.l.b16 %v32
  %v233 = vpack.c.b16 %v206, %v197
  %v234 = vpack.c.b16 %v207, %v198
  %v235 = vpack.c.b16 %v208, %v199
  %v236 = vpack.c.b16 %v209, %v200
  %v237 = vpack.c.b16 %v210, %v201
  %v238 = vpack.c.b16 %v211, %v202
  %v239 = vpack.c.b16 %v212, %v203
  %v240 = vpack.c.b16 %v213, %v204
  %v241 = vpack.c.b16 %v214, %v205
  %v242 = vpack.c.b16 %v224, %v215
  %v243 = vpack.c.b16 %v225, %v216
  %v244 = vpack.c.b16 %v226, %v217
  %v245 = vpack.c.b16 %v227, %v218
  %v246 = vpack.c.b16 %v228, %v219
  %v247 = vpack.c.b16 %v229, %v220
  %v248 = vpack.c.b16 %v230, %v221
  %v249 = vpack.c.b16 %v231, %v222
  %v250 = vpack.c.b16 %v232, %v223
  %v413 = vunpack.c.l.b16 %v33
  %v414 = vunpack.c.l.b16 %v34
  %v415 = vunpack.c.l.b16 %v35
  %v416 = vunpack.c.l.b16 %v36
  %v417 = vunpack.c.l.b16 %v37
  %v418 = vunpack.c.l.b16 %v38
  %v419 = vunpack.c.l.b16 %v39
  %v420 = vunpack.c.l.b16 %v40
  %v421 = vunpack.c.l.b16 %v41
  %v422 = vunpack.c.l.b16 %v42
  %v423 = vunpack.c.l.b16 %v43
  %v424 = vunpack.c.l.b16 %v44
  %v425 = vunpack.c.l.b16 %v45
  %v426 = vunpack.c.l.b16 %v46
  %v427 = vunpack.c.l.b16 %v47
  %v428 = vunpack.c.l.b16 %v48
  %v429 = vunpack.c.l.b16 %v49
  %v430 = vunpack.c.l.b16 %v50
  %v431 = vunpack.c.l.b16 %v51
  %v432 = vunpack.c.l.b16 %v52
  %v433 = vunpack.c.l.b16 %v53
  %v434 = vunpack.c.l.b16 %v54
  %v435 = vunpack.c.l.b16 %v55
  %v436 = vunpack.c.l.b16 %v56
  %v437 = vunpack.c.l.b16 %v57
  %v438 = vunpack.c.l.b16 %v58
  %v439 = vunpack.c.l.b16 %v59
  %v440 = vunpack.c.l.b16 %v60
  %v441 = vunpack.c.l.b16 %v61
  %v442 = vunpack.c.l.b16 %v62
  %v443 = vunpack.c.l.b16 %v63
  %v444 = vunpack.c.l.b16 %v64
  %v445 = vunpack.c.l.b16 %v65
  %v446 = vunpack.c.l.b16 %v66
  %v447 = vunpack.c.l.b16 %v67
  %v448 = vunpack.c.l.b16 %v68
  %v449 = vunpack.c.l.b16 %v69
  %v450 = vunpack.c.l.b16 %v70
  %v451 = vunpack.c.l.b16 %v71
  %v452 = vunpack.c.l.b16 %v72
  %v453 = vunpack.c.l.b16 %v73
  %v454 = vunpack.c.l.b16 %v74
  %v455 = vunpack.c.l.b16 %v75
  %v456 = vunpack.c.l.b16 %v76
  %v457 = vunpack.c.l.b16 %v77
  %v458 = vunpack.c.l.b16 %v78
  %v459 = vunpack.c.l.b16 %v79
  %v460 = vunpack.c.l.b16 %v80
  %v461 = vunpack.c.l.b16 %v81
  %v462 = vunpack.c.l.b16 %v82
  %v463 = vunpack.c.l.b16 %v83
  %v464 = vunpack.c.l.b16 %v84
  %v465 = vunpack.c.l.b16 %v85
  %v466 = vunpack.c.l.b16 %v86
  %v467 = vunpack.c.l.b16 %v87
  %v468 = vunpack.c.l.b16 %v88
  %v469 = vunpack.c.l.b16 %v89
  %v470 = vunpack.c.l.b16 %v90
  %v471 = vunpack.c.l.b16 %v91
  %v472 = vunpack.c.l.b16 %v92
  %v473 = vunpack.c.l.b16 %v93
  %v474 = vunpack.c.l.b16 %v94
  %v475 = vunpack.c.l.b16 %v95
  %v476 = vunpack.c.l.b16 %v96
  %v477 = vunpack.c.l.b16 %v97
  %v478 = vunpack.c.l.b16 %v98
  %v479 = vunpack.c.l.b16 %v99
  %v480 = vunpack.c.l.b16 %v100
  %v481 = vunpack.c.l.b16 %v101
  %v482 = vunpack.c.l.b16 %v102
  %v483 = vunpack.c.l.b16 %v103
  %v484 = vunpack.c.l.b16 %v104
  %v485 = vunpack.c.l.b16 %v105
  %v486 = vunpack.c.l.b16 %v106
  %v487 = vunpack.c.l.b16 %v107
  %v488 = vunpack.c.l.b16 %v108
  %v489 = vunpack.c.l.b16 %v109
  %v490 = vunpack.c.l.b16 %v110
  %v491 = vunpack.c.l.b16 %v111
  %v492 = vunpack.c.l.b16 %v112
  %v493 = vunpack.c.l.b16 %v113
  %v494 = vunpack.c.l.b16 %v114
  %v495 = vunpack.c.l.b16 %v115
  %v496 = vunpack.c.l.b16 %v116
  %v497 = vunpack.c.l.b16 %v117
  %v498 = vunpack.c.l.b16 %v118
  %v499 = vunpack.c.l.b16 %v119
  %v500 = vunpack.c.l.b16 %v120
  %v501 = vunpack.c.l.b16 %v121
  %v502 = vunpack.c.l.b16 %v122
  %v503 = vunpack.c.l.b16 %v123
  %v504 = vunpack.c.l.b16 %v124
  %v505 = vunpack.c.l.b16 %v125
  %v506 = vunpack.c.l.b16 %v126
  %v507 = vunpack.c.l.b16 %v127
  %v508 = vunpack.c.l.b16 %v128
  %v509 = vunpack.c.l.b16 %v129
  %v510 = vunpack.c.l.b16 %v130
  %v511 = vunpack.c.l.b16 %v131
  %v512 = vunpack.c.l.b16 %v132
  %v513 = vunpack.c.l.b16 %v133
  %v514 = vunpack.c.l.b16 %v134
  %v515 = vunpack.c.l.b16 %v135
  %v516 = vunpack.c.l.b16 %v136
  %v517 = vunpack.c.l.b16 %v137
  %v518 = vunpack.c.l.b16 %v138
  %v519 = vunpack.c.l.b16 %v139
  %v520 = vunpack.c.l.b16 %v140
  %v521 = vunpack.c.l.b16 %v141
  %v522 = vunpack.c.l.b16 %v142
  %v523 = vunpack.c.l.b16 %v143
  %v524 = vunpack.c.l.b16 %v144
  %v525 = vunpack.c.l.b16 %v145
  %v526 = vunpack.c.l.b16 %v146
  %v527 = vunpack.c.l.b16 %v147
  %v528 = vunpack.c.l.b16 %v148
  %v529 = vunpack.c.l.b16 %v149
  %v530 = vunpack.c.l.b16 %v150
  %v531 = vunpack.c.l.b16 %v151
  %v532 = vunpack.c.l.b16 %v152
  %v533 = vunpack.c.l.b16 %v153
  %v534 = vunpack.c.l.b16 %v154
  %v535 = vunpack.c.l.b16 %v155
  %v536 = vunpack.c.l.b16 %v156
  %v537 = vunpack.c.l.b16 %v157
  %v538 = vunpack.c.l.b16 %v158
  %v539 = vunpack.c.l.b16 %v159
  %v540 = vunpack.c.l.b16 %v160
  %v541 = vunpack.c.l.b16 %v161
  %v542 = vunpack.c.l.b16 %v162
  %v543 = vunpack.c.l.b16 %v163
  %v544 = vunpack.c.l.b16 %v164
  %v545 = vunpack.c.l.b16 %v165
  %v546 = vunpack.c.l.b16 %v166
  %v547 = vunpack.c.l.b16 %v167
  %v548 = vunpack.c.l.b16 %v168
  %v549 = vunpack.c.l.b16 %v169
  %v550 = vunpack.c.l.b16 %v170
  %v551 = vunpack.c.l.b16 %v171
  %v552 = vunpack.c.l.b16 %v172
  %v553 = vunpack.c.l.b16 %v173
  %v554 = vunpack.c.l.b16 %v174
  %v555 = vunpack.c.l.b16 %v175
  %v556 = vunpack.c.l.b16 %v176
  %v557 = vpack.c.b16 %v414, %v413
  %v558 = vpack.c.b16 %v416, %v415
  %v559 = vpack.c.b16 %v418, %v417
  %v560 = vpack.c.b16 %v420, %v419
  %v561 = vpack.c.b16 %v422, %v421
  %v562 = vpack.c.b16 %v424, %v423
  %v563 = vpack.c.b16 %v426, %v425
  %v564 = vpack.c.b16 %v428, %v427
  %v565 = vpack.c.b16 %v430, %v429
  %v566 = vpack.c.b16 %v432, %v431
  %v567 = vpack.c.b16 %v434, %v433
  %v568 = vpack.c.b16 %v436, %v435
  %v569 = vpack.c.b16 %v438, %v437
  %v570 = vpack.c.b16 %v440, %v439
  %v571 = vpack.c.b16 %v442, %v441
  %v572 = vpack.c.b16 %v444, %v443
  %v573 = vpack.c.b16 %v446, %v445
  %v574 = vpack.c.b16 %v448, %v447
  %v575 = vpack.c.b16 %v450, %v449
  %v576 = vpack.c.b16 %v452, %v451
  %v577 = vpack.c.b16 %v454, %v453
  %v578 = vpack.c.b16 %v456, %v455
  %v579 = vpack.c.b16 %v458, %v457
  %v580 = vpack.c.b16 %v460, %v459
  %v581 = vpack.c.b16 %v462, %v461
  %v582 = vpack.c.b16 %v464, %v463
  %v583 = vpack.c.b16 %v466, %v465
  %v584 = vpack.c.b16 %v468, %v467
  %v585 = vpack.c.b16 %v470, %v469
  %v586 = vpack.c.b16 %v472, %v471
  %v587 = vpack.c.b16 %v474, %v473
  %v588 = vpack.c.b16 %v476, %v475
  %v589 = vpack.c.b16 %v478, %v477
  %v590 = vpack.c.b16 %v480, %v479
  %v591 = vpack.c.b16 %v482, %v481
  %v592 = vpack.c.b16 %v484, %v483
  %v593 = vpack.c.b16 %v486, %v485
  %v594 = vpack.c.b16 %v488, %v487
  %v595 = vpack.c.b16 %v490, %v489
  %v596 = vpack.c.b16 %v492, %v491
  %v597 = vpack.c.b16 %v494, %v493
  %v598 = vpack.c.b16 %v496, %v495
  %v599 = vpack.c.b16 %v498, %v497
  %v600 = vpack.c.b16 %v500, %v499
  %v601 = vpack.c.b16 %v502, %v501
  %v602 = vpack.c.b16 %v504, %v503
  %v603 = vpack.c.b16 %v506, %v505
  %v604 = vpack.c.b16 %v508, %v507
  %v605 = vpack.c.b16 %v510, %v509
  %v606 = vpack.c.b16 %v512, %v511
  %v607 = vpack.c.b16 %v514, %v513
  %v608 = vpack.c.b16 %v516, %v515
  %v609 = vpack.c.b16 %v518, %v517
  %v610 = vpack.c.b16 %v520, %v519
  %v611 = vpack.c.b16 %v522, %v521
  %v612 = vpack.c.b16 %v524, %v523
  %v613 = vpack.c.b16 %v526, %v525
  %v614 = vpack.c.b16 %v528, %v527
  %v615 = vpack.c.b16 %v530, %v529
  %v616 = vpack.c.b16 %v532, %v531
  %v617 = vpack.c.b16 %v534, %v533
  %v618 = vpack.c.b16 %v536, %v535
  %v619 = vpack.c.b16 %v538, %v537
  %v620 = vpack.c.b16 %v540, %v539
  %v621 = vpack.c.b16 %v542, %v541
  %v622 = vpack.c.b16 %v544, %v543
  %v623 = vpack.c.b16 %v546, %v545
  %v624 = vpack.c.b16 %v548, %v547
  %v625 = vpack.c.b16 %v550, %v549
  %v626 = vpack.c.b16 %v552, %v551
  %v627 = vpack.c.b16 %v554, %v553
  %v628 = vpack.c.b16 %v556, %v555
  %701 = vmatpush.bf16.msra.mxu0 %v564
  %702 = vmatpush.bf16.msra.mxu0 %v563
  %703 = vmatpush.bf16.msra.mxu0 %v562
  %704 = vmatpush.bf16.msra.mxu0 %v561
  %705 = vmatpush.bf16.msra.mxu0 %v560
  %706 = vmatpush.bf16.msra.mxu0 %v559
  %707 = vmatpush.bf16.msra.mxu0 %v558
  %708 = vmatpush.bf16.msra.mxu0 %v557
  %709 = vmatmul.bf16.gmra.mxu0 %v233
  %v710 = vpop.f32.mrf.mxu0
  %v711 = vadd.f32 0.0, %v710
  %v712 = vpop.f32.mrf.mxu0
  %v713 = vadd.f32 0.0, %v712
  %714 = vmatmul.bf16.gmra.mxu0 %v242
  %v715 = vpop.f32.mrf.mxu0
  %v716 = vadd.f32 0.0, %v715
  %v717 = vpop.f32.mrf.mxu0
  %v718 = vadd.f32 0.0, %v717
  %719 = vdwg.mxu0
  %720 = vmatpush.bf16.msra.mxu0 %v572
  %721 = vmatpush.bf16.msra.mxu0 %v571
  %722 = vmatpush.bf16.msra.mxu0 %v570
  %723 = vmatpush.bf16.msra.mxu0 %v569
  %724 = vmatpush.bf16.msra.mxu0 %v568
  %725 = vmatpush.bf16.msra.mxu0 %v567
  %726 = vmatpush.bf16.msra.mxu0 %v566
  %727 = vmatpush.bf16.msra.mxu0 %v565
  %728 = vmatmul.bf16.gmra.mxu0 %v234
  %v729 = vpop.f32.mrf.mxu0
  %v730 = vadd.f32 %v711, %v729
  %v731 = vpop.f32.mrf.mxu0
  %v732 = vadd.f32 %v713, %v731
  %733 = vmatmul.bf16.gmra.mxu0 %v243
  %v734 = vpop.f32.mrf.mxu0
  %v735 = vadd.f32 %v716, %v734
  %v736 = vpop.f32.mrf.mxu0
  %v737 = vadd.f32 %v718, %v736
  %738 = vdwg.mxu0
  %739 = vmatpush.bf16.msra.mxu0 %v580
  %740 = vmatpush.bf16.msra.mxu0 %v579
  %741 = vmatpush.bf16.msra.mxu0 %v578
  %742 = vmatpush.bf16.msra.mxu0 %v577
  %743 = vmatpush.bf16.msra.mxu0 %v576
  %744 = vmatpush.bf16.msra.mxu0 %v575
  %745 = vmatpush.bf16.msra.mxu0 %v574
  %746 = vmatpush.bf16.msra.mxu0 %v573
  %747 = vmatmul.bf16.gmra.mxu0 %v235
  %v748 = vpop.f32.mrf.mxu0
  %v749 = vadd.f32 %v730, %v748
  %v750 = vpop.f32.mrf.mxu0
  %v751 = vadd.f32 %v732, %v750
  %752 = vmatmul.bf16.gmra.mxu0 %v244
  %v753 = vpop.f32.mrf.mxu0
  %v754 = vadd.f32 %v735, %v753
  %v755 = vpop.f32.mrf.mxu0
  %v756 = vadd.f32 %v737, %v755
  %757 = vdwg.mxu0
  %758 = vmatpush.bf16.msra.mxu0 %v588
  %759 = vmatpush.bf16.msra.mxu0 %v587
  %760 = vmatpush.bf16.msra.mxu0 %v586
  %761 = vmatpush.bf16.msra.mxu0 %v585
  %762 = vmatpush.bf16.msra.mxu0 %v584
  %763 = vmatpush.bf16.msra.mxu0 %v583
  %764 = vmatpush.bf16.msra.mxu0 %v582
  %765 = vmatpush.bf16.msra.mxu0 %v581
  %766 = vmatmul.bf16.gmra.mxu0 %v236
  %v767 = vpop.f32.mrf.mxu0
  %v768 = vadd.f32 %v749, %v767
  %v769 = vpop.f32.mrf.mxu0
  %v770 = vadd.f32 %v751, %v769
  %771 = vmatmul.bf16.gmra.mxu0 %v245
  %v772 = vpop.f32.mrf.mxu0
  %v773 = vadd.f32 %v754, %v772
  %v774 = vpop.f32.mrf.mxu0
  %v775 = vadd.f32 %v756, %v774
  %776 = vdwg.mxu0
  %777 = vmatpush.bf16.msra.mxu0 %v596
  %778 = vmatpush.bf16.msra.mxu0 %v595
  %779 = vmatpush.bf16.msra.mxu0 %v594
  %780 = vmatpush.bf16.msra.mxu0 %v593
  %781 = vmatpush.bf16.msra.mxu0 %v592
  %782 = vmatpush.bf16.msra.mxu0 %v591
  %783 = vmatpush.bf16.msra.mxu0 %v590
  %784 = vmatpush.bf16.msra.mxu0 %v589
  %785 = vmatmul.bf16.gmra.mxu0 %v237
  %v786 = vpop.f32.mrf.mxu0
  %v787 = vadd.f32 %v768, %v786
  %v788 = vpop.f32.mrf.mxu0
  %v789 = vadd.f32 %v770, %v788
  %790 = vmatmul.bf16.gmra.mxu0 %v246
  %v791 = vpop.f32.mrf.mxu0
  %v792 = vadd.f32 %v773, %v791
  %v793 = vpop.f32.mrf.mxu0
  %v794 = vadd.f32 %v775, %v793
  %795 = vdwg.mxu0
  %796 = vmatpush.bf16.msra.mxu0 %v604
  %797 = vmatpush.bf16.msra.mxu0 %v603
  %798 = vmatpush.bf16.msra.mxu0 %v602
  %799 = vmatpush.bf16.msra.mxu0 %v601
  %800 = vmatpush.bf16.msra.mxu0 %v600
  %801 = vmatpush.bf16.msra.mxu0 %v599
  %802 = vmatpush.bf16.msra.mxu0 %v598
  %803 = vmatpush.bf16.msra.mxu0 %v597
  %804 = vmatmul.bf16.gmra.mxu0 %v238
  %v805 = vpop.f32.mrf.mxu0
  %v806 = vadd.f32 %v787, %v805
  %v807 = vpop.f32.mrf.mxu0
  %v808 = vadd.f32 %v789, %v807
  %809 = vmatmul.bf16.gmra.mxu0 %v247
  %v810 = vpop.f32.mrf.mxu0
  %v811 = vadd.f32 %v792, %v810
  %v812 = vpop.f32.mrf.mxu0
  %v813 = vadd.f32 %v794, %v812
  %814 = vdwg.mxu0
  %815 = vmatpush.bf16.msra.mxu0 %v612
  %816 = vmatpush.bf16.msra.mxu0 %v611
  %817 = vmatpush.bf16.msra.mxu0 %v610
  %818 = vmatpush.bf16.msra.mxu0 %v609
  %819 = vmatpush.bf16.msra.mxu0 %v608
  %820 = vmatpush.bf16.msra.mxu0 %v607
  %821 = vmatpush.bf16.msra.mxu0 %v606
  %822 = vmatpush.bf16.msra.mxu0 %v605
  %823 = vmatmul.bf16.gmra.mxu0 %v239
  %v824 = vpop.f32.mrf.mxu0
  %v825 = vadd.f32 %v806, %v824
  %v826 = vpop.f32.mrf.mxu0
  %v827 = vadd.f32 %v808, %v826
  %828 = vmatmul.bf16.gmra.mxu0 %v248
  %v829 = vpop.f32.mrf.mxu0
  %v830 = vadd.f32 %v811, %v829
  %v831 = vpop.f32.mrf.mxu0
  %v832 = vadd.f32 %v813, %v831
  %833 = vdwg.mxu0
  %834 = vmatpush.bf16.msra.mxu0 %v620
  %835 = vmatpush.bf16.msra.mxu0 %v619
  %836 = vmatpush.bf16.msra.mxu0 %v618
  %837 = vmatpush.bf16.msra.mxu0 %v617
  %838 = vmatpush.bf16.msra.mxu0 %v616
  %839 = vmatpush.bf16.msra.mxu0 %v615
  %840 = vmatpush.bf16.msra.mxu0 %v614
  %841 = vmatpush.bf16.msra.mxu0 %v613
  %842 = vmatmul.bf16.gmra.mxu0 %v240
  %v843 = vpop.f32.mrf.mxu0
  %v844 = vadd.f32 %v825, %v843
  %v845 = vpop.f32.mrf.mxu0
  %v846 = vadd.f32 %v827, %v845
  %847 = vmatmul.bf16.gmra.mxu0 %v249
  %v848 = vpop.f32.mrf.mxu0
  %v849 = vadd.f32 %v830, %v848
  %v850 = vpop.f32.mrf.mxu0
  %v851 = vadd.f32 %v832, %v850
  %852 = vdwg.mxu0
  %853 = vmatpush.bf16.msra.mxu0 %v628
  %854 = vmatpush.bf16.msra.mxu0 %v627
  %855 = vmatpush.bf16.msra.mxu0 %v626
  %856 = vmatpush.bf16.msra.mxu0 %v625
  %857 = vmatpush.bf16.msra.mxu0 %v624
  %858 = vmatpush.bf16.msra.mxu0 %v623
  %859 = vmatpush.bf16.msra.mxu0 %v622
  %860 = vmatpush.bf16.msra.mxu0 %v621
  %861 = vmatmul.bf16.gmra.mxu0 %v241
  %v862 = vpop.f32.mrf.mxu0
  %v863 = vadd.f32 %v844, %v862
  %v864 = vpop.f32.mrf.mxu0
  %v865 = vadd.f32 %v846, %v864
  %866 = vmatmul.bf16.gmra.mxu0 %v250
  %v867 = vpop.f32.mrf.mxu0
  %v868 = vadd.f32 %v849, %v867
  %v869 = vpop.f32.mrf.mxu0
  %v870 = vadd.f32 %v851, %v869
  %871 = vdwg.mxu0
  %872 = vst [vmem:[%s2] sm:$0xff] %v863
  %873 = vst [vmem:[%s2 + $0x8] sm:$0xff] %v865
  %874 = vst [vmem:[%s2 + $0x10] sm:$0xff] %v868
  %875 = vst [vmem:[%s2 + $0x18] sm:$0xff] %v870
  %v876 = vadd.f32 %v863, %v865
  %v877 = vadd.f32 %v876, %v868
  %v878 = vadd.f32 %v877, %v870
  %v879 = vrot.slane %v878, 4
  %v880 = vadd.f32 %v878, %v879
  %v881 = vrot.slane %v880, 2
  %v882 = vadd.f32 %v880, %v881
  %v883 = vrot.slane %v882, 1
  %v884 = vadd.f32 %v882, %v883
  %v885 = vmul.f32 %v863, %v863
  %v886 = vmul.f32 %v865, %v865
  %v887 = vmul.f32 %v868, %v868
  %v888 = vmul.f32 %v870, %v870
  %v889 = vadd.f32 %v885, %v886
  %v890 = vadd.f32 %v889, %v887
  %v891 = vadd.f32 %v890, %v888
  %v892 = vrot.slane %v891, 4
  %v893 = vadd.f32 %v891, %v892
  %v894 = vrot.slane %v893, 2
  %v895 = vadd.f32 %v893, %v894
  %v896 = vrot.slane %v895, 1
  %v897 = vadd.f32 %v895, %v896
  %vm898 = vcmask 1040384
  %v899 = vsel %vm898, %v884, %v897
  %900 = vst [vmem:[%s3] sm:$0x3] %v899
  // Predicated region
  $region10: #{encoder_forward.71} parent=0 // pred_check
    _
  $region11: #{encoder_forward.71} parent=0 // pred_check_branch
    %902 = sbr.rel (0) target = $region13
  $region12: #{encoder_forward.71} parent=0 // pred_region
    _
  $region13: #{encoder_forward.71} parent=0 // pred_fallthru
    _
  // Predicated region
  $region14: #{encoder_forward.71} parent=0 // pred_check
    _
  $region15: #{encoder_forward.71} parent=0 // pred_check_branch
    %904 = sbr.rel (0) target = $region17
  $region16: #{encoder_forward.71} parent=0 // pred_region
    _
  $region17: #{encoder_forward.71} parent=0 // pred_fallthru
    _
  // Predicated region
  $region18: #{encoder_forward.71} parent=0 // pred_check
    _
  $region19: #{encoder_forward.71} parent=0 // pred_check_branch
    %906 = sbr.rel (0) target = $region21
  $region20: #{encoder_forward.71} parent=0 // pred_region
    _
  $region21: #{encoder_forward.71} parent=0 // pred_fallthru
    _
  // Predicated region
  $region22: #{encoder_forward.71} parent=0 // pred_check
    _
  $region23: #{encoder_forward.71} parent=0 // pred_check_branch
    %908 = sbr.rel (0) target = $region25
  $region24: #{encoder_forward.71} parent=0 // pred_region
    _
  $region25: #{encoder_forward.71} parent=0 // pred_fallthru
    _

// kernel: encoder_forward.75
$region0: #{encoder_forward.75}
  #allocation0 [shape = 'u32[]', space=smem, size = 0x4, offset = 0x4, fixed_abs, tag = 'smem constant byte address 0x4 - core index']
  #allocation1 [shape = 'u32[72,128]{1,0:T(1,128)}', space=vmem, size = 0x9000, scoped, tag = 'internal scratch']
  %s0 = inlined_call_operand.vmem [shape: bf16[32,128], index: 0, kind: input, shape index: {}]
  %s1 = inlined_call_operand.vmem [shape: bf16[128,128], index: 1, kind: input, shape index: {}]
  %s2 = inlined_call_operand.vmem [shape: f32[32,128], index: 2, kind: output, shape index: {0}]
  %s3 = inlined_call_operand.hbm [shape: f32[32,128], index: 3, kind: output, shape index: {1}]
  %4 = xla_tuple %s2, %s3
  %s5 = sld [smem:[#allocation0]]
  $region26: #{encoder_forward.75} parent=0
    _
  %s7 = ssub.s32 1, %s5
  %s8 = scalar_select 0, %s7, %s5
  $region1: #{encoder_forward.75} parent=0
    #allocation2 [shape = 'u8[16384]{0}', space=vmem, size = 0x4000, scoped, tag = 'output window, operand 1, single buffered']
    #allocation3 [shape = 's32[1]{0}', space=sflag, size = 0x4, scoped, tag = 'scoped memory for encoder_forward.75']
    %9 = vsyncpa [#allocation3], 0
    // Predicated region
    $region2: #{encoder_forward.75} parent=1 // pred_check
      _
    $region3: #{encoder_forward.75} parent=1 // pred_check_branch
      %11 = sbr.rel (0) target = $region5
    $region4: #{encoder_forward.75} parent=1 // pred_region
      _
    $region5: #{encoder_forward.75} parent=1 // pred_fallthru
      _
    // Predicated region
    $region6: #{encoder_forward.75} parent=1 // pred_check
      _
    $region7: #{encoder_forward.75} parent=1 // pred_check_branch
      %13 = sbr.rel (0) target = $region9
    $region8: #{encoder_forward.75} parent=1 // pred_region
      _
    $region9: #{encoder_forward.75} parent=1 // pred_fallthru
      _
    %v14 = vld [vmem:[%s0] sm:$0xf]
    %v15 = vld [vmem:[%s0 + $0x4] sm:$0xf]
    %v16 = vld [vmem:[%s0 + $0x8] sm:$0xf]
    %v17 = vld [vmem:[%s0 + $0xc] sm:$0xf]
    %v18 = vld [vmem:[%s1] sm:$0xf]
    %v19 = vld [vmem:[%s1 + $0x4] sm:$0xf]
    %v20 = vld [vmem:[%s1 + $0x8] sm:$0xf]
    %v21 = vld [vmem:[%s1 + $0xc] sm:$0xf]
    %v22 = vld [vmem:[%s1 + $0x10] sm:$0xf]
    %v23 = vld [vmem:[%s1 + $0x14] sm:$0xf]
    %v24 = vld [vmem:[%s1 + $0x18] sm:$0xf]
    %v25 = vld [vmem:[%s1 + $0x1c] sm:$0xf]
    %v26 = vld [vmem:[%s1 + $0x20] sm:$0xf]
    %v27 = vld [vmem:[%s1 + $0x24] sm:$0xf]
    %v28 = vld [vmem:[%s1 + $0x28] sm:$0xf]
    %v29 = vld [vmem:[%s1 + $0x2c] sm:$0xf]
    %v30 = vld [vmem:[%s1 + $0x30] sm:$0xf]
    %v31 = vld [vmem:[%s1 + $0x34] sm:$0xf]
    %v32 = vld [vmem:[%s1 + $0x38] sm:$0xf]
    %v33 = vld [vmem:[%s1 + $0x3c] sm:$0xf]
    %v38 = vunpack.c.l.b16 %v14
    %v39 = vunpack.c.l.b16 %v15
    %v40 = vunpack.c.l.b16 %v16
    %v41 = vunpack.c.l.b16 %v17
    %v42 = vpack.c.b16 %v39, %v38
    %v43 = vpack.c.b16 %v41, %v40
    %v62 = vunpack.c.l.b16 %v18
    %v63 = vunpack.c.l.b16 %v19
    %v64 = vunpack.c.l.b16 %v20
    %v65 = vunpack.c.l.b16 %v21
    %v66 = vunpack.c.l.b16 %v22
    %v67 = vunpack.c.l.b16 %v23
    %v68 = vunpack.c.l.b16 %v24
    %v69 = vunpack.c.l.b16 %v25
    %v70 = vunpack.c.l.b16 %v26
    %v71 = vunpack.c.l.b16 %v27
    %v72 = vunpack.c.l.b16 %v28
    %v73 = vunpack.c.l.b16 %v29
    %v74 = vunpack.c.l.b16 %v30
    %v75 = vunpack.c.l.b16 %v31
    %v76 = vunpack.c.l.b16 %v32
    %v77 = vunpack.c.l.b16 %v33
    %v78 = vpack.c.b16 %v63, %v62
    %v79 = vpack.c.b16 %v65, %v64
    %v80 = vpack.c.b16 %v67, %v66
    %v81 = vpack.c.b16 %v69, %v68
    %v82 = vpack.c.b16 %v71, %v70
    %v83 = vpack.c.b16 %v73, %v72
    %v84 = vpack.c.b16 %v75, %v74
    %v85 = vpack.c.b16 %v77, %v76
    %94 = vmatpush.bf16.xpose.msra.mxu0 %v85
    %95 = vmatpush.bf16.xpose.msra.mxu0 %v84
    %96 = vmatpush.bf16.xpose.msra.mxu0 %v83
    %97 = vmatpush.bf16.xpose.msra.mxu0 %v82
    %98 = vmatpush.bf16.xpose.msra.mxu0 %v81
    %99 = vmatpush.bf16.xpose.msra.mxu0 %v80
    %100 = vmatpush.bf16.xpose.msra.mxu0 %v79
    %101 = vmatpush.bf16.xpose.msra.mxu0 %v78
    %102 = vmatmul.bf16.gmra.mxu0 %v42
    %v103 = vpop.f32.mrf.mxu0
    %v104 = vadd.f32 0.0, %v103
    %v105 = vpop.f32.mrf.mxu0
    %v106 = vadd.f32 0.0, %v105
    %107 = vmatmul.bf16.gmra.mxu0 %v43
    %v108 = vpop.f32.mrf.mxu0
    %v109 = vadd.f32 0.0, %v108
    %v110 = vpop.f32.mrf.mxu0
    %v111 = vadd.f32 0.0, %v110
    %112 = vdwg.mxu0
    %v113 = vlaneseq
    %v114 = vand.u32 %v113, 127
    %vm115 = vcmp.lt.s32.totalorder %v114, 64
    %v116 = vsel %vm115, %v104, -1e+30
    %v117 = vsel %vm115, %v106, -1e+30
    %v118 = vsel %vm115, %v109, -1e+30
    %v119 = vsel %vm115, %v111, -1e+30
    %120 = vmax.xlane.f32.xlu0 %v116
    %v121 = vpop.xlane.xlu0 %120
    %122 = vmax.xlane.f32.xlu0 %v117
    %v123 = vpop.xlane.xlu0 %122
    %124 = vmax.xlane.f32.xlu0 %v118
    %v125 = vpop.xlane.xlu0 %124
    %126 = vmax.xlane.f32.xlu0 %v119
    %v127 = vpop.xlane.xlu0 %126
    %v128 = vsub.f32 %v116, %v121
    %v129 = vsub.f32 %v117, %v123
    %v130 = vsub.f32 %v118, %v125
    %v131 = vsub.f32 %v119, %v127
    %v132 = vmul.f32 %v128, 1.442695
    %v133 = vpow.pop %v132
    %v134 = vmul.f32 %v129, 1.442695
    %v135 = vpow.pop %v134
    %v136 = vmul.f32 %v130, 1.442695
    %v137 = vpow.pop %v136
    %v138 = vmul.f32 %v131, 1.442695
    %v139 = vpow.pop %v138
    %140 = vadd.xlane.f32.xlu0 %v133
    %v141 = vpop.xlane.xlu0 %140
    %142 = vadd.xlane.f32.xlu0 %v135
    %v143 = vpop.xlane.xlu0 %142
    %144 = vadd.xlane.f32.xlu0 %v137
    %v145 = vpop.xlane.xlu0 %144
    %146 = vadd.xlane.f32.xlu0 %v139
    %v147 = vpop.xlane.xlu0 %146
    %v148 = vrcp.pop %v141
    %v149 = vrcp.pop %v143
    %v150 = vrcp.pop %v145
    %v151 = vrcp.pop %v147
    %v152 = vmul.f32 %v133, %v148
    %v153 = vmul.f32 %v135, %v149
    %v154 = vmul.f32 %v137, %v150
    %v155 = vmul.f32 %v139, %v151
    %v156 = vsub.f32 %v152, 0.0025
    %v157 = vsub.f32 %v153, 0.0025
    %v158 = vsub.f32 %v154, 0.0025
    %v159 = vsub.f32 %v155, 0.0025
    %v160 = vmax.f32 %v156, 0.0
    %v161 = vmax.f32 %v157, 0.0
    %v162 = vmax.f32 %v158, 0.0
    %v163 = vmax.f32 %v159, 0.0
    %v164 = vmul.f32 %v160, %v152
    %v165 = vmul.f32 %v161, %v153
    %v166 = vmul.f32 %v162, %v154
    %v167 = vmul.f32 %v163, %v155
    %v168 = vand.u32 2147483647, %v156
    %v169 = vand.u32 2147483647, %v157
    %v170 = vand.u32 2147483647, %v158
    %v171 = vand.u32 2147483647, %v159
    %v172 = vadd.f32 %v168, 1e-12
    %v173 = vadd.f32 %v169, 1e-12
    %v174 = vadd.f32 %v170, 1e-12
    %v175 = vadd.f32 %v171, 1e-12
    %v176 = vrcp.pop %v172
    %v177 = vmul.f32 %v172, %v176
    %v178 = vsub.f32 1.0, %v177
    %v179 = vmul.f32 %v176, %v178
    %v180 = vadd.f32 %v176, %v179
    %vm181 = vweird.f32 %v172
    %vm182 = vweird.f32 %v176
    %vm183 = vmor %vm181, %vm182
    %v184 = vsel %vm183, %v176, %v180
    %v185 = vand.u32 2147483647, %v172
    %vm186 = vcmp.eq.f32.partialorder %v185, 8.507059e+37
    %v187 = vand.u32 %v172, 2147483648
    %v188 = vor.u32 1.1754944e-38, %v187
    %v189 = vsel %vm186, %v188, %v184
    %v190 = vmul.f32 %v164, %v189
    %v191 = vrcp.pop %v173
    %v192 = vmul.f32 %v173, %v191
    %v193 = vsub.f32 1.0, %v192
    %v194 = vmul.f32 %v191, %v193
    %v195 = vadd.f32 %v191, %v194
    %vm196 = vweird.f32 %v173
    %vm197 = vweird.f32 %v191
    %vm198 = vmor %vm196, %vm197
    %v199 = vsel %vm198, %v191, %v195
    %v200 = vand.u32 2147483647, %v173
    %vm201 = vcmp.eq.f32.partialorder %v200, 8.507059e+37
    %v202 = vand.u32 %v173, 2147483648
    %v203 = vor.u32 1.1754944e-38, %v202
    %v204 = vsel %vm201, %v203, %v199
    %v205 = vmul.f32 %v165, %v204
    %v206 = vrcp.pop %v174
    %v207 = vmul.f32 %v174, %v206
    %v208 = vsub.f32 1.0, %v207
    %v209 = vmul.f32 %v206, %v208
    %v210 = vadd.f32 %v206, %v209
    %vm211 = vweird.f32 %v174
    %vm212 = vweird.f32 %v206
    %vm213 = vmor %vm211, %vm212
    %v214 = vsel %vm213, %v206, %v210
    %v215 = vand.u32 2147483647, %v174
    %vm216 = vcmp.eq.f32.partialorder %v215, 8.507059e+37
    %v217 = vand.u32 %v174, 2147483648
    %v218 = vor.u32 1.1754944e-38, %v217
    %v219 = vsel %vm216, %v218, %v214
    %v220 = vmul.f32 %v166, %v219
    %v221 = vrcp.pop %v175
    %v222 = vmul.f32 %v175, %v221
    %v223 = vsub.f32 1.0, %v222
    %v224 = vmul.f32 %v221, %v223
    %v225 = vadd.f32 %v221, %v224
    %vm226 = vweird.f32 %v175
    %vm227 = vweird.f32 %v221
    %vm228 = vmor %vm226, %vm227
    %v229 = vsel %vm228, %v221, %v225
    %v230 = vand.u32 2147483647, %v175
    %vm231 = vcmp.eq.f32.partialorder %v230, 8.507059e+37
    %v232 = vand.u32 %v175, 2147483648
    %v233 = vor.u32 1.1754944e-38, %v232
    %v234 = vsel %vm231, %v233, %v229
    %v235 = vmul.f32 %v167, %v234
    %v236 = vand.u32 2147483647, %v190
    %v237 = vand.u32 2147483647, %v205
    %v238 = vand.u32 2147483647, %v220
    %v239 = vand.u32 2147483647, %v235
    %240 = vadd.xlane.f32.xlu0 %v236
    %v241 = vpop.xlane.xlu0 %240
    %242 = vadd.xlane.f32.xlu0 %v237
    %v243 = vpop.xlane.xlu0 %242
    %244 = vadd.xlane.f32.xlu0 %v238
    %v245 = vpop.xlane.xlu0 %244
    %246 = vadd.xlane.f32.xlu0 %v239
    %v247 = vpop.xlane.xlu0 %246
    %v248 = vmax.f32 %v241, 1e-12
    %v249 = vmax.f32 %v243, 1e-12
    %v250 = vmax.f32 %v245, 1e-12
    %v251 = vmax.f32 %v247, 1e-12
    %v252 = vrcp.pop %v248
    %v253 = vrcp.pop %v249
    %v254 = vrcp.pop %v250
    %v255 = vrcp.pop %v251
    %v256 = vmul.f32 %v190, %v252
    %v257 = vmul.f32 %v205, %v253
    %v258 = vmul.f32 %v220, %v254
    %v259 = vmul.f32 %v235, %v255
    %v260 = vpack.c.bf16 %v257, %v256
    %v261 = vpack.c.bf16 %v259, %v258
    %262 = vmatpush.bf16.msra.mxu0 %v85
    %263 = vmatpush.bf16.msra.mxu0 %v84
    %264 = vmatpush.bf16.msra.mxu0 %v83
    %265 = vmatpush.bf16.msra.mxu0 %v82
    %266 = vmatpush.bf16.msra.mxu0 %v81
    %267 = vmatpush.bf16.msra.mxu0 %v80
    %268 = vmatpush.bf16.msra.mxu0 %v79
    %269 = vmatpush.bf16.msra.mxu0 %v78
    %270 = vmatmul.bf16.gmra.mxu0 %v260
    %v271 = vpop.f32.mrf.mxu0
    %v272 = vadd.f32 0.0, %v271
    %v273 = vpop.f32.mrf.mxu0
    %v274 = vadd.f32 0.0, %v273
    %275 = vmatmul.bf16.gmra.mxu0 %v261
    %v276 = vpop.f32.mrf.mxu0
    %v277 = vadd.f32 0.0, %v276
    %v278 = vpop.f32.mrf.mxu0
    %v279 = vadd.f32 0.0, %v278
    %280 = vdwg.mxu0
    %281 = vst [vmem:[%s2] sm:$0xff] %v272
    %282 = vst [vmem:[%s2 + $0x8] sm:$0xff] %v274
    %283 = vst [vmem:[%s2 + $0x10] sm:$0xff] %v277
    %284 = vst [vmem:[%s2 + $0x18] sm:$0xff] %v279
    %285 = vst [vmem:[#allocation2] sm:$0xff] %v256
    %286 = vst [vmem:[#allocation2 + $0x8] sm:$0xff] %v257
    %287 = vst [vmem:[#allocation2 + $0x10] sm:$0xff] %v258
    %288 = vst [vmem:[#allocation2 + $0x18] sm:$0xff] %v259
    // Predicated region
    $region10: #{encoder_forward.75} parent=1 // pred_check
      _
    $region11: #{encoder_forward.75} parent=1 // pred_check_branch
      %290 = sbr.rel (0) target = $region13
    $region12: #{encoder_forward.75} parent=1 // pred_region
      _
    $region13: #{encoder_forward.75} parent=1 // pred_fallthru
      _
    // Predicated region
    $region14: #{encoder_forward.75} parent=1 // pred_check
      _
    $region15: #{encoder_forward.75} parent=1 // pred_check_branch
      %292 = sbr.rel (0) target = $region17
    $region16: #{encoder_forward.75} parent=1 // pred_region
      %294 = vsyncadd [#allocation3], 0
      %s295 = sshll.u32 [#allocation2], 4
      %s296 = int_to_ptr.vmem [resolvable:$true] %s295
      %s297 = sshll.u32 %s3, 4
      %s298 = int_to_ptr.hbm [resolvable:$true] %s297
      %303 = dma.vmem_to_hbm [thread:$0]  %s296, 512, %s298, [#allocation3], 128, 128, 8
    $region17: #{encoder_forward.75} parent=1 // pred_fallthru
      _
    // Predicated region
    $region18: #{encoder_forward.75} parent=1 // pred_check
      _
    $region19: #{encoder_forward.75} parent=1 // pred_check_branch
      %305 = sbr.rel (0) target = $region21
    $region20: #{encoder_forward.75} parent=1 // pred_region
      _
    $region21: #{encoder_forward.75} parent=1 // pred_fallthru
      _
    // Predicated region
    $region22: #{encoder_forward.75} parent=1 // pred_check
      _
    $region23: #{encoder_forward.75} parent=1 // pred_check_branch
      %307 = sbr.rel (0) target = $region25
    $region24: #{encoder_forward.75} parent=1 // pred_region
      %309 = dma.done [#allocation3], 512
    $region25: #{encoder_forward.75} parent=1 // pred_fallthru
      _
    %310 = vsyncpa [#allocation3], 1

// kernel: encoder_forward.73
$region0: #{encoder_forward.73}
  #allocation0 [shape = 'u32[]', space=smem, size = 0x4, offset = 0x4, fixed_abs, tag = 'smem constant byte address 0x4 - core index']
  #allocation1 [shape = 'u32[72,128]{1,0:T(1,128)}', space=vmem, size = 0x9000, scoped, tag = 'internal scratch']
  %s0 = inlined_call_operand.vmem [shape: bf16[32,640], index: 0, kind: input, shape index: {}]
  %s1 = inlined_call_operand.vmem [shape: bf16[640,128], index: 1, kind: input, shape index: {}]
  %s2 = inlined_call_operand.vmem [shape: f32[32,128], index: 2, kind: output, shape index: {0}]
  %s3 = inlined_call_operand.vmem [shape: f32[1,2,128], index: 3, kind: output, shape index: {1}]
  %4 = xla_tuple %s2, %s3
  %s5 = sld [smem:[#allocation0]]
  $region26: #{encoder_forward.73} parent=0
    _
  %s7 = ssub.s32 1, %s5
  %s8 = scalar_select 0, %s7, %s5
  // Predicated region
  $region2: #{encoder_forward.73} parent=0 // pred_check
    _
  $region3: #{encoder_forward.73} parent=0 // pred_check_branch
    %10 = sbr.rel (0) target = $region5
  $region4: #{encoder_forward.73} parent=0 // pred_region
    _
  $region5: #{encoder_forward.73} parent=0 // pred_fallthru
    _
  // Predicated region
  $region6: #{encoder_forward.73} parent=0 // pred_check
    _
  $region7: #{encoder_forward.73} parent=0 // pred_check_branch
    %12 = sbr.rel (0) target = $region9
  $region8: #{encoder_forward.73} parent=0 // pred_region
    _
  $region9: #{encoder_forward.73} parent=0 // pred_fallthru
    _
  %v13 = vld [vmem:[%s0] sm:$0xff]
  %v14 = vld [vmem:[%s0 + $0x8] sm:$0xff]
  %v15 = vld [vmem:[%s0 + $0x10] sm:$0xf]
  %v16 = vld [vmem:[%s0 + $0x14] sm:$0xff]
  %v17 = vld [vmem:[%s0 + $0x1c] sm:$0xff]
  %v18 = vld [vmem:[%s0 + $0x24] sm:$0xf]
  %v19 = vld [vmem:[%s0 + $0x28] sm:$0xff]
  %v20 = vld [vmem:[%s0 + $0x30] sm:$0xff]
  %v21 = vld [vmem:[%s0 + $0x38] sm:$0xf]
  %v22 = vld [vmem:[%s0 + $0x3c] sm:$0xff]
  %v23 = vld [vmem:[%s0 + $0x44] sm:$0xff]
  %v24 = vld [vmem:[%s0 + $0x4c] sm:$0xf]
  %v25 = vld [vmem:[%s1] sm:$0xf]
  %v26 = vld [vmem:[%s1 + $0x4] sm:$0xf]
  %v27 = vld [vmem:[%s1 + $0x8] sm:$0xf]
  %v28 = vld [vmem:[%s1 + $0xc] sm:$0xf]
  %v29 = vld [vmem:[%s1 + $0x10] sm:$0xf]
  %v30 = vld [vmem:[%s1 + $0x14] sm:$0xf]
  %v31 = vld [vmem:[%s1 + $0x18] sm:$0xf]
  %v32 = vld [vmem:[%s1 + $0x1c] sm:$0xf]
  %v33 = vld [vmem:[%s1 + $0x20] sm:$0xf]
  %v34 = vld [vmem:[%s1 + $0x24] sm:$0xf]
  %v35 = vld [vmem:[%s1 + $0x28] sm:$0xf]
  %v36 = vld [vmem:[%s1 + $0x2c] sm:$0xf]
  %v37 = vld [vmem:[%s1 + $0x30] sm:$0xf]
  %v38 = vld [vmem:[%s1 + $0x34] sm:$0xf]
  %v39 = vld [vmem:[%s1 + $0x38] sm:$0xf]
  %v40 = vld [vmem:[%s1 + $0x3c] sm:$0xf]
  %v41 = vld [vmem:[%s1 + $0x40] sm:$0xf]
  %v42 = vld [vmem:[%s1 + $0x44] sm:$0xf]
  %v43 = vld [vmem:[%s1 + $0x48] sm:$0xf]
  %v44 = vld [vmem:[%s1 + $0x4c] sm:$0xf]
  %v45 = vld [vmem:[%s1 + $0x50] sm:$0xf]
  %v46 = vld [vmem:[%s1 + $0x54] sm:$0xf]
  %v47 = vld [vmem:[%s1 + $0x58] sm:$0xf]
  %v48 = vld [vmem:[%s1 + $0x5c] sm:$0xf]
  %v49 = vld [vmem:[%s1 + $0x60] sm:$0xf]
  %v50 = vld [vmem:[%s1 + $0x64] sm:$0xf]
  %v51 = vld [vmem:[%s1 + $0x68] sm:$0xf]
  %v52 = vld [vmem:[%s1 + $0x6c] sm:$0xf]
  %v53 = vld [vmem:[%s1 + $0x70] sm:$0xf]
  %v54 = vld [vmem:[%s1 + $0x74] sm:$0xf]
  %v55 = vld [vmem:[%s1 + $0x78] sm:$0xf]
  %v56 = vld [vmem:[%s1 + $0x7c] sm:$0xf]
  %v57 = vld [vmem:[%s1 + $0x80] sm:$0xf]
  %v58 = vld [vmem:[%s1 + $0x84] sm:$0xf]
  %v59 = vld [vmem:[%s1 + $0x88] sm:$0xf]
  %v60 = vld [vmem:[%s1 + $0x8c] sm:$0xf]
  %v61 = vld [vmem:[%s1 + $0x90] sm:$0xf]
  %v62 = vld [vmem:[%s1 + $0x94] sm:$0xf]
  %v63 = vld [vmem:[%s1 + $0x98] sm:$0xf]
  %v64 = vld [vmem:[%s1 + $0x9c] sm:$0xf]
  %v65 = vld [vmem:[%s1 + $0xa0] sm:$0xf]
  %v66 = vld [vmem:[%s1 + $0xa4] sm:$0xf]
  %v67 = vld [vmem:[%s1 + $0xa8] sm:$0xf]
  %v68 = vld [vmem:[%s1 + $0xac] sm:$0xf]
  %v69 = vld [vmem:[%s1 + $0xb0] sm:$0xf]
  %v70 = vld [vmem:[%s1 + $0xb4] sm:$0xf]
  %v71 = vld [vmem:[%s1 + $0xb8] sm:$0xf]
  %v72 = vld [vmem:[%s1 + $0xbc] sm:$0xf]
  %v73 = vld [vmem:[%s1 + $0xc0] sm:$0xf]
  %v74 = vld [vmem:[%s1 + $0xc4] sm:$0xf]
  %v75 = vld [vmem:[%s1 + $0xc8] sm:$0xf]
  %v76 = vld [vmem:[%s1 + $0xcc] sm:$0xf]
  %v77 = vld [vmem:[%s1 + $0xd0] sm:$0xf]
  %v78 = vld [vmem:[%s1 + $0xd4] sm:$0xf]
  %v79 = vld [vmem:[%s1 + $0xd8] sm:$0xf]
  %v80 = vld [vmem:[%s1 + $0xdc] sm:$0xf]
  %v81 = vld [vmem:[%s1 + $0xe0] sm:$0xf]
  %v82 = vld [vmem:[%s1 + $0xe4] sm:$0xf]
  %v83 = vld [vmem:[%s1 + $0xe8] sm:$0xf]
  %v84 = vld [vmem:[%s1 + $0xec] sm:$0xf]
  %v85 = vld [vmem:[%s1 + $0xf0] sm:$0xf]
  %v86 = vld [vmem:[%s1 + $0xf4] sm:$0xf]
  %v87 = vld [vmem:[%s1 + $0xf8] sm:$0xf]
  %v88 = vld [vmem:[%s1 + $0xfc] sm:$0xf]
  %v89 = vld [vmem:[%s1 + $0x100] sm:$0xf]
  %v90 = vld [vmem:[%s1 + $0x104] sm:$0xf]
  %v91 = vld [vmem:[%s1 + $0x108] sm:$0xf]
  %v92 = vld [vmem:[%s1 + $0x10c] sm:$0xf]
  %v93 = vld [vmem:[%s1 + $0x110] sm:$0xf]
  %v94 = vld [vmem:[%s1 + $0x114] sm:$0xf]
  %v95 = vld [vmem:[%s1 + $0x118] sm:$0xf]
  %v96 = vld [vmem:[%s1 + $0x11c] sm:$0xf]
  %v97 = vld [vmem:[%s1 + $0x120] sm:$0xf]
  %v98 = vld [vmem:[%s1 + $0x124] sm:$0xf]
  %v99 = vld [vmem:[%s1 + $0x128] sm:$0xf]
  %v100 = vld [vmem:[%s1 + $0x12c] sm:$0xf]
  %v101 = vld [vmem:[%s1 + $0x130] sm:$0xf]
  %v102 = vld [vmem:[%s1 + $0x134] sm:$0xf]
  %v103 = vld [vmem:[%s1 + $0x138] sm:$0xf]
  %v104 = vld [vmem:[%s1 + $0x13c] sm:$0xf]
  %v117 = vunpack.c.l.b16 %v13
  %v118 = vunpack.c.h.b16 %v13
  %v119 = vunpack.c.l.b16 %v14
  %v120 = vunpack.c.h.b16 %v14
  %v121 = vunpack.c.l.b16 %v15
  %v122 = vunpack.c.l.b16 %v16
  %v123 = vunpack.c.h.b16 %v16
  %v124 = vunpack.c.l.b16 %v17
  %v125 = vunpack.c.h.b16 %v17
  %v126 = vunpack.c.l.b16 %v18
  %v127 = vunpack.c.l.b16 %v19
  %v128 = vunpack.c.h.b16 %v19
  %v129 = vunpack.c.l.b16 %v20
  %v130 = vunpack.c.h.b16 %v20
  %v131 = vunpack.c.l.b16 %v21
  %v132 = vunpack.c.l.b16 %v22
  %v133 = vunpack.c.h.b16 %v22
  %v134 = vunpack.c.l.b16 %v23
  %v135 = vunpack.c.h.b16 %v23
  %v136 = vunpack.c.l.b16 %v24
  %v137 = vpack.c.b16 %v122, %v117
  %v138 = vpack.c.b16 %v123, %v118
  %v139 = vpack.c.b16 %v124, %v119
  %v140 = vpack.c.b16 %v125, %v120
  %v141 = vpack.c.b16 %v126, %v121
  %v142 = vpack.c.b16 %v132, %v127
  %v143 = vpack.c.b16 %v133, %v128
  %v144 = vpack.c.b16 %v134, %v129
  %v145 = vpack.c.b16 %v135, %v130
  %v146 = vpack.c.b16 %v136, %v131
  %v237 = vunpack.c.l.b16 %v25
  %v238 = vunpack.c.l.b16 %v26
  %v239 = vunpack.c.l.b16 %v27
  %v240 = vunpack.c.l.b16 %v28
  %v241 = vunpack.c.l.b16 %v29
  %v242 = vunpack.c.l.b16 %v30
  %v243 = vunpack.c.l.b16 %v31
  %v244 = vunpack.c.l.b16 %v32
  %v245 = vunpack.c.l.b16 %v33
  %v246 = vunpack.c.l.b16 %v34
  %v247 = vunpack.c.l.b16 %v35
  %v248 = vunpack.c.l.b16 %v36
  %v249 = vunpack.c.l.b16 %v37
  %v250 = vunpack.c.l.b16 %v38
  %v251 = vunpack.c.l.b16 %v39
  %v252 = vunpack.c.l.b16 %v40
  %v253 = vunpack.c.l.b16 %v41
  %v254 = vunpack.c.l.b16 %v42
  %v255 = vunpack.c.l.b16 %v43
  %v256 = vunpack.c.l.b16 %v44
  %v257 = vunpack.c.l.b16 %v45
  %v258 = vunpack.c.l.b16 %v46
  %v259 = vunpack.c.l.b16 %v47
  %v260 = vunpack.c.l.b16 %v48
  %v261 = vunpack.c.l.b16 %v49
  %v262 = vunpack.c.l.b16 %v50
  %v263 = vunpack.c.l.b16 %v51
  %v264 = vunpack.c.l.b16 %v52
  %v265 = vunpack.c.l.b16 %v53
  %v266 = vunpack.c.l.b16 %v54
  %v267 = vunpack.c.l.b16 %v55
  %v268 = vunpack.c.l.b16 %v56
  %v269 = vunpack.c.l.b16 %v57
  %v270 = vunpack.c.l.b16 %v58
  %v271 = vunpack.c.l.b16 %v59
  %v272 = vunpack.c.l.b16 %v60
  %v273 = vunpack.c.l.b16 %v61
  %v274 = vunpack.c.l.b16 %v62
  %v275 = vunpack.c.l.b16 %v63
  %v276 = vunpack.c.l.b16 %v64
  %v277 = vunpack.c.l.b16 %v65
  %v278 = vunpack.c.l.b16 %v66
  %v279 = vunpack.c.l.b16 %v67
  %v280 = vunpack.c.l.b16 %v68
  %v281 = vunpack.c.l.b16 %v69
  %v282 = vunpack.c.l.b16 %v70
  %v283 = vunpack.c.l.b16 %v71
  %v284 = vunpack.c.l.b16 %v72
  %v285 = vunpack.c.l.b16 %v73
  %v286 = vunpack.c.l.b16 %v74
  %v287 = vunpack.c.l.b16 %v75
  %v288 = vunpack.c.l.b16 %v76
  %v289 = vunpack.c.l.b16 %v77
  %v290 = vunpack.c.l.b16 %v78
  %v291 = vunpack.c.l.b16 %v79
  %v292 = vunpack.c.l.b16 %v80
  %v293 = vunpack.c.l.b16 %v81
  %v294 = vunpack.c.l.b16 %v82
  %v295 = vunpack.c.l.b16 %v83
  %v296 = vunpack.c.l.b16 %v84
  %v297 = vunpack.c.l.b16 %v85
  %v298 = vunpack.c.l.b16 %v86
  %v299 = vunpack.c.l.b16 %v87
  %v300 = vunpack.c.l.b16 %v88
  %v301 = vunpack.c.l.b16 %v89
  %v302 = vunpack.c.l.b16 %v90
  %v303 = vunpack.c.l.b16 %v91
  %v304 = vunpack.c.l.b16 %v92
  %v305 = vunpack.c.l.b16 %v93
  %v306 = vunpack.c.l.b16 %v94
  %v307 = vunpack.c.l.b16 %v95
  %v308 = vunpack.c.l.b16 %v96
  %v309 = vunpack.c.l.b16 %v97
  %v310 = vunpack.c.l.b16 %v98
  %v311 = vunpack.c.l.b16 %v99
  %v312 = vunpack.c.l.b16 %v100
  %v313 = vunpack.c.l.b16 %v101
  %v314 = vunpack.c.l.b16 %v102
  %v315 = vunpack.c.l.b16 %v103
  %v316 = vunpack.c.l.b16 %v104
  %v317 = vpack.c.b16 %v238, %v237
  %v318 = vpack.c.b16 %v240, %v239
  %v319 = vpack.c.b16 %v242, %v241
  %v320 = vpack.c.b16 %v244, %v243
  %v321 = vpack.c.b16 %v246, %v245
  %v322 = vpack.c.b16 %v248, %v247
  %v323 = vpack.c.b16 %v250, %v249
  %v324 = vpack.c.b16 %v252, %v251
  %v325 = vpack.c.b16 %v254, %v253
  %v326 = vpack.c.b16 %v256, %v255
  %v327 = vpack.c.b16 %v258, %v257
  %v328 = vpack.c.b16 %v260, %v259
  %v329 = vpack.c.b16 %v262, %v261
  %v330 = vpack.c.b16 %v264, %v263
  %v331 = vpack.c.b16 %v266, %v265
  %v332 = vpack.c.b16 %v268, %v267
  %v333 = vpack.c.b16 %v270, %v269
  %v334 = vpack.c.b16 %v272, %v271
  %v335 = vpack.c.b16 %v274, %v273
  %v336 = vpack.c.b16 %v276, %v275
  %v337 = vpack.c.b16 %v278, %v277
  %v338 = vpack.c.b16 %v280, %v279
  %v339 = vpack.c.b16 %v282, %v281
  %v340 = vpack.c.b16 %v284, %v283
  %v341 = vpack.c.b16 %v286, %v285
  %v342 = vpack.c.b16 %v288, %v287
  %v343 = vpack.c.b16 %v290, %v289
  %v344 = vpack.c.b16 %v292, %v291
  %v345 = vpack.c.b16 %v294, %v293
  %v346 = vpack.c.b16 %v296, %v295
  %v347 = vpack.c.b16 %v298, %v297
  %v348 = vpack.c.b16 %v300, %v299
  %v349 = vpack.c.b16 %v302, %v301
  %v350 = vpack.c.b16 %v304, %v303
  %v351 = vpack.c.b16 %v306, %v305
  %v352 = vpack.c.b16 %v308, %v307
  %v353 = vpack.c.b16 %v310, %v309
  %v354 = vpack.c.b16 %v312, %v311
  %v355 = vpack.c.b16 %v314, %v313
  %v356 = vpack.c.b16 %v316, %v315
  %397 = vmatpush.bf16.msra.mxu0 %v324
  %398 = vmatpush.bf16.msra.mxu0 %v323
  %399 = vmatpush.bf16.msra.mxu0 %v322
  %400 = vmatpush.bf16.msra.mxu0 %v321
  %401 = vmatpush.bf16.msra.mxu0 %v320
  %402 = vmatpush.bf16.msra.mxu0 %v319
  %403 = vmatpush.bf16.msra.mxu0 %v318
  %404 = vmatpush.bf16.msra.mxu0 %v317
  %405 = vmatmul.bf16.gmra.mxu0 %v137
  %v406 = vpop.f32.mrf.mxu0
  %v407 = vadd.f32 0.0, %v406
  %v408 = vpop.f32.mrf.mxu0
  %v409 = vadd.f32 0.0, %v408
  %410 = vmatmul.bf16.gmra.mxu0 %v142
  %v411 = vpop.f32.mrf.mxu0
  %v412 = vadd.f32 0.0, %v411
  %v413 = vpop.f32.mrf.mxu0
  %v414 = vadd.f32 0.0, %v413
  %415 = vdwg.mxu0
  %416 = vmatpush.bf16.msra.mxu0 %v332
  %417 = vmatpush.bf16.msra.mxu0 %v331
  %418 = vmatpush.bf16.msra.mxu0 %v330
  %419 = vmatpush.bf16.msra.mxu0 %v329
  %420 = vmatpush.bf16.msra.mxu0 %v328
  %421 = vmatpush.bf16.msra.mxu0 %v327
  %422 = vmatpush.bf16.msra.mxu0 %v326
  %423 = vmatpush.bf16.msra.mxu0 %v325
  %424 = vmatmul.bf16.gmra.mxu0 %v138
  %v425 = vpop.f32.mrf.mxu0
  %v426 = vadd.f32 %v407, %v425
  %v427 = vpop.f32.mrf.mxu0
  %v428 = vadd.f32 %v409, %v427
  %429 = vmatmul.bf16.gmra.mxu0 %v143
  %v430 = vpop.f32.mrf.mxu0
  %v431 = vadd.f32 %v412, %v430
  %v432 = vpop.f32.mrf.mxu0
  %v433 = vadd.f32 %v414, %v432
  %434 = vdwg.mxu0
  %435 = vmatpush.bf16.msra.mxu0 %v340
  %436 = vmatpush.bf16.msra.mxu0 %v339
  %437 = vmatpush.bf16.msra.mxu0 %v338
  %438 = vmatpush.bf16.msra.mxu0 %v337
  %439 = vmatpush.bf16.msra.mxu0 %v336
  %440 = vmatpush.bf16.msra.mxu0 %v335
  %441 = vmatpush.bf16.msra.mxu0 %v334
  %442 = vmatpush.bf16.msra.mxu0 %v333
  %443 = vmatmul.bf16.gmra.mxu0 %v139
  %v444 = vpop.f32.mrf.mxu0
  %v445 = vadd.f32 %v426, %v444
  %v446 = vpop.f32.mrf.mxu0
  %v447 = vadd.f32 %v428, %v446
  %448 = vmatmul.bf16.gmra.mxu0 %v144
  %v449 = vpop.f32.mrf.mxu0
  %v450 = vadd.f32 %v431, %v449
  %v451 = vpop.f32.mrf.mxu0
  %v452 = vadd.f32 %v433, %v451
  %453 = vdwg.mxu0
  %454 = vmatpush.bf16.msra.mxu0 %v348
  %455 = vmatpush.bf16.msra.mxu0 %v347
  %456 = vmatpush.bf16.msra.mxu0 %v346
  %457 = vmatpush.bf16.msra.mxu0 %v345
  %458 = vmatpush.bf16.msra.mxu0 %v344
  %459 = vmatpush.bf16.msra.mxu0 %v343
  %460 = vmatpush.bf16.msra.mxu0 %v342
  %461 = vmatpush.bf16.msra.mxu0 %v341
  %462 = vmatmul.bf16.gmra.mxu0 %v140
  %v463 = vpop.f32.mrf.mxu0
  %v464 = vadd.f32 %v445, %v463
  %v465 = vpop.f32.mrf.mxu0
  %v466 = vadd.f32 %v447, %v465
  %467 = vmatmul.bf16.gmra.mxu0 %v145
  %v468 = vpop.f32.mrf.mxu0
  %v469 = vadd.f32 %v450, %v468
  %v470 = vpop.f32.mrf.mxu0
  %v471 = vadd.f32 %v452, %v470
  %472 = vdwg.mxu0
  %473 = vmatpush.bf16.msra.mxu0 %v356
  %474 = vmatpush.bf16.msra.mxu0 %v355
  %475 = vmatpush.bf16.msra.mxu0 %v354
  %476 = vmatpush.bf16.msra.mxu0 %v353
  %477 = vmatpush.bf16.msra.mxu0 %v352
  %478 = vmatpush.bf16.msra.mxu0 %v351
  %479 = vmatpush.bf16.msra.mxu0 %v350
  %480 = vmatpush.bf16.msra.mxu0 %v349
  %481 = vmatmul.bf16.gmra.mxu0 %v141
  %v482 = vpop.f32.mrf.mxu0
  %v483 = vadd.f32 %v464, %v482
  %v484 = vpop.f32.mrf.mxu0
  %v485 = vadd.f32 %v466, %v484
  %486 = vmatmul.bf16.gmra.mxu0 %v146
  %v487 = vpop.f32.mrf.mxu0
  %v488 = vadd.f32 %v469, %v487
  %v489 = vpop.f32.mrf.mxu0
  %v490 = vadd.f32 %v471, %v489
  %491 = vdwg.mxu0
  %492 = vst [vmem:[%s2] sm:$0xff] %v483
  %493 = vst [vmem:[%s2 + $0x8] sm:$0xff] %v485
  %494 = vst [vmem:[%s2 + $0x10] sm:$0xff] %v488
  %495 = vst [vmem:[%s2 + $0x18] sm:$0xff] %v490
  %v496 = vadd.f32 %v483, %v485
  %v497 = vadd.f32 %v496, %v488
  %v498 = vadd.f32 %v497, %v490
  %v499 = vrot.slane %v498, 4
  %v500 = vadd.f32 %v498, %v499
  %v501 = vrot.slane %v500, 2
  %v502 = vadd.f32 %v500, %v501
  %v503 = vrot.slane %v502, 1
  %v504 = vadd.f32 %v502, %v503
  %v505 = vmul.f32 %v483, %v483
  %v506 = vmul.f32 %v485, %v485
  %v507 = vmul.f32 %v488, %v488
  %v508 = vmul.f32 %v490, %v490
  %v509 = vadd.f32 %v505, %v506
  %v510 = vadd.f32 %v509, %v507
  %v511 = vadd.f32 %v510, %v508
  %v512 = vrot.slane %v511, 4
  %v513 = vadd.f32 %v511, %v512
  %v514 = vrot.slane %v513, 2
  %v515 = vadd.f32 %v513, %v514
  %v516 = vrot.slane %v515, 1
  %v517 = vadd.f32 %v515, %v516
  %vm518 = vcmask 1040384
  %v519 = vsel %vm518, %v504, %v517
  %520 = vst [vmem:[%s3] sm:$0x3] %v519
  // Predicated region
  $region10: #{encoder_forward.73} parent=0 // pred_check
    _
  $region11: #{encoder_forward.73} parent=0 // pred_check_branch
    %522 = sbr.rel (0) target = $region13
  $region12: #{encoder_forward.73} parent=0 // pred_region
    _
  $region13: #{encoder_forward.73} parent=0 // pred_fallthru
    _
  // Predicated region
  $region14: #{encoder_forward.73} parent=0 // pred_check
    _
  $region15: #{encoder_forward.73} parent=0 // pred_check_branch
    %524 = sbr.rel (0) target = $region17
  $region16: #{encoder_forward.73} parent=0 // pred_region
    _
  $region17: #{encoder_forward.73} parent=0 // pred_fallthru
    _
  // Predicated region
  $region18: #{encoder_forward.73} parent=0 // pred_check
    _
  $region19: #{encoder_forward.73} parent=0 // pred_check_branch
    %526 = sbr.rel (0) target = $region21
  $region20: #{encoder_forward.73} parent=0 // pred_region
    _
  $region21: #{encoder_forward.73} parent=0 // pred_fallthru
    _
  // Predicated region
  $region22: #{encoder_forward.73} parent=0 // pred_check
    _
  $region23: #{encoder_forward.73} parent=0 // pred_check_branch
    %528 = sbr.rel (0) target = $region25
  $region24: #{encoder_forward.73} parent=0 // pred_region
    _
  $region25: #{encoder_forward.73} parent=0 // pred_fallthru
    _

// kernel: encoder_forward.80
$region0: #{encoder_forward.80}
  #allocation0 [shape = 'u32[]', space=smem, size = 0x4, offset = 0x4, fixed_abs, tag = 'smem constant byte address 0x4 - core index']
  #allocation1 [shape = 'u32[72,128]{1,0:T(1,128)}', space=vmem, size = 0x9000, scoped, tag = 'internal scratch']
  %s0 = inlined_call_operand.vmem [shape: f32[128,128], index: 0, kind: input, shape index: {}]
  %s1 = inlined_call_operand.vmem [shape: f32[1,128], index: 1, kind: input, shape index: {}]
  %s2 = inlined_call_operand.vmem [shape: f32[1,128], index: 2, kind: input, shape index: {}]
  %s3 = inlined_call_operand.vmem [shape: f32[128,128], index: 3, kind: output, shape index: {}]
  %s4 = sld [smem:[#allocation0]]
  $region22: #{encoder_forward.80} parent=0
    _
  %s6 = ssub.s32 1, %s4
  %s7 = scalar_select 0, %s6, %s4
  // Predicated region
  $region2: #{encoder_forward.80} parent=0 // pred_check
    _
  $region3: #{encoder_forward.80} parent=0 // pred_check_branch
    %9 = sbr.rel (0) target = $region5
  $region4: #{encoder_forward.80} parent=0 // pred_region
    _
  $region5: #{encoder_forward.80} parent=0 // pred_fallthru
    _
  // Predicated region
  $region6: #{encoder_forward.80} parent=0 // pred_check
    _
  $region7: #{encoder_forward.80} parent=0 // pred_check_branch
    %11 = sbr.rel (0) target = $region9
  $region8: #{encoder_forward.80} parent=0 // pred_region
    _
  $region9: #{encoder_forward.80} parent=0 // pred_fallthru
    _
  // Predicated region
  $region10: #{encoder_forward.80} parent=0 // pred_check
    _
  $region11: #{encoder_forward.80} parent=0 // pred_check_branch
    %13 = sbr.rel (0) target = $region13
  $region12: #{encoder_forward.80} parent=0 // pred_region
    _
  $region13: #{encoder_forward.80} parent=0 // pred_fallthru
    _
  %v14 = vld [vmem:[%s0] sm:$0xff]
  %v15 = vld [vmem:[%s0 + $0x8] sm:$0xff]
  %v16 = vld [vmem:[%s0 + $0x10] sm:$0xff]
  %v17 = vld [vmem:[%s0 + $0x18] sm:$0xff]
  %v18 = vld [vmem:[%s0 + $0x20] sm:$0xff]
  %v19 = vld [vmem:[%s0 + $0x28] sm:$0xff]
  %v20 = vld [vmem:[%s0 + $0x30] sm:$0xff]
  %v21 = vld [vmem:[%s0 + $0x38] sm:$0xff]
  %v22 = vld [vmem:[%s0 + $0x40] sm:$0xff]
  %v23 = vld [vmem:[%s0 + $0x48] sm:$0xff]
  %v24 = vld [vmem:[%s0 + $0x50] sm:$0xff]
  %v25 = vld [vmem:[%s0 + $0x58] sm:$0xff]
  %v26 = vld [vmem:[%s0 + $0x60] sm:$0xff]
  %v27 = vld [vmem:[%s0 + $0x68] sm:$0xff]
  %v28 = vld [vmem:[%s0 + $0x70] sm:$0xff]
  %v29 = vld [vmem:[%s0 + $0x78] sm:$0xff]
  %v30 = vld [vmem:[%s1] sm:$0x1]
  %v32 = vperm.slane %v30, 0
  %v34 = vmul.f32 %v14, %v32
  %v35 = vmul.f32 %v15, %v32
  %v36 = vmul.f32 %v16, %v32
  %v37 = vmul.f32 %v17, %v32
  %v38 = vmul.f32 %v18, %v32
  %v39 = vmul.f32 %v19, %v32
  %v40 = vmul.f32 %v20, %v32
  %v41 = vmul.f32 %v21, %v32
  %v42 = vmul.f32 %v22, %v32
  %v43 = vmul.f32 %v23, %v32
  %v44 = vmul.f32 %v24, %v32
  %v45 = vmul.f32 %v25, %v32
  %v46 = vmul.f32 %v26, %v32
  %v47 = vmul.f32 %v27, %v32
  %v48 = vmul.f32 %v28, %v32
  %v49 = vmul.f32 %v29, %v32
  %v50 = vld [vmem:[%s2] sm:$0x1]
  %v52 = vperm.slane %v50, 0
  %v54 = vadd.f32 %v34, %v52
  %v55 = vadd.f32 %v35, %v52
  %v56 = vadd.f32 %v36, %v52
  %v57 = vadd.f32 %v37, %v52
  %v58 = vadd.f32 %v38, %v52
  %v59 = vadd.f32 %v39, %v52
  %v60 = vadd.f32 %v40, %v52
  %v61 = vadd.f32 %v41, %v52
  %v62 = vadd.f32 %v42, %v52
  %v63 = vadd.f32 %v43, %v52
  %v64 = vadd.f32 %v44, %v52
  %v65 = vadd.f32 %v45, %v52
  %v66 = vadd.f32 %v46, %v52
  %v67 = vadd.f32 %v47, %v52
  %v68 = vadd.f32 %v48, %v52
  %v69 = vadd.f32 %v49, %v52
  %v70 = vmax.f32 %v54, 0.0
  %v71 = vmax.f32 %v55, 0.0
  %v72 = vmax.f32 %v56, 0.0
  %v73 = vmax.f32 %v57, 0.0
  %v74 = vmax.f32 %v58, 0.0
  %v75 = vmax.f32 %v59, 0.0
  %v76 = vmax.f32 %v60, 0.0
  %v77 = vmax.f32 %v61, 0.0
  %v78 = vmax.f32 %v62, 0.0
  %v79 = vmax.f32 %v63, 0.0
  %v80 = vmax.f32 %v64, 0.0
  %v81 = vmax.f32 %v65, 0.0
  %v82 = vmax.f32 %v66, 0.0
  %v83 = vmax.f32 %v67, 0.0
  %v84 = vmax.f32 %v68, 0.0
  %v85 = vmax.f32 %v69, 0.0
  %86 = vst [vmem:[%s3] sm:$0xff] %v70
  %87 = vst [vmem:[%s3 + $0x8] sm:$0xff] %v71
  %88 = vst [vmem:[%s3 + $0x10] sm:$0xff] %v72
  %89 = vst [vmem:[%s3 + $0x18] sm:$0xff] %v73
  %90 = vst [vmem:[%s3 + $0x20] sm:$0xff] %v74
  %91 = vst [vmem:[%s3 + $0x28] sm:$0xff] %v75
  %92 = vst [vmem:[%s3 + $0x30] sm:$0xff] %v76
  %93 = vst [vmem:[%s3 + $0x38] sm:$0xff] %v77
  %94 = vst [vmem:[%s3 + $0x40] sm:$0xff] %v78
  %95 = vst [vmem:[%s3 + $0x48] sm:$0xff] %v79
  %96 = vst [vmem:[%s3 + $0x50] sm:$0xff] %v80
  %97 = vst [vmem:[%s3 + $0x58] sm:$0xff] %v81
  %98 = vst [vmem:[%s3 + $0x60] sm:$0xff] %v82
  %99 = vst [vmem:[%s3 + $0x68] sm:$0xff] %v83
  %100 = vst [vmem:[%s3 + $0x70] sm:$0xff] %v84
  %101 = vst [vmem:[%s3 + $0x78] sm:$0xff] %v85
  // Predicated region
  $region14: #{encoder_forward.80} parent=0 // pred_check
    _
  $region15: #{encoder_forward.80} parent=0 // pred_check_branch
    %103 = sbr.rel (0) target = $region17
  $region16: #{encoder_forward.80} parent=0 // pred_region
    _
  $region17: #{encoder_forward.80} parent=0 // pred_fallthru
    _
  // Predicated region
  $region18: #{encoder_forward.80} parent=0 // pred_check
    _
  $region19: #{encoder_forward.80} parent=0 // pred_check_branch
    %105 = sbr.rel (0) target = $region21
  $region20: #{encoder_forward.80} parent=0 // pred_region
    _
  $region21: #{encoder_forward.80} parent=0 // pred_fallthru
    _

// kernel: encoder_forward.76
$region0: #{encoder_forward.76}
  #allocation0 [shape = 'u32[]', space=smem, size = 0x4, offset = 0x4, fixed_abs, tag = 'smem constant byte address 0x4 - core index']
  #allocation1 [shape = 'u32[72,128]{1,0:T(1,128)}', space=vmem, size = 0x9000, scoped, tag = 'internal scratch']
  %s0 = inlined_call_operand.vmem [shape: bf16[32,256], index: 0, kind: input, shape index: {}]
  %s1 = inlined_call_operand.vmem [shape: bf16[256,128], index: 1, kind: input, shape index: {}]
  %s2 = inlined_call_operand.vmem [shape: f32[32,128], index: 2, kind: output, shape index: {0}]
  %s3 = inlined_call_operand.vmem [shape: f32[1,2,128], index: 3, kind: output, shape index: {1}]
  %4 = xla_tuple %s2, %s3
  %s5 = sld [smem:[#allocation0]]
  $region26: #{encoder_forward.76} parent=0
    _
  %s7 = ssub.s32 1, %s5
  %s8 = scalar_select 0, %s7, %s5
  // Predicated region
  $region2: #{encoder_forward.76} parent=0 // pred_check
    _
  $region3: #{encoder_forward.76} parent=0 // pred_check_branch
    %10 = sbr.rel (0) target = $region5
  $region4: #{encoder_forward.76} parent=0 // pred_region
    _
  $region5: #{encoder_forward.76} parent=0 // pred_fallthru
    _
  // Predicated region
  $region6: #{encoder_forward.76} parent=0 // pred_check
    _
  $region7: #{encoder_forward.76} parent=0 // pred_check_branch
    %12 = sbr.rel (0) target = $region9
  $region8: #{encoder_forward.76} parent=0 // pred_region
    _
  $region9: #{encoder_forward.76} parent=0 // pred_fallthru
    _
  %v13 = vld [vmem:[%s0] sm:$0xff]
  %v14 = vld [vmem:[%s0 + $0x8] sm:$0xff]
  %v15 = vld [vmem:[%s0 + $0x10] sm:$0xff]
  %v16 = vld [vmem:[%s0 + $0x18] sm:$0xff]
  %v17 = vld [vmem:[%s1] sm:$0xf]
  %v18 = vld [vmem:[%s1 + $0x4] sm:$0xf]
  %v19 = vld [vmem:[%s1 + $0x8] sm:$0xf]
  %v20 = vld [vmem:[%s1 + $0xc] sm:$0xf]
  %v21 = vld [vmem:[%s1 + $0x10] sm:$0xf]
  %v22 = vld [vmem:[%s1 + $0x14] sm:$0xf]
  %v23 = vld [vmem:[%s1 + $0x18] sm:$0xf]
  %v24 = vld [vmem:[%s1 + $0x1c] sm:$0xf]
  %v25 = vld [vmem:[%s1 + $0x20] sm:$0xf]
  %v26 = vld [vmem:[%s1 + $0x24] sm:$0xf]
  %v27 = vld [vmem:[%s1 + $0x28] sm:$0xf]
  %v28 = vld [vmem:[%s1 + $0x2c] sm:$0xf]
  %v29 = vld [vmem:[%s1 + $0x30] sm:$0xf]
  %v30 = vld [vmem:[%s1 + $0x34] sm:$0xf]
  %v31 = vld [vmem:[%s1 + $0x38] sm:$0xf]
  %v32 = vld [vmem:[%s1 + $0x3c] sm:$0xf]
  %v33 = vld [vmem:[%s1 + $0x40] sm:$0xf]
  %v34 = vld [vmem:[%s1 + $0x44] sm:$0xf]
  %v35 = vld [vmem:[%s1 + $0x48] sm:$0xf]
  %v36 = vld [vmem:[%s1 + $0x4c] sm:$0xf]
  %v37 = vld [vmem:[%s1 + $0x50] sm:$0xf]
  %v38 = vld [vmem:[%s1 + $0x54] sm:$0xf]
  %v39 = vld [vmem:[%s1 + $0x58] sm:$0xf]
  %v40 = vld [vmem:[%s1 + $0x5c] sm:$0xf]
  %v41 = vld [vmem:[%s1 + $0x60] sm:$0xf]
  %v42 = vld [vmem:[%s1 + $0x64] sm:$0xf]
  %v43 = vld [vmem:[%s1 + $0x68] sm:$0xf]
  %v44 = vld [vmem:[%s1 + $0x6c] sm:$0xf]
  %v45 = vld [vmem:[%s1 + $0x70] sm:$0xf]
  %v46 = vld [vmem:[%s1 + $0x74] sm:$0xf]
  %v47 = vld [vmem:[%s1 + $0x78] sm:$0xf]
  %v48 = vld [vmem:[%s1 + $0x7c] sm:$0xf]
  %v53 = vunpack.c.l.b16 %v13
  %v54 = vunpack.c.h.b16 %v13
  %v55 = vunpack.c.l.b16 %v14
  %v56 = vunpack.c.h.b16 %v14
  %v57 = vunpack.c.l.b16 %v15
  %v58 = vunpack.c.h.b16 %v15
  %v59 = vunpack.c.l.b16 %v16
  %v60 = vunpack.c.h.b16 %v16
  %v61 = vpack.c.b16 %v55, %v53
  %v62 = vpack.c.b16 %v56, %v54
  %v63 = vpack.c.b16 %v59, %v57
  %v64 = vpack.c.b16 %v60, %v58
  %v101 = vunpack.c.l.b16 %v17
  %v102 = vunpack.c.l.b16 %v18
  %v103 = vunpack.c.l.b16 %v19
  %v104 = vunpack.c.l.b16 %v20
  %v105 = vunpack.c.l.b16 %v21
  %v106 = vunpack.c.l.b16 %v22
  %v107 = vunpack.c.l.b16 %v23
  %v108 = vunpack.c.l.b16 %v24
  %v109 = vunpack.c.l.b16 %v25
  %v110 = vunpack.c.l.b16 %v26
  %v111 = vunpack.c.l.b16 %v27
  %v112 = vunpack.c.l.b16 %v28
  %v113 = vunpack.c.l.b16 %v29
  %v114 = vunpack.c.l.b16 %v30
  %v115 = vunpack.c.l.b16 %v31
  %v116 = vunpack.c.l.b16 %v32
  %v117 = vunpack.c.l.b16 %v33
  %v118 = vunpack.c.l.b16 %v34
  %v119 = vunpack.c.l.b16 %v35
  %v120 = vunpack.c.l.b16 %v36
  %v121 = vunpack.c.l.b16 %v37
  %v122 = vunpack.c.l.b16 %v38
  %v123 = vunpack.c.l.b16 %v39
  %v124 = vunpack.c.l.b16 %v40
  %v125 = vunpack.c.l.b16 %v41
  %v126 = vunpack.c.l.b16 %v42
  %v127 = vunpack.c.l.b16 %v43
  %v128 = vunpack.c.l.b16 %v44
  %v129 = vunpack.c.l.b16 %v45
  %v130 = vunpack.c.l.b16 %v46
  %v131 = vunpack.c.l.b16 %v47
  %v132 = vunpack.c.l.b16 %v48
  %v133 = vpack.c.b16 %v102, %v101
  %v134 = vpack.c.b16 %v104, %v103
  %v135 = vpack.c.b16 %v106, %v105
  %v136 = vpack.c.b16 %v108, %v107
  %v137 = vpack.c.b16 %v110, %v109
  %v138 = vpack.c.b16 %v112, %v111
  %v139 = vpack.c.b16 %v114, %v113
  %v140 = vpack.c.b16 %v116, %v115
  %v141 = vpack.c.b16 %v118, %v117
  %v142 = vpack.c.b16 %v120, %v119
  %v143 = vpack.c.b16 %v122, %v121
  %v144 = vpack.c.b16 %v124, %v123
  %v145 = vpack.c.b16 %v126, %v125
  %v146 = vpack.c.b16 %v128, %v127
  %v147 = vpack.c.b16 %v130, %v129
  %v148 = vpack.c.b16 %v132, %v131
  %165 = vmatpush.bf16.msra.mxu0 %v140
  %166 = vmatpush.bf16.msra.mxu0 %v139
  %167 = vmatpush.bf16.msra.mxu0 %v138
  %168 = vmatpush.bf16.msra.mxu0 %v137
  %169 = vmatpush.bf16.msra.mxu0 %v136
  %170 = vmatpush.bf16.msra.mxu0 %v135
  %171 = vmatpush.bf16.msra.mxu0 %v134
  %172 = vmatpush.bf16.msra.mxu0 %v133
  %173 = vmatmul.bf16.gmra.mxu0 %v61
  %v174 = vpop.f32.mrf.mxu0
  %v175 = vadd.f32 0.0, %v174
  %v176 = vpop.f32.mrf.mxu0
  %v177 = vadd.f32 0.0, %v176
  %178 = vmatmul.bf16.gmra.mxu0 %v63
  %v179 = vpop.f32.mrf.mxu0
  %v180 = vadd.f32 0.0, %v179
  %v181 = vpop.f32.mrf.mxu0
  %v182 = vadd.f32 0.0, %v181
  %183 = vdwg.mxu0
  %184 = vmatpush.bf16.msra.mxu0 %v148
  %185 = vmatpush.bf16.msra.mxu0 %v147
  %186 = vmatpush.bf16.msra.mxu0 %v146
  %187 = vmatpush.bf16.msra.mxu0 %v145
  %188 = vmatpush.bf16.msra.mxu0 %v144
  %189 = vmatpush.bf16.msra.mxu0 %v143
  %190 = vmatpush.bf16.msra.mxu0 %v142
  %191 = vmatpush.bf16.msra.mxu0 %v141
  %192 = vmatmul.bf16.gmra.mxu0 %v62
  %v193 = vpop.f32.mrf.mxu0
  %v194 = vadd.f32 %v175, %v193
  %v195 = vpop.f32.mrf.mxu0
  %v196 = vadd.f32 %v177, %v195
  %197 = vmatmul.bf16.gmra.mxu0 %v64
  %v198 = vpop.f32.mrf.mxu0
  %v199 = vadd.f32 %v180, %v198
  %v200 = vpop.f32.mrf.mxu0
  %v201 = vadd.f32 %v182, %v200
  %202 = vdwg.mxu0
  %203 = vst [vmem:[%s2] sm:$0xff] %v194
  %204 = vst [vmem:[%s2 + $0x8] sm:$0xff] %v196
  %205 = vst [vmem:[%s2 + $0x10] sm:$0xff] %v199
  %206 = vst [vmem:[%s2 + $0x18] sm:$0xff] %v201
  %v207 = vadd.f32 %v194, %v196
  %v208 = vadd.f32 %v207, %v199
  %v209 = vadd.f32 %v208, %v201
  %v210 = vrot.slane %v209, 4
  %v211 = vadd.f32 %v209, %v210
  %v212 = vrot.slane %v211, 2
  %v213 = vadd.f32 %v211, %v212
  %v214 = vrot.slane %v213, 1
  %v215 = vadd.f32 %v213, %v214
  %v216 = vmul.f32 %v194, %v194
  %v217 = vmul.f32 %v196, %v196
  %v218 = vmul.f32 %v199, %v199
  %v219 = vmul.f32 %v201, %v201
  %v220 = vadd.f32 %v216, %v217
  %v221 = vadd.f32 %v220, %v218
  %v222 = vadd.f32 %v221, %v219
  %v223 = vrot.slane %v222, 4
  %v224 = vadd.f32 %v222, %v223
  %v225 = vrot.slane %v224, 2
  %v226 = vadd.f32 %v224, %v225
  %v227 = vrot.slane %v226, 1
  %v228 = vadd.f32 %v226, %v227
  %vm229 = vcmask 1040384
  %v230 = vsel %vm229, %v215, %v228
  %231 = vst [vmem:[%s3] sm:$0x3] %v230
  // Predicated region
  $region10: #{encoder_forward.76} parent=0 // pred_check
    _
  $region11: #{encoder_forward.76} parent=0 // pred_check_branch
    %233 = sbr.rel (0) target = $region13
  $region12: #{encoder_forward.76} parent=0 // pred_region
    _
  $region13: #{encoder_forward.76} parent=0 // pred_fallthru
    _
  // Predicated region
  $region14: #{encoder_forward.76} parent=0 // pred_check
    _
  $region15: #{encoder_forward.76} parent=0 // pred_check_branch
    %235 = sbr.rel (0) target = $region17
  $region16: #{encoder_forward.76} parent=0 // pred_region
    _
  $region17: #{encoder_forward.76} parent=0 // pred_fallthru
    _
  // Predicated region
  $region18: #{encoder_forward.76} parent=0 // pred_check
    _
  $region19: #{encoder_forward.76} parent=0 // pred_check_branch
    %237 = sbr.rel (0) target = $region21
  $region20: #{encoder_forward.76} parent=0 // pred_region
    _
  $region21: #{encoder_forward.76} parent=0 // pred_fallthru
    _
  // Predicated region
  $region22: #{encoder_forward.76} parent=0 // pred_check
    _
  $region23: #{encoder_forward.76} parent=0 // pred_check_branch
    %239 = sbr.rel (0) target = $region25
  $region24: #{encoder_forward.76} parent=0 // pred_region
    _
  $region25: #{encoder_forward.76} parent=0 // pred_fallthru
    _

// kernel: encoder_forward.81
$region0: #{encoder_forward.81}
  #allocation0 [shape = 'u32[]', space=smem, size = 0x4, offset = 0x4, fixed_abs, tag = 'smem constant byte address 0x4 - core index']
  #allocation1 [shape = 'u32[72,128]{1,0:T(1,128)}', space=vmem, size = 0x9000, scoped, tag = 'internal scratch']
  %s0 = inlined_call_operand.vmem [shape: bf16[128,128], index: 0, kind: input, shape index: {}]
  %s1 = inlined_call_operand.vmem [shape: bf16[128,128], index: 1, kind: input, shape index: {}]
  %s2 = inlined_call_operand.vmem [shape: f32[128,128], index: 2, kind: output, shape index: {0}]
  %s3 = inlined_call_operand.vmem [shape: f32[1,2,128], index: 3, kind: output, shape index: {1}]
  %4 = xla_tuple %s2, %s3
  %s5 = sld [smem:[#allocation0]]
  $region26: #{encoder_forward.81} parent=0
    _
  %s7 = ssub.s32 1, %s5
  %s8 = scalar_select 0, %s7, %s5
  // Predicated region
  $region2: #{encoder_forward.81} parent=0 // pred_check
    _
  $region3: #{encoder_forward.81} parent=0 // pred_check_branch
    %10 = sbr.rel (0) target = $region5
  $region4: #{encoder_forward.81} parent=0 // pred_region
    _
  $region5: #{encoder_forward.81} parent=0 // pred_fallthru
    _
  // Predicated region
  $region6: #{encoder_forward.81} parent=0 // pred_check
    _
  $region7: #{encoder_forward.81} parent=0 // pred_check_branch
    %12 = sbr.rel (0) target = $region9
  $region8: #{encoder_forward.81} parent=0 // pred_region
    _
  $region9: #{encoder_forward.81} parent=0 // pred_fallthru
    _
  %v13 = vld [vmem:[%s0] sm:$0xf]
  %v14 = vld [vmem:[%s0 + $0x4] sm:$0xf]
  %v15 = vld [vmem:[%s0 + $0x8] sm:$0xf]
  %v16 = vld [vmem:[%s0 + $0xc] sm:$0xf]
  %v17 = vld [vmem:[%s0 + $0x10] sm:$0xf]
  %v18 = vld [vmem:[%s0 + $0x14] sm:$0xf]
  %v19 = vld [vmem:[%s0 + $0x18] sm:$0xf]
  %v20 = vld [vmem:[%s0 + $0x1c] sm:$0xf]
  %v21 = vld [vmem:[%s0 + $0x20] sm:$0xf]
  %v22 = vld [vmem:[%s0 + $0x24] sm:$0xf]
  %v23 = vld [vmem:[%s0 + $0x28] sm:$0xf]
  %v24 = vld [vmem:[%s0 + $0x2c] sm:$0xf]
  %v25 = vld [vmem:[%s0 + $0x30] sm:$0xf]
  %v26 = vld [vmem:[%s0 + $0x34] sm:$0xf]
  %v27 = vld [vmem:[%s0 + $0x38] sm:$0xf]
  %v28 = vld [vmem:[%s0 + $0x3c] sm:$0xf]
  %v29 = vld [vmem:[%s1] sm:$0xf]
  %v30 = vld [vmem:[%s1 + $0x4] sm:$0xf]
  %v31 = vld [vmem:[%s1 + $0x8] sm:$0xf]
  %v32 = vld [vmem:[%s1 + $0xc] sm:$0xf]
  %v33 = vld [vmem:[%s1 + $0x10] sm:$0xf]
  %v34 = vld [vmem:[%s1 + $0x14] sm:$0xf]
  %v35 = vld [vmem:[%s1 + $0x18] sm:$0xf]
  %v36 = vld [vmem:[%s1 + $0x1c] sm:$0xf]
  %v37 = vld [vmem:[%s1 + $0x20] sm:$0xf]
  %v38 = vld [vmem:[%s1 + $0x24] sm:$0xf]
  %v39 = vld [vmem:[%s1 + $0x28] sm:$0xf]
  %v40 = vld [vmem:[%s1 + $0x2c] sm:$0xf]
  %v41 = vld [vmem:[%s1 + $0x30] sm:$0xf]
  %v42 = vld [vmem:[%s1 + $0x34] sm:$0xf]
  %v43 = vld [vmem:[%s1 + $0x38] sm:$0xf]
  %v44 = vld [vmem:[%s1 + $0x3c] sm:$0xf]
  %v61 = vunpack.c.l.b16 %v13
  %v62 = vunpack.c.l.b16 %v14
  %v63 = vunpack.c.l.b16 %v15
  %v64 = vunpack.c.l.b16 %v16
  %v65 = vunpack.c.l.b16 %v17
  %v66 = vunpack.c.l.b16 %v18
  %v67 = vunpack.c.l.b16 %v19
  %v68 = vunpack.c.l.b16 %v20
  %v69 = vunpack.c.l.b16 %v21
  %v70 = vunpack.c.l.b16 %v22
  %v71 = vunpack.c.l.b16 %v23
  %v72 = vunpack.c.l.b16 %v24
  %v73 = vunpack.c.l.b16 %v25
  %v74 = vunpack.c.l.b16 %v26
  %v75 = vunpack.c.l.b16 %v27
  %v76 = vunpack.c.l.b16 %v28
  %v77 = vpack.c.b16 %v62, %v61
  %v78 = vpack.c.b16 %v64, %v63
  %v79 = vpack.c.b16 %v66, %v65
  %v80 = vpack.c.b16 %v68, %v67
  %v81 = vpack.c.b16 %v70, %v69
  %v82 = vpack.c.b16 %v72, %v71
  %v83 = vpack.c.b16 %v74, %v73
  %v84 = vpack.c.b16 %v76, %v75
  %v109 = vunpack.c.l.b16 %v29
  %v110 = vunpack.c.l.b16 %v30
  %v111 = vunpack.c.l.b16 %v31
  %v112 = vunpack.c.l.b16 %v32
  %v113 = vunpack.c.l.b16 %v33
  %v114 = vunpack.c.l.b16 %v34
  %v115 = vunpack.c.l.b16 %v35
  %v116 = vunpack.c.l.b16 %v36
  %v117 = vunpack.c.l.b16 %v37
  %v118 = vunpack.c.l.b16 %v38
  %v119 = vunpack.c.l.b16 %v39
  %v120 = vunpack.c.l.b16 %v40
  %v121 = vunpack.c.l.b16 %v41
  %v122 = vunpack.c.l.b16 %v42
  %v123 = vunpack.c.l.b16 %v43
  %v124 = vunpack.c.l.b16 %v44
  %v125 = vpack.c.b16 %v110, %v109
  %v126 = vpack.c.b16 %v112, %v111
  %v127 = vpack.c.b16 %v114, %v113
  %v128 = vpack.c.b16 %v116, %v115
  %v129 = vpack.c.b16 %v118, %v117
  %v130 = vpack.c.b16 %v120, %v119
  %v131 = vpack.c.b16 %v122, %v121
  %v132 = vpack.c.b16 %v124, %v123
  %141 = vmatpush.bf16.msra.mxu0 %v132
  %142 = vmatpush.bf16.msra.mxu0 %v131
  %143 = vmatpush.bf16.msra.mxu0 %v130
  %144 = vmatpush.bf16.msra.mxu0 %v129
  %145 = vmatpush.bf16.msra.mxu0 %v128
  %146 = vmatpush.bf16.msra.mxu0 %v127
  %147 = vmatpush.bf16.msra.mxu0 %v126
  %148 = vmatpush.bf16.msra.mxu0 %v125
  %149 = vmatmul.bf16.gmra.mxu0 %v77
  %v150 = vpop.f32.mrf.mxu0
  %v151 = vadd.f32 0.0, %v150
  %v152 = vpop.f32.mrf.mxu0
  %v153 = vadd.f32 0.0, %v152
  %154 = vmatmul.bf16.gmra.mxu0 %v78
  %v155 = vpop.f32.mrf.mxu0
  %v156 = vadd.f32 0.0, %v155
  %v157 = vpop.f32.mrf.mxu0
  %v158 = vadd.f32 0.0, %v157
  %159 = vmatmul.bf16.gmra.mxu0 %v79
  %v160 = vpop.f32.mrf.mxu0
  %v161 = vadd.f32 0.0, %v160
  %v162 = vpop.f32.mrf.mxu0
  %v163 = vadd.f32 0.0, %v162
  %164 = vmatmul.bf16.gmra.mxu0 %v80
  %v165 = vpop.f32.mrf.mxu0
  %v166 = vadd.f32 0.0, %v165
  %v167 = vpop.f32.mrf.mxu0
  %v168 = vadd.f32 0.0, %v167
  %169 = vmatmul.bf16.gmra.mxu0 %v81
  %v170 = vpop.f32.mrf.mxu0
  %v171 = vadd.f32 0.0, %v170
  %v172 = vpop.f32.mrf.mxu0
  %v173 = vadd.f32 0.0, %v172
  %174 = vmatmul.bf16.gmra.mxu0 %v82
  %v175 = vpop.f32.mrf.mxu0
  %v176 = vadd.f32 0.0, %v175
  %v177 = vpop.f32.mrf.mxu0
  %v178 = vadd.f32 0.0, %v177
  %179 = vmatmul.bf16.gmra.mxu0 %v83
  %v180 = vpop.f32.mrf.mxu0
  %v181 = vadd.f32 0.0, %v180
  %v182 = vpop.f32.mrf.mxu0
  %v183 = vadd.f32 0.0, %v182
  %184 = vmatmul.bf16.gmra.mxu0 %v84
  %v185 = vpop.f32.mrf.mxu0
  %v186 = vadd.f32 0.0, %v185
  %v187 = vpop.f32.mrf.mxu0
  %v188 = vadd.f32 0.0, %v187
  %189 = vdwg.mxu0
  %190 = vst [vmem:[%s2] sm:$0xff] %v151
  %191 = vst [vmem:[%s2 + $0x8] sm:$0xff] %v153
  %192 = vst [vmem:[%s2 + $0x10] sm:$0xff] %v156
  %193 = vst [vmem:[%s2 + $0x18] sm:$0xff] %v158
  %194 = vst [vmem:[%s2 + $0x20] sm:$0xff] %v161
  %195 = vst [vmem:[%s2 + $0x28] sm:$0xff] %v163
  %196 = vst [vmem:[%s2 + $0x30] sm:$0xff] %v166
  %197 = vst [vmem:[%s2 + $0x38] sm:$0xff] %v168
  %198 = vst [vmem:[%s2 + $0x40] sm:$0xff] %v171
  %199 = vst [vmem:[%s2 + $0x48] sm:$0xff] %v173
  %200 = vst [vmem:[%s2 + $0x50] sm:$0xff] %v176
  %201 = vst [vmem:[%s2 + $0x58] sm:$0xff] %v178
  %202 = vst [vmem:[%s2 + $0x60] sm:$0xff] %v181
  %203 = vst [vmem:[%s2 + $0x68] sm:$0xff] %v183
  %204 = vst [vmem:[%s2 + $0x70] sm:$0xff] %v186
  %205 = vst [vmem:[%s2 + $0x78] sm:$0xff] %v188
  %v206 = vadd.f32 %v151, %v153
  %v207 = vadd.f32 %v206, %v156
  %v208 = vadd.f32 %v207, %v158
  %v209 = vadd.f32 %v208, %v161
  %v210 = vadd.f32 %v209, %v163
  %v211 = vadd.f32 %v210, %v166
  %v212 = vadd.f32 %v211, %v168
  %v213 = vadd.f32 %v212, %v171
  %v214 = vadd.f32 %v213, %v173
  %v215 = vadd.f32 %v214, %v176
  %v216 = vadd.f32 %v215, %v178
  %v217 = vadd.f32 %v216, %v181
  %v218 = vadd.f32 %v217, %v183
  %v219 = vadd.f32 %v218, %v186
  %v220 = vadd.f32 %v219, %v188
  %v221 = vrot.slane %v220, 4
  %v222 = vadd.f32 %v220, %v221
  %v223 = vrot.slane %v222, 2
  %v224 = vadd.f32 %v222, %v223
  %v225 = vrot.slane %v224, 1
  %v226 = vadd.f32 %v224, %v225
  %v227 = vmul.f32 %v151, %v151
  %v228 = vmul.f32 %v153, %v153
  %v229 = vmul.f32 %v156, %v156
  %v230 = vmul.f32 %v158, %v158
  %v231 = vmul.f32 %v161, %v161
  %v232 = vmul.f32 %v163, %v163
  %v233 = vmul.f32 %v166, %v166
  %v234 = vmul.f32 %v168, %v168
  %v235 = vmul.f32 %v171, %v171
  %v236 = vmul.f32 %v173, %v173
  %v237 = vmul.f32 %v176, %v176
  %v238 = vmul.f32 %v178, %v178
  %v239 = vmul.f32 %v181, %v181
  %v240 = vmul.f32 %v183, %v183
  %v241 = vmul.f32 %v186, %v186
  %v242 = vmul.f32 %v188, %v188
  %v243 = vadd.f32 %v227, %v228
  %v244 = vadd.f32 %v243, %v229
  %v245 = vadd.f32 %v244, %v230
  %v246 = vadd.f32 %v245, %v231
  %v247 = vadd.f32 %v246, %v232
  %v248 = vadd.f32 %v247, %v233
  %v249 = vadd.f32 %v248, %v234
  %v250 = vadd.f32 %v249, %v235
  %v251 = vadd.f32 %v250, %v236
  %v252 = vadd.f32 %v251, %v237
  %v253 = vadd.f32 %v252, %v238
  %v254 = vadd.f32 %v253, %v239
  %v255 = vadd.f32 %v254, %v240
  %v256 = vadd.f32 %v255, %v241
  %v257 = vadd.f32 %v256, %v242
  %v258 = vrot.slane %v257, 4
  %v259 = vadd.f32 %v257, %v258
  %v260 = vrot.slane %v259, 2
  %v261 = vadd.f32 %v259, %v260
  %v262 = vrot.slane %v261, 1
  %v263 = vadd.f32 %v261, %v262
  %vm264 = vcmask 1040384
  %v265 = vsel %vm264, %v226, %v263
  %266 = vst [vmem:[%s3] sm:$0x3] %v265
  // Predicated region
  $region10: #{encoder_forward.81} parent=0 // pred_check
    _
  $region11: #{encoder_forward.81} parent=0 // pred_check_branch
    %268 = sbr.rel (0) target = $region13
  $region12: #{encoder_forward.81} parent=0 // pred_region
    _
  $region13: #{encoder_forward.81} parent=0 // pred_fallthru
    _
  // Predicated region
  $region14: #{encoder_forward.81} parent=0 // pred_check
    _
  $region15: #{encoder_forward.81} parent=0 // pred_check_branch
    %270 = sbr.rel (0) target = $region17
  $region16: #{encoder_forward.81} parent=0 // pred_region
    _
  $region17: #{encoder_forward.81} parent=0 // pred_fallthru
    _
  // Predicated region
  $region18: #{encoder_forward.81} parent=0 // pred_check
    _
  $region19: #{encoder_forward.81} parent=0 // pred_check_branch
    %272 = sbr.rel (0) target = $region21
  $region20: #{encoder_forward.81} parent=0 // pred_region
    _
  $region21: #{encoder_forward.81} parent=0 // pred_fallthru
    _
  // Predicated region
  $region22: #{encoder_forward.81} parent=0 // pred_check
    _
  $region23: #{encoder_forward.81} parent=0 // pred_check_branch
    %274 = sbr.rel (0) target = $region25
  $region24: #{encoder_forward.81} parent=0 // pred_region
    _
  $region25: #{encoder_forward.81} parent=0 // pred_fallthru
    _

// kernel: encoder_forward.86
$region0: #{encoder_forward.86}
  #allocation0 [shape = 'u32[]', space=smem, size = 0x4, offset = 0x4, fixed_abs, tag = 'smem constant byte address 0x4 - core index']
  #allocation1 [shape = 'u32[72,128]{1,0:T(1,128)}', space=vmem, size = 0x9000, scoped, tag = 'internal scratch']
  %s0 = inlined_call_operand.vmem [shape: bf16[512,128], index: 0, kind: input, shape index: {}]
  %s1 = inlined_call_operand.vmem [shape: bf16[128,128], index: 1, kind: input, shape index: {}]
  %s2 = inlined_call_operand.vmem [shape: f32[512,128], index: 2, kind: output, shape index: {}]
  %s3 = sld [smem:[#allocation0]]
  $region18: #{encoder_forward.86} parent=0
    _
  %s5 = ssub.s32 1, %s3
  %s6 = scalar_select 0, %s5, %s3
  // Predicated region
  $region2: #{encoder_forward.86} parent=0 // pred_check
    _
  $region3: #{encoder_forward.86} parent=0 // pred_check_branch
    %8 = sbr.rel (0) target = $region5
  $region4: #{encoder_forward.86} parent=0 // pred_region
    _
  $region5: #{encoder_forward.86} parent=0 // pred_fallthru
    _
  // Predicated region
  $region6: #{encoder_forward.86} parent=0 // pred_check
    _
  $region7: #{encoder_forward.86} parent=0 // pred_check_branch
    %10 = sbr.rel (0) target = $region9
  $region8: #{encoder_forward.86} parent=0 // pred_region
    _
  $region9: #{encoder_forward.86} parent=0 // pred_fallthru
    _
  %v11 = vld [vmem:[%s0] sm:$0xf]
  %v12 = vld [vmem:[%s0 + $0x4] sm:$0xf]
  %v13 = vld [vmem:[%s0 + $0x8] sm:$0xf]
  %v14 = vld [vmem:[%s0 + $0xc] sm:$0xf]
  %v15 = vld [vmem:[%s0 + $0x10] sm:$0xf]
  %v16 = vld [vmem:[%s0 + $0x14] sm:$0xf]
  %v17 = vld [vmem:[%s0 + $0x18] sm:$0xf]
  %v18 = vld [vmem:[%s0 + $0x1c] sm:$0xf]
  %v19 = vld [vmem:[%s0 + $0x20] sm:$0xf]
  %v20 = vld [vmem:[%s0 + $0x24] sm:$0xf]
  %v21 = vld [vmem:[%s0 + $0x28] sm:$0xf]
  %v22 = vld [vmem:[%s0 + $0x2c] sm:$0xf]
  %v23 = vld [vmem:[%s0 + $0x30] sm:$0xf]
  %v24 = vld [vmem:[%s0 + $0x34] sm:$0xf]
  %v25 = vld [vmem:[%s0 + $0x38] sm:$0xf]
  %v26 = vld [vmem:[%s0 + $0x3c] sm:$0xf]
  %v27 = vld [vmem:[%s0 + $0x40] sm:$0xf]
  %v28 = vld [vmem:[%s0 + $0x44] sm:$0xf]
  %v29 = vld [vmem:[%s0 + $0x48] sm:$0xf]
  %v30 = vld [vmem:[%s0 + $0x4c] sm:$0xf]
  %v31 = vld [vmem:[%s0 + $0x50] sm:$0xf]
  %v32 = vld [vmem:[%s0 + $0x54] sm:$0xf]
  %v33 = vld [vmem:[%s0 + $0x58] sm:$0xf]
  %v34 = vld [vmem:[%s0 + $0x5c] sm:$0xf]
  %v35 = vld [vmem:[%s0 + $0x60] sm:$0xf]
  %v36 = vld [vmem:[%s0 + $0x64] sm:$0xf]
  %v37 = vld [vmem:[%s0 + $0x68] sm:$0xf]
  %v38 = vld [vmem:[%s0 + $0x6c] sm:$0xf]
  %v39 = vld [vmem:[%s0 + $0x70] sm:$0xf]
  %v40 = vld [vmem:[%s0 + $0x74] sm:$0xf]
  %v41 = vld [vmem:[%s0 + $0x78] sm:$0xf]
  %v42 = vld [vmem:[%s0 + $0x7c] sm:$0xf]
  %v43 = vld [vmem:[%s0 + $0x80] sm:$0xf]
  %v44 = vld [vmem:[%s0 + $0x84] sm:$0xf]
  %v45 = vld [vmem:[%s0 + $0x88] sm:$0xf]
  %v46 = vld [vmem:[%s0 + $0x8c] sm:$0xf]
  %v47 = vld [vmem:[%s0 + $0x90] sm:$0xf]
  %v48 = vld [vmem:[%s0 + $0x94] sm:$0xf]
  %v49 = vld [vmem:[%s0 + $0x98] sm:$0xf]
  %v50 = vld [vmem:[%s0 + $0x9c] sm:$0xf]
  %v51 = vld [vmem:[%s0 + $0xa0] sm:$0xf]
  %v52 = vld [vmem:[%s0 + $0xa4] sm:$0xf]
  %v53 = vld [vmem:[%s0 + $0xa8] sm:$0xf]
  %v54 = vld [vmem:[%s0 + $0xac] sm:$0xf]
  %v55 = vld [vmem:[%s0 + $0xb0] sm:$0xf]
  %v56 = vld [vmem:[%s0 + $0xb4] sm:$0xf]
  %v57 = vld [vmem:[%s0 + $0xb8] sm:$0xf]
  %v58 = vld [vmem:[%s0 + $0xbc] sm:$0xf]
  %v59 = vld [vmem:[%s0 + $0xc0] sm:$0xf]
  %v60 = vld [vmem:[%s0 + $0xc4] sm:$0xf]
  %v61 = vld [vmem:[%s0 + $0xc8] sm:$0xf]
  %v62 = vld [vmem:[%s0 + $0xcc] sm:$0xf]
  %v63 = vld [vmem:[%s0 + $0xd0] sm:$0xf]
  %v64 = vld [vmem:[%s0 + $0xd4] sm:$0xf]
  %v65 = vld [vmem:[%s0 + $0xd8] sm:$0xf]
  %v66 = vld [vmem:[%s0 + $0xdc] sm:$0xf]
  %v67 = vld [vmem:[%s0 + $0xe0] sm:$0xf]
  %v68 = vld [vmem:[%s0 + $0xe4] sm:$0xf]
  %v69 = vld [vmem:[%s0 + $0xe8] sm:$0xf]
  %v70 = vld [vmem:[%s0 + $0xec] sm:$0xf]
  %v71 = vld [vmem:[%s0 + $0xf0] sm:$0xf]
  %v72 = vld [vmem:[%s0 + $0xf4] sm:$0xf]
  %v73 = vld [vmem:[%s0 + $0xf8] sm:$0xf]
  %v74 = vld [vmem:[%s0 + $0xfc] sm:$0xf]
  %v75 = vld [vmem:[%s1] sm:$0xf]
  %v76 = vld [vmem:[%s1 + $0x4] sm:$0xf]
  %v77 = vld [vmem:[%s1 + $0x8] sm:$0xf]
  %v78 = vld [vmem:[%s1 + $0xc] sm:$0xf]
  %v79 = vld [vmem:[%s1 + $0x10] sm:$0xf]
  %v80 = vld [vmem:[%s1 + $0x14] sm:$0xf]
  %v81 = vld [vmem:[%s1 + $0x18] sm:$0xf]
  %v82 = vld [vmem:[%s1 + $0x1c] sm:$0xf]
  %v83 = vld [vmem:[%s1 + $0x20] sm:$0xf]
  %v84 = vld [vmem:[%s1 + $0x24] sm:$0xf]
  %v85 = vld [vmem:[%s1 + $0x28] sm:$0xf]
  %v86 = vld [vmem:[%s1 + $0x2c] sm:$0xf]
  %v87 = vld [vmem:[%s1 + $0x30] sm:$0xf]
  %v88 = vld [vmem:[%s1 + $0x34] sm:$0xf]
  %v89 = vld [vmem:[%s1 + $0x38] sm:$0xf]
  %v90 = vld [vmem:[%s1 + $0x3c] sm:$0xf]
  %v155 = vunpack.c.l.b16 %v11
  %v156 = vunpack.c.l.b16 %v12
  %v157 = vunpack.c.l.b16 %v13
  %v158 = vunpack.c.l.b16 %v14
  %v159 = vunpack.c.l.b16 %v15
  %v160 = vunpack.c.l.b16 %v16
  %v161 = vunpack.c.l.b16 %v17
  %v162 = vunpack.c.l.b16 %v18
  %v163 = vunpack.c.l.b16 %v19
  %v164 = vunpack.c.l.b16 %v20
  %v165 = vunpack.c.l.b16 %v21
  %v166 = vunpack.c.l.b16 %v22
  %v167 = vunpack.c.l.b16 %v23
  %v168 = vunpack.c.l.b16 %v24
  %v169 = vunpack.c.l.b16 %v25
  %v170 = vunpack.c.l.b16 %v26
  %v171 = vunpack.c.l.b16 %v27
  %v172 = vunpack.c.l.b16 %v28
  %v173 = vunpack.c.l.b16 %v29
  %v174 = vunpack.c.l.b16 %v30
  %v175 = vunpack.c.l.b16 %v31
  %v176 = vunpack.c.l.b16 %v32
  %v177 = vunpack.c.l.b16 %v33
  %v178 = vunpack.c.l.b16 %v34
  %v179 = vunpack.c.l.b16 %v35
  %v180 = vunpack.c.l.b16 %v36
  %v181 = vunpack.c.l.b16 %v37
  %v182 = vunpack.c.l.b16 %v38
  %v183 = vunpack.c.l.b16 %v39
  %v184 = vunpack.c.l.b16 %v40
  %v185 = vunpack.c.l.b16 %v41
  %v186 = vunpack.c.l.b16 %v42
  %v187 = vunpack.c.l.b16 %v43
  %v188 = vunpack.c.l.b16 %v44
  %v189 = vunpack.c.l.b16 %v45
  %v190 = vunpack.c.l.b16 %v46
  %v191 = vunpack.c.l.b16 %v47
  %v192 = vunpack.c.l.b16 %v48
  %v193 = vunpack.c.l.b16 %v49
  %v194 = vunpack.c.l.b16 %v50
  %v195 = vunpack.c.l.b16 %v51
  %v196 = vunpack.c.l.b16 %v52
  %v197 = vunpack.c.l.b16 %v53
  %v198 = vunpack.c.l.b16 %v54
  %v199 = vunpack.c.l.b16 %v55
  %v200 = vunpack.c.l.b16 %v56
  %v201 = vunpack.c.l.b16 %v57
  %v202 = vunpack.c.l.b16 %v58
  %v203 = vunpack.c.l.b16 %v59
  %v204 = vunpack.c.l.b16 %v60
  %v205 = vunpack.c.l.b16 %v61
  %v206 = vunpack.c.l.b16 %v62
  %v207 = vunpack.c.l.b16 %v63
  %v208 = vunpack.c.l.b16 %v64
  %v209 = vunpack.c.l.b16 %v65
  %v210 = vunpack.c.l.b16 %v66
  %v211 = vunpack.c.l.b16 %v67
  %v212 = vunpack.c.l.b16 %v68
  %v213 = vunpack.c.l.b16 %v69
  %v214 = vunpack.c.l.b16 %v70
  %v215 = vunpack.c.l.b16 %v71
  %v216 = vunpack.c.l.b16 %v72
  %v217 = vunpack.c.l.b16 %v73
  %v218 = vunpack.c.l.b16 %v74
  %v219 = vpack.c.b16 %v156, %v155
  %v220 = vpack.c.b16 %v158, %v157
  %v221 = vpack.c.b16 %v160, %v159
  %v222 = vpack.c.b16 %v162, %v161
  %v223 = vpack.c.b16 %v164, %v163
  %v224 = vpack.c.b16 %v166, %v165
  %v225 = vpack.c.b16 %v168, %v167
  %v226 = vpack.c.b16 %v170, %v169
  %v227 = vpack.c.b16 %v172, %v171
  %v228 = vpack.c.b16 %v174, %v173
  %v229 = vpack.c.b16 %v176, %v175
  %v230 = vpack.c.b16 %v178, %v177
  %v231 = vpack.c.b16 %v180, %v179
  %v232 = vpack.c.b16 %v182, %v181
  %v233 = vpack.c.b16 %v184, %v183
  %v234 = vpack.c.b16 %v186, %v185
  %v235 = vpack.c.b16 %v188, %v187
  %v236 = vpack.c.b16 %v190, %v189
  %v237 = vpack.c.b16 %v192, %v191
  %v238 = vpack.c.b16 %v194, %v193
  %v239 = vpack.c.b16 %v196, %v195
  %v240 = vpack.c.b16 %v198, %v197
  %v241 = vpack.c.b16 %v200, %v199
  %v242 = vpack.c.b16 %v202, %v201
  %v243 = vpack.c.b16 %v204, %v203
  %v244 = vpack.c.b16 %v206, %v205
  %v245 = vpack.c.b16 %v208, %v207
  %v246 = vpack.c.b16 %v210, %v209
  %v247 = vpack.c.b16 %v212, %v211
  %v248 = vpack.c.b16 %v214, %v213
  %v249 = vpack.c.b16 %v216, %v215
  %v250 = vpack.c.b16 %v218, %v217
  %v299 = vunpack.c.l.b16 %v75
  %v300 = vunpack.c.l.b16 %v76
  %v301 = vunpack.c.l.b16 %v77
  %v302 = vunpack.c.l.b16 %v78
  %v303 = vunpack.c.l.b16 %v79
  %v304 = vunpack.c.l.b16 %v80
  %v305 = vunpack.c.l.b16 %v81
  %v306 = vunpack.c.l.b16 %v82
  %v307 = vunpack.c.l.b16 %v83
  %v308 = vunpack.c.l.b16 %v84
  %v309 = vunpack.c.l.b16 %v85
  %v310 = vunpack.c.l.b16 %v86
  %v311 = vunpack.c.l.b16 %v87
  %v312 = vunpack.c.l.b16 %v88
  %v313 = vunpack.c.l.b16 %v89
  %v314 = vunpack.c.l.b16 %v90
  %v315 = vpack.c.b16 %v300, %v299
  %v316 = vpack.c.b16 %v302, %v301
  %v317 = vpack.c.b16 %v304, %v303
  %v318 = vpack.c.b16 %v306, %v305
  %v319 = vpack.c.b16 %v308, %v307
  %v320 = vpack.c.b16 %v310, %v309
  %v321 = vpack.c.b16 %v312, %v311
  %v322 = vpack.c.b16 %v314, %v313
  %331 = vmatpush.bf16.msra.mxu0 %v322
  %332 = vmatpush.bf16.msra.mxu0 %v321
  %333 = vmatpush.bf16.msra.mxu0 %v320
  %334 = vmatpush.bf16.msra.mxu0 %v319
  %335 = vmatpush.bf16.msra.mxu0 %v318
  %336 = vmatpush.bf16.msra.mxu0 %v317
  %337 = vmatpush.bf16.msra.mxu0 %v316
  %338 = vmatpush.bf16.msra.mxu0 %v315
  %339 = vmatmul.bf16.gmra.mxu0 %v219
  %v340 = vpop.f32.mrf.mxu0
  %v341 = vadd.f32 0.0, %v340
  %v342 = vpop.f32.mrf.mxu0
  %v343 = vadd.f32 0.0, %v342
  %344 = vmatmul.bf16.gmra.mxu0 %v220
  %v345 = vpop.f32.mrf.mxu0
  %v346 = vadd.f32 0.0, %v345
  %v347 = vpop.f32.mrf.mxu0
  %v348 = vadd.f32 0.0, %v347
  %349 = vmatmul.bf16.gmra.mxu0 %v221
  %v350 = vpop.f32.mrf.mxu0
  %v351 = vadd.f32 0.0, %v350
  %v352 = vpop.f32.mrf.mxu0
  %v353 = vadd.f32 0.0, %v352
  %354 = vmatmul.bf16.gmra.mxu0 %v222
  %v355 = vpop.f32.mrf.mxu0
  %v356 = vadd.f32 0.0, %v355
  %v357 = vpop.f32.mrf.mxu0
  %v358 = vadd.f32 0.0, %v357
  %359 = vmatmul.bf16.gmra.mxu0 %v223
  %v360 = vpop.f32.mrf.mxu0
  %v361 = vadd.f32 0.0, %v360
  %v362 = vpop.f32.mrf.mxu0
  %v363 = vadd.f32 0.0, %v362
  %364 = vmatmul.bf16.gmra.mxu0 %v224
  %v365 = vpop.f32.mrf.mxu0
  %v366 = vadd.f32 0.0, %v365
  %v367 = vpop.f32.mrf.mxu0
  %v368 = vadd.f32 0.0, %v367
  %369 = vmatmul.bf16.gmra.mxu0 %v225
  %v370 = vpop.f32.mrf.mxu0
  %v371 = vadd.f32 0.0, %v370
  %v372 = vpop.f32.mrf.mxu0
  %v373 = vadd.f32 0.0, %v372
  %374 = vmatmul.bf16.gmra.mxu0 %v226
  %v375 = vpop.f32.mrf.mxu0
  %v376 = vadd.f32 0.0, %v375
  %v377 = vpop.f32.mrf.mxu0
  %v378 = vadd.f32 0.0, %v377
  %379 = vmatmul.bf16.gmra.mxu0 %v227
  %v380 = vpop.f32.mrf.mxu0
  %v381 = vadd.f32 0.0, %v380
  %v382 = vpop.f32.mrf.mxu0
  %v383 = vadd.f32 0.0, %v382
  %384 = vmatmul.bf16.gmra.mxu0 %v228
  %v385 = vpop.f32.mrf.mxu0
  %v386 = vadd.f32 0.0, %v385
  %v387 = vpop.f32.mrf.mxu0
  %v388 = vadd.f32 0.0, %v387
  %389 = vmatmul.bf16.gmra.mxu0 %v229
  %v390 = vpop.f32.mrf.mxu0
  %v391 = vadd.f32 0.0, %v390
  %v392 = vpop.f32.mrf.mxu0
  %v393 = vadd.f32 0.0, %v392
  %394 = vmatmul.bf16.gmra.mxu0 %v230
  %v395 = vpop.f32.mrf.mxu0
  %v396 = vadd.f32 0.0, %v395
  %v397 = vpop.f32.mrf.mxu0
  %v398 = vadd.f32 0.0, %v397
  %399 = vmatmul.bf16.gmra.mxu0 %v231
  %v400 = vpop.f32.mrf.mxu0
  %v401 = vadd.f32 0.0, %v400
  %v402 = vpop.f32.mrf.mxu0
  %v403 = vadd.f32 0.0, %v402
  %404 = vmatmul.bf16.gmra.mxu0 %v232
  %v405 = vpop.f32.mrf.mxu0
  %v406 = vadd.f32 0.0, %v405
  %v407 = vpop.f32.mrf.mxu0
  %v408 = vadd.f32 0.0, %v407
  %409 = vmatmul.bf16.gmra.mxu0 %v233
  %v410 = vpop.f32.mrf.mxu0
  %v411 = vadd.f32 0.0, %v410
  %v412 = vpop.f32.mrf.mxu0
  %v413 = vadd.f32 0.0, %v412
  %414 = vmatmul.bf16.gmra.mxu0 %v234
  %v415 = vpop.f32.mrf.mxu0
  %v416 = vadd.f32 0.0, %v415
  %v417 = vpop.f32.mrf.mxu0
  %v418 = vadd.f32 0.0, %v417
  %419 = vmatmul.bf16.gmra.mxu0 %v235
  %v420 = vpop.f32.mrf.mxu0
  %v421 = vadd.f32 0.0, %v420
  %v422 = vpop.f32.mrf.mxu0
  %v423 = vadd.f32 0.0, %v422
  %424 = vmatmul.bf16.gmra.mxu0 %v236
  %v425 = vpop.f32.mrf.mxu0
  %v426 = vadd.f32 0.0, %v425
  %v427 = vpop.f32.mrf.mxu0
  %v428 = vadd.f32 0.0, %v427
  %429 = vmatmul.bf16.gmra.mxu0 %v237
  %v430 = vpop.f32.mrf.mxu0
  %v431 = vadd.f32 0.0, %v430
  %v432 = vpop.f32.mrf.mxu0
  %v433 = vadd.f32 0.0, %v432
  %434 = vmatmul.bf16.gmra.mxu0 %v238
  %v435 = vpop.f32.mrf.mxu0
  %v436 = vadd.f32 0.0, %v435
  %v437 = vpop.f32.mrf.mxu0
  %v438 = vadd.f32 0.0, %v437
  %439 = vmatmul.bf16.gmra.mxu0 %v239
  %v440 = vpop.f32.mrf.mxu0
  %v441 = vadd.f32 0.0, %v440
  %v442 = vpop.f32.mrf.mxu0
  %v443 = vadd.f32 0.0, %v442
  %444 = vmatmul.bf16.gmra.mxu0 %v240
  %v445 = vpop.f32.mrf.mxu0
  %v446 = vadd.f32 0.0, %v445
  %v447 = vpop.f32.mrf.mxu0
  %v448 = vadd.f32 0.0, %v447
  %449 = vmatmul.bf16.gmra.mxu0 %v241
  %v450 = vpop.f32.mrf.mxu0
  %v451 = vadd.f32 0.0, %v450
  %v452 = vpop.f32.mrf.mxu0
  %v453 = vadd.f32 0.0, %v452
  %454 = vmatmul.bf16.gmra.mxu0 %v242
  %v455 = vpop.f32.mrf.mxu0
  %v456 = vadd.f32 0.0, %v455
  %v457 = vpop.f32.mrf.mxu0
  %v458 = vadd.f32 0.0, %v457
  %459 = vmatmul.bf16.gmra.mxu0 %v243
  %v460 = vpop.f32.mrf.mxu0
  %v461 = vadd.f32 0.0, %v460
  %v462 = vpop.f32.mrf.mxu0
  %v463 = vadd.f32 0.0, %v462
  %464 = vmatmul.bf16.gmra.mxu0 %v244
  %v465 = vpop.f32.mrf.mxu0
  %v466 = vadd.f32 0.0, %v465
  %v467 = vpop.f32.mrf.mxu0
  %v468 = vadd.f32 0.0, %v467
  %469 = vmatmul.bf16.gmra.mxu0 %v245
  %v470 = vpop.f32.mrf.mxu0
  %v471 = vadd.f32 0.0, %v470
  %v472 = vpop.f32.mrf.mxu0
  %v473 = vadd.f32 0.0, %v472
  %474 = vmatmul.bf16.gmra.mxu0 %v246
  %v475 = vpop.f32.mrf.mxu0
  %v476 = vadd.f32 0.0, %v475
  %v477 = vpop.f32.mrf.mxu0
  %v478 = vadd.f32 0.0, %v477
  %479 = vmatmul.bf16.gmra.mxu0 %v247
  %v480 = vpop.f32.mrf.mxu0
  %v481 = vadd.f32 0.0, %v480
  %v482 = vpop.f32.mrf.mxu0
  %v483 = vadd.f32 0.0, %v482
  %484 = vmatmul.bf16.gmra.mxu0 %v248
  %v485 = vpop.f32.mrf.mxu0
  %v486 = vadd.f32 0.0, %v485
  %v487 = vpop.f32.mrf.mxu0
  %v488 = vadd.f32 0.0, %v487
  %489 = vmatmul.bf16.gmra.mxu0 %v249
  %v490 = vpop.f32.mrf.mxu0
  %v491 = vadd.f32 0.0, %v490
  %v492 = vpop.f32.mrf.mxu0
  %v493 = vadd.f32 0.0, %v492
  %494 = vmatmul.bf16.gmra.mxu0 %v250
  %v495 = vpop.f32.mrf.mxu0
  %v496 = vadd.f32 0.0, %v495
  %v497 = vpop.f32.mrf.mxu0
  %v498 = vadd.f32 0.0, %v497
  %499 = vdwg.mxu0
  %v500 = vtanh.pop %v341
  %v501 = vtanh.pop %v343
  %v502 = vtanh.pop %v346
  %v503 = vtanh.pop %v348
  %v504 = vtanh.pop %v351
  %v505 = vtanh.pop %v353
  %v506 = vtanh.pop %v356
  %v507 = vtanh.pop %v358
  %v508 = vtanh.pop %v361
  %v509 = vtanh.pop %v363
  %v510 = vtanh.pop %v366
  %v511 = vtanh.pop %v368
  %v512 = vtanh.pop %v371
  %v513 = vtanh.pop %v373
  %v514 = vtanh.pop %v376
  %v515 = vtanh.pop %v378
  %v516 = vtanh.pop %v381
  %v517 = vtanh.pop %v383
  %v518 = vtanh.pop %v386
  %v519 = vtanh.pop %v388
  %v520 = vtanh.pop %v391
  %v521 = vtanh.pop %v393
  %v522 = vtanh.pop %v396
  %v523 = vtanh.pop %v398
  %v524 = vtanh.pop %v401
  %v525 = vtanh.pop %v403
  %v526 = vtanh.pop %v406
  %v527 = vtanh.pop %v408
  %v528 = vtanh.pop %v411
  %v529 = vtanh.pop %v413
  %v530 = vtanh.pop %v416
  %v531 = vtanh.pop %v418
  %v532 = vtanh.pop %v421
  %v533 = vtanh.pop %v423
  %v534 = vtanh.pop %v426
  %v535 = vtanh.pop %v428
  %v536 = vtanh.pop %v431
  %v537 = vtanh.pop %v433
  %v538 = vtanh.pop %v436
  %v539 = vtanh.pop %v438
  %v540 = vtanh.pop %v441
  %v541 = vtanh.pop %v443
  %v542 = vtanh.pop %v446
  %v543 = vtanh.pop %v448
  %v544 = vtanh.pop %v451
  %v545 = vtanh.pop %v453
  %v546 = vtanh.pop %v456
  %v547 = vtanh.pop %v458
  %v548 = vtanh.pop %v461
  %v549 = vtanh.pop %v463
  %v550 = vtanh.pop %v466
  %v551 = vtanh.pop %v468
  %v552 = vtanh.pop %v471
  %v553 = vtanh.pop %v473
  %v554 = vtanh.pop %v476
  %v555 = vtanh.pop %v478
  %v556 = vtanh.pop %v481
  %v557 = vtanh.pop %v483
  %v558 = vtanh.pop %v486
  %v559 = vtanh.pop %v488
  %v560 = vtanh.pop %v491
  %v561 = vtanh.pop %v493
  %v562 = vtanh.pop %v496
  %v563 = vtanh.pop %v498
  %564 = vst [vmem:[%s2] sm:$0xff] %v500
  %565 = vst [vmem:[%s2 + $0x8] sm:$0xff] %v501
  %566 = vst [vmem:[%s2 + $0x10] sm:$0xff] %v502
  %567 = vst [vmem:[%s2 + $0x18] sm:$0xff] %v503
  %568 = vst [vmem:[%s2 + $0x20] sm:$0xff] %v504
  %569 = vst [vmem:[%s2 + $0x28] sm:$0xff] %v505
  %570 = vst [vmem:[%s2 + $0x30] sm:$0xff] %v506
  %571 = vst [vmem:[%s2 + $0x38] sm:$0xff] %v507
  %572 = vst [vmem:[%s2 + $0x40] sm:$0xff] %v508
  %573 = vst [vmem:[%s2 + $0x48] sm:$0xff] %v509
  %574 = vst [vmem:[%s2 + $0x50] sm:$0xff] %v510
  %575 = vst [vmem:[%s2 + $0x58] sm:$0xff] %v511
  %576 = vst [vmem:[%s2 + $0x60] sm:$0xff] %v512
  %577 = vst [vmem:[%s2 + $0x68] sm:$0xff] %v513
  %578 = vst [vmem:[%s2 + $0x70] sm:$0xff] %v514
  %579 = vst [vmem:[%s2 + $0x78] sm:$0xff] %v515
  %580 = vst [vmem:[%s2 + $0x80] sm:$0xff] %v516
  %581 = vst [vmem:[%s2 + $0x88] sm:$0xff] %v517
  %582 = vst [vmem:[%s2 + $0x90] sm:$0xff] %v518
  %583 = vst [vmem:[%s2 + $0x98] sm:$0xff] %v519
  %584 = vst [vmem:[%s2 + $0xa0] sm:$0xff] %v520
  %585 = vst [vmem:[%s2 + $0xa8] sm:$0xff] %v521
  %586 = vst [vmem:[%s2 + $0xb0] sm:$0xff] %v522
  %587 = vst [vmem:[%s2 + $0xb8] sm:$0xff] %v523
  %588 = vst [vmem:[%s2 + $0xc0] sm:$0xff] %v524
  %589 = vst [vmem:[%s2 + $0xc8] sm:$0xff] %v525
  %590 = vst [vmem:[%s2 + $0xd0] sm:$0xff] %v526
  %591 = vst [vmem:[%s2 + $0xd8] sm:$0xff] %v527
  %592 = vst [vmem:[%s2 + $0xe0] sm:$0xff] %v528
  %593 = vst [vmem:[%s2 + $0xe8] sm:$0xff] %v529
  %594 = vst [vmem:[%s2 + $0xf0] sm:$0xff] %v530
  %595 = vst [vmem:[%s2 + $0xf8] sm:$0xff] %v531
  %596 = vst [vmem:[%s2 + $0x100] sm:$0xff] %v532
  %597 = vst [vmem:[%s2 + $0x108] sm:$0xff] %v533
  %598 = vst [vmem:[%s2 + $0x110] sm:$0xff] %v534
  %599 = vst [vmem:[%s2 + $0x118] sm:$0xff] %v535
  %600 = vst [vmem:[%s2 + $0x120] sm:$0xff] %v536
  %601 = vst [vmem:[%s2 + $0x128] sm:$0xff] %v537
  %602 = vst [vmem:[%s2 + $0x130] sm:$0xff] %v538
  %603 = vst [vmem:[%s2 + $0x138] sm:$0xff] %v539
  %604 = vst [vmem:[%s2 + $0x140] sm:$0xff] %v540
  %605 = vst [vmem:[%s2 + $0x148] sm:$0xff] %v541
  %606 = vst [vmem:[%s2 + $0x150] sm:$0xff] %v542
  %607 = vst [vmem:[%s2 + $0x158] sm:$0xff] %v543
  %608 = vst [vmem:[%s2 + $0x160] sm:$0xff] %v544
  %609 = vst [vmem:[%s2 + $0x168] sm:$0xff] %v545
  %610 = vst [vmem:[%s2 + $0x170] sm:$0xff] %v546
  %611 = vst [vmem:[%s2 + $0x178] sm:$0xff] %v547
  %612 = vst [vmem:[%s2 + $0x180] sm:$0xff] %v548
  %613 = vst [vmem:[%s2 + $0x188] sm:$0xff] %v549
  %614 = vst [vmem:[%s2 + $0x190] sm:$0xff] %v550
  %615 = vst [vmem:[%s2 + $0x198] sm:$0xff] %v551
  %616 = vst [vmem:[%s2 + $0x1a0] sm:$0xff] %v552
  %617 = vst [vmem:[%s2 + $0x1a8] sm:$0xff] %v553
  %618 = vst [vmem:[%s2 + $0x1b0] sm:$0xff] %v554
  %619 = vst [vmem:[%s2 + $0x1b8] sm:$0xff] %v555
  %620 = vst [vmem:[%s2 + $0x1c0] sm:$0xff] %v556
  %621 = vst [vmem:[%s2 + $0x1c8] sm:$0xff] %v557
  %622 = vst [vmem:[%s2 + $0x1d0] sm:$0xff] %v558
  %623 = vst [vmem:[%s2 + $0x1d8] sm:$0xff] %v559
  %624 = vst [vmem:[%s2 + $0x1e0] sm:$0xff] %v560
  %625 = vst [vmem:[%s2 + $0x1e8] sm:$0xff] %v561
  %626 = vst [vmem:[%s2 + $0x1f0] sm:$0xff] %v562
  %627 = vst [vmem:[%s2 + $0x1f8] sm:$0xff] %v563
  // Predicated region
  $region10: #{encoder_forward.86} parent=0 // pred_check
    _
  $region11: #{encoder_forward.86} parent=0 // pred_check_branch
    %629 = sbr.rel (0) target = $region13
  $region12: #{encoder_forward.86} parent=0 // pred_region
    _
  $region13: #{encoder_forward.86} parent=0 // pred_fallthru
    _
  // Predicated region
  $region14: #{encoder_forward.86} parent=0 // pred_check
    _
  $region15: #{encoder_forward.86} parent=0 // pred_check_branch
    %631 = sbr.rel (0) target = $region17
  $region16: #{encoder_forward.86} parent=0 // pred_region
    _
  $region17: #{encoder_forward.86} parent=0 // pred_fallthru
    _

</llo_original>
